<compile_context>
chip_gen: v6e
topology: v6e:2x2x1
jax: 0.10.0
libtpu: 0.0.40
codegen_flags: <defaults>
</compile_context>

<pallas_src>
import numpy as np

import jax
import jax.numpy as jnp
from jax import lax
from jax.experimental import pallas as pl
from jax.experimental.pallas import tpu as pltpu


# ----------------------------- static geometry ------------------------------
# Layer 1 works on the padded 30x30 grid flattened to 900 rows; valid conv
# outputs are computed for padded rows r = m + 31, m in [0, 838).
# Layer 2 works on the padded 16x16 grid flattened to 256 rows; valid conv
# outputs for padded rows r = m + 17, m in [0, 222).
_OFF1 = [(dh - 1) * 30 + (dw - 1) for dh in range(3) for dw in range(3)]
_OFF2 = [(dh - 1) * 16 + (dw - 1) for dh in range(3) for dw in range(3)]

_Y1_ROWS = 838          # conv1 output rows computed (padded rows 31..868)
_P1_ROWS = 807          # pooling-window maxima needed for layer-1 pool
_X2_ROWS = 256          # 16x16 padded layer-2 input grid
_Y2_ROWS = 222          # conv2 output rows computed (padded rows 17..238)
_P2_ROWS = 205          # pooling-window maxima needed for layer-2 pool


def _build_selectors():
    # sel1: (256, 807). Row t = (i+1)*16 + (j+1) picks pooled1[i, j] which sits
    # at P1 index 60*i + 2*j; border rows stay all-zero -> zero padding for
    # conv2 comes for free out of the same matmul.
    sel1 = np.zeros((_X2_ROWS, _P1_ROWS), np.float32)
    for i in range(14):
        for j in range(14):
            sel1[(i + 1) * 16 + (j + 1), 60 * i + 2 * j] = 1.0
    # sel2: (49, 205). Row i*7 + j picks pooled2[i, j] at P2 index 32*i + 2*j.
    sel2 = np.zeros((49, _P2_ROWS), np.float32)
    for i in range(7):
        for j in range(7):
            sel2[i * 7 + j, 32 * i + 2 * j] = 1.0
    return sel1, sel2


_SEL1_NP, _SEL2_NP = _build_selectors()


# ------------------------------ Pallas kernels -------------------------------

def _conv_stack_kernel(x1_ref, w1_ref, b1_ref, w2_ref, b2_ref, sel1_ref,
                       sel2_ref, o_ref, x1b_ref, y1_ref, x2_ref, y2_ref):
    """conv1+ReLU+pool+conv2+ReLU+pool for one image, entirely in VMEM."""
    # Broadcast the single input channel across the 32 conv1 output lanes once.
    x1b_ref[...] = jnp.broadcast_to(x1_ref[...], (900, 32))

    # ---- conv1 (C_in = 1): 9 VPU FMAs over sublane-shifted slices ----------
    acc1 = jnp.zeros((_Y1_ROWS, 32), jnp.float32)
    for k, off in enumerate(_OFF1):
        s = 31 + off                                    # static, in [0, 62]
        acc1 = acc1 + x1b_ref[s:s + _Y1_ROWS, :] * w1_ref[k:k + 1, :]
    y1_ref[...] = jnp.maximum(acc1 + b1_ref[...], 0.0)  # ReLU fused

    # ---- maxpool1 (2x2, stride 2): shifted maxes + selection matmul --------
    p1 = jnp.maximum(
        jnp.maximum(y1_ref[0:_P1_ROWS, :], y1_ref[1:1 + _P1_ROWS, :]),
        jnp.maximum(y1_ref[30:30 + _P1_ROWS, :], y1_ref[31:31 + _P1_ROWS, :]))
    # (256, 807) @ (807, 32): compacts the stride-2 grid AND re-pads with zeros
    x2_ref[...] = jnp.dot(sel1_ref[...], p1, preferred_element_type=jnp.float32)

    # ---- conv2: in-kernel im2col as 9 shifted (222,32)@(32,64) matmuls ------
    acc2 = jnp.zeros((_Y2_ROWS, 64), jnp.float32)
    for k, off in enumerate(_OFF2):
        s = 17 + off                                    # static, in [0, 34]
        acc2 = acc2 + jnp.dot(x2_ref[s:s + _Y2_ROWS, :], w2_ref[k],
                              preferred_element_type=jnp.float32)
    y2_ref[...] = jnp.maximum(acc2 + b2_ref[...], 0.0)  # ReLU fused

    # ---- maxpool2 + gather into the (49, 64) feature block ------------------
    p2 = jnp.maximum(
        jnp.maximum(y2_ref[0:_P2_ROWS, :], y2_ref[1:1 + _P2_ROWS, :]),
        jnp.maximum(y2_ref[16:16 + _P2_ROWS, :], y2_ref[17:17 + _P2_ROWS, :]))
    o_ref[...] = jnp.dot(sel2_ref[...], p2, preferred_element_type=jnp.float32)


def _fc_kernel(f_ref, w1_ref, b1_ref, w2_ref, b2_ref, o_ref):
    """fc1 + ReLU + fc2 fused (weights already transposed/permuted)."""
    h = jnp.dot(f_ref[...], w1_ref[...],
                preferred_element_type=jnp.float32) + b1_ref[...]
    h = jnp.maximum(h, 0.0)
    o_ref[...] = jnp.dot(h, w2_ref[...],
                         preferred_element_type=jnp.float32) + b2_ref[...]


# -------------------------------- wrappers -----------------------------------

def _conv_stack(xp, w1, b1, w2, b2, sel1, sel2):
    B = xp.shape[0]
    return pl.pallas_call(
        _conv_stack_kernel,
        out_shape=jax.ShapeDtypeStruct((B, 49, 64), jnp.float32),
        grid=(B,),
        in_specs=[
            pl.BlockSpec((None, 900, 1), lambda b: (b, 0, 0)),   # padded image
            pl.BlockSpec((9, 32), lambda b: (0, 0)),             # w1 taps
            pl.BlockSpec((1, 32), lambda b: (0, 0)),             # b1
            pl.BlockSpec((9, 32, 64), lambda b: (0, 0, 0)),      # w2 taps
            pl.BlockSpec((1, 64), lambda b: (0, 0)),             # b2
            pl.BlockSpec((_X2_ROWS, _P1_ROWS), lambda b: (0, 0)),  # sel1
            pl.BlockSpec((49, _P2_ROWS), lambda b: (0, 0)),        # sel2
        ],
        out_specs=pl.BlockSpec((None, 49, 64), lambda b: (b, 0, 0)),
        scratch_shapes=[
            pltpu.VMEM((900, 32), jnp.float32),        # broadcast input
            pltpu.VMEM((_Y1_ROWS, 32), jnp.float32),   # conv1+relu output
            pltpu.VMEM((_X2_ROWS, 32), jnp.float32),   # padded pooled1
            pltpu.VMEM((_Y2_ROWS, 64), jnp.float32),   # conv2+relu output
        ],
        compiler_params=pltpu.CompilerParams(
            dimension_semantics=("parallel",)),
    )(xp, w1, b1, w2, b2, sel1, sel2)


def _fc_head(feats, wfc1p, bfc1, wfc2t, bfc2, tb):
    Bp = feats.shape[0]
    return pl.pallas_call(
        _fc_kernel,
        out_shape=jax.ShapeDtypeStruct((Bp, 10), jnp.float32),
        grid=(Bp // tb,),
        in_specs=[
            pl.BlockSpec((tb, 3136), lambda i: (i, 0)),
            pl.BlockSpec((3136, 128), lambda i: (0, 0)),
            pl.BlockSpec((1, 128), lambda i: (0, 0)),
            pl.BlockSpec((128, 10), lambda i: (0, 0)),
            pl.BlockSpec((1, 10), lambda i: (0, 0)),
        ],
        out_specs=pl.BlockSpec((tb, 10), lambda i: (i, 0)),
        compiler_params=pltpu.CompilerParams(
            dimension_semantics=("parallel",)),
    )(feats, wfc1p, bfc1, wfc2t, bfc2)


def _prepare_params(params):
    """One-time weight re-layout (done outside the kernels, per review)."""
    w1 = jnp.transpose(params["w1"].astype(jnp.float32),
                       (2, 3, 1, 0)).reshape(9, 32)          # [dh*3+dw, o]
    b1 = params["b1"].astype(jnp.float32).reshape(1, 32)
    w2 = jnp.transpose(params["w2"].astype(jnp.float32),
                       (2, 3, 1, 0)).reshape(9, 32, 64)      # [dh*3+dw, c, o]
    b2 = params["b2"].astype(jnp.float32).reshape(1, 64)
    # fc1: PyTorch columns are indexed c*49 + s (NCHW flatten); our kernel's
    # features are indexed s*64 + c.  Permute + transpose once.
    wfc1 = params["wfc1"].astype(jnp.float32)                # (128, 3136)
    wfc1p = (wfc1.T.reshape(64, 49, 128)
             .transpose(1, 0, 2).reshape(3136, 128))         # (3136, 128)
    bfc1 = params["bfc1"].astype(jnp.float32).reshape(1, 128)
    wfc2t = params["wfc2"].astype(jnp.float32).T             # (128, 10)
    bfc2 = params["bfc2"].astype(jnp.float32).reshape(1, 10)
    return w1, b1, w2, b2, wfc1p, bfc1, wfc2t, bfc2


def net_forward(params, x_nchw):
    w1, b1, w2, b2, wfc1p, bfc1, wfc2t, bfc2 = _prepare_params(params)
    sel1 = jnp.asarray(_SEL1_NP)
    sel2 = jnp.asarray(_SEL2_NP)

    B = x_nchw.shape[0]
    # Only glue left on the input side: zero-pad the raw image and flatten.
    x = x_nchw.astype(jnp.float32).reshape(B, 28, 28)
    xp = jnp.pad(x, ((0, 0), (1, 1), (1, 1))).reshape(B, 900, 1)

    feats = _conv_stack(xp, w1, b1, w2, b2, sel1, sel2)      # (B, 49, 64)
    feats = feats.reshape(B, 3136)                           # contiguous, free

    if B <= 128:
        tb, Bp = B, B
    else:
        tb = 128
        Bp = ((B + tb - 1) // tb) * tb
    if Bp != B:
        feats = jnp.pad(feats, ((0, Bp - B), (0, 0)))
    out = _fc_head(feats, wfc1p, bfc1, wfc2t, bfc2, tb)      # (Bp, 10)
    return out[:B]


# ------------------------- reference (pure XLA) ------------------------------

def net_forward_ref(params, x_nchw):
    x = x_nchw.astype(jnp.float32)

    def conv(x, w, b):
        y = lax.conv_general_dilated(
            x, w, window_strides=(1, 1), padding="SAME",
            dimension_numbers=("NCHW", "OIHW", "NCHW"))
        return jax.nn.relu(y + b[None, :, None, None])

    def pool(x):
        return lax.reduce_window(x, -jnp.inf, lax.max,
                                 (1, 1, 2, 2), (1, 1, 2, 2), "VALID")

    x = pool(conv(x, params["w1"], params["b1"]))
    x = pool(conv(x, params["w2"], params["b2"]))
    x = x.reshape(x.shape[0], -1)
    x = jax.nn.relu(x @ params["wfc1"].T + params["bfc1"])
    return x @ params["wfc2"].T + params["bfc2"]


# ---------------------------------- main --------------------------------------

def init_params(key):
    ks = jax.random.split(key, 8)

    def w(k, shape, fan_in):
        return jax.random.normal(k, shape, jnp.float32) / jnp.sqrt(fan_in)

    return {
        "w1": w(ks[0], (32, 1, 3, 3), 1 * 9),
        "b1": w(ks[1], (32,), 9.0),
        "w2": w(ks[2], (64, 32, 3, 3), 32 * 9),
        "b2": w(ks[3], (64,), 32.0 * 9),
        "wfc1": w(ks[4], (128, 64 * 7 * 7), 64 * 7 * 7),
        "bfc1": w(ks[5], (128,), 64.0 * 7 * 7),
        "wfc2": w(ks[6], (10, 128), 128),
        "bfc2": w(ks[7], (10,), 128.0),
    }


if __name__ == "__main__":
    key = jax.random.PRNGKey(0)
    pkey, xkey = jax.random.split(key)
    params = init_params(pkey)
    # module implies 28x28 single-channel inputs (fc1 expects 64*7*7); batch=2
    x = jax.random.normal(xkey, (2, 1, 28, 28), jnp.float32)

    fwd = jax.jit(net_forward)
    out = jax.block_until_ready(fwd(params, x))
    assert out.shape == (2, 10), out.shape

    ref = jax.block_until_ready(net_forward_ref(params, x))
    max_err = float(jnp.max(jnp.abs(out - ref)))
    assert jnp.allclose(out, ref, rtol=2e-3, atol=2e-3), (
        f"mismatch vs XLA reference: max abs diff {max_err}")

    print("KERNEL_OK")
</pallas_src>

<mosaic_0001>
module attributes {stable_mosaic.version = 11 : i64} {
  func.func @_conv_stack_kernel(%arg0: i32, %arg1: memref<1x900x1xf32, #tpu.memory_space<vmem>>, %arg2: memref<9x32xf32, #tpu.memory_space<vmem>>, %arg3: memref<1x32xf32, #tpu.memory_space<vmem>>, %arg4: memref<9x32x64xf32, #tpu.memory_space<vmem>>, %arg5: memref<1x64xf32, #tpu.memory_space<vmem>>, %arg6: memref<256x807xf32, #tpu.memory_space<vmem>>, %arg7: memref<49x205xf32, #tpu.memory_space<vmem>>, %arg8: memref<1x49x64xf32, #tpu.memory_space<vmem>>, %arg9: memref<900x32xf32, #tpu.memory_space<vmem>>, %arg10: memref<838x32xf32, #tpu.memory_space<vmem>>, %arg11: memref<256x32xf32, #tpu.memory_space<vmem>>, %arg12: memref<222x64xf32, #tpu.memory_space<vmem>>) attributes {dimension_semantics = [#tpu.dimension_semantics<parallel>], iteration_bounds = array<i64: 2>, scalar_prefetch = 0 : i64, scratch_operands = 4 : i64, tpu.core_type = #tpu.core_type<tc>, window_params = [{transform_indices = @transform_0, window_bounds = array<i64: 1, 900, 1>}, {pipeline_mode = #tpu.pipeline_mode<synchronous>, transform_indices = @transform_1, window_bounds = array<i64: 9, 32>}, {pipeline_mode = #tpu.pipeline_mode<synchronous>, transform_indices = @transform_2, window_bounds = array<i64: 1, 32>}, {pipeline_mode = #tpu.pipeline_mode<synchronous>, transform_indices = @transform_3, window_bounds = array<i64: 9, 32, 64>}, {pipeline_mode = #tpu.pipeline_mode<synchronous>, transform_indices = @transform_4, window_bounds = array<i64: 1, 64>}, {pipeline_mode = #tpu.pipeline_mode<synchronous>, transform_indices = @transform_5, window_bounds = array<i64: 256, 807>}, {pipeline_mode = #tpu.pipeline_mode<synchronous>, transform_indices = @transform_6, window_bounds = array<i64: 49, 205>}, {transform_indices = @transform_7, window_bounds = array<i64: 1, 49, 64>}]} {
    %c0 = arith.constant 0 : index
    %c0_0 = arith.constant 0 : index
    %c0_1 = arith.constant 0 : index
    %0 = vector.load %arg1[%c0, %c0_0, %c0_1] : memref<1x900x1xf32, #tpu.memory_space<vmem>>, vector<1x900x1xf32>
    %1 = vector.shape_cast %0 : vector<1x900x1xf32> to vector<900x1xf32>
    %2 = vector.shape_cast %1 : vector<900x1xf32> to vector<900x1xf32>
    %3 = vector.broadcast %2 : vector<900x1xf32> to vector<900x32xf32>
    %c0_2 = arith.constant 0 : index
    %c0_3 = arith.constant 0 : index
    %4 = vector.load %arg9[%c0_2, %c0_3] : memref<900x32xf32, #tpu.memory_space<vmem>>, vector<900x32xf32>
    tpu.vector_store %arg9[%c0_2, %c0_3], %3 {strides = array<i32>} : memref<900x32xf32, #tpu.memory_space<vmem>>, vector<900x32xf32>,
    %cst = arith.constant 0.000000e+00 : f32
    %5 = vector.broadcast %cst : f32 to vector<838x32xf32>
    %c0_4 = arith.constant 0 : index
    %c0_5 = arith.constant 0 : index
    %6 = vector.load %arg9[%c0_4, %c0_5] : memref<900x32xf32, #tpu.memory_space<vmem>>, vector<838x32xf32>
    %c0_6 = arith.constant 0 : index
    %c0_7 = arith.constant 0 : index
    %7 = vector.load %arg2[%c0_6, %c0_7] : memref<9x32xf32, #tpu.memory_space<vmem>>, vector<1x32xf32>
    %8 = vector.broadcast %7 : vector<1x32xf32> to vector<838x32xf32>
    %9 = arith.mulf %6, %8 : vector<838x32xf32>
    %10 = arith.addf %5, %9 : vector<838x32xf32>
    %c1 = arith.constant 1 : index
    %c0_8 = arith.constant 0 : index
    %11 = vector.load %arg9[%c1, %c0_8] : memref<900x32xf32, #tpu.memory_space<vmem>>, vector<838x32xf32>
    %c1_9 = arith.constant 1 : index
    %c0_10 = arith.constant 0 : index
    %12 = vector.load %arg2[%c1_9, %c0_10] : memref<9x32xf32, #tpu.memory_space<vmem>>, vector<1x32xf32>
    %13 = vector.broadcast %12 : vector<1x32xf32> to vector<838x32xf32>
    %14 = arith.mulf %11, %13 : vector<838x32xf32>
    %15 = arith.addf %10, %14 : vector<838x32xf32>
    %c2 = arith.constant 2 : index
    %c0_11 = arith.constant 0 : index
    %16 = vector.load %arg9[%c2, %c0_11] : memref<900x32xf32, #tpu.memory_space<vmem>>, vector<838x32xf32>
    %c2_12 = arith.constant 2 : index
    %c0_13 = arith.constant 0 : index
    %17 = vector.load %arg2[%c2_12, %c0_13] : memref<9x32xf32, #tpu.memory_space<vmem>>, vector<1x32xf32>
    %18 = vector.broadcast %17 : vector<1x32xf32> to vector<838x32xf32>
    %19 = arith.mulf %16, %18 : vector<838x32xf32>
    %20 = arith.addf %15, %19 : vector<838x32xf32>
    %c30 = arith.constant 30 : index
    %c0_14 = arith.constant 0 : index
    %21 = vector.load %arg9[%c30, %c0_14] : memref<900x32xf32, #tpu.memory_space<vmem>>, vector<838x32xf32>
    %c3 = arith.constant 3 : index
    %c0_15 = arith.constant 0 : index
    %22 = vector.load %arg2[%c3, %c0_15] : memref<9x32xf32, #tpu.memory_space<vmem>>, vector<1x32xf32>
    %23 = vector.broadcast %22 : vector<1x32xf32> to vector<838x32xf32>
    %24 = arith.mulf %21, %23 : vector<838x32xf32>
    %25 = arith.addf %20, %24 : vector<838x32xf32>
    %c31 = arith.constant 31 : index
    %c0_16 = arith.constant 0 : index
    %26 = vector.load %arg9[%c31, %c0_16] : memref<900x32xf32, #tpu.memory_space<vmem>>, vector<838x32xf32>
    %c4 = arith.constant 4 : index
    %c0_17 = arith.constant 0 : index
    %27 = vector.load %arg2[%c4, %c0_17] : memref<9x32xf32, #tpu.memory_space<vmem>>, vector<1x32xf32>
    %28 = vector.broadcast %27 : vector<1x32xf32> to vector<838x32xf32>
    %29 = arith.mulf %26, %28 : vector<838x32xf32>
    %30 = arith.addf %25, %29 : vector<838x32xf32>
    %c32 = arith.constant 32 : index
    %c0_18 = arith.constant 0 : index
    %31 = vector.load %arg9[%c32, %c0_18] : memref<900x32xf32, #tpu.memory_space<vmem>>, vector<838x32xf32>
    %c5 = arith.constant 5 : index
    %c0_19 = arith.constant 0 : index
    %32 = vector.load %arg2[%c5, %c0_19] : memref<9x32xf32, #tpu.memory_space<vmem>>, vector<1x32xf32>
    %33 = vector.broadcast %32 : vector<1x32xf32> to vector<838x32xf32>
    %34 = arith.mulf %31, %33 : vector<838x32xf32>
    %35 = arith.addf %30, %34 : vector<838x32xf32>
    %c60 = arith.constant 60 : index
    %c0_20 = arith.constant 0 : index
    %36 = vector.load %arg9[%c60, %c0_20] : memref<900x32xf32, #tpu.memory_space<vmem>>, vector<838x32xf32>
    %c6 = arith.constant 6 : index
    %c0_21 = arith.constant 0 : index
    %37 = vector.load %arg2[%c6, %c0_21] : memref<9x32xf32, #tpu.memory_space<vmem>>, vector<1x32xf32>
    %38 = vector.broadcast %37 : vector<1x32xf32> to vector<838x32xf32>
    %39 = arith.mulf %36, %38 : vector<838x32xf32>
    %40 = arith.addf %35, %39 : vector<838x32xf32>
    %c61 = arith.constant 61 : index
    %c0_22 = arith.constant 0 : index
    %41 = vector.load %arg9[%c61, %c0_22] : memref<900x32xf32, #tpu.memory_space<vmem>>, vector<838x32xf32>
    %c7 = arith.constant 7 : index
    %c0_23 = arith.constant 0 : index
    %42 = vector.load %arg2[%c7, %c0_23] : memref<9x32xf32, #tpu.memory_space<vmem>>, vector<1x32xf32>
    %43 = vector.broadcast %42 : vector<1x32xf32> to vector<838x32xf32>
    %44 = arith.mulf %41, %43 : vector<838x32xf32>
    %45 = arith.addf %40, %44 : vector<838x32xf32>
    %c62 = arith.constant 62 : index
    %c0_24 = arith.constant 0 : index
    %46 = vector.load %arg9[%c62, %c0_24] : memref<900x32xf32, #tpu.memory_space<vmem>>, vector<838x32xf32>
    %c8 = arith.constant 8 : index
    %c0_25 = arith.constant 0 : index
    %47 = vector.load %arg2[%c8, %c0_25] : memref<9x32xf32, #tpu.memory_space<vmem>>, vector<1x32xf32>
    %48 = vector.broadcast %47 : vector<1x32xf32> to vector<838x32xf32>
    %49 = arith.mulf %46, %48 : vector<838x32xf32>
    %50 = arith.addf %45, %49 : vector<838x32xf32>
    %c0_26 = arith.constant 0 : index
    %c0_27 = arith.constant 0 : index
    %51 = vector.load %arg3[%c0_26, %c0_27] : memref<1x32xf32, #tpu.memory_space<vmem>>, vector<1x32xf32>
    %52 = vector.broadcast %51 : vector<1x32xf32> to vector<838x32xf32>
    %53 = arith.addf %50, %52 : vector<838x32xf32>
    %cst_28 = arith.constant 0.000000e+00 : f32
    %54 = vector.broadcast %cst_28 : f32 to vector<838x32xf32>
    %55 = arith.maximumf %53, %54 : vector<838x32xf32>
    %c0_29 = arith.constant 0 : index
    %c0_30 = arith.constant 0 : index
    %56 = vector.load %arg10[%c0_29, %c0_30] : memref<838x32xf32, #tpu.memory_space<vmem>>, vector<838x32xf32>
    tpu.vector_store %arg10[%c0_29, %c0_30], %55 {strides = array<i32>} : memref<838x32xf32, #tpu.memory_space<vmem>>, vector<838x32xf32>,
    %c0_31 = arith.constant 0 : index
    %c0_32 = arith.constant 0 : index
    %57 = vector.load %arg10[%c0_31, %c0_32] : memref<838x32xf32, #tpu.memory_space<vmem>>, vector<807x32xf32>
    %c1_33 = arith.constant 1 : index
    %c0_34 = arith.constant 0 : index
    %58 = vector.load %arg10[%c1_33, %c0_34] : memref<838x32xf32, #tpu.memory_space<vmem>>, vector<807x32xf32>
    %59 = arith.maximumf %57, %58 : vector<807x32xf32>
    %c30_35 = arith.constant 30 : index
    %c0_36 = arith.constant 0 : index
    %60 = vector.load %arg10[%c30_35, %c0_36] : memref<838x32xf32, #tpu.memory_space<vmem>>, vector<807x32xf32>
    %c31_37 = arith.constant 31 : index
    %c0_38 = arith.constant 0 : index
    %61 = vector.load %arg10[%c31_37, %c0_38] : memref<838x32xf32, #tpu.memory_space<vmem>>, vector<807x32xf32>
    %62 = arith.maximumf %60, %61 : vector<807x32xf32>
    %63 = arith.maximumf %59, %62 : vector<807x32xf32>
    %c0_39 = arith.constant 0 : index
    %c0_40 = arith.constant 0 : index
    %64 = vector.load %arg6[%c0_39, %c0_40] : memref<256x807xf32, #tpu.memory_space<vmem>>, vector<256x807xf32>
    %cst_41 = arith.constant dense<0.000000e+00> : vector<256x32xf32>
    %65 = tpu.matmul %64, %63, %cst_41 {dimension_numbers = #tpu.dot_dimension_numbers<[1], [0], [0], [1], [0, 0, 1, 1], [], []>} : vector<256x807xf32>, vector<807x32xf32>, vector<256x32xf32> -> vector<256x32xf32>
    %c0_42 = arith.constant 0 : index
    %c0_43 = arith.constant 0 : index
    %66 = vector.load %arg11[%c0_42, %c0_43] : memref<256x32xf32, #tpu.memory_space<vmem>>, vector<256x32xf32>
    tpu.vector_store %arg11[%c0_42, %c0_43], %65 {strides = array<i32>} : memref<256x32xf32, #tpu.memory_space<vmem>>, vector<256x32xf32>,
    %cst_44 = arith.constant 0.000000e+00 : f32
    %67 = vector.broadcast %cst_44 : f32 to vector<222x64xf32>
    %c0_45 = arith.constant 0 : index
    %c0_46 = arith.constant 0 : index
    %68 = vector.load %arg11[%c0_45, %c0_46] : memref<256x32xf32, #tpu.memory_space<vmem>>, vector<222x32xf32>
    %c0_47 = arith.constant 0 : index
    %c0_48 = arith.constant 0 : index
    %c0_49 = arith.constant 0 : index
    %69 = vector.load %arg4[%c0_47, %c0_48, %c0_49] : memref<9x32x64xf32, #tpu.memory_space<vmem>>, vector<1x32x64xf32>
    %70 = vector.shape_cast %69 : vector<1x32x64xf32> to vector<32x64xf32>
    %cst_50 = arith.constant dense<0.000000e+00> : vector<222x64xf32>
    %71 = tpu.matmul %68, %70, %cst_50 {dimension_numbers = #tpu.dot_dimension_numbers<[1], [0], [0], [1], [0, 0, 1, 1], [], []>} : vector<222x32xf32>, vector<32x64xf32>, vector<222x64xf32> -> vector<222x64xf32>
    %72 = arith.addf %67, %71 : vector<222x64xf32>
    %c1_51 = arith.constant 1 : index
    %c0_52 = arith.constant 0 : index
    %73 = vector.load %arg11[%c1_51, %c0_52] : memref<256x32xf32, #tpu.memory_space<vmem>>, vector<222x32xf32>
    %c1_53 = arith.constant 1 : index
    %c0_54 = arith.constant 0 : index
    %c0_55 = arith.constant 0 : index
    %74 = vector.load %arg4[%c1_53, %c0_54, %c0_55] : memref<9x32x64xf32, #tpu.memory_space<vmem>>, vector<1x32x64xf32>
    %75 = vector.shape_cast %74 : vector<1x32x64xf32> to vector<32x64xf32>
    %cst_56 = arith.constant dense<0.000000e+00> : vector<222x64xf32>
    %76 = tpu.matmul %73, %75, %cst_56 {dimension_numbers = #tpu.dot_dimension_numbers<[1], [0], [0], [1], [0, 0, 1, 1], [], []>} : vector<222x32xf32>, vector<32x64xf32>, vector<222x64xf32> -> vector<222x64xf32>
    %77 = arith.addf %72, %76 : vector<222x64xf32>
    %c2_57 = arith.constant 2 : index
    %c0_58 = arith.constant 0 : index
    %78 = vector.load %arg11[%c2_57, %c0_58] : memref<256x32xf32, #tpu.memory_space<vmem>>, vector<222x32xf32>
    %c2_59 = arith.constant 2 : index
    %c0_60 = arith.constant 0 : index
    %c0_61 = arith.constant 0 : index
    %79 = vector.load %arg4[%c2_59, %c0_60, %c0_61] : memref<9x32x64xf32, #tpu.memory_space<vmem>>, vector<1x32x64xf32>
    %80 = vector.shape_cast %79 : vector<1x32x64xf32> to vector<32x64xf32>
    %cst_62 = arith.constant dense<0.000000e+00> : vector<222x64xf32>
    %81 = tpu.matmul %78, %80, %cst_62 {dimension_numbers = #tpu.dot_dimension_numbers<[1], [0], [0], [1], [0, 0, 1, 1], [], []>} : vector<222x32xf32>, vector<32x64xf32>, vector<222x64xf32> -> vector<222x64xf32>
    %82 = arith.addf %77, %81 : vector<222x64xf32>
    %c16 = arith.constant 16 : index
    %c0_63 = arith.constant 0 : index
    %83 = vector.load %arg11[%c16, %c0_63] : memref<256x32xf32, #tpu.memory_space<vmem>>, vector<222x32xf32>
    %c3_64 = arith.constant 3 : index
    %c0_65 = arith.constant 0 : index
    %c0_66 = arith.constant 0 : index
    %84 = vector.load %arg4[%c3_64, %c0_65, %c0_66] : memref<9x32x64xf32, #tpu.memory_space<vmem>>, vector<1x32x64xf32>
    %85 = vector.shape_cast %84 : vector<1x32x64xf32> to vector<32x64xf32>
    %cst_67 = arith.constant dense<0.000000e+00> : vector<222x64xf32>
    %86 = tpu.matmul %83, %85, %cst_67 {dimension_numbers = #tpu.dot_dimension_numbers<[1], [0], [0], [1], [0, 0, 1, 1], [], []>} : vector<222x32xf32>, vector<32x64xf32>, vector<222x64xf32> -> vector<222x64xf32>
    %87 = arith.addf %82, %86 : vector<222x64xf32>
    %c17 = arith.constant 17 : index
    %c0_68 = arith.constant 0 : index
    %88 = vector.load %arg11[%c17, %c0_68] : memref<256x32xf32, #tpu.memory_space<vmem>>, vector<222x32xf32>
    %c4_69 = arith.constant 4 : index
    %c0_70 = arith.constant 0 : index
    %c0_71 = arith.constant 0 : index
    %89 = vector.load %arg4[%c4_69, %c0_70, %c0_71] : memref<9x32x64xf32, #tpu.memory_space<vmem>>, vector<1x32x64xf32>
    %90 = vector.shape_cast %89 : vector<1x32x64xf32> to vector<32x64xf32>
    %cst_72 = arith.constant dense<0.000000e+00> : vector<222x64xf32>
    %91 = tpu.matmul %88, %90, %cst_72 {dimension_numbers = #tpu.dot_dimension_numbers<[1], [0], [0], [1], [0, 0, 1, 1], [], []>} : vector<222x32xf32>, vector<32x64xf32>, vector<222x64xf32> -> vector<222x64xf32>
    %92 = arith.addf %87, %91 : vector<222x64xf32>
    %c18 = arith.constant 18 : index
    %c0_73 = arith.constant 0 : index
    %93 = vector.load %arg11[%c18, %c0_73] : memref<256x32xf32, #tpu.memory_space<vmem>>, vector<222x32xf32>
    %c5_74 = arith.constant 5 : index
    %c0_75 = arith.constant 0 : index
    %c0_76 = arith.constant 0 : index
    %94 = vector.load %arg4[%c5_74, %c0_75, %c0_76] : memref<9x32x64xf32, #tpu.memory_space<vmem>>, vector<1x32x64xf32>
    %95 = vector.shape_cast %94 : vector<1x32x64xf32> to vector<32x64xf32>
    %cst_77 = arith.constant dense<0.000000e+00> : vector<222x64xf32>
    %96 = tpu.matmul %93, %95, %cst_77 {dimension_numbers = #tpu.dot_dimension_numbers<[1], [0], [0], [1], [0, 0, 1, 1], [], []>} : vector<222x32xf32>, vector<32x64xf32>, vector<222x64xf32> -> vector<222x64xf32>
    %97 = arith.addf %92, %96 : vector<222x64xf32>
    %c32_78 = arith.constant 32 : index
    %c0_79 = arith.constant 0 : index
    %98 = vector.load %arg11[%c32_78, %c0_79] : memref<256x32xf32, #tpu.memory_space<vmem>>, vector<222x32xf32>
    %c6_80 = arith.constant 6 : index
    %c0_81 = arith.constant 0 : index
    %c0_82 = arith.constant 0 : index
    %99 = vector.load %arg4[%c6_80, %c0_81, %c0_82] : memref<9x32x64xf32, #tpu.memory_space<vmem>>, vector<1x32x64xf32>
    %100 = vector.shape_cast %99 : vector<1x32x64xf32> to vector<32x64xf32>
    %cst_83 = arith.constant dense<0.000000e+00> : vector<222x64xf32>
    %101 = tpu.matmul %98, %100, %cst_83 {dimension_numbers = #tpu.dot_dimension_numbers<[1], [0], [0], [1], [0, 0, 1, 1], [], []>} : vector<222x32xf32>, vector<32x64xf32>, vector<222x64xf32> -> vector<222x64xf32>
    %102 = arith.addf %97, %101 : vector<222x64xf32>
    %c33 = arith.constant 33 : index
    %c0_84 = arith.constant 0 : index
    %103 = vector.load %arg11[%c33, %c0_84] : memref<256x32xf32, #tpu.memory_space<vmem>>, vector<222x32xf32>
    %c7_85 = arith.constant 7 : index
    %c0_86 = arith.constant 0 : index
    %c0_87 = arith.constant 0 : index
    %104 = vector.load %arg4[%c7_85, %c0_86, %c0_87] : memref<9x32x64xf32, #tpu.memory_space<vmem>>, vector<1x32x64xf32>
    %105 = vector.shape_cast %104 : vector<1x32x64xf32> to vector<32x64xf32>
    %cst_88 = arith.constant dense<0.000000e+00> : vector<222x64xf32>
    %106 = tpu.matmul %103, %105, %cst_88 {dimension_numbers = #tpu.dot_dimension_numbers<[1], [0], [0], [1], [0, 0, 1, 1], [], []>} : vector<222x32xf32>, vector<32x64xf32>, vector<222x64xf32> -> vector<222x64xf32>
    %107 = arith.addf %102, %106 : vector<222x64xf32>
    %c34 = arith.constant 34 : index
    %c0_89 = arith.constant 0 : index
    %108 = vector.load %arg11[%c34, %c0_89] : memref<256x32xf32, #tpu.memory_space<vmem>>, vector<222x32xf32>
    %c8_90 = arith.constant 8 : index
    %c0_91 = arith.constant 0 : index
    %c0_92 = arith.constant 0 : index
    %109 = vector.load %arg4[%c8_90, %c0_91, %c0_92] : memref<9x32x64xf32, #tpu.memory_space<vmem>>, vector<1x32x64xf32>
    %110 = vector.shape_cast %109 : vector<1x32x64xf32> to vector<32x64xf32>
    %cst_93 = arith.constant dense<0.000000e+00> : vector<222x64xf32>
    %111 = tpu.matmul %108, %110, %cst_93 {dimension_numbers = #tpu.dot_dimension_numbers<[1], [0], [0], [1], [0, 0, 1, 1], [], []>} : vector<222x32xf32>, vector<32x64xf32>, vector<222x64xf32> -> vector<222x64xf32>
    %112 = arith.addf %107, %111 : vector<222x64xf32>
    %c0_94 = arith.constant 0 : index
    %c0_95 = arith.constant 0 : index
    %113 = vector.load %arg5[%c0_94, %c0_95] : memref<1x64xf32, #tpu.memory_space<vmem>>, vector<1x64xf32>
    %114 = vector.broadcast %113 : vector<1x64xf32> to vector<222x64xf32>
    %115 = arith.addf %112, %114 : vector<222x64xf32>
    %cst_96 = arith.constant 0.000000e+00 : f32
    %116 = vector.broadcast %cst_96 : f32 to vector<222x64xf32>
    %117 = arith.maximumf %115, %116 : vector<222x64xf32>
    %c0_97 = arith.constant 0 : index
    %c0_98 = arith.constant 0 : index
    %118 = vector.load %arg12[%c0_97, %c0_98] : memref<222x64xf32, #tpu.memory_space<vmem>>, vector<222x64xf32>
    tpu.vector_store %arg12[%c0_97, %c0_98], %117 {strides = array<i32>} : memref<222x64xf32, #tpu.memory_space<vmem>>, vector<222x64xf32>,
    %c0_99 = arith.constant 0 : index
    %c0_100 = arith.constant 0 : index
    %119 = vector.load %arg12[%c0_99, %c0_100] : memref<222x64xf32, #tpu.memory_space<vmem>>, vector<205x64xf32>
    %c1_101 = arith.constant 1 : index
    %c0_102 = arith.constant 0 : index
    %120 = vector.load %arg12[%c1_101, %c0_102] : memref<222x64xf32, #tpu.memory_space<vmem>>, vector<205x64xf32>
    %121 = arith.maximumf %119, %120 : vector<205x64xf32>
    %c16_103 = arith.constant 16 : index
    %c0_104 = arith.constant 0 : index
    %122 = vector.load %arg12[%c16_103, %c0_104] : memref<222x64xf32, #tpu.memory_space<vmem>>, vector<205x64xf32>
    %c17_105 = arith.constant 17 : index
    %c0_106 = arith.constant 0 : index
    %123 = vector.load %arg12[%c17_105, %c0_106] : memref<222x64xf32, #tpu.memory_space<vmem>>, vector<205x64xf32>
    %124 = arith.maximumf %122, %123 : vector<205x64xf32>
    %125 = arith.maximumf %121, %124 : vector<205x64xf32>
    %c0_107 = arith.constant 0 : index
    %c0_108 = arith.constant 0 : index
    %126 = vector.load %arg7[%c0_107, %c0_108] : memref<49x205xf32, #tpu.memory_space<vmem>>, vector<49x205xf32>
    %cst_109 = arith.constant dense<0.000000e+00> : vector<49x64xf32>
    %127 = tpu.matmul %126, %125, %cst_109 {dimension_numbers = #tpu.dot_dimension_numbers<[1], [0], [0], [1], [0, 0, 1, 1], [], []>} : vector<49x205xf32>, vector<205x64xf32>, vector<49x64xf32> -> vector<49x64xf32>
    %c0_110 = arith.constant 0 : index
    %c0_111 = arith.constant 0 : index
    %c0_112 = arith.constant 0 : index
    %128 = vector.load %arg8[%c0_110, %c0_111, %c0_112] : memref<1x49x64xf32, #tpu.memory_space<vmem>>, vector<1x49x64xf32>
    %129 = vector.shape_cast %128 : vector<1x49x64xf32> to vector<49x64xf32>
    %130 = vector.shape_cast %127 : vector<49x64xf32> to vector<1x49x64xf32>
    tpu.vector_store %arg8[%c0_110, %c0_111, %c0_112], %130 {strides = array<i32>} : memref<1x49x64xf32, #tpu.memory_space<vmem>>, vector<1x49x64xf32>,
    return
  }
  func.func @transform_0(%arg0: i32) -> (i32, i32, i32) {
    %c0_i32 = arith.constant 0 : i32
    %c0_i32_0 = arith.constant 0 : i32
    %c0_i32_1 = arith.constant 0 : i32
    return %arg0, %c0_i32, %c0_i32_0 : i32, i32, i32
  }
  func.func @transform_1(%arg0: i32) -> (i32, i32) {
    %c0_i32 = arith.constant 0 : i32
    %c0_i32_0 = arith.constant 0 : i32
    %c0_i32_1 = arith.constant 0 : i32
    return %c0_i32, %c0_i32_0 : i32, i32
  }
  func.func @transform_2(%arg0: i32) -> (i32, i32) {
    %c0_i32 = arith.constant 0 : i32
    %c0_i32_0 = arith.constant 0 : i32
    %c0_i32_1 = arith.constant 0 : i32
    return %c0_i32, %c0_i32_0 : i32, i32
  }
  func.func @transform_3(%arg0: i32) -> (i32, i32, i32) {
    %c0_i32 = arith.constant 0 : i32
    %c0_i32_0 = arith.constant 0 : i32
    %c0_i32_1 = arith.constant 0 : i32
    %c0_i32_2 = arith.constant 0 : i32
    return %c0_i32, %c0_i32_0, %c0_i32_1 : i32, i32, i32
  }
  func.func @transform_4(%arg0: i32) -> (i32, i32) {
    %c0_i32 = arith.constant 0 : i32
    %c0_i32_0 = arith.constant 0 : i32
    %c0_i32_1 = arith.constant 0 : i32
    return %c0_i32, %c0_i32_0 : i32, i32
  }
  func.func @transform_5(%arg0: i32) -> (i32, i32) {
    %c0_i32 = arith.constant 0 : i32
    %c0_i32_0 = arith.constant 0 : i32
    %c0_i32_1 = arith.constant 0 : i32
    return %c0_i32, %c0_i32_0 : i32, i32
  }
  func.func @transform_6(%arg0: i32) -> (i32, i32) {
    %c0_i32 = arith.constant 0 : i32
    %c0_i32_0 = arith.constant 0 : i32
    %c0_i32_1 = arith.constant 0 : i32
    return %c0_i32, %c0_i32_0 : i32, i32
  }
  func.func @transform_7(%arg0: i32) -> (i32, i32, i32) {
    %c0_i32 = arith.constant 0 : i32
    %c0_i32_0 = arith.constant 0 : i32
    %c0_i32_1 = arith.constant 0 : i32
    return %arg0, %c0_i32, %c0_i32_0 : i32, i32, i32
  }
}

module attributes {stable_mosaic.version = 11 : i64} {
  func.func @_fc_kernel(%arg0: i32, %arg1: memref<2x3136xf32, #tpu.memory_space<vmem>>, %arg2: memref<3136x128xf32, #tpu.memory_space<vmem>>, %arg3: memref<1x128xf32, #tpu.memory_space<vmem>>, %arg4: memref<128x10xf32, #tpu.memory_space<vmem>>, %arg5: memref<1x10xf32, #tpu.memory_space<vmem>>, %arg6: memref<2x10xf32, #tpu.memory_space<vmem>>) attributes {dimension_semantics = [#tpu.dimension_semantics<parallel>], iteration_bounds = array<i64: 1>, scalar_prefetch = 0 : i64, scratch_operands = 0 : i64, tpu.core_type = #tpu.core_type<tc>, window_params = [{transform_indices = @transform_0, window_bounds = array<i64: 2, 3136>}, {pipeline_mode = #tpu.pipeline_mode<synchronous>, transform_indices = @transform_1, window_bounds = array<i64: 3136, 128>}, {pipeline_mode = #tpu.pipeline_mode<synchronous>, transform_indices = @transform_2, window_bounds = array<i64: 1, 128>}, {pipeline_mode = #tpu.pipeline_mode<synchronous>, transform_indices = @transform_3, window_bounds = array<i64: 128, 10>}, {pipeline_mode = #tpu.pipeline_mode<synchronous>, transform_indices = @transform_4, window_bounds = array<i64: 1, 10>}, {transform_indices = @transform_5, window_bounds = array<i64: 2, 10>}]} {
    %c0 = arith.constant 0 : index
    %c0_0 = arith.constant 0 : index
    %0 = vector.load %arg1[%c0, %c0_0] : memref<2x3136xf32, #tpu.memory_space<vmem>>, vector<2x3136xf32>
    %c0_1 = arith.constant 0 : index
    %c0_2 = arith.constant 0 : index
    %1 = vector.load %arg2[%c0_1, %c0_2] : memref<3136x128xf32, #tpu.memory_space<vmem>>, vector<3136x128xf32>
    %cst = arith.constant dense<0.000000e+00> : vector<2x128xf32>
    %2 = tpu.matmul %0, %1, %cst {dimension_numbers = #tpu.dot_dimension_numbers<[1], [0], [0], [1], [0, 0, 1, 1], [], []>} : vector<2x3136xf32>, vector<3136x128xf32>, vector<2x128xf32> -> vector<2x128xf32>
    %c0_3 = arith.constant 0 : index
    %c0_4 = arith.constant 0 : index
    %3 = vector.load %arg3[%c0_3, %c0_4] : memref<1x128xf32, #tpu.memory_space<vmem>>, vector<1x128xf32>
    %4 = vector.broadcast %3 : vector<1x128xf32> to vector<2x128xf32>
    %5 = arith.addf %2, %4 : vector<2x128xf32>
    %cst_5 = arith.constant 0.000000e+00 : f32
    %6 = vector.broadcast %cst_5 : f32 to vector<2x128xf32>
    %7 = arith.maximumf %5, %6 : vector<2x128xf32>
    %c0_6 = arith.constant 0 : index
    %c0_7 = arith.constant 0 : index
    %8 = vector.load %arg4[%c0_6, %c0_7] : memref<128x10xf32, #tpu.memory_space<vmem>>, vector<128x10xf32>
    %cst_8 = arith.constant dense<0.000000e+00> : vector<2x10xf32>
    %9 = tpu.matmul %7, %8, %cst_8 {dimension_numbers = #tpu.dot_dimension_numbers<[1], [0], [0], [1], [0, 0, 1, 1], [], []>} : vector<2x128xf32>, vector<128x10xf32>, vector<2x10xf32> -> vector<2x10xf32>
    %c0_9 = arith.constant 0 : index
    %c0_10 = arith.constant 0 : index
    %10 = vector.load %arg5[%c0_9, %c0_10] : memref<1x10xf32, #tpu.memory_space<vmem>>, vector<1x10xf32>
    %11 = vector.broadcast %10 : vector<1x10xf32> to vector<2x10xf32>
    %12 = arith.addf %9, %11 : vector<2x10xf32>
    %c0_11 = arith.constant 0 : index
    %c0_12 = arith.constant 0 : index
    %13 = vector.load %arg6[%c0_11, %c0_12] : memref<2x10xf32, #tpu.memory_space<vmem>>, vector<2x10xf32>
    tpu.vector_store %arg6[%c0_11, %c0_12], %12 {strides = array<i32>} : memref<2x10xf32, #tpu.memory_space<vmem>>, vector<2x10xf32>,
    return
  }
  func.func @transform_0(%arg0: i32) -> (i32, i32) {
    %c0_i32 = arith.constant 0 : i32
    %c0_i32_0 = arith.constant 0 : i32
    return %arg0, %c0_i32 : i32, i32
  }
  func.func @transform_1(%arg0: i32) -> (i32, i32) {
    %c0_i32 = arith.constant 0 : i32
    %c0_i32_0 = arith.constant 0 : i32
    %c0_i32_1 = arith.constant 0 : i32
    return %c0_i32, %c0_i32_0 : i32, i32
  }
  func.func @transform_2(%arg0: i32) -> (i32, i32) {
    %c0_i32 = arith.constant 0 : i32
    %c0_i32_0 = arith.constant 0 : i32
    %c0_i32_1 = arith.constant 0 : i32
    return %c0_i32, %c0_i32_0 : i32, i32
  }
  func.func @transform_3(%arg0: i32) -> (i32, i32) {
    %c0_i32 = arith.constant 0 : i32
    %c0_i32_0 = arith.constant 0 : i32
    %c0_i32_1 = arith.constant 0 : i32
    return %c0_i32, %c0_i32_0 : i32, i32
  }
  func.func @transform_4(%arg0: i32) -> (i32, i32) {
    %c0_i32 = arith.constant 0 : i32
    %c0_i32_0 = arith.constant 0 : i32
    %c0_i32_1 = arith.constant 0 : i32
    return %c0_i32, %c0_i32_0 : i32, i32
  }
  func.func @transform_5(%arg0: i32) -> (i32, i32) {
    %c0_i32 = arith.constant 0 : i32
    %c0_i32_0 = arith.constant 0 : i32
    return %arg0, %c0_i32 : i32, i32
  }
}

</mosaic_0001>

<llo_original>
// kernel: net_forward.3
$region0: #{net_forward.3}
  #allocation0 [shape = 'u32[]', space=smem, size = 0x4, offset = 0x4, fixed_abs, tag = 'smem constant byte address 0x4 - core index']
  #allocation1 [shape = 'u32[144,128]{1,0:T(1,128)}', space=vmem, size = 0x12000, scoped, tag = 'internal scratch']
  %s0 = inlined_call_operand.vmem [shape: f32[2,3136], index: 0, kind: input, shape index: {}]
  %s1 = inlined_call_operand.vmem [shape: f32[3136,128], index: 1, kind: input, shape index: {}]
  %s2 = inlined_call_operand.vmem [shape: f32[1,128], index: 2, kind: input, shape index: {}]
  %s3 = inlined_call_operand.vmem [shape: f32[128,10], index: 3, kind: input, shape index: {}]
  %s4 = inlined_call_operand.vmem [shape: f32[1,10], index: 4, kind: input, shape index: {}]
  %s5 = inlined_call_operand.hbm [shape: f32[2,10], index: 5, kind: output, shape index: {}]
  %s6 = sld [smem:[#allocation0]]
  $region30: #{net_forward.3} parent=0
    _
  %s8 = ssub.s32 1, %s6
  %s9 = scalar_select 0, %s8, %s6
  $region1: #{net_forward.3} parent=0
    #allocation2 [shape = 'u8[1024]{0}', space=vmem, size = 0x400, scoped, tag = 'output window, operand 0, single buffered']
    #allocation3 [shape = 's32[1]{0}', space=sflag, size = 0x4, scoped, tag = 'scoped memory for net_forward.3']
    %10 = vsyncpa [#allocation3], 0
    // Predicated region
    $region2: #{net_forward.3} parent=1 // pred_check
      _
    $region3: #{net_forward.3} parent=1 // pred_check_branch
      %12 = sbr.rel (0) target = $region5
    $region4: #{net_forward.3} parent=1 // pred_region
      _
    $region5: #{net_forward.3} parent=1 // pred_fallthru
      _
    // Predicated region
    $region6: #{net_forward.3} parent=1 // pred_check
      _
    $region7: #{net_forward.3} parent=1 // pred_check_branch
      %14 = sbr.rel (0) target = $region9
    $region8: #{net_forward.3} parent=1 // pred_region
      _
    $region9: #{net_forward.3} parent=1 // pred_fallthru
      _
    // Predicated region
    $region10: #{net_forward.3} parent=1 // pred_check
      _
    $region11: #{net_forward.3} parent=1 // pred_check_branch
      %16 = sbr.rel (0) target = $region13
    $region12: #{net_forward.3} parent=1 // pred_region
      _
    $region13: #{net_forward.3} parent=1 // pred_fallthru
      _
    // Predicated region
    $region14: #{net_forward.3} parent=1 // pred_check
      _
    $region15: #{net_forward.3} parent=1 // pred_check_branch
      %18 = sbr.rel (0) target = $region17
    $region16: #{net_forward.3} parent=1 // pred_region
      _
    $region17: #{net_forward.3} parent=1 // pred_fallthru
      _
    // Predicated region
    $region18: #{net_forward.3} parent=1 // pred_check
      _
    $region19: #{net_forward.3} parent=1 // pred_check_branch
      %20 = sbr.rel (0) target = $region21
    $region20: #{net_forward.3} parent=1 // pred_region
      _
    $region21: #{net_forward.3} parent=1 // pred_fallthru
      _
    %v21 = vld [vmem:[%s0] sm:$0xff]
    %v22 = vld [vmem:[%s0 + $0x8] sm:$0xff]
    %v23 = vld [vmem:[%s0 + $0x10] sm:$0xff]
    %v24 = vld [vmem:[%s0 + $0x18] sm:$0xff]
    %v25 = vld [vmem:[%s0 + $0x20] sm:$0xff]
    %v26 = vld [vmem:[%s0 + $0x28] sm:$0xff]
    %v27 = vld [vmem:[%s0 + $0x30] sm:$0x3]
    %v28 = vld [vmem:[%s1] sm:$0xff]
    %v29 = vld [vmem:[%s1 + $0x8] sm:$0xff]
    %v30 = vld [vmem:[%s1 + $0x10] sm:$0xff]
    %v31 = vld [vmem:[%s1 + $0x18] sm:$0xff]
    %v32 = vld [vmem:[%s1 + $0x20] sm:$0xff]
    %v33 = vld [vmem:[%s1 + $0x28] sm:$0xff]
    %v34 = vld [vmem:[%s1 + $0x30] sm:$0xff]
    %v35 = vld [vmem:[%s1 + $0x38] sm:$0xff]
    %v36 = vld [vmem:[%s1 + $0x40] sm:$0xff]
    %v37 = vld [vmem:[%s1 + $0x48] sm:$0xff]
    %v38 = vld [vmem:[%s1 + $0x50] sm:$0xff]
    %v39 = vld [vmem:[%s1 + $0x58] sm:$0xff]
    %v40 = vld [vmem:[%s1 + $0x60] sm:$0xff]
    %v41 = vld [vmem:[%s1 + $0x68] sm:$0xff]
    %v42 = vld [vmem:[%s1 + $0x70] sm:$0xff]
    %v43 = vld [vmem:[%s1 + $0x78] sm:$0xff]
    %v44 = vld [vmem:[%s1 + $0x80] sm:$0xff]
    %v45 = vld [vmem:[%s1 + $0x88] sm:$0xff]
    %v46 = vld [vmem:[%s1 + $0x90] sm:$0xff]
    %v47 = vld [vmem:[%s1 + $0x98] sm:$0xff]
    %v48 = vld [vmem:[%s1 + $0xa0] sm:$0xff]
    %v49 = vld [vmem:[%s1 + $0xa8] sm:$0xff]
    %v50 = vld [vmem:[%s1 + $0xb0] sm:$0xff]
    %v51 = vld [vmem:[%s1 + $0xb8] sm:$0xff]
    %v52 = vld [vmem:[%s1 + $0xc0] sm:$0xff]
    %v53 = vld [vmem:[%s1 + $0xc8] sm:$0xff]
    %v54 = vld [vmem:[%s1 + $0xd0] sm:$0xff]
    %v55 = vld [vmem:[%s1 + $0xd8] sm:$0xff]
    %v56 = vld [vmem:[%s1 + $0xe0] sm:$0xff]
    %v57 = vld [vmem:[%s1 + $0xe8] sm:$0xff]
    %v58 = vld [vmem:[%s1 + $0xf0] sm:$0xff]
    %v59 = vld [vmem:[%s1 + $0xf8] sm:$0xff]
    %v60 = vld [vmem:[%s1 + $0x100] sm:$0xff]
    %v61 = vld [vmem:[%s1 + $0x108] sm:$0xff]
    %v62 = vld [vmem:[%s1 + $0x110] sm:$0xff]
    %v63 = vld [vmem:[%s1 + $0x118] sm:$0xff]
    %v64 = vld [vmem:[%s1 + $0x120] sm:$0xff]
    %v65 = vld [vmem:[%s1 + $0x128] sm:$0xff]
    %v66 = vld [vmem:[%s1 + $0x130] sm:$0xff]
    %v67 = vld [vmem:[%s1 + $0x138] sm:$0xff]
    %v68 = vld [vmem:[%s1 + $0x140] sm:$0xff]
    %v69 = vld [vmem:[%s1 + $0x148] sm:$0xff]
    %v70 = vld [vmem:[%s1 + $0x150] sm:$0xff]
    %v71 = vld [vmem:[%s1 + $0x158] sm:$0xff]
    %v72 = vld [vmem:[%s1 + $0x160] sm:$0xff]
    %v73 = vld [vmem:[%s1 + $0x168] sm:$0xff]
    %v74 = vld [vmem:[%s1 + $0x170] sm:$0xff]
    %v75 = vld [vmem:[%s1 + $0x178] sm:$0xff]
    %v76 = vld [vmem:[%s1 + $0x180] sm:$0xff]
    %v77 = vld [vmem:[%s1 + $0x188] sm:$0xff]
    %v78 = vld [vmem:[%s1 + $0x190] sm:$0xff]
    %v79 = vld [vmem:[%s1 + $0x198] sm:$0xff]
    %v80 = vld [vmem:[%s1 + $0x1a0] sm:$0xff]
    %v81 = vld [vmem:[%s1 + $0x1a8] sm:$0xff]
    %v82 = vld [vmem:[%s1 + $0x1b0] sm:$0xff]
    %v83 = vld [vmem:[%s1 + $0x1b8] sm:$0xff]
    %v84 = vld [vmem:[%s1 + $0x1c0] sm:$0xff]
    %v85 = vld [vmem:[%s1 + $0x1c8] sm:$0xff]
    %v86 = vld [vmem:[%s1 + $0x1d0] sm:$0xff]
    %v87 = vld [vmem:[%s1 + $0x1d8] sm:$0xff]
    %v88 = vld [vmem:[%s1 + $0x1e0] sm:$0xff]
    %v89 = vld [vmem:[%s1 + $0x1e8] sm:$0xff]
    %v90 = vld [vmem:[%s1 + $0x1f0] sm:$0xff]
    %v91 = vld [vmem:[%s1 + $0x1f8] sm:$0xff]
    %v92 = vld [vmem:[%s1 + $0x200] sm:$0xff]
    %v93 = vld [vmem:[%s1 + $0x208] sm:$0xff]
    %v94 = vld [vmem:[%s1 + $0x210] sm:$0xff]
    %v95 = vld [vmem:[%s1 + $0x218] sm:$0xff]
    %v96 = vld [vmem:[%s1 + $0x220] sm:$0xff]
    %v97 = vld [vmem:[%s1 + $0x228] sm:$0xff]
    %v98 = vld [vmem:[%s1 + $0x230] sm:$0xff]
    %v99 = vld [vmem:[%s1 + $0x238] sm:$0xff]
    %v100 = vld [vmem:[%s1 + $0x240] sm:$0xff]
    %v101 = vld [vmem:[%s1 + $0x248] sm:$0xff]
    %v102 = vld [vmem:[%s1 + $0x250] sm:$0xff]
    %v103 = vld [vmem:[%s1 + $0x258] sm:$0xff]
    %v104 = vld [vmem:[%s1 + $0x260] sm:$0xff]
    %v105 = vld [vmem:[%s1 + $0x268] sm:$0xff]
    %v106 = vld [vmem:[%s1 + $0x270] sm:$0xff]
    %v107 = vld [vmem:[%s1 + $0x278] sm:$0xff]
    %v108 = vld [vmem:[%s1 + $0x280] sm:$0xff]
    %v109 = vld [vmem:[%s1 + $0x288] sm:$0xff]
    %v110 = vld [vmem:[%s1 + $0x290] sm:$0xff]
    %v111 = vld [vmem:[%s1 + $0x298] sm:$0xff]
    %v112 = vld [vmem:[%s1 + $0x2a0] sm:$0xff]
    %v113 = vld [vmem:[%s1 + $0x2a8] sm:$0xff]
    %v114 = vld [vmem:[%s1 + $0x2b0] sm:$0xff]
    %v115 = vld [vmem:[%s1 + $0x2b8] sm:$0xff]
    %v116 = vld [vmem:[%s1 + $0x2c0] sm:$0xff]
    %v117 = vld [vmem:[%s1 + $0x2c8] sm:$0xff]
    %v118 = vld [vmem:[%s1 + $0x2d0] sm:$0xff]
    %v119 = vld [vmem:[%s1 + $0x2d8] sm:$0xff]
    %v120 = vld [vmem:[%s1 + $0x2e0] sm:$0xff]
    %v121 = vld [vmem:[%s1 + $0x2e8] sm:$0xff]
    %v122 = vld [vmem:[%s1 + $0x2f0] sm:$0xff]
    %v123 = vld [vmem:[%s1 + $0x2f8] sm:$0xff]
    %v124 = vld [vmem:[%s1 + $0x300] sm:$0xff]
    %v125 = vld [vmem:[%s1 + $0x308] sm:$0xff]
    %v126 = vld [vmem:[%s1 + $0x310] sm:$0xff]
    %v127 = vld [vmem:[%s1 + $0x318] sm:$0xff]
    %v128 = vld [vmem:[%s1 + $0x320] sm:$0xff]
    %v129 = vld [vmem:[%s1 + $0x328] sm:$0xff]
    %v130 = vld [vmem:[%s1 + $0x330] sm:$0xff]
    %v131 = vld [vmem:[%s1 + $0x338] sm:$0xff]
    %v132 = vld [vmem:[%s1 + $0x340] sm:$0xff]
    %v133 = vld [vmem:[%s1 + $0x348] sm:$0xff]
    %v134 = vld [vmem:[%s1 + $0x350] sm:$0xff]
    %v135 = vld [vmem:[%s1 + $0x358] sm:$0xff]
    %v136 = vld [vmem:[%s1 + $0x360] sm:$0xff]
    %v137 = vld [vmem:[%s1 + $0x368] sm:$0xff]
    %v138 = vld [vmem:[%s1 + $0x370] sm:$0xff]
    %v139 = vld [vmem:[%s1 + $0x378] sm:$0xff]
    %v140 = vld [vmem:[%s1 + $0x380] sm:$0xff]
    %v141 = vld [vmem:[%s1 + $0x388] sm:$0xff]
    %v142 = vld [vmem:[%s1 + $0x390] sm:$0xff]
    %v143 = vld [vmem:[%s1 + $0x398] sm:$0xff]
    %v144 = vld [vmem:[%s1 + $0x3a0] sm:$0xff]
    %v145 = vld [vmem:[%s1 + $0x3a8] sm:$0xff]
    %v146 = vld [vmem:[%s1 + $0x3b0] sm:$0xff]
    %v147 = vld [vmem:[%s1 + $0x3b8] sm:$0xff]
    %v148 = vld [vmem:[%s1 + $0x3c0] sm:$0xff]
    %v149 = vld [vmem:[%s1 + $0x3c8] sm:$0xff]
    %v150 = vld [vmem:[%s1 + $0x3d0] sm:$0xff]
    %v151 = vld [vmem:[%s1 + $0x3d8] sm:$0xff]
    %v152 = vld [vmem:[%s1 + $0x3e0] sm:$0xff]
    %v153 = vld [vmem:[%s1 + $0x3e8] sm:$0xff]
    %v154 = vld [vmem:[%s1 + $0x3f0] sm:$0xff]
    %v155 = vld [vmem:[%s1 + $0x3f8] sm:$0xff]
    %v156 = vld [vmem:[%s1 + $0x400] sm:$0xff]
    %v157 = vld [vmem:[%s1 + $0x408] sm:$0xff]
    %v158 = vld [vmem:[%s1 + $0x410] sm:$0xff]
    %v159 = vld [vmem:[%s1 + $0x418] sm:$0xff]
    %v160 = vld [vmem:[%s1 + $0x420] sm:$0xff]
    %v161 = vld [vmem:[%s1 + $0x428] sm:$0xff]
    %v162 = vld [vmem:[%s1 + $0x430] sm:$0xff]
    %v163 = vld [vmem:[%s1 + $0x438] sm:$0xff]
    %v164 = vld [vmem:[%s1 + $0x440] sm:$0xff]
    %v165 = vld [vmem:[%s1 + $0x448] sm:$0xff]
    %v166 = vld [vmem:[%s1 + $0x450] sm:$0xff]
    %v167 = vld [vmem:[%s1 + $0x458] sm:$0xff]
    %v168 = vld [vmem:[%s1 + $0x460] sm:$0xff]
    %v169 = vld [vmem:[%s1 + $0x468] sm:$0xff]
    %v170 = vld [vmem:[%s1 + $0x470] sm:$0xff]
    %v171 = vld [vmem:[%s1 + $0x478] sm:$0xff]
    %v172 = vld [vmem:[%s1 + $0x480] sm:$0xff]
    %v173 = vld [vmem:[%s1 + $0x488] sm:$0xff]
    %v174 = vld [vmem:[%s1 + $0x490] sm:$0xff]
    %v175 = vld [vmem:[%s1 + $0x498] sm:$0xff]
    %v176 = vld [vmem:[%s1 + $0x4a0] sm:$0xff]
    %v177 = vld [vmem:[%s1 + $0x4a8] sm:$0xff]
    %v178 = vld [vmem:[%s1 + $0x4b0] sm:$0xff]
    %v179 = vld [vmem:[%s1 + $0x4b8] sm:$0xff]
    %v180 = vld [vmem:[%s1 + $0x4c0] sm:$0xff]
    %v181 = vld [vmem:[%s1 + $0x4c8] sm:$0xff]
    %v182 = vld [vmem:[%s1 + $0x4d0] sm:$0xff]
    %v183 = vld [vmem:[%s1 + $0x4d8] sm:$0xff]
    %v184 = vld [vmem:[%s1 + $0x4e0] sm:$0xff]
    %v185 = vld [vmem:[%s1 + $0x4e8] sm:$0xff]
    %v186 = vld [vmem:[%s1 + $0x4f0] sm:$0xff]
    %v187 = vld [vmem:[%s1 + $0x4f8] sm:$0xff]
    %v188 = vld [vmem:[%s1 + $0x500] sm:$0xff]
    %v189 = vld [vmem:[%s1 + $0x508] sm:$0xff]
    %v190 = vld [vmem:[%s1 + $0x510] sm:$0xff]
    %v191 = vld [vmem:[%s1 + $0x518] sm:$0xff]
    %v192 = vld [vmem:[%s1 + $0x520] sm:$0xff]
    %v193 = vld [vmem:[%s1 + $0x528] sm:$0xff]
    %v194 = vld [vmem:[%s1 + $0x530] sm:$0xff]
    %v195 = vld [vmem:[%s1 + $0x538] sm:$0xff]
    %v196 = vld [vmem:[%s1 + $0x540] sm:$0xff]
    %v197 = vld [vmem:[%s1 + $0x548] sm:$0xff]
    %v198 = vld [vmem:[%s1 + $0x550] sm:$0xff]
    %v199 = vld [vmem:[%s1 + $0x558] sm:$0xff]
    %v200 = vld [vmem:[%s1 + $0x560] sm:$0xff]
    %v201 = vld [vmem:[%s1 + $0x568] sm:$0xff]
    %v202 = vld [vmem:[%s1 + $0x570] sm:$0xff]
    %v203 = vld [vmem:[%s1 + $0x578] sm:$0xff]
    %v204 = vld [vmem:[%s1 + $0x580] sm:$0xff]
    %v205 = vld [vmem:[%s1 + $0x588] sm:$0xff]
    %v206 = vld [vmem:[%s1 + $0x590] sm:$0xff]
    %v207 = vld [vmem:[%s1 + $0x598] sm:$0xff]
    %v208 = vld [vmem:[%s1 + $0x5a0] sm:$0xff]
    %v209 = vld [vmem:[%s1 + $0x5a8] sm:$0xff]
    %v210 = vld [vmem:[%s1 + $0x5b0] sm:$0xff]
    %v211 = vld [vmem:[%s1 + $0x5b8] sm:$0xff]
    %v212 = vld [vmem:[%s1 + $0x5c0] sm:$0xff]
    %v213 = vld [vmem:[%s1 + $0x5c8] sm:$0xff]
    %v214 = vld [vmem:[%s1 + $0x5d0] sm:$0xff]
    %v215 = vld [vmem:[%s1 + $0x5d8] sm:$0xff]
    %v216 = vld [vmem:[%s1 + $0x5e0] sm:$0xff]
    %v217 = vld [vmem:[%s1 + $0x5e8] sm:$0xff]
    %v218 = vld [vmem:[%s1 + $0x5f0] sm:$0xff]
    %v219 = vld [vmem:[%s1 + $0x5f8] sm:$0xff]
    %v220 = vld [vmem:[%s1 + $0x600] sm:$0xff]
    %v221 = vld [vmem:[%s1 + $0x608] sm:$0xff]
    %v222 = vld [vmem:[%s1 + $0x610] sm:$0xff]
    %v223 = vld [vmem:[%s1 + $0x618] sm:$0xff]
    %v224 = vld [vmem:[%s1 + $0x620] sm:$0xff]
    %v225 = vld [vmem:[%s1 + $0x628] sm:$0xff]
    %v226 = vld [vmem:[%s1 + $0x630] sm:$0xff]
    %v227 = vld [vmem:[%s1 + $0x638] sm:$0xff]
    %v228 = vld [vmem:[%s1 + $0x640] sm:$0xff]
    %v229 = vld [vmem:[%s1 + $0x648] sm:$0xff]
    %v230 = vld [vmem:[%s1 + $0x650] sm:$0xff]
    %v231 = vld [vmem:[%s1 + $0x658] sm:$0xff]
    %v232 = vld [vmem:[%s1 + $0x660] sm:$0xff]
    %v233 = vld [vmem:[%s1 + $0x668] sm:$0xff]
    %v234 = vld [vmem:[%s1 + $0x670] sm:$0xff]
    %v235 = vld [vmem:[%s1 + $0x678] sm:$0xff]
    %v236 = vld [vmem:[%s1 + $0x680] sm:$0xff]
    %v237 = vld [vmem:[%s1 + $0x688] sm:$0xff]
    %v238 = vld [vmem:[%s1 + $0x690] sm:$0xff]
    %v239 = vld [vmem:[%s1 + $0x698] sm:$0xff]
    %v240 = vld [vmem:[%s1 + $0x6a0] sm:$0xff]
    %v241 = vld [vmem:[%s1 + $0x6a8] sm:$0xff]
    %v242 = vld [vmem:[%s1 + $0x6b0] sm:$0xff]
    %v243 = vld [vmem:[%s1 + $0x6b8] sm:$0xff]
    %v244 = vld [vmem:[%s1 + $0x6c0] sm:$0xff]
    %v245 = vld [vmem:[%s1 + $0x6c8] sm:$0xff]
    %v246 = vld [vmem:[%s1 + $0x6d0] sm:$0xff]
    %v247 = vld [vmem:[%s1 + $0x6d8] sm:$0xff]
    %v248 = vld [vmem:[%s1 + $0x6e0] sm:$0xff]
    %v249 = vld [vmem:[%s1 + $0x6e8] sm:$0xff]
    %v250 = vld [vmem:[%s1 + $0x6f0] sm:$0xff]
    %v251 = vld [vmem:[%s1 + $0x6f8] sm:$0xff]
    %v252 = vld [vmem:[%s1 + $0x700] sm:$0xff]
    %v253 = vld [vmem:[%s1 + $0x708] sm:$0xff]
    %v254 = vld [vmem:[%s1 + $0x710] sm:$0xff]
    %v255 = vld [vmem:[%s1 + $0x718] sm:$0xff]
    %v256 = vld [vmem:[%s1 + $0x720] sm:$0xff]
    %v257 = vld [vmem:[%s1 + $0x728] sm:$0xff]
    %v258 = vld [vmem:[%s1 + $0x730] sm:$0xff]
    %v259 = vld [vmem:[%s1 + $0x738] sm:$0xff]
    %v260 = vld [vmem:[%s1 + $0x740] sm:$0xff]
    %v261 = vld [vmem:[%s1 + $0x748] sm:$0xff]
    %v262 = vld [vmem:[%s1 + $0x750] sm:$0xff]
    %v263 = vld [vmem:[%s1 + $0x758] sm:$0xff]
    %v264 = vld [vmem:[%s1 + $0x760] sm:$0xff]
    %v265 = vld [vmem:[%s1 + $0x768] sm:$0xff]
    %v266 = vld [vmem:[%s1 + $0x770] sm:$0xff]
    %v267 = vld [vmem:[%s1 + $0x778] sm:$0xff]
    %v268 = vld [vmem:[%s1 + $0x780] sm:$0xff]
    %v269 = vld [vmem:[%s1 + $0x788] sm:$0xff]
    %v270 = vld [vmem:[%s1 + $0x790] sm:$0xff]
    %v271 = vld [vmem:[%s1 + $0x798] sm:$0xff]
    %v272 = vld [vmem:[%s1 + $0x7a0] sm:$0xff]
    %v273 = vld [vmem:[%s1 + $0x7a8] sm:$0xff]
    %v274 = vld [vmem:[%s1 + $0x7b0] sm:$0xff]
    %v275 = vld [vmem:[%s1 + $0x7b8] sm:$0xff]
    %v276 = vld [vmem:[%s1 + $0x7c0] sm:$0xff]
    %v277 = vld [vmem:[%s1 + $0x7c8] sm:$0xff]
    %v278 = vld [vmem:[%s1 + $0x7d0] sm:$0xff]
    %v279 = vld [vmem:[%s1 + $0x7d8] sm:$0xff]
    %v280 = vld [vmem:[%s1 + $0x7e0] sm:$0xff]
    %v281 = vld [vmem:[%s1 + $0x7e8] sm:$0xff]
    %v282 = vld [vmem:[%s1 + $0x7f0] sm:$0xff]
    %v283 = vld [vmem:[%s1 + $0x7f8] sm:$0xff]
    %v284 = vld [vmem:[%s1 + $0x800] sm:$0xff]
    %v285 = vld [vmem:[%s1 + $0x808] sm:$0xff]
    %v286 = vld [vmem:[%s1 + $0x810] sm:$0xff]
    %v287 = vld [vmem:[%s1 + $0x818] sm:$0xff]
    %v288 = vld [vmem:[%s1 + $0x820] sm:$0xff]
    %v289 = vld [vmem:[%s1 + $0x828] sm:$0xff]
    %v290 = vld [vmem:[%s1 + $0x830] sm:$0xff]
    %v291 = vld [vmem:[%s1 + $0x838] sm:$0xff]
    %v292 = vld [vmem:[%s1 + $0x840] sm:$0xff]
    %v293 = vld [vmem:[%s1 + $0x848] sm:$0xff]
    %v294 = vld [vmem:[%s1 + $0x850] sm:$0xff]
    %v295 = vld [vmem:[%s1 + $0x858] sm:$0xff]
    %v296 = vld [vmem:[%s1 + $0x860] sm:$0xff]
    %v297 = vld [vmem:[%s1 + $0x868] sm:$0xff]
    %v298 = vld [vmem:[%s1 + $0x870] sm:$0xff]
    %v299 = vld [vmem:[%s1 + $0x878] sm:$0xff]
    %v300 = vld [vmem:[%s1 + $0x880] sm:$0xff]
    %v301 = vld [vmem:[%s1 + $0x888] sm:$0xff]
    %v302 = vld [vmem:[%s1 + $0x890] sm:$0xff]
    %v303 = vld [vmem:[%s1 + $0x898] sm:$0xff]
    %v304 = vld [vmem:[%s1 + $0x8a0] sm:$0xff]
    %v305 = vld [vmem:[%s1 + $0x8a8] sm:$0xff]
    %v306 = vld [vmem:[%s1 + $0x8b0] sm:$0xff]
    %v307 = vld [vmem:[%s1 + $0x8b8] sm:$0xff]
    %v308 = vld [vmem:[%s1 + $0x8c0] sm:$0xff]
    %v309 = vld [vmem:[%s1 + $0x8c8] sm:$0xff]
    %v310 = vld [vmem:[%s1 + $0x8d0] sm:$0xff]
    %v311 = vld [vmem:[%s1 + $0x8d8] sm:$0xff]
    %v312 = vld [vmem:[%s1 + $0x8e0] sm:$0xff]
    %v313 = vld [vmem:[%s1 + $0x8e8] sm:$0xff]
    %v314 = vld [vmem:[%s1 + $0x8f0] sm:$0xff]
    %v315 = vld [vmem:[%s1 + $0x8f8] sm:$0xff]
    %v316 = vld [vmem:[%s1 + $0x900] sm:$0xff]
    %v317 = vld [vmem:[%s1 + $0x908] sm:$0xff]
    %v318 = vld [vmem:[%s1 + $0x910] sm:$0xff]
    %v319 = vld [vmem:[%s1 + $0x918] sm:$0xff]
    %v320 = vld [vmem:[%s1 + $0x920] sm:$0xff]
    %v321 = vld [vmem:[%s1 + $0x928] sm:$0xff]
    %v322 = vld [vmem:[%s1 + $0x930] sm:$0xff]
    %v323 = vld [vmem:[%s1 + $0x938] sm:$0xff]
    %v324 = vld [vmem:[%s1 + $0x940] sm:$0xff]
    %v325 = vld [vmem:[%s1 + $0x948] sm:$0xff]
    %v326 = vld [vmem:[%s1 + $0x950] sm:$0xff]
    %v327 = vld [vmem:[%s1 + $0x958] sm:$0xff]
    %v328 = vld [vmem:[%s1 + $0x960] sm:$0xff]
    %v329 = vld [vmem:[%s1 + $0x968] sm:$0xff]
    %v330 = vld [vmem:[%s1 + $0x970] sm:$0xff]
    %v331 = vld [vmem:[%s1 + $0x978] sm:$0xff]
    %v332 = vld [vmem:[%s1 + $0x980] sm:$0xff]
    %v333 = vld [vmem:[%s1 + $0x988] sm:$0xff]
    %v334 = vld [vmem:[%s1 + $0x990] sm:$0xff]
    %v335 = vld [vmem:[%s1 + $0x998] sm:$0xff]
    %v336 = vld [vmem:[%s1 + $0x9a0] sm:$0xff]
    %v337 = vld [vmem:[%s1 + $0x9a8] sm:$0xff]
    %v338 = vld [vmem:[%s1 + $0x9b0] sm:$0xff]
    %v339 = vld [vmem:[%s1 + $0x9b8] sm:$0xff]
    %v340 = vld [vmem:[%s1 + $0x9c0] sm:$0xff]
    %v341 = vld [vmem:[%s1 + $0x9c8] sm:$0xff]
    %v342 = vld [vmem:[%s1 + $0x9d0] sm:$0xff]
    %v343 = vld [vmem:[%s1 + $0x9d8] sm:$0xff]
    %v344 = vld [vmem:[%s1 + $0x9e0] sm:$0xff]
    %v345 = vld [vmem:[%s1 + $0x9e8] sm:$0xff]
    %v346 = vld [vmem:[%s1 + $0x9f0] sm:$0xff]
    %v347 = vld [vmem:[%s1 + $0x9f8] sm:$0xff]
    %v348 = vld [vmem:[%s1 + $0xa00] sm:$0xff]
    %v349 = vld [vmem:[%s1 + $0xa08] sm:$0xff]
    %v350 = vld [vmem:[%s1 + $0xa10] sm:$0xff]
    %v351 = vld [vmem:[%s1 + $0xa18] sm:$0xff]
    %v352 = vld [vmem:[%s1 + $0xa20] sm:$0xff]
    %v353 = vld [vmem:[%s1 + $0xa28] sm:$0xff]
    %v354 = vld [vmem:[%s1 + $0xa30] sm:$0xff]
    %v355 = vld [vmem:[%s1 + $0xa38] sm:$0xff]
    %v356 = vld [vmem:[%s1 + $0xa40] sm:$0xff]
    %v357 = vld [vmem:[%s1 + $0xa48] sm:$0xff]
    %v358 = vld [vmem:[%s1 + $0xa50] sm:$0xff]
    %v359 = vld [vmem:[%s1 + $0xa58] sm:$0xff]
    %v360 = vld [vmem:[%s1 + $0xa60] sm:$0xff]
    %v361 = vld [vmem:[%s1 + $0xa68] sm:$0xff]
    %v362 = vld [vmem:[%s1 + $0xa70] sm:$0xff]
    %v363 = vld [vmem:[%s1 + $0xa78] sm:$0xff]
    %v364 = vld [vmem:[%s1 + $0xa80] sm:$0xff]
    %v365 = vld [vmem:[%s1 + $0xa88] sm:$0xff]
    %v366 = vld [vmem:[%s1 + $0xa90] sm:$0xff]
    %v367 = vld [vmem:[%s1 + $0xa98] sm:$0xff]
    %v368 = vld [vmem:[%s1 + $0xaa0] sm:$0xff]
    %v369 = vld [vmem:[%s1 + $0xaa8] sm:$0xff]
    %v370 = vld [vmem:[%s1 + $0xab0] sm:$0xff]
    %v371 = vld [vmem:[%s1 + $0xab8] sm:$0xff]
    %v372 = vld [vmem:[%s1 + $0xac0] sm:$0xff]
    %v373 = vld [vmem:[%s1 + $0xac8] sm:$0xff]
    %v374 = vld [vmem:[%s1 + $0xad0] sm:$0xff]
    %v375 = vld [vmem:[%s1 + $0xad8] sm:$0xff]
    %v376 = vld [vmem:[%s1 + $0xae0] sm:$0xff]
    %v377 = vld [vmem:[%s1 + $0xae8] sm:$0xff]
    %v378 = vld [vmem:[%s1 + $0xaf0] sm:$0xff]
    %v379 = vld [vmem:[%s1 + $0xaf8] sm:$0xff]
    %v380 = vld [vmem:[%s1 + $0xb00] sm:$0xff]
    %v381 = vld [vmem:[%s1 + $0xb08] sm:$0xff]
    %v382 = vld [vmem:[%s1 + $0xb10] sm:$0xff]
    %v383 = vld [vmem:[%s1 + $0xb18] sm:$0xff]
    %v384 = vld [vmem:[%s1 + $0xb20] sm:$0xff]
    %v385 = vld [vmem:[%s1 + $0xb28] sm:$0xff]
    %v386 = vld [vmem:[%s1 + $0xb30] sm:$0xff]
    %v387 = vld [vmem:[%s1 + $0xb38] sm:$0xff]
    %v388 = vld [vmem:[%s1 + $0xb40] sm:$0xff]
    %v389 = vld [vmem:[%s1 + $0xb48] sm:$0xff]
    %v390 = vld [vmem:[%s1 + $0xb50] sm:$0xff]
    %v391 = vld [vmem:[%s1 + $0xb58] sm:$0xff]
    %v392 = vld [vmem:[%s1 + $0xb60] sm:$0xff]
    %v393 = vld [vmem:[%s1 + $0xb68] sm:$0xff]
    %v394 = vld [vmem:[%s1 + $0xb70] sm:$0xff]
    %v395 = vld [vmem:[%s1 + $0xb78] sm:$0xff]
    %v396 = vld [vmem:[%s1 + $0xb80] sm:$0xff]
    %v397 = vld [vmem:[%s1 + $0xb88] sm:$0xff]
    %v398 = vld [vmem:[%s1 + $0xb90] sm:$0xff]
    %v399 = vld [vmem:[%s1 + $0xb98] sm:$0xff]
    %v400 = vld [vmem:[%s1 + $0xba0] sm:$0xff]
    %v401 = vld [vmem:[%s1 + $0xba8] sm:$0xff]
    %v402 = vld [vmem:[%s1 + $0xbb0] sm:$0xff]
    %v403 = vld [vmem:[%s1 + $0xbb8] sm:$0xff]
    %v404 = vld [vmem:[%s1 + $0xbc0] sm:$0xff]
    %v405 = vld [vmem:[%s1 + $0xbc8] sm:$0xff]
    %v406 = vld [vmem:[%s1 + $0xbd0] sm:$0xff]
    %v407 = vld [vmem:[%s1 + $0xbd8] sm:$0xff]
    %v408 = vld [vmem:[%s1 + $0xbe0] sm:$0xff]
    %v409 = vld [vmem:[%s1 + $0xbe8] sm:$0xff]
    %v410 = vld [vmem:[%s1 + $0xbf0] sm:$0xff]
    %v411 = vld [vmem:[%s1 + $0xbf8] sm:$0xff]
    %v412 = vld [vmem:[%s1 + $0xc00] sm:$0xff]
    %v413 = vld [vmem:[%s1 + $0xc08] sm:$0xff]
    %v414 = vld [vmem:[%s1 + $0xc10] sm:$0xff]
    %v415 = vld [vmem:[%s1 + $0xc18] sm:$0xff]
    %v416 = vld [vmem:[%s1 + $0xc20] sm:$0xff]
    %v417 = vld [vmem:[%s1 + $0xc28] sm:$0xff]
    %v418 = vld [vmem:[%s1 + $0xc30] sm:$0xff]
    %v419 = vld [vmem:[%s1 + $0xc38] sm:$0xff]
    %v420 = vld [vmem:[%s2] sm:$0x1]
    %v422 = vlaneseq
    %v423 = vshrl.u32 %v422, 7
    %v424 = vsub.s32 0, %v423
    %v425 = vrot.slane %v420, %v424
    %v434 = vcombine.high %v21, %v21
    %v436 = vunpack.c.l.s4 1983009808
    %v437 = vunpack.c.0.s8 %v436
    %v438 = vlaneseq
    %v439 = vshrl.u32 %v438, 7
    %v440 = vsub.s32 %v437, %v439
    %v441 = vrot.slane %v21, %v440
    %v443 = vunpack.c.l.s4 1983009808
    %v444 = vunpack.c.0.s8 %v443
    %v445 = vlaneseq
    %v446 = vshrl.u32 %v445, 7
    %v447 = vsub.s32 %v444, %v446
    %v448 = vrot.slane %v434, %v447
    %v449 = vcombine.high %v441, %v441
    %v450 = vcombine.high %v448, %v448
    %v451 = vcombine.high %v22, %v22
    %v453 = vunpack.c.l.s4 1983009808
    %v454 = vunpack.c.0.s8 %v453
    %v455 = vlaneseq
    %v456 = vshrl.u32 %v455, 7
    %v457 = vsub.s32 %v454, %v456
    %v458 = vrot.slane %v22, %v457
    %v460 = vunpack.c.l.s4 1983009808
    %v461 = vunpack.c.0.s8 %v460
    %v462 = vlaneseq
    %v463 = vshrl.u32 %v462, 7
    %v464 = vsub.s32 %v461, %v463
    %v465 = vrot.slane %v451, %v464
    %v466 = vcombine.high %v458, %v458
    %v467 = vcombine.high %v465, %v465
    %v468 = vcombine.high %v23, %v23
    %v470 = vunpack.c.l.s4 1983009808
    %v471 = vunpack.c.0.s8 %v470
    %v472 = vlaneseq
    %v473 = vshrl.u32 %v472, 7
    %v474 = vsub.s32 %v471, %v473
    %v475 = vrot.slane %v23, %v474
    %v477 = vunpack.c.l.s4 1983009808
    %v478 = vunpack.c.0.s8 %v477
    %v479 = vlaneseq
    %v480 = vshrl.u32 %v479, 7
    %v481 = vsub.s32 %v478, %v480
    %v482 = vrot.slane %v468, %v481
    %v483 = vcombine.high %v475, %v475
    %v484 = vcombine.high %v482, %v482
    %v485 = vcombine.high %v24, %v24
    %v487 = vunpack.c.l.s4 1983009808
    %v488 = vunpack.c.0.s8 %v487
    %v489 = vlaneseq
    %v490 = vshrl.u32 %v489, 7
    %v491 = vsub.s32 %v488, %v490
    %v492 = vrot.slane %v24, %v491
    %v494 = vunpack.c.l.s4 1983009808
    %v495 = vunpack.c.0.s8 %v494
    %v496 = vlaneseq
    %v497 = vshrl.u32 %v496, 7
    %v498 = vsub.s32 %v495, %v497
    %v499 = vrot.slane %v485, %v498
    %v500 = vcombine.high %v492, %v492
    %v501 = vcombine.high %v499, %v499
    %v502 = vcombine.high %v25, %v25
    %v504 = vunpack.c.l.s4 1983009808
    %v505 = vunpack.c.0.s8 %v504
    %v506 = vlaneseq
    %v507 = vshrl.u32 %v506, 7
    %v508 = vsub.s32 %v505, %v507
    %v509 = vrot.slane %v25, %v508
    %v511 = vunpack.c.l.s4 1983009808
    %v512 = vunpack.c.0.s8 %v511
    %v513 = vlaneseq
    %v514 = vshrl.u32 %v513, 7
    %v515 = vsub.s32 %v512, %v514
    %v516 = vrot.slane %v502, %v515
    %v517 = vcombine.high %v509, %v509
    %v518 = vcombine.high %v516, %v516
    %v519 = vcombine.high %v26, %v26
    %v521 = vunpack.c.l.s4 1983009808
    %v522 = vunpack.c.0.s8 %v521
    %v523 = vlaneseq
    %v524 = vshrl.u32 %v523, 7
    %v525 = vsub.s32 %v522, %v524
    %v526 = vrot.slane %v26, %v525
    %v528 = vunpack.c.l.s4 1983009808
    %v529 = vunpack.c.0.s8 %v528
    %v530 = vlaneseq
    %v531 = vshrl.u32 %v530, 7
    %v532 = vsub.s32 %v529, %v531
    %v533 = vrot.slane %v519, %v532
    %v534 = vcombine.high %v526, %v526
    %v535 = vcombine.high %v533, %v533
    %v537 = vunpack.c.l.s4 1983009808
    %v538 = vunpack.c.0.s8 %v537
    %v539 = vlaneseq
    %v540 = vshrl.u32 %v539, 7
    %v541 = vsub.s32 %v538, %v540
    %v542 = vrot.slane %v27, %v541
    %vm567 = vcmask 523264
    %v568 = vsel %vm567, %v542, 0
    %570 = vmatprep.subr.mxu0 0.0
    %571 = vmatpush1.msra.mxu0 %v43
    %572 = vmatprep.subr.mxu0 0.0
    %573 = vmatpush1.msra.mxu0 %v42
    %574 = vmatprep.subr.mxu0 0.0
    %575 = vmatpush1.msra.mxu0 %v41
    %576 = vmatprep.subr.mxu0 0.0
    %577 = vmatpush1.msra.mxu0 %v40
    %578 = vmatprep.subr.mxu0 0.0
    %579 = vmatpush1.msra.mxu0 %v39
    %580 = vmatprep.subr.mxu0 0.0
    %581 = vmatpush1.msra.mxu0 %v38
    %582 = vmatprep.subr.mxu0 0.0
    %583 = vmatpush1.msra.mxu0 %v37
    %584 = vmatprep.subr.mxu0 0.0
    %585 = vmatpush1.msra.mxu0 %v36
    %586 = vmatprep.subr.mxu0 0.0
    %587 = vmatpush1.msra.mxu0 %v35
    %588 = vmatprep.subr.mxu0 0.0
    %589 = vmatpush1.msra.mxu0 %v34
    %590 = vmatprep.subr.mxu0 0.0
    %591 = vmatpush1.msra.mxu0 %v33
    %592 = vmatprep.subr.mxu0 0.0
    %593 = vmatpush1.msra.mxu0 %v32
    %594 = vmatprep.subr.mxu0 0.0
    %595 = vmatpush1.msra.mxu0 %v31
    %596 = vmatprep.subr.mxu0 0.0
    %597 = vmatpush1.msra.mxu0 %v30
    %598 = vmatprep.subr.mxu0 0.0
    %599 = vmatpush1.msra.mxu0 %v29
    %600 = vmatprep.subr.mxu0 0.0
    %601 = vmatpush1.msra.mxu0 %v28
    %602 = vmatprep.subr.mxu0 0.0
    %603 = vmatpush2.msra.mxu0 %v59
    %604 = vmatprep.subr.mxu0 0.0
    %605 = vmatpush2.msra.mxu0 %v58
    %606 = vmatprep.subr.mxu0 0.0
    %607 = vmatpush2.msra.mxu0 %v57
    %608 = vmatprep.subr.mxu0 0.0
    %609 = vmatpush2.msra.mxu0 %v56
    %610 = vmatprep.subr.mxu0 0.0
    %611 = vmatpush2.msra.mxu0 %v55
    %612 = vmatprep.subr.mxu0 0.0
    %613 = vmatpush2.msra.mxu0 %v54
    %614 = vmatprep.subr.mxu0 0.0
    %615 = vmatpush2.msra.mxu0 %v53
    %616 = vmatprep.subr.mxu0 0.0
    %617 = vmatpush2.msra.mxu0 %v52
    %618 = vmatprep.subr.mxu0 0.0
    %619 = vmatpush2.msra.mxu0 %v51
    %620 = vmatprep.subr.mxu0 0.0
    %621 = vmatpush2.msra.mxu0 %v50
    %622 = vmatprep.subr.mxu0 0.0
    %623 = vmatpush2.msra.mxu0 %v49
    %624 = vmatprep.subr.mxu0 0.0
    %625 = vmatpush2.msra.mxu0 %v48
    %626 = vmatprep.subr.mxu0 0.0
    %627 = vmatpush2.msra.mxu0 %v47
    %628 = vmatprep.subr.mxu0 0.0
    %629 = vmatpush2.msra.mxu0 %v46
    %630 = vmatprep.subr.mxu0 0.0
    %631 = vmatpush2.msra.mxu0 %v45
    %632 = vmatprep.subr.mxu0 0.0
    %633 = vmatpush2.msra.mxu0 %v44
    %634 = vmatprep.mubr.f32.mxu0 %v449
    %635 = vmatmul.mubr.f32.gmra.mxu0 %v441
    %v636 = vpop.f32.mrf.mxu0
    %v637 = vadd.f32 %v425, %v636
    %v638 = vpop.f32.mrf.mxu0
    %639 = vdwg.mxu0
    %640 = vmatprep.subr.mxu0 0.0
    %641 = vmatpush1.msra.mxu0 %v75
    %642 = vmatprep.subr.mxu0 0.0
    %643 = vmatpush1.msra.mxu0 %v74
    %644 = vmatprep.subr.mxu0 0.0
    %645 = vmatpush1.msra.mxu0 %v73
    %646 = vmatprep.subr.mxu0 0.0
    %647 = vmatpush1.msra.mxu0 %v72
    %648 = vmatprep.subr.mxu0 0.0
    %649 = vmatpush1.msra.mxu0 %v71
    %650 = vmatprep.subr.mxu0 0.0
    %651 = vmatpush1.msra.mxu0 %v70
    %652 = vmatprep.subr.mxu0 0.0
    %653 = vmatpush1.msra.mxu0 %v69
    %654 = vmatprep.subr.mxu0 0.0
    %655 = vmatpush1.msra.mxu0 %v68
    %656 = vmatprep.subr.mxu0 0.0
    %657 = vmatpush1.msra.mxu0 %v67
    %658 = vmatprep.subr.mxu0 0.0
    %659 = vmatpush1.msra.mxu0 %v66
    %660 = vmatprep.subr.mxu0 0.0
    %661 = vmatpush1.msra.mxu0 %v65
    %662 = vmatprep.subr.mxu0 0.0
    %663 = vmatpush1.msra.mxu0 %v64
    %664 = vmatprep.subr.mxu0 0.0
    %665 = vmatpush1.msra.mxu0 %v63
    %666 = vmatprep.subr.mxu0 0.0
    %667 = vmatpush1.msra.mxu0 %v62
    %668 = vmatprep.subr.mxu0 0.0
    %669 = vmatpush1.msra.mxu0 %v61
    %670 = vmatprep.subr.mxu0 0.0
    %671 = vmatpush1.msra.mxu0 %v60
    %672 = vmatprep.subr.mxu0 0.0
    %673 = vmatpush2.msra.mxu0 %v91
    %674 = vmatprep.subr.mxu0 0.0
    %675 = vmatpush2.msra.mxu0 %v90
    %676 = vmatprep.subr.mxu0 0.0
    %677 = vmatpush2.msra.mxu0 %v89
    %678 = vmatprep.subr.mxu0 0.0
    %679 = vmatpush2.msra.mxu0 %v88
    %680 = vmatprep.subr.mxu0 0.0
    %681 = vmatpush2.msra.mxu0 %v87
    %682 = vmatprep.subr.mxu0 0.0
    %683 = vmatpush2.msra.mxu0 %v86
    %684 = vmatprep.subr.mxu0 0.0
    %685 = vmatpush2.msra.mxu0 %v85
    %686 = vmatprep.subr.mxu0 0.0
    %687 = vmatpush2.msra.mxu0 %v84
    %688 = vmatprep.subr.mxu0 0.0
    %689 = vmatpush2.msra.mxu0 %v83
    %690 = vmatprep.subr.mxu0 0.0
    %691 = vmatpush2.msra.mxu0 %v82
    %692 = vmatprep.subr.mxu0 0.0
    %693 = vmatpush2.msra.mxu0 %v81
    %694 = vmatprep.subr.mxu0 0.0
    %695 = vmatpush2.msra.mxu0 %v80
    %696 = vmatprep.subr.mxu0 0.0
    %697 = vmatpush2.msra.mxu0 %v79
    %698 = vmatprep.subr.mxu0 0.0
    %699 = vmatpush2.msra.mxu0 %v78
    %700 = vmatprep.subr.mxu0 0.0
    %701 = vmatpush2.msra.mxu0 %v77
    %702 = vmatprep.subr.mxu0 0.0
    %703 = vmatpush2.msra.mxu0 %v76
    %704 = vmatprep.mubr.f32.mxu0 %v450
    %705 = vmatmul.mubr.f32.gmra.mxu0 %v448
    %v706 = vpop.f32.mrf.mxu0
    %v707 = vadd.f32 %v637, %v706
    %v708 = vpop.f32.mrf.mxu0
    %709 = vdwg.mxu0
    %710 = vmatprep.subr.mxu0 0.0
    %711 = vmatpush1.msra.mxu0 %v107
    %712 = vmatprep.subr.mxu0 0.0
    %713 = vmatpush1.msra.mxu0 %v106
    %714 = vmatprep.subr.mxu0 0.0
    %715 = vmatpush1.msra.mxu0 %v105
    %716 = vmatprep.subr.mxu0 0.0
    %717 = vmatpush1.msra.mxu0 %v104
    %718 = vmatprep.subr.mxu0 0.0
    %719 = vmatpush1.msra.mxu0 %v103
    %720 = vmatprep.subr.mxu0 0.0
    %721 = vmatpush1.msra.mxu0 %v102
    %722 = vmatprep.subr.mxu0 0.0
    %723 = vmatpush1.msra.mxu0 %v101
    %724 = vmatprep.subr.mxu0 0.0
    %725 = vmatpush1.msra.mxu0 %v100
    %726 = vmatprep.subr.mxu0 0.0
    %727 = vmatpush1.msra.mxu0 %v99
    %728 = vmatprep.subr.mxu0 0.0
    %729 = vmatpush1.msra.mxu0 %v98
    %730 = vmatprep.subr.mxu0 0.0
    %731 = vmatpush1.msra.mxu0 %v97
    %732 = vmatprep.subr.mxu0 0.0
    %733 = vmatpush1.msra.mxu0 %v96
    %734 = vmatprep.subr.mxu0 0.0
    %735 = vmatpush1.msra.mxu0 %v95
    %736 = vmatprep.subr.mxu0 0.0
    %737 = vmatpush1.msra.mxu0 %v94
    %738 = vmatprep.subr.mxu0 0.0
    %739 = vmatpush1.msra.mxu0 %v93
    %740 = vmatprep.subr.mxu0 0.0
    %741 = vmatpush1.msra.mxu0 %v92
    %742 = vmatprep.subr.mxu0 0.0
    %743 = vmatpush2.msra.mxu0 %v123
    %744 = vmatprep.subr.mxu0 0.0
    %745 = vmatpush2.msra.mxu0 %v122
    %746 = vmatprep.subr.mxu0 0.0
    %747 = vmatpush2.msra.mxu0 %v121
    %748 = vmatprep.subr.mxu0 0.0
    %749 = vmatpush2.msra.mxu0 %v120
    %750 = vmatprep.subr.mxu0 0.0
    %751 = vmatpush2.msra.mxu0 %v119
    %752 = vmatprep.subr.mxu0 0.0
    %753 = vmatpush2.msra.mxu0 %v118
    %754 = vmatprep.subr.mxu0 0.0
    %755 = vmatpush2.msra.mxu0 %v117
    %756 = vmatprep.subr.mxu0 0.0
    %757 = vmatpush2.msra.mxu0 %v116
    %758 = vmatprep.subr.mxu0 0.0
    %759 = vmatpush2.msra.mxu0 %v115
    %760 = vmatprep.subr.mxu0 0.0
    %761 = vmatpush2.msra.mxu0 %v114
    %762 = vmatprep.subr.mxu0 0.0
    %763 = vmatpush2.msra.mxu0 %v113
    %764 = vmatprep.subr.mxu0 0.0
    %765 = vmatpush2.msra.mxu0 %v112
    %766 = vmatprep.subr.mxu0 0.0
    %767 = vmatpush2.msra.mxu0 %v111
    %768 = vmatprep.subr.mxu0 0.0
    %769 = vmatpush2.msra.mxu0 %v110
    %770 = vmatprep.subr.mxu0 0.0
    %771 = vmatpush2.msra.mxu0 %v109
    %772 = vmatprep.subr.mxu0 0.0
    %773 = vmatpush2.msra.mxu0 %v108
    %774 = vmatprep.mubr.f32.mxu0 %v466
    %775 = vmatmul.mubr.f32.gmra.mxu0 %v458
    %v776 = vpop.f32.mrf.mxu0
    %v777 = vadd.f32 %v707, %v776
    %v778 = vpop.f32.mrf.mxu0
    %779 = vdwg.mxu0
    %780 = vmatprep.subr.mxu0 0.0
    %781 = vmatpush1.msra.mxu0 %v139
    %782 = vmatprep.subr.mxu0 0.0
    %783 = vmatpush1.msra.mxu0 %v138
    %784 = vmatprep.subr.mxu0 0.0
    %785 = vmatpush1.msra.mxu0 %v137
    %786 = vmatprep.subr.mxu0 0.0
    %787 = vmatpush1.msra.mxu0 %v136
    %788 = vmatprep.subr.mxu0 0.0
    %789 = vmatpush1.msra.mxu0 %v135
    %790 = vmatprep.subr.mxu0 0.0
    %791 = vmatpush1.msra.mxu0 %v134
    %792 = vmatprep.subr.mxu0 0.0
    %793 = vmatpush1.msra.mxu0 %v133
    %794 = vmatprep.subr.mxu0 0.0
    %795 = vmatpush1.msra.mxu0 %v132
    %796 = vmatprep.subr.mxu0 0.0
    %797 = vmatpush1.msra.mxu0 %v131
    %798 = vmatprep.subr.mxu0 0.0
    %799 = vmatpush1.msra.mxu0 %v130
    %800 = vmatprep.subr.mxu0 0.0
    %801 = vmatpush1.msra.mxu0 %v129
    %802 = vmatprep.subr.mxu0 0.0
    %803 = vmatpush1.msra.mxu0 %v128
    %804 = vmatprep.subr.mxu0 0.0
    %805 = vmatpush1.msra.mxu0 %v127
    %806 = vmatprep.subr.mxu0 0.0
    %807 = vmatpush1.msra.mxu0 %v126
    %808 = vmatprep.subr.mxu0 0.0
    %809 = vmatpush1.msra.mxu0 %v125
    %810 = vmatprep.subr.mxu0 0.0
    %811 = vmatpush1.msra.mxu0 %v124
    %812 = vmatprep.subr.mxu0 0.0
    %813 = vmatpush2.msra.mxu0 %v155
    %814 = vmatprep.subr.mxu0 0.0
    %815 = vmatpush2.msra.mxu0 %v154
    %816 = vmatprep.subr.mxu0 0.0
    %817 = vmatpush2.msra.mxu0 %v153
    %818 = vmatprep.subr.mxu0 0.0
    %819 = vmatpush2.msra.mxu0 %v152
    %820 = vmatprep.subr.mxu0 0.0
    %821 = vmatpush2.msra.mxu0 %v151
    %822 = vmatprep.subr.mxu0 0.0
    %823 = vmatpush2.msra.mxu0 %v150
    %824 = vmatprep.subr.mxu0 0.0
    %825 = vmatpush2.msra.mxu0 %v149
    %826 = vmatprep.subr.mxu0 0.0
    %827 = vmatpush2.msra.mxu0 %v148
    %828 = vmatprep.subr.mxu0 0.0
    %829 = vmatpush2.msra.mxu0 %v147
    %830 = vmatprep.subr.mxu0 0.0
    %831 = vmatpush2.msra.mxu0 %v146
    %832 = vmatprep.subr.mxu0 0.0
    %833 = vmatpush2.msra.mxu0 %v145
    %834 = vmatprep.subr.mxu0 0.0
    %835 = vmatpush2.msra.mxu0 %v144
    %836 = vmatprep.subr.mxu0 0.0
    %837 = vmatpush2.msra.mxu0 %v143
    %838 = vmatprep.subr.mxu0 0.0
    %839 = vmatpush2.msra.mxu0 %v142
    %840 = vmatprep.subr.mxu0 0.0
    %841 = vmatpush2.msra.mxu0 %v141
    %842 = vmatprep.subr.mxu0 0.0
    %843 = vmatpush2.msra.mxu0 %v140
    %844 = vmatprep.mubr.f32.mxu0 %v467
    %845 = vmatmul.mubr.f32.gmra.mxu0 %v465
    %v846 = vpop.f32.mrf.mxu0
    %v847 = vadd.f32 %v777, %v846
    %v848 = vpop.f32.mrf.mxu0
    %849 = vdwg.mxu0
    %850 = vmatprep.subr.mxu0 0.0
    %851 = vmatpush1.msra.mxu0 %v171
    %852 = vmatprep.subr.mxu0 0.0
    %853 = vmatpush1.msra.mxu0 %v170
    %854 = vmatprep.subr.mxu0 0.0
    %855 = vmatpush1.msra.mxu0 %v169
    %856 = vmatprep.subr.mxu0 0.0
    %857 = vmatpush1.msra.mxu0 %v168
    %858 = vmatprep.subr.mxu0 0.0
    %859 = vmatpush1.msra.mxu0 %v167
    %860 = vmatprep.subr.mxu0 0.0
    %861 = vmatpush1.msra.mxu0 %v166
    %862 = vmatprep.subr.mxu0 0.0
    %863 = vmatpush1.msra.mxu0 %v165
    %864 = vmatprep.subr.mxu0 0.0
    %865 = vmatpush1.msra.mxu0 %v164
    %866 = vmatprep.subr.mxu0 0.0
    %867 = vmatpush1.msra.mxu0 %v163
    %868 = vmatprep.subr.mxu0 0.0
    %869 = vmatpush1.msra.mxu0 %v162
    %870 = vmatprep.subr.mxu0 0.0
    %871 = vmatpush1.msra.mxu0 %v161
    %872 = vmatprep.subr.mxu0 0.0
    %873 = vmatpush1.msra.mxu0 %v160
    %874 = vmatprep.subr.mxu0 0.0
    %875 = vmatpush1.msra.mxu0 %v159
    %876 = vmatprep.subr.mxu0 0.0
    %877 = vmatpush1.msra.mxu0 %v158
    %878 = vmatprep.subr.mxu0 0.0
    %879 = vmatpush1.msra.mxu0 %v157
    %880 = vmatprep.subr.mxu0 0.0
    %881 = vmatpush1.msra.mxu0 %v156
    %882 = vmatprep.subr.mxu0 0.0
    %883 = vmatpush2.msra.mxu0 %v187
    %884 = vmatprep.subr.mxu0 0.0
    %885 = vmatpush2.msra.mxu0 %v186
    %886 = vmatprep.subr.mxu0 0.0
    %887 = vmatpush2.msra.mxu0 %v185
    %888 = vmatprep.subr.mxu0 0.0
    %889 = vmatpush2.msra.mxu0 %v184
    %890 = vmatprep.subr.mxu0 0.0
    %891 = vmatpush2.msra.mxu0 %v183
    %892 = vmatprep.subr.mxu0 0.0
    %893 = vmatpush2.msra.mxu0 %v182
    %894 = vmatprep.subr.mxu0 0.0
    %895 = vmatpush2.msra.mxu0 %v181
    %896 = vmatprep.subr.mxu0 0.0
    %897 = vmatpush2.msra.mxu0 %v180
    %898 = vmatprep.subr.mxu0 0.0
    %899 = vmatpush2.msra.mxu0 %v179
    %900 = vmatprep.subr.mxu0 0.0
    %901 = vmatpush2.msra.mxu0 %v178
    %902 = vmatprep.subr.mxu0 0.0
    %903 = vmatpush2.msra.mxu0 %v177
    %904 = vmatprep.subr.mxu0 0.0
    %905 = vmatpush2.msra.mxu0 %v176
    %906 = vmatprep.subr.mxu0 0.0
    %907 = vmatpush2.msra.mxu0 %v175
    %908 = vmatprep.subr.mxu0 0.0
    %909 = vmatpush2.msra.mxu0 %v174
    %910 = vmatprep.subr.mxu0 0.0
    %911 = vmatpush2.msra.mxu0 %v173
    %912 = vmatprep.subr.mxu0 0.0
    %913 = vmatpush2.msra.mxu0 %v172
    %914 = vmatprep.mubr.f32.mxu0 %v483
    %915 = vmatmul.mubr.f32.gmra.mxu0 %v475
    %v916 = vpop.f32.mrf.mxu0
    %v917 = vadd.f32 %v847, %v916
    %v918 = vpop.f32.mrf.mxu0
    %919 = vdwg.mxu0
    %920 = vmatprep.subr.mxu0 0.0
    %921 = vmatpush1.msra.mxu0 %v203
    %922 = vmatprep.subr.mxu0 0.0
    %923 = vmatpush1.msra.mxu0 %v202
    %924 = vmatprep.subr.mxu0 0.0
    %925 = vmatpush1.msra.mxu0 %v201
    %926 = vmatprep.subr.mxu0 0.0
    %927 = vmatpush1.msra.mxu0 %v200
    %928 = vmatprep.subr.mxu0 0.0
    %929 = vmatpush1.msra.mxu0 %v199
    %930 = vmatprep.subr.mxu0 0.0
    %931 = vmatpush1.msra.mxu0 %v198
    %932 = vmatprep.subr.mxu0 0.0
    %933 = vmatpush1.msra.mxu0 %v197
    %934 = vmatprep.subr.mxu0 0.0
    %935 = vmatpush1.msra.mxu0 %v196
    %936 = vmatprep.subr.mxu0 0.0
    %937 = vmatpush1.msra.mxu0 %v195
    %938 = vmatprep.subr.mxu0 0.0
    %939 = vmatpush1.msra.mxu0 %v194
    %940 = vmatprep.subr.mxu0 0.0
    %941 = vmatpush1.msra.mxu0 %v193
    %942 = vmatprep.subr.mxu0 0.0
    %943 = vmatpush1.msra.mxu0 %v192
    %944 = vmatprep.subr.mxu0 0.0
    %945 = vmatpush1.msra.mxu0 %v191
    %946 = vmatprep.subr.mxu0 0.0
    %947 = vmatpush1.msra.mxu0 %v190
    %948 = vmatprep.subr.mxu0 0.0
    %949 = vmatpush1.msra.mxu0 %v189
    %950 = vmatprep.subr.mxu0 0.0
    %951 = vmatpush1.msra.mxu0 %v188
    %952 = vmatprep.subr.mxu0 0.0
    %953 = vmatpush2.msra.mxu0 %v219
    %954 = vmatprep.subr.mxu0 0.0
    %955 = vmatpush2.msra.mxu0 %v218
    %956 = vmatprep.subr.mxu0 0.0
    %957 = vmatpush2.msra.mxu0 %v217
    %958 = vmatprep.subr.mxu0 0.0
    %959 = vmatpush2.msra.mxu0 %v216
    %960 = vmatprep.subr.mxu0 0.0
    %961 = vmatpush2.msra.mxu0 %v215
    %962 = vmatprep.subr.mxu0 0.0
    %963 = vmatpush2.msra.mxu0 %v214
    %964 = vmatprep.subr.mxu0 0.0
    %965 = vmatpush2.msra.mxu0 %v213
    %966 = vmatprep.subr.mxu0 0.0
    %967 = vmatpush2.msra.mxu0 %v212
    %968 = vmatprep.subr.mxu0 0.0
    %969 = vmatpush2.msra.mxu0 %v211
    %970 = vmatprep.subr.mxu0 0.0
    %971 = vmatpush2.msra.mxu0 %v210
    %972 = vmatprep.subr.mxu0 0.0
    %973 = vmatpush2.msra.mxu0 %v209
    %974 = vmatprep.subr.mxu0 0.0
    %975 = vmatpush2.msra.mxu0 %v208
    %976 = vmatprep.subr.mxu0 0.0
    %977 = vmatpush2.msra.mxu0 %v207
    %978 = vmatprep.subr.mxu0 0.0
    %979 = vmatpush2.msra.mxu0 %v206
    %980 = vmatprep.subr.mxu0 0.0
    %981 = vmatpush2.msra.mxu0 %v205
    %982 = vmatprep.subr.mxu0 0.0
    %983 = vmatpush2.msra.mxu0 %v204
    %984 = vmatprep.mubr.f32.mxu0 %v484
    %985 = vmatmul.mubr.f32.gmra.mxu0 %v482
    %v986 = vpop.f32.mrf.mxu0
    %v987 = vadd.f32 %v917, %v986
    %v988 = vpop.f32.mrf.mxu0
    %989 = vdwg.mxu0
    %990 = vmatprep.subr.mxu0 0.0
    %991 = vmatpush1.msra.mxu0 %v235
    %992 = vmatprep.subr.mxu0 0.0
    %993 = vmatpush1.msra.mxu0 %v234
    %994 = vmatprep.subr.mxu0 0.0
    %995 = vmatpush1.msra.mxu0 %v233
    %996 = vmatprep.subr.mxu0 0.0
    %997 = vmatpush1.msra.mxu0 %v232
    %998 = vmatprep.subr.mxu0 0.0
    %999 = vmatpush1.msra.mxu0 %v231
    %1000 = vmatprep.subr.mxu0 0.0
    %1001 = vmatpush1.msra.mxu0 %v230
    %1002 = vmatprep.subr.mxu0 0.0
    %1003 = vmatpush1.msra.mxu0 %v229
    %1004 = vmatprep.subr.mxu0 0.0
    %1005 = vmatpush1.msra.mxu0 %v228
    %1006 = vmatprep.subr.mxu0 0.0
    %1007 = vmatpush1.msra.mxu0 %v227
    %1008 = vmatprep.subr.mxu0 0.0
    %1009 = vmatpush1.msra.mxu0 %v226
    %1010 = vmatprep.subr.mxu0 0.0
    %1011 = vmatpush1.msra.mxu0 %v225
    %1012 = vmatprep.subr.mxu0 0.0
    %1013 = vmatpush1.msra.mxu0 %v224
    %1014 = vmatprep.subr.mxu0 0.0
    %1015 = vmatpush1.msra.mxu0 %v223
    %1016 = vmatprep.subr.mxu0 0.0
    %1017 = vmatpush1.msra.mxu0 %v222
    %1018 = vmatprep.subr.mxu0 0.0
    %1019 = vmatpush1.msra.mxu0 %v221
    %1020 = vmatprep.subr.mxu0 0.0
    %1021 = vmatpush1.msra.mxu0 %v220
    %1022 = vmatprep.subr.mxu0 0.0
    %1023 = vmatpush2.msra.mxu0 %v251
    %1024 = vmatprep.subr.mxu0 0.0
    %1025 = vmatpush2.msra.mxu0 %v250
    %1026 = vmatprep.subr.mxu0 0.0
    %1027 = vmatpush2.msra.mxu0 %v249
    %1028 = vmatprep.subr.mxu0 0.0
    %1029 = vmatpush2.msra.mxu0 %v248
    %1030 = vmatprep.subr.mxu0 0.0
    %1031 = vmatpush2.msra.mxu0 %v247
    %1032 = vmatprep.subr.mxu0 0.0
    %1033 = vmatpush2.msra.mxu0 %v246
    %1034 = vmatprep.subr.mxu0 0.0
    %1035 = vmatpush2.msra.mxu0 %v245
    %1036 = vmatprep.subr.mxu0 0.0
    %1037 = vmatpush2.msra.mxu0 %v244
    %1038 = vmatprep.subr.mxu0 0.0
    %1039 = vmatpush2.msra.mxu0 %v243
    %1040 = vmatprep.subr.mxu0 0.0
    %1041 = vmatpush2.msra.mxu0 %v242
    %1042 = vmatprep.subr.mxu0 0.0
    %1043 = vmatpush2.msra.mxu0 %v241
    %1044 = vmatprep.subr.mxu0 0.0
    %1045 = vmatpush2.msra.mxu0 %v240
    %1046 = vmatprep.subr.mxu0 0.0
    %1047 = vmatpush2.msra.mxu0 %v239
    %1048 = vmatprep.subr.mxu0 0.0
    %1049 = vmatpush2.msra.mxu0 %v238
    %1050 = vmatprep.subr.mxu0 0.0
    %1051 = vmatpush2.msra.mxu0 %v237
    %1052 = vmatprep.subr.mxu0 0.0
    %1053 = vmatpush2.msra.mxu0 %v236
    %1054 = vmatprep.mubr.f32.mxu0 %v500
    %1055 = vmatmul.mubr.f32.gmra.mxu0 %v492
    %v1056 = vpop.f32.mrf.mxu0
    %v1057 = vadd.f32 %v987, %v1056
    %v1058 = vpop.f32.mrf.mxu0
    %1059 = vdwg.mxu0
    %1060 = vmatprep.subr.mxu0 0.0
    %1061 = vmatpush1.msra.mxu0 %v267
    %1062 = vmatprep.subr.mxu0 0.0
    %1063 = vmatpush1.msra.mxu0 %v266
    %1064 = vmatprep.subr.mxu0 0.0
    %1065 = vmatpush1.msra.mxu0 %v265
    %1066 = vmatprep.subr.mxu0 0.0
    %1067 = vmatpush1.msra.mxu0 %v264
    %1068 = vmatprep.subr.mxu0 0.0
    %1069 = vmatpush1.msra.mxu0 %v263
    %1070 = vmatprep.subr.mxu0 0.0
    %1071 = vmatpush1.msra.mxu0 %v262
    %1072 = vmatprep.subr.mxu0 0.0
    %1073 = vmatpush1.msra.mxu0 %v261
    %1074 = vmatprep.subr.mxu0 0.0
    %1075 = vmatpush1.msra.mxu0 %v260
    %1076 = vmatprep.subr.mxu0 0.0
    %1077 = vmatpush1.msra.mxu0 %v259
    %1078 = vmatprep.subr.mxu0 0.0
    %1079 = vmatpush1.msra.mxu0 %v258
    %1080 = vmatprep.subr.mxu0 0.0
    %1081 = vmatpush1.msra.mxu0 %v257
    %1082 = vmatprep.subr.mxu0 0.0
    %1083 = vmatpush1.msra.mxu0 %v256
    %1084 = vmatprep.subr.mxu0 0.0
    %1085 = vmatpush1.msra.mxu0 %v255
    %1086 = vmatprep.subr.mxu0 0.0
    %1087 = vmatpush1.msra.mxu0 %v254
    %1088 = vmatprep.subr.mxu0 0.0
    %1089 = vmatpush1.msra.mxu0 %v253
    %1090 = vmatprep.subr.mxu0 0.0
    %1091 = vmatpush1.msra.mxu0 %v252
    %1092 = vmatprep.subr.mxu0 0.0
    %1093 = vmatpush2.msra.mxu0 %v283
    %1094 = vmatprep.subr.mxu0 0.0
    %1095 = vmatpush2.msra.mxu0 %v282
    %1096 = vmatprep.subr.mxu0 0.0
    %1097 = vmatpush2.msra.mxu0 %v281
    %1098 = vmatprep.subr.mxu0 0.0
    %1099 = vmatpush2.msra.mxu0 %v280
    %1100 = vmatprep.subr.mxu0 0.0
    %1101 = vmatpush2.msra.mxu0 %v279
    %1102 = vmatprep.subr.mxu0 0.0
    %1103 = vmatpush2.msra.mxu0 %v278
    %1104 = vmatprep.subr.mxu0 0.0
    %1105 = vmatpush2.msra.mxu0 %v277
    %1106 = vmatprep.subr.mxu0 0.0
    %1107 = vmatpush2.msra.mxu0 %v276
    %1108 = vmatprep.subr.mxu0 0.0
    %1109 = vmatpush2.msra.mxu0 %v275
    %1110 = vmatprep.subr.mxu0 0.0
    %1111 = vmatpush2.msra.mxu0 %v274
    %1112 = vmatprep.subr.mxu0 0.0
    %1113 = vmatpush2.msra.mxu0 %v273
    %1114 = vmatprep.subr.mxu0 0.0
    %1115 = vmatpush2.msra.mxu0 %v272
    %1116 = vmatprep.subr.mxu0 0.0
    %1117 = vmatpush2.msra.mxu0 %v271
    %1118 = vmatprep.subr.mxu0 0.0
    %1119 = vmatpush2.msra.mxu0 %v270
    %1120 = vmatprep.subr.mxu0 0.0
    %1121 = vmatpush2.msra.mxu0 %v269
    %1122 = vmatprep.subr.mxu0 0.0
    %1123 = vmatpush2.msra.mxu0 %v268
    %1124 = vmatprep.mubr.f32.mxu0 %v501
    %1125 = vmatmul.mubr.f32.gmra.mxu0 %v499
    %v1126 = vpop.f32.mrf.mxu0
    %v1127 = vadd.f32 %v1057, %v1126
    %v1128 = vpop.f32.mrf.mxu0
    %1129 = vdwg.mxu0
    %1130 = vmatprep.subr.mxu0 0.0
    %1131 = vmatpush1.msra.mxu0 %v299
    %1132 = vmatprep.subr.mxu0 0.0
    %1133 = vmatpush1.msra.mxu0 %v298
    %1134 = vmatprep.subr.mxu0 0.0
    %1135 = vmatpush1.msra.mxu0 %v297
    %1136 = vmatprep.subr.mxu0 0.0
    %1137 = vmatpush1.msra.mxu0 %v296
    %1138 = vmatprep.subr.mxu0 0.0
    %1139 = vmatpush1.msra.mxu0 %v295
    %1140 = vmatprep.subr.mxu0 0.0
    %1141 = vmatpush1.msra.mxu0 %v294
    %1142 = vmatprep.subr.mxu0 0.0
    %1143 = vmatpush1.msra.mxu0 %v293
    %1144 = vmatprep.subr.mxu0 0.0
    %1145 = vmatpush1.msra.mxu0 %v292
    %1146 = vmatprep.subr.mxu0 0.0
    %1147 = vmatpush1.msra.mxu0 %v291
    %1148 = vmatprep.subr.mxu0 0.0
    %1149 = vmatpush1.msra.mxu0 %v290
    %1150 = vmatprep.subr.mxu0 0.0
    %1151 = vmatpush1.msra.mxu0 %v289
    %1152 = vmatprep.subr.mxu0 0.0
    %1153 = vmatpush1.msra.mxu0 %v288
    %1154 = vmatprep.subr.mxu0 0.0
    %1155 = vmatpush1.msra.mxu0 %v287
    %1156 = vmatprep.subr.mxu0 0.0
    %1157 = vmatpush1.msra.mxu0 %v286
    %1158 = vmatprep.subr.mxu0 0.0
    %1159 = vmatpush1.msra.mxu0 %v285
    %1160 = vmatprep.subr.mxu0 0.0
    %1161 = vmatpush1.msra.mxu0 %v284
    %1162 = vmatprep.subr.mxu0 0.0
    %1163 = vmatpush2.msra.mxu0 %v315
    %1164 = vmatprep.subr.mxu0 0.0
    %1165 = vmatpush2.msra.mxu0 %v314
    %1166 = vmatprep.subr.mxu0 0.0
    %1167 = vmatpush2.msra.mxu0 %v313
    %1168 = vmatprep.subr.mxu0 0.0
    %1169 = vmatpush2.msra.mxu0 %v312
    %1170 = vmatprep.subr.mxu0 0.0
    %1171 = vmatpush2.msra.mxu0 %v311
    %1172 = vmatprep.subr.mxu0 0.0
    %1173 = vmatpush2.msra.mxu0 %v310
    %1174 = vmatprep.subr.mxu0 0.0
    %1175 = vmatpush2.msra.mxu0 %v309
    %1176 = vmatprep.subr.mxu0 0.0
    %1177 = vmatpush2.msra.mxu0 %v308
    %1178 = vmatprep.subr.mxu0 0.0
    %1179 = vmatpush2.msra.mxu0 %v307
    %1180 = vmatprep.subr.mxu0 0.0
    %1181 = vmatpush2.msra.mxu0 %v306
    %1182 = vmatprep.subr.mxu0 0.0
    %1183 = vmatpush2.msra.mxu0 %v305
    %1184 = vmatprep.subr.mxu0 0.0
    %1185 = vmatpush2.msra.mxu0 %v304
    %1186 = vmatprep.subr.mxu0 0.0
    %1187 = vmatpush2.msra.mxu0 %v303
    %1188 = vmatprep.subr.mxu0 0.0
    %1189 = vmatpush2.msra.mxu0 %v302
    %1190 = vmatprep.subr.mxu0 0.0
    %1191 = vmatpush2.msra.mxu0 %v301
    %1192 = vmatprep.subr.mxu0 0.0
    %1193 = vmatpush2.msra.mxu0 %v300
    %1194 = vmatprep.mubr.f32.mxu0 %v517
    %1195 = vmatmul.mubr.f32.gmra.mxu0 %v509
    %v1196 = vpop.f32.mrf.mxu0
    %v1197 = vadd.f32 %v1127, %v1196
    %v1198 = vpop.f32.mrf.mxu0
    %1199 = vdwg.mxu0
    %1200 = vmatprep.subr.mxu0 0.0
    %1201 = vmatpush1.msra.mxu0 %v331
    %1202 = vmatprep.subr.mxu0 0.0
    %1203 = vmatpush1.msra.mxu0 %v330
    %1204 = vmatprep.subr.mxu0 0.0
    %1205 = vmatpush1.msra.mxu0 %v329
    %1206 = vmatprep.subr.mxu0 0.0
    %1207 = vmatpush1.msra.mxu0 %v328
    %1208 = vmatprep.subr.mxu0 0.0
    %1209 = vmatpush1.msra.mxu0 %v327
    %1210 = vmatprep.subr.mxu0 0.0
    %1211 = vmatpush1.msra.mxu0 %v326
    %1212 = vmatprep.subr.mxu0 0.0
    %1213 = vmatpush1.msra.mxu0 %v325
    %1214 = vmatprep.subr.mxu0 0.0
    %1215 = vmatpush1.msra.mxu0 %v324
    %1216 = vmatprep.subr.mxu0 0.0
    %1217 = vmatpush1.msra.mxu0 %v323
    %1218 = vmatprep.subr.mxu0 0.0
    %1219 = vmatpush1.msra.mxu0 %v322
    %1220 = vmatprep.subr.mxu0 0.0
    %1221 = vmatpush1.msra.mxu0 %v321
    %1222 = vmatprep.subr.mxu0 0.0
    %1223 = vmatpush1.msra.mxu0 %v320
    %1224 = vmatprep.subr.mxu0 0.0
    %1225 = vmatpush1.msra.mxu0 %v319
    %1226 = vmatprep.subr.mxu0 0.0
    %1227 = vmatpush1.msra.mxu0 %v318
    %1228 = vmatprep.subr.mxu0 0.0
    %1229 = vmatpush1.msra.mxu0 %v317
    %1230 = vmatprep.subr.mxu0 0.0
    %1231 = vmatpush1.msra.mxu0 %v316
    %1232 = vmatprep.subr.mxu0 0.0
    %1233 = vmatpush2.msra.mxu0 %v347
    %1234 = vmatprep.subr.mxu0 0.0
    %1235 = vmatpush2.msra.mxu0 %v346
    %1236 = vmatprep.subr.mxu0 0.0
    %1237 = vmatpush2.msra.mxu0 %v345
    %1238 = vmatprep.subr.mxu0 0.0
    %1239 = vmatpush2.msra.mxu0 %v344
    %1240 = vmatprep.subr.mxu0 0.0
    %1241 = vmatpush2.msra.mxu0 %v343
    %1242 = vmatprep.subr.mxu0 0.0
    %1243 = vmatpush2.msra.mxu0 %v342
    %1244 = vmatprep.subr.mxu0 0.0
    %1245 = vmatpush2.msra.mxu0 %v341
    %1246 = vmatprep.subr.mxu0 0.0
    %1247 = vmatpush2.msra.mxu0 %v340
    %1248 = vmatprep.subr.mxu0 0.0
    %1249 = vmatpush2.msra.mxu0 %v339
    %1250 = vmatprep.subr.mxu0 0.0
    %1251 = vmatpush2.msra.mxu0 %v338
    %1252 = vmatprep.subr.mxu0 0.0
    %1253 = vmatpush2.msra.mxu0 %v337
    %1254 = vmatprep.subr.mxu0 0.0
    %1255 = vmatpush2.msra.mxu0 %v336
    %1256 = vmatprep.subr.mxu0 0.0
    %1257 = vmatpush2.msra.mxu0 %v335
    %1258 = vmatprep.subr.mxu0 0.0
    %1259 = vmatpush2.msra.mxu0 %v334
    %1260 = vmatprep.subr.mxu0 0.0
    %1261 = vmatpush2.msra.mxu0 %v333
    %1262 = vmatprep.subr.mxu0 0.0
    %1263 = vmatpush2.msra.mxu0 %v332
    %1264 = vmatprep.mubr.f32.mxu0 %v518
    %1265 = vmatmul.mubr.f32.gmra.mxu0 %v516
    %v1266 = vpop.f32.mrf.mxu0
    %v1267 = vadd.f32 %v1197, %v1266
    %v1268 = vpop.f32.mrf.mxu0
    %1269 = vdwg.mxu0
    %1270 = vmatprep.subr.mxu0 0.0
    %1271 = vmatpush1.msra.mxu0 %v363
    %1272 = vmatprep.subr.mxu0 0.0
    %1273 = vmatpush1.msra.mxu0 %v362
    %1274 = vmatprep.subr.mxu0 0.0
    %1275 = vmatpush1.msra.mxu0 %v361
    %1276 = vmatprep.subr.mxu0 0.0
    %1277 = vmatpush1.msra.mxu0 %v360
    %1278 = vmatprep.subr.mxu0 0.0
    %1279 = vmatpush1.msra.mxu0 %v359
    %1280 = vmatprep.subr.mxu0 0.0
    %1281 = vmatpush1.msra.mxu0 %v358
    %1282 = vmatprep.subr.mxu0 0.0
    %1283 = vmatpush1.msra.mxu0 %v357
    %1284 = vmatprep.subr.mxu0 0.0
    %1285 = vmatpush1.msra.mxu0 %v356
    %1286 = vmatprep.subr.mxu0 0.0
    %1287 = vmatpush1.msra.mxu0 %v355
    %1288 = vmatprep.subr.mxu0 0.0
    %1289 = vmatpush1.msra.mxu0 %v354
    %1290 = vmatprep.subr.mxu0 0.0
    %1291 = vmatpush1.msra.mxu0 %v353
    %1292 = vmatprep.subr.mxu0 0.0
    %1293 = vmatpush1.msra.mxu0 %v352
    %1294 = vmatprep.subr.mxu0 0.0
    %1295 = vmatpush1.msra.mxu0 %v351
    %1296 = vmatprep.subr.mxu0 0.0
    %1297 = vmatpush1.msra.mxu0 %v350
    %1298 = vmatprep.subr.mxu0 0.0
    %1299 = vmatpush1.msra.mxu0 %v349
    %1300 = vmatprep.subr.mxu0 0.0
    %1301 = vmatpush1.msra.mxu0 %v348
    %1302 = vmatprep.subr.mxu0 0.0
    %1303 = vmatpush2.msra.mxu0 %v379
    %1304 = vmatprep.subr.mxu0 0.0
    %1305 = vmatpush2.msra.mxu0 %v378
    %1306 = vmatprep.subr.mxu0 0.0
    %1307 = vmatpush2.msra.mxu0 %v377
    %1308 = vmatprep.subr.mxu0 0.0
    %1309 = vmatpush2.msra.mxu0 %v376
    %1310 = vmatprep.subr.mxu0 0.0
    %1311 = vmatpush2.msra.mxu0 %v375
    %1312 = vmatprep.subr.mxu0 0.0
    %1313 = vmatpush2.msra.mxu0 %v374
    %1314 = vmatprep.subr.mxu0 0.0
    %1315 = vmatpush2.msra.mxu0 %v373
    %1316 = vmatprep.subr.mxu0 0.0
    %1317 = vmatpush2.msra.mxu0 %v372
    %1318 = vmatprep.subr.mxu0 0.0
    %1319 = vmatpush2.msra.mxu0 %v371
    %1320 = vmatprep.subr.mxu0 0.0
    %1321 = vmatpush2.msra.mxu0 %v370
    %1322 = vmatprep.subr.mxu0 0.0
    %1323 = vmatpush2.msra.mxu0 %v369
    %1324 = vmatprep.subr.mxu0 0.0
    %1325 = vmatpush2.msra.mxu0 %v368
    %1326 = vmatprep.subr.mxu0 0.0
    %1327 = vmatpush2.msra.mxu0 %v367
    %1328 = vmatprep.subr.mxu0 0.0
    %1329 = vmatpush2.msra.mxu0 %v366
    %1330 = vmatprep.subr.mxu0 0.0
    %1331 = vmatpush2.msra.mxu0 %v365
    %1332 = vmatprep.subr.mxu0 0.0
    %1333 = vmatpush2.msra.mxu0 %v364
    %1334 = vmatprep.mubr.f32.mxu0 %v534
    %1335 = vmatmul.mubr.f32.gmra.mxu0 %v526
    %v1336 = vpop.f32.mrf.mxu0
    %v1337 = vadd.f32 %v1267, %v1336
    %v1338 = vpop.f32.mrf.mxu0
    %1339 = vdwg.mxu0
    %1340 = vmatprep.subr.mxu0 0.0
    %1341 = vmatpush1.msra.mxu0 %v395
    %1342 = vmatprep.subr.mxu0 0.0
    %1343 = vmatpush1.msra.mxu0 %v394
    %1344 = vmatprep.subr.mxu0 0.0
    %1345 = vmatpush1.msra.mxu0 %v393
    %1346 = vmatprep.subr.mxu0 0.0
    %1347 = vmatpush1.msra.mxu0 %v392
    %1348 = vmatprep.subr.mxu0 0.0
    %1349 = vmatpush1.msra.mxu0 %v391
    %1350 = vmatprep.subr.mxu0 0.0
    %1351 = vmatpush1.msra.mxu0 %v390
    %1352 = vmatprep.subr.mxu0 0.0
    %1353 = vmatpush1.msra.mxu0 %v389
    %1354 = vmatprep.subr.mxu0 0.0
    %1355 = vmatpush1.msra.mxu0 %v388
    %1356 = vmatprep.subr.mxu0 0.0
    %1357 = vmatpush1.msra.mxu0 %v387
    %1358 = vmatprep.subr.mxu0 0.0
    %1359 = vmatpush1.msra.mxu0 %v386
    %1360 = vmatprep.subr.mxu0 0.0
    %1361 = vmatpush1.msra.mxu0 %v385
    %1362 = vmatprep.subr.mxu0 0.0
    %1363 = vmatpush1.msra.mxu0 %v384
    %1364 = vmatprep.subr.mxu0 0.0
    %1365 = vmatpush1.msra.mxu0 %v383
    %1366 = vmatprep.subr.mxu0 0.0
    %1367 = vmatpush1.msra.mxu0 %v382
    %1368 = vmatprep.subr.mxu0 0.0
    %1369 = vmatpush1.msra.mxu0 %v381
    %1370 = vmatprep.subr.mxu0 0.0
    %1371 = vmatpush1.msra.mxu0 %v380
    %1372 = vmatprep.subr.mxu0 0.0
    %1373 = vmatpush2.msra.mxu0 %v411
    %1374 = vmatprep.subr.mxu0 0.0
    %1375 = vmatpush2.msra.mxu0 %v410
    %1376 = vmatprep.subr.mxu0 0.0
    %1377 = vmatpush2.msra.mxu0 %v409
    %1378 = vmatprep.subr.mxu0 0.0
    %1379 = vmatpush2.msra.mxu0 %v408
    %1380 = vmatprep.subr.mxu0 0.0
    %1381 = vmatpush2.msra.mxu0 %v407
    %1382 = vmatprep.subr.mxu0 0.0
    %1383 = vmatpush2.msra.mxu0 %v406
    %1384 = vmatprep.subr.mxu0 0.0
    %1385 = vmatpush2.msra.mxu0 %v405
    %1386 = vmatprep.subr.mxu0 0.0
    %1387 = vmatpush2.msra.mxu0 %v404
    %1388 = vmatprep.subr.mxu0 0.0
    %1389 = vmatpush2.msra.mxu0 %v403
    %1390 = vmatprep.subr.mxu0 0.0
    %1391 = vmatpush2.msra.mxu0 %v402
    %1392 = vmatprep.subr.mxu0 0.0
    %1393 = vmatpush2.msra.mxu0 %v401
    %1394 = vmatprep.subr.mxu0 0.0
    %1395 = vmatpush2.msra.mxu0 %v400
    %1396 = vmatprep.subr.mxu0 0.0
    %1397 = vmatpush2.msra.mxu0 %v399
    %1398 = vmatprep.subr.mxu0 0.0
    %1399 = vmatpush2.msra.mxu0 %v398
    %1400 = vmatprep.subr.mxu0 0.0
    %1401 = vmatpush2.msra.mxu0 %v397
    %1402 = vmatprep.subr.mxu0 0.0
    %1403 = vmatpush2.msra.mxu0 %v396
    %1404 = vmatprep.mubr.f32.mxu0 %v535
    %1405 = vmatmul.mubr.f32.gmra.mxu0 %v533
    %v1406 = vpop.f32.mrf.mxu0
    %v1407 = vadd.f32 %v1337, %v1406
    %v1408 = vpop.f32.mrf.mxu0
    %1409 = vdwg.mxu0
    %1410 = vmatprep.subr.mxu0 0.0
    %1411 = vmatpush1.msra.mxu0 0.0
    %1412 = vmatprep.subr.mxu0 0.0
    %1413 = vmatpush1.msra.mxu0 0.0
    %1414 = vmatprep.subr.mxu0 0.0
    %1415 = vmatpush1.msra.mxu0 0.0
    %1416 = vmatprep.subr.mxu0 0.0
    %1417 = vmatpush1.msra.mxu0 0.0
    %1418 = vmatprep.subr.mxu0 0.0
    %1419 = vmatpush1.msra.mxu0 0.0
    %1420 = vmatprep.subr.mxu0 0.0
    %1421 = vmatpush1.msra.mxu0 0.0
    %1422 = vmatprep.subr.mxu0 0.0
    %1423 = vmatpush1.msra.mxu0 0.0
    %1424 = vmatprep.subr.mxu0 0.0
    %1425 = vmatpush1.msra.mxu0 0.0
    %1426 = vmatprep.subr.mxu0 0.0
    %1427 = vmatpush1.msra.mxu0 %v419
    %1428 = vmatprep.subr.mxu0 0.0
    %1429 = vmatpush1.msra.mxu0 %v418
    %1430 = vmatprep.subr.mxu0 0.0
    %1431 = vmatpush1.msra.mxu0 %v417
    %1432 = vmatprep.subr.mxu0 0.0
    %1433 = vmatpush1.msra.mxu0 %v416
    %1434 = vmatprep.subr.mxu0 0.0
    %1435 = vmatpush1.msra.mxu0 %v415
    %1436 = vmatprep.subr.mxu0 0.0
    %1437 = vmatpush1.msra.mxu0 %v414
    %1438 = vmatprep.subr.mxu0 0.0
    %1439 = vmatpush1.msra.mxu0 %v413
    %1440 = vmatprep.subr.mxu0 0.0
    %1441 = vmatpush1.msra.mxu0 %v412
    %1442 = vmatprep.subr.mxu0 0.0
    %1443 = vmatpush2.msra.mxu0 0.0
    %1444 = vmatprep.subr.mxu0 0.0
    %1445 = vmatpush2.msra.mxu0 0.0
    %1446 = vmatprep.subr.mxu0 0.0
    %1447 = vmatpush2.msra.mxu0 0.0
    %1448 = vmatprep.subr.mxu0 0.0
    %1449 = vmatpush2.msra.mxu0 0.0
    %1450 = vmatprep.subr.mxu0 0.0
    %1451 = vmatpush2.msra.mxu0 0.0
    %1452 = vmatprep.subr.mxu0 0.0
    %1453 = vmatpush2.msra.mxu0 0.0
    %1454 = vmatprep.subr.mxu0 0.0
    %1455 = vmatpush2.msra.mxu0 0.0
    %1456 = vmatprep.subr.mxu0 0.0
    %1457 = vmatpush2.msra.mxu0 0.0
    %1458 = vmatprep.subr.mxu0 0.0
    %1459 = vmatpush2.msra.mxu0 0.0
    %1460 = vmatprep.subr.mxu0 0.0
    %1461 = vmatpush2.msra.mxu0 0.0
    %1462 = vmatprep.subr.mxu0 0.0
    %1463 = vmatpush2.msra.mxu0 0.0
    %1464 = vmatprep.subr.mxu0 0.0
    %1465 = vmatpush2.msra.mxu0 0.0
    %1466 = vmatprep.subr.mxu0 0.0
    %1467 = vmatpush2.msra.mxu0 0.0
    %1468 = vmatprep.subr.mxu0 0.0
    %1469 = vmatpush2.msra.mxu0 0.0
    %1470 = vmatprep.subr.mxu0 0.0
    %1471 = vmatpush2.msra.mxu0 0.0
    %1472 = vmatprep.subr.mxu0 0.0
    %1473 = vmatpush2.msra.mxu0 0.0
    %1474 = vmatprep.mubr.f32.mxu0 0.0
    %1475 = vmatmul.mubr.f32.gmra.mxu0 %v568
    %v1476 = vpop.f32.mrf.mxu0
    %v1477 = vadd.f32 %v1407, %v1476
    %v1478 = vpop.f32.mrf.mxu0
    %1479 = vdwg.mxu0
    %v1480 = vmax.f32 %v1477, 0.0
    %v1481 = vld [vmem:[%s3] sm:$0xff]
    %v1482 = vld [vmem:[%s3 + $0x8] sm:$0xff]
    %v1483 = vld [vmem:[%s3 + $0x10] sm:$0xff]
    %v1484 = vld [vmem:[%s3 + $0x18] sm:$0xff]
    %v1485 = vld [vmem:[%s3 + $0x20] sm:$0xff]
    %v1486 = vld [vmem:[%s3 + $0x28] sm:$0xff]
    %v1487 = vld [vmem:[%s3 + $0x30] sm:$0xff]
    %v1488 = vld [vmem:[%s3 + $0x38] sm:$0xff]
    %v1489 = vld [vmem:[%s3 + $0x40] sm:$0xff]
    %v1490 = vld [vmem:[%s3 + $0x48] sm:$0xff]
    %v1491 = vld [vmem:[%s3 + $0x50] sm:$0xff]
    %v1492 = vld [vmem:[%s3 + $0x58] sm:$0xff]
    %v1493 = vld [vmem:[%s3 + $0x60] sm:$0xff]
    %v1494 = vld [vmem:[%s3 + $0x68] sm:$0xff]
    %v1495 = vld [vmem:[%s3 + $0x70] sm:$0xff]
    %v1496 = vld [vmem:[%s3 + $0x78] sm:$0xff]
    %v1497 = vld [vmem:[%s4] sm:$0x1]
    %v1499 = vlaneseq
    %v1500 = vshrl.u32 %v1499, 7
    %v1501 = vsub.s32 0, %v1500
    %v1502 = vrot.slane %v1497, %v1501
    %1504 = vmatprep.subr.mxu0 0.0
    %1505 = vmatpush1.msra.mxu0 %v1496
    %1506 = vmatprep.subr.mxu0 0.0
    %1507 = vmatpush1.msra.mxu0 %v1495
    %1508 = vmatprep.subr.mxu0 0.0
    %1509 = vmatpush1.msra.mxu0 %v1494
    %1510 = vmatprep.subr.mxu0 0.0
    %1511 = vmatpush1.msra.mxu0 %v1493
    %1512 = vmatprep.subr.mxu0 0.0
    %1513 = vmatpush1.msra.mxu0 %v1492
    %1514 = vmatprep.subr.mxu0 0.0
    %1515 = vmatpush1.msra.mxu0 %v1491
    %1516 = vmatprep.subr.mxu0 0.0
    %1517 = vmatpush1.msra.mxu0 %v1490
    %1518 = vmatprep.subr.mxu0 0.0
    %1519 = vmatpush1.msra.mxu0 %v1489
    %1520 = vmatprep.subr.mxu0 0.0
    %1521 = vmatpush1.msra.mxu0 %v1488
    %1522 = vmatprep.subr.mxu0 0.0
    %1523 = vmatpush1.msra.mxu0 %v1487
    %1524 = vmatprep.subr.mxu0 0.0
    %1525 = vmatpush1.msra.mxu0 %v1486
    %1526 = vmatprep.subr.mxu0 0.0
    %1527 = vmatpush1.msra.mxu0 %v1485
    %1528 = vmatprep.subr.mxu0 0.0
    %1529 = vmatpush1.msra.mxu0 %v1484
    %1530 = vmatprep.subr.mxu0 0.0
    %1531 = vmatpush1.msra.mxu0 %v1483
    %1532 = vmatprep.subr.mxu0 0.0
    %1533 = vmatpush1.msra.mxu0 %v1482
    %1534 = vmatprep.subr.mxu0 0.0
    %1535 = vmatpush1.msra.mxu0 %v1481
    %1536 = vmatprep.subr.mxu0 0.0
    %1537 = vmatpush2.msra.mxu0 0.0
    %1538 = vmatprep.subr.mxu0 0.0
    %1539 = vmatpush2.msra.mxu0 0.0
    %1540 = vmatprep.subr.mxu0 0.0
    %1541 = vmatpush2.msra.mxu0 0.0
    %1542 = vmatprep.subr.mxu0 0.0
    %1543 = vmatpush2.msra.mxu0 0.0
    %1544 = vmatprep.subr.mxu0 0.0
    %1545 = vmatpush2.msra.mxu0 0.0
    %1546 = vmatprep.subr.mxu0 0.0
    %1547 = vmatpush2.msra.mxu0 0.0
    %1548 = vmatprep.subr.mxu0 0.0
    %1549 = vmatpush2.msra.mxu0 0.0
    %1550 = vmatprep.subr.mxu0 0.0
    %1551 = vmatpush2.msra.mxu0 0.0
    %1552 = vmatprep.subr.mxu0 0.0
    %1553 = vmatpush2.msra.mxu0 0.0
    %1554 = vmatprep.subr.mxu0 0.0
    %1555 = vmatpush2.msra.mxu0 0.0
    %1556 = vmatprep.subr.mxu0 0.0
    %1557 = vmatpush2.msra.mxu0 0.0
    %1558 = vmatprep.subr.mxu0 0.0
    %1559 = vmatpush2.msra.mxu0 0.0
    %1560 = vmatprep.subr.mxu0 0.0
    %1561 = vmatpush2.msra.mxu0 0.0
    %1562 = vmatprep.subr.mxu0 0.0
    %1563 = vmatpush2.msra.mxu0 0.0
    %1564 = vmatprep.subr.mxu0 0.0
    %1565 = vmatpush2.msra.mxu0 0.0
    %1566 = vmatprep.subr.mxu0 0.0
    %1567 = vmatpush2.msra.mxu0 0.0
    %1568 = vmatprep.mubr.f32.mxu0 0.0
    %1569 = vmatmul.mubr.f32.gmra.mxu0 %v1480
    %v1570 = vpop.f32.mrf.mxu0
    %v1571 = vadd.f32 %v1502, %v1570
    %v1572 = vpop.f32.mrf.mxu0
    %1573 = vdwg.mxu0
    %vm1574 = vcmask 74752
    %1575 = vst.msk [vmem:[#allocation2] sm:$0x3] %vm1574, %v1571
    // Predicated region
    $region22: #{net_forward.3} parent=1 // pred_check
      _
    $region23: #{net_forward.3} parent=1 // pred_check_branch
      %1577 = sbr.rel (0) target = $region25
    $region24: #{net_forward.3} parent=1 // pred_region
      %s1579 = ssub.s32 32, 32
      %1580 = vsyncadd [#allocation3], %s1579
      %s1582 = sshll.u32 [#allocation2], 4
      %s1583 = int_to_ptr.vmem [resolvable:$true] %s1582
      %1585 = dma.vmem_to_hbm [thread:$0]  %s1583, 32, %s5, [#allocation3]
    $region25: #{net_forward.3} parent=1 // pred_fallthru
      _
    // Predicated region
    $region26: #{net_forward.3} parent=1 // pred_check
      _
    $region27: #{net_forward.3} parent=1 // pred_check_branch
      %1587 = sbr.rel (0) target = $region29
    $region28: #{net_forward.3} parent=1 // pred_region
      %1588 = dma.done [#allocation3], 32
    $region29: #{net_forward.3} parent=1 // pred_fallthru
      _
    %1589 = vsyncpa [#allocation3], 1

// kernel: net_forward.2
$region0: #{net_forward.2}
  #allocation0 [shape = 'u32[]', space=smem, size = 0x4, offset = 0x4, fixed_abs, tag = 'smem constant byte address 0x4 - core index']
  #allocation1 [shape = 'u32[144,128]{1,0:T(1,128)}', space=vmem, size = 0x12000, scoped, tag = 'internal scratch']
  #allocation2 [shape = 'f32[900,32]{1,0:T(8,128)}', space=vmem, size = 0x71000, scoped, tag = 'scratch operand']
  #allocation3 [shape = 'f32[838,32]{1,0:T(8,128)}', space=vmem, size = 0x69000, scoped, tag = 'scratch operand']
  #allocation4 [shape = 'f32[256,32]{1,0:T(8,128)}', space=vmem, size = 0x20000, scoped, tag = 'scratch operand']
  #allocation5 [shape = 'f32[222,64]{1,0:T(8,128)}', space=vmem, size = 0x1c000, scoped, tag = 'scratch operand']
  %s0 = inlined_call_operand.vmem [shape: f32[2,900,1], index: 0, kind: input, shape index: {}]
  %s1 = inlined_call_operand.vmem [shape: f32[9,32], index: 1, kind: input, shape index: {}]
  %s2 = inlined_call_operand.vmem [shape: f32[1,32], index: 2, kind: input, shape index: {}]
  %s3 = inlined_call_operand.vmem [shape: f32[9,32,64], index: 3, kind: input, shape index: {}]
  %s4 = inlined_call_operand.vmem [shape: f32[1,64], index: 4, kind: input, shape index: {}]
  %s5 = inlined_call_operand.vmem [shape: f32[256,807], index: 5, kind: input, shape index: {}]
  %s6 = inlined_call_operand.vmem [shape: f32[49,205], index: 6, kind: input, shape index: {}]
  %s7 = inlined_call_operand.vmem [shape: f32[2,49,64], index: 7, kind: output, shape index: {}]
  %s8 = sld [smem:[#allocation0]]
  $region61: #{net_forward.2} parent=0
    _
  %s10 = ssub.s32 1, %s8
  %s11 = scalar_select 0, %s10, %s8
  loop: start=0, step=1, limit=4
  $region2: #{net_forward.2} parent=0 // loop_pre_header
    _
  $region3: #{net_forward.2} parent=0 // loop_header
    %s13 = sphi 0, %s17
    %p14 = scmp.ge.s32.totalorder %s13, 4
    %s23 = sphi 0, %s25
    %s26 = sphi 0, %s23
    %s27 = sphi 0, %s26
    %s43 = sphi 0, %s27
    %s47 = sphi 0, %s47
    %s49 = sphi 0, %s47
    %s50 = sphi 0, %s49
    %s64 = sphi 0, %s50
    %s68 = sphi 0, %s68
    %s70 = sphi 0, %s68
    %s71 = sphi 0, %s70
    %s85 = sphi 0, %s71
    %s89 = sphi 0, %s89
    %s91 = sphi 0, %s89
    %s92 = sphi 0, %s91
    %s106 = sphi 0, %s92
    %s110 = sphi 0, %s110
    %s112 = sphi 0, %s110
    %s113 = sphi 0, %s112
    %s127 = sphi 0, %s113
    %s131 = sphi 0, %s131
    %s133 = sphi 0, %s131
    %s134 = sphi 0, %s133
    %s148 = sphi 0, %s134
    %s152 = sphi 0, %s152
    %s154 = sphi 0, %s152
    %s155 = sphi 0, %s154
    %s169 = sphi 0, %s155
    %s175 = sphi 0, %s177
    %s178 = sphi 0, %s175
    %s179 = sphi 0, %s178
    %s195 = sphi 0, %s179
  $region4: #{net_forward.2} parent=0 // loop_header_branch
    %16 = sbr.rel (%p14) target = $region8
  $region5: #{net_forward.2} parent=0 // loop_body
    %s18 = ssub.s32 %s13, 1
    %s19 = ssub.s32 %s13, 2
    %s20 = sadd.s32 %s13, 1
    %s21 = ssub.s32 %s13, %s20
    %p22 = scmp.eq.s32.totalorder %s21, 0
    %s24 = sadd.s32 %s23, 1
    %s25 = scalar_select %p22, %s23, %s24
    %p28 = pneg %p22
    %p29 = scmp.eq.s32.totalorder %s13, 1
    %p30 = por %p28, %p29
    %p31 = scmp.ne.s32.totalorder %s23, %s26
    %p32 = scmp.eq.s32.totalorder %s13, 0
    %p33 = por %p31, %p32
    %p34 = scmp.ne.s32.totalorder %s23, %s26
    %p35 = scmp.eq.s32.totalorder %s18, 1
    %p36 = por %p34, %p35
    %p37 = scmp.ne.s32.totalorder %s26, %s27
    %p38 = scmp.eq.s32.totalorder %s18, 0
    %p39 = por %p37, %p38
    %p40 = scmp.ne.s32.totalorder %s26, %s27
    %p41 = scmp.eq.s32.totalorder %s19, 1
    %p42 = por %p40, %p41
    %p44 = scmp.ne.s32.totalorder %s27, %s43
    %p45 = scmp.eq.s32.totalorder %s19, 0
    %p46 = por %p44, %p45
    %s48 = sadd.s32 %s47, 1
    %p51 = scmp.eq.s32.totalorder %s13, 1
    %p52 = scmp.ne.s32.totalorder %s47, %s49
    %p53 = scmp.eq.s32.totalorder %s13, 0
    %p54 = por %p52, %p53
    %p55 = scmp.ne.s32.totalorder %s47, %s49
    %p56 = scmp.eq.s32.totalorder %s18, 1
    %p57 = por %p55, %p56
    %p58 = scmp.ne.s32.totalorder %s49, %s50
    %p59 = scmp.eq.s32.totalorder %s18, 0
    %p60 = por %p58, %p59
    %p61 = scmp.ne.s32.totalorder %s49, %s50
    %p62 = scmp.eq.s32.totalorder %s19, 1
    %p63 = por %p61, %p62
    %p65 = scmp.ne.s32.totalorder %s50, %s64
    %p66 = scmp.eq.s32.totalorder %s19, 0
    %p67 = por %p65, %p66
    %s69 = sadd.s32 %s68, 1
    %p72 = scmp.eq.s32.totalorder %s13, 1
    %p73 = scmp.ne.s32.totalorder %s68, %s70
    %p74 = scmp.eq.s32.totalorder %s13, 0
    %p75 = por %p73, %p74
    %p76 = scmp.ne.s32.totalorder %s68, %s70
    %p77 = scmp.eq.s32.totalorder %s18, 1
    %p78 = por %p76, %p77
    %p79 = scmp.ne.s32.totalorder %s70, %s71
    %p80 = scmp.eq.s32.totalorder %s18, 0
    %p81 = por %p79, %p80
    %p82 = scmp.ne.s32.totalorder %s70, %s71
    %p83 = scmp.eq.s32.totalorder %s19, 1
    %p84 = por %p82, %p83
    %p86 = scmp.ne.s32.totalorder %s71, %s85
    %p87 = scmp.eq.s32.totalorder %s19, 0
    %p88 = por %p86, %p87
    %s90 = sadd.s32 %s89, 1
    %p93 = scmp.eq.s32.totalorder %s13, 1
    %p94 = scmp.ne.s32.totalorder %s89, %s91
    %p95 = scmp.eq.s32.totalorder %s13, 0
    %p96 = por %p94, %p95
    %p97 = scmp.ne.s32.totalorder %s89, %s91
    %p98 = scmp.eq.s32.totalorder %s18, 1
    %p99 = por %p97, %p98
    %p100 = scmp.ne.s32.totalorder %s91, %s92
    %p101 = scmp.eq.s32.totalorder %s18, 0
    %p102 = por %p100, %p101
    %p103 = scmp.ne.s32.totalorder %s91, %s92
    %p104 = scmp.eq.s32.totalorder %s19, 1
    %p105 = por %p103, %p104
    %p107 = scmp.ne.s32.totalorder %s92, %s106
    %p108 = scmp.eq.s32.totalorder %s19, 0
    %p109 = por %p107, %p108
    %s111 = sadd.s32 %s110, 1
    %p114 = scmp.eq.s32.totalorder %s13, 1
    %p115 = scmp.ne.s32.totalorder %s110, %s112
    %p116 = scmp.eq.s32.totalorder %s13, 0
    %p117 = por %p115, %p116
    %p118 = scmp.ne.s32.totalorder %s110, %s112
    %p119 = scmp.eq.s32.totalorder %s18, 1
    %p120 = por %p118, %p119
    %p121 = scmp.ne.s32.totalorder %s112, %s113
    %p122 = scmp.eq.s32.totalorder %s18, 0
    %p123 = por %p121, %p122
    %p124 = scmp.ne.s32.totalorder %s112, %s113
    %p125 = scmp.eq.s32.totalorder %s19, 1
    %p126 = por %p124, %p125
    %p128 = scmp.ne.s32.totalorder %s113, %s127
    %p129 = scmp.eq.s32.totalorder %s19, 0
    %p130 = por %p128, %p129
    %s132 = sadd.s32 %s131, 1
    %p135 = scmp.eq.s32.totalorder %s13, 1
    %p136 = scmp.ne.s32.totalorder %s131, %s133
    %p137 = scmp.eq.s32.totalorder %s13, 0
    %p138 = por %p136, %p137
    %p139 = scmp.ne.s32.totalorder %s131, %s133
    %p140 = scmp.eq.s32.totalorder %s18, 1
    %p141 = por %p139, %p140
    %p142 = scmp.ne.s32.totalorder %s133, %s134
    %p143 = scmp.eq.s32.totalorder %s18, 0
    %p144 = por %p142, %p143
    %p145 = scmp.ne.s32.totalorder %s133, %s134
    %p146 = scmp.eq.s32.totalorder %s19, 1
    %p147 = por %p145, %p146
    %p149 = scmp.ne.s32.totalorder %s134, %s148
    %p150 = scmp.eq.s32.totalorder %s19, 0
    %p151 = por %p149, %p150
    %s153 = sadd.s32 %s152, 1
    %p156 = scmp.eq.s32.totalorder %s13, 1
    %p157 = scmp.ne.s32.totalorder %s152, %s154
    %p158 = scmp.eq.s32.totalorder %s13, 0
    %p159 = por %p157, %p158
    %p160 = scmp.ne.s32.totalorder %s152, %s154
    %p161 = scmp.eq.s32.totalorder %s18, 1
    %p162 = por %p160, %p161
    %p163 = scmp.ne.s32.totalorder %s154, %s155
    %p164 = scmp.eq.s32.totalorder %s18, 0
    %p165 = por %p163, %p164
    %p166 = scmp.ne.s32.totalorder %s154, %s155
    %p167 = scmp.eq.s32.totalorder %s19, 1
    %p168 = por %p166, %p167
    %p170 = scmp.ne.s32.totalorder %s155, %s169
    %p171 = scmp.eq.s32.totalorder %s19, 0
    %p172 = por %p170, %p171
    %s173 = ssub.s32 %s13, %s20
    %p174 = scmp.eq.s32.totalorder %s173, 0
    %s176 = sadd.s32 %s175, 1
    %s177 = scalar_select %p174, %s175, %s176
    %p180 = pneg %p174
    %p181 = scmp.eq.s32.totalorder %s13, 1
    %p182 = por %p180, %p181
    %p183 = scmp.ne.s32.totalorder %s175, %s178
    %p184 = scmp.eq.s32.totalorder %s13, 0
    %p185 = por %p183, %p184
    %p186 = scmp.ne.s32.totalorder %s175, %s178
    %p187 = scmp.eq.s32.totalorder %s18, 1
    %p188 = por %p186, %p187
    %p189 = scmp.ne.s32.totalorder %s178, %s179
    %p190 = scmp.eq.s32.totalorder %s18, 0
    %p191 = por %p189, %p190
    %p192 = scmp.ne.s32.totalorder %s178, %s179
    %p193 = scmp.eq.s32.totalorder %s19, 1
    %p194 = por %p192, %p193
    %p196 = scmp.ne.s32.totalorder %s179, %s195
    %p197 = scmp.eq.s32.totalorder %s19, 0
    %p198 = por %p196, %p197
    %p199 = scmp.le.s32.totalorder 1, %s13
    %p200 = scmp.lt.s32.totalorder %s13, 3
    %p201 = pnand %p199, %p200
    %p202 = pneg %p201
    // Predicated region
    $region9: #{net_forward.2} parent=5 // pred_check
      _
    $region10: #{net_forward.2} parent=5 // pred_check_branch
      %204 = sbr.rel (%p201) target = $region12
    $region11: #{net_forward.2} parent=5 // pred_region
      %s205 = ssub.s32 %s13, 1
      // Predicated region
      $region13: #{net_forward.2} parent=11 // pred_check
        %p206 = pneg %p60
      $region14: #{net_forward.2} parent=11 // pred_check_branch
        %208 = sbr.rel (%p206) target = $region16
      $region15: #{net_forward.2} parent=11 // pred_region
        _
      $region16: #{net_forward.2} parent=11 // pred_fallthru
        _
      // Predicated region
      $region17: #{net_forward.2} parent=11 // pred_check
        %p209 = pneg %p81
      $region18: #{net_forward.2} parent=11 // pred_check_branch
        %211 = sbr.rel (%p209) target = $region20
      $region19: #{net_forward.2} parent=11 // pred_region
        _
      $region20: #{net_forward.2} parent=11 // pred_fallthru
        _
      // Predicated region
      $region21: #{net_forward.2} parent=11 // pred_check
        %p212 = pneg %p102
      $region22: #{net_forward.2} parent=11 // pred_check_branch
        %214 = sbr.rel (%p212) target = $region24
      $region23: #{net_forward.2} parent=11 // pred_region
        _
      $region24: #{net_forward.2} parent=11 // pred_fallthru
        _
      // Predicated region
      $region25: #{net_forward.2} parent=11 // pred_check
        %p215 = pneg %p123
      $region26: #{net_forward.2} parent=11 // pred_check_branch
        %217 = sbr.rel (%p215) target = $region28
      $region27: #{net_forward.2} parent=11 // pred_region
        _
      $region28: #{net_forward.2} parent=11 // pred_fallthru
        _
      // Predicated region
      $region29: #{net_forward.2} parent=11 // pred_check
        %p218 = pneg %p144
      $region30: #{net_forward.2} parent=11 // pred_check_branch
        %220 = sbr.rel (%p218) target = $region32
      $region31: #{net_forward.2} parent=11 // pred_region
        _
      $region32: #{net_forward.2} parent=11 // pred_fallthru
        _
      // Predicated region
      $region33: #{net_forward.2} parent=11 // pred_check
        %p221 = pneg %p165
      $region34: #{net_forward.2} parent=11 // pred_check_branch
        %223 = sbr.rel (%p221) target = $region36
      $region35: #{net_forward.2} parent=11 // pred_region
        _
      $region36: #{net_forward.2} parent=11 // pred_fallthru
        _
    $region12: #{net_forward.2} parent=5 // pred_fallthru
      _
    %p224 = scmp.lt.s32.totalorder %s13, 2
    // Predicated region
    $region37: #{net_forward.2} parent=5 // pred_check
      %p225 = pneg %p224
    $region38: #{net_forward.2} parent=5 // pred_check_branch
      %227 = sbr.rel (%p225) target = $region40
    $region39: #{net_forward.2} parent=5 // pred_region
      // Predicated region
      $region41: #{net_forward.2} parent=39 // pred_check
        %p228 = pneg %p33
      $region42: #{net_forward.2} parent=39 // pred_check_branch
        %230 = sbr.rel (%p228) target = $region44
      $region43: #{net_forward.2} parent=39 // pred_region
        %p231 = scmp.lt.s32.totalorder %s13, 1
        %s232 = scalar_select %p231, %s13, 1
        %s233 = smul.addr %s232, 113
        %s234 = smul.addr %s233, 8
        %s235 = scalar_lea.vmem %s0, %s234
      $region44: #{net_forward.2} parent=39 // pred_fallthru
        _
    $region40: #{net_forward.2} parent=5 // pred_fallthru
      _
    %p236 = scmp.le.s32.totalorder 1, %s13
    %p237 = scmp.lt.s32.totalorder %s13, 3
    %p238 = pnand %p236, %p237
    %p239 = pneg %p238
    // Predicated region
    $region45: #{net_forward.2} parent=5 // pred_check
      _
    $region46: #{net_forward.2} parent=5 // pred_check_branch
      %241 = sbr.rel (%p238) target = $region48
    $region47: #{net_forward.2} parent=5 // pred_region
      %s242 = ssub.s32 %s13, 1
      %p243 = scmp.lt.s32.totalorder %s18, 1
      %s244 = scalar_select %p243, %s18, 1
      %s245 = smul.addr %s244, 113
      %s246 = smul.addr %s245, 8
      %s247 = scalar_lea.vmem %s0, %s246
      %p248 = pneg %p39
      %p249 = pneg %p36
      %p250 = pneg %p60
      %p251 = pneg %p57
      %p252 = pneg %p81
      %p253 = pneg %p78
      %p254 = pneg %p102
      %p255 = pneg %p99
      %p256 = pneg %p123
      %p257 = pneg %p120
      %p258 = pneg %p144
      %p259 = pneg %p141
      %p260 = pneg %p165
      %p261 = pneg %p162
      %p262 = pneg %p191
      %p263 = pneg %p188
      %p264 = scmp.lt.s32.totalorder %s18, 1
      %s265 = scalar_select %p264, %s18, 1
      %s266 = smul.addr %s265, 7
      %s267 = smul.addr %s266, 8
      %s268 = scalar_lea.vmem %s7, %s267
      %p269 = scmp.lt.s32.totalorder %s18, 1
      %s270 = scalar_select %p269, %s18, 1
      %s271 = smul.addr %s270, 113
      %s272 = smul.addr %s271, 8
      %s273 = scalar_lea.vmem %s0, %s272
      %p274 = scmp.lt.s32.totalorder %s18, 1
      %s275 = scalar_select %p274, %s18, 1
      %s276 = smul.addr %s275, 7
      %s277 = smul.addr %s276, 8
      %s278 = scalar_lea.vmem %s7, %s277
      %v279 = vld [vmem:[%s273] sm:$0xff]
      %v280 = vld [vmem:[%s273 + $0x8] sm:$0xff]
      %v281 = vld [vmem:[%s273 + $0x10] sm:$0xff]
      %v282 = vld [vmem:[%s273 + $0x18] sm:$0xff]
      %v283 = vld [vmem:[%s273 + $0x20] sm:$0xff]
      %v284 = vld [vmem:[%s273 + $0x28] sm:$0xff]
      %v285 = vld [vmem:[%s273 + $0x30] sm:$0xff]
      %v286 = vld [vmem:[%s273 + $0x38] sm:$0xff]
      %v287 = vld [vmem:[%s273 + $0x40] sm:$0xff]
      %v288 = vld [vmem:[%s273 + $0x48] sm:$0xff]
      %v289 = vld [vmem:[%s273 + $0x50] sm:$0xff]
      %v290 = vld [vmem:[%s273 + $0x58] sm:$0xff]
      %v291 = vld [vmem:[%s273 + $0x60] sm:$0xff]
      %v292 = vld [vmem:[%s273 + $0x68] sm:$0xff]
      %v293 = vld [vmem:[%s273 + $0x70] sm:$0xff]
      %v294 = vld [vmem:[%s273 + $0x78] sm:$0xff]
      %v295 = vld [vmem:[%s273 + $0x80] sm:$0xff]
      %v296 = vld [vmem:[%s273 + $0x88] sm:$0xff]
      %v297 = vld [vmem:[%s273 + $0x90] sm:$0xff]
      %v298 = vld [vmem:[%s273 + $0x98] sm:$0xff]
      %v299 = vld [vmem:[%s273 + $0xa0] sm:$0xff]
      %v300 = vld [vmem:[%s273 + $0xa8] sm:$0xff]
      %v301 = vld [vmem:[%s273 + $0xb0] sm:$0xff]
      %v302 = vld [vmem:[%s273 + $0xb8] sm:$0xff]
      %v303 = vld [vmem:[%s273 + $0xc0] sm:$0xff]
      %v304 = vld [vmem:[%s273 + $0xc8] sm:$0xff]
      %v305 = vld [vmem:[%s273 + $0xd0] sm:$0xff]
      %v306 = vld [vmem:[%s273 + $0xd8] sm:$0xff]
      %v307 = vld [vmem:[%s273 + $0xe0] sm:$0xff]
      %v308 = vld [vmem:[%s273 + $0xe8] sm:$0xff]
      %v309 = vld [vmem:[%s273 + $0xf0] sm:$0xff]
      %v310 = vld [vmem:[%s273 + $0xf8] sm:$0xff]
      %v311 = vld [vmem:[%s273 + $0x100] sm:$0xff]
      %v312 = vld [vmem:[%s273 + $0x108] sm:$0xff]
      %v313 = vld [vmem:[%s273 + $0x110] sm:$0xff]
      %v314 = vld [vmem:[%s273 + $0x118] sm:$0xff]
      %v315 = vld [vmem:[%s273 + $0x120] sm:$0xff]
      %v316 = vld [vmem:[%s273 + $0x128] sm:$0xff]
      %v317 = vld [vmem:[%s273 + $0x130] sm:$0xff]
      %v318 = vld [vmem:[%s273 + $0x138] sm:$0xff]
      %v319 = vld [vmem:[%s273 + $0x140] sm:$0xff]
      %v320 = vld [vmem:[%s273 + $0x148] sm:$0xff]
      %v321 = vld [vmem:[%s273 + $0x150] sm:$0xff]
      %v322 = vld [vmem:[%s273 + $0x158] sm:$0xff]
      %v323 = vld [vmem:[%s273 + $0x160] sm:$0xff]
      %v324 = vld [vmem:[%s273 + $0x168] sm:$0xff]
      %v325 = vld [vmem:[%s273 + $0x170] sm:$0xff]
      %v326 = vld [vmem:[%s273 + $0x178] sm:$0xff]
      %v327 = vld [vmem:[%s273 + $0x180] sm:$0xff]
      %v328 = vld [vmem:[%s273 + $0x188] sm:$0xff]
      %v329 = vld [vmem:[%s273 + $0x190] sm:$0xff]
      %v330 = vld [vmem:[%s273 + $0x198] sm:$0xff]
      %v331 = vld [vmem:[%s273 + $0x1a0] sm:$0xff]
      %v332 = vld [vmem:[%s273 + $0x1a8] sm:$0xff]
      %v333 = vld [vmem:[%s273 + $0x1b0] sm:$0xff]
      %v334 = vld [vmem:[%s273 + $0x1b8] sm:$0xff]
      %v335 = vld [vmem:[%s273 + $0x1c0] sm:$0xff]
      %v336 = vld [vmem:[%s273 + $0x1c8] sm:$0xff]
      %v337 = vld [vmem:[%s273 + $0x1d0] sm:$0xff]
      %v338 = vld [vmem:[%s273 + $0x1d8] sm:$0xff]
      %v339 = vld [vmem:[%s273 + $0x1e0] sm:$0xff]
      %v340 = vld [vmem:[%s273 + $0x1e8] sm:$0xff]
      %v341 = vld [vmem:[%s273 + $0x1f0] sm:$0xff]
      %v342 = vld [vmem:[%s273 + $0x1f8] sm:$0xff]
      %v343 = vld [vmem:[%s273 + $0x200] sm:$0xff]
      %v344 = vld [vmem:[%s273 + $0x208] sm:$0xff]
      %v345 = vld [vmem:[%s273 + $0x210] sm:$0xff]
      %v346 = vld [vmem:[%s273 + $0x218] sm:$0xff]
      %v347 = vld [vmem:[%s273 + $0x220] sm:$0xff]
      %v348 = vld [vmem:[%s273 + $0x228] sm:$0xff]
      %v349 = vld [vmem:[%s273 + $0x230] sm:$0xff]
      %v350 = vld [vmem:[%s273 + $0x238] sm:$0xff]
      %v351 = vld [vmem:[%s273 + $0x240] sm:$0xff]
      %v352 = vld [vmem:[%s273 + $0x248] sm:$0xff]
      %v353 = vld [vmem:[%s273 + $0x250] sm:$0xff]
      %v354 = vld [vmem:[%s273 + $0x258] sm:$0xff]
      %v355 = vld [vmem:[%s273 + $0x260] sm:$0xff]
      %v356 = vld [vmem:[%s273 + $0x268] sm:$0xff]
      %v357 = vld [vmem:[%s273 + $0x270] sm:$0xff]
      %v358 = vld [vmem:[%s273 + $0x278] sm:$0xff]
      %v359 = vld [vmem:[%s273 + $0x280] sm:$0xff]
      %v360 = vld [vmem:[%s273 + $0x288] sm:$0xff]
      %v361 = vld [vmem:[%s273 + $0x290] sm:$0xff]
      %v362 = vld [vmem:[%s273 + $0x298] sm:$0xff]
      %v363 = vld [vmem:[%s273 + $0x2a0] sm:$0xff]
      %v364 = vld [vmem:[%s273 + $0x2a8] sm:$0xff]
      %v365 = vld [vmem:[%s273 + $0x2b0] sm:$0xff]
      %v366 = vld [vmem:[%s273 + $0x2b8] sm:$0xff]
      %v367 = vld [vmem:[%s273 + $0x2c0] sm:$0xff]
      %v368 = vld [vmem:[%s273 + $0x2c8] sm:$0xff]
      %v369 = vld [vmem:[%s273 + $0x2d0] sm:$0xff]
      %v370 = vld [vmem:[%s273 + $0x2d8] sm:$0xff]
      %v371 = vld [vmem:[%s273 + $0x2e0] sm:$0xff]
      %v372 = vld [vmem:[%s273 + $0x2e8] sm:$0xff]
      %v373 = vld [vmem:[%s273 + $0x2f0] sm:$0xff]
      %v374 = vld [vmem:[%s273 + $0x2f8] sm:$0xff]
      %v375 = vld [vmem:[%s273 + $0x300] sm:$0xff]
      %v376 = vld [vmem:[%s273 + $0x308] sm:$0xff]
      %v377 = vld [vmem:[%s273 + $0x310] sm:$0xff]
      %v378 = vld [vmem:[%s273 + $0x318] sm:$0xff]
      %v379 = vld [vmem:[%s273 + $0x320] sm:$0xff]
      %v380 = vld [vmem:[%s273 + $0x328] sm:$0xff]
      %v381 = vld [vmem:[%s273 + $0x330] sm:$0xff]
      %v382 = vld [vmem:[%s273 + $0x338] sm:$0xff]
      %v383 = vld [vmem:[%s273 + $0x340] sm:$0xff]
      %v384 = vld [vmem:[%s273 + $0x348] sm:$0xff]
      %v385 = vld [vmem:[%s273 + $0x350] sm:$0xff]
      %v386 = vld [vmem:[%s273 + $0x358] sm:$0xff]
      %v387 = vld [vmem:[%s273 + $0x360] sm:$0xff]
      %v388 = vld [vmem:[%s273 + $0x368] sm:$0xff]
      %v389 = vld [vmem:[%s273 + $0x370] sm:$0xff]
      %v390 = vld [vmem:[%s273 + $0x378] sm:$0xff]
      %v391 = vld [vmem:[%s273 + $0x380] sm:$0xf]
      %393 = vset.pattern.permute.xlu0 0
      %394 = vperm.xlu0 %393, %v279
      %v395 = vpop.permute.xlu0 %394
      %398 = vset.pattern.permute.xlu0 0
      %399 = vperm.xlu0 %398, %v280
      %v400 = vpop.permute.xlu0 %399
      %403 = vset.pattern.permute.xlu0 0
      %404 = vperm.xlu0 %403, %v281
      %v405 = vpop.permute.xlu0 %404
      %408 = vset.pattern.permute.xlu0 0
      %409 = vperm.xlu0 %408, %v282
      %v410 = vpop.permute.xlu0 %409
      %413 = vset.pattern.permute.xlu0 0
      %414 = vperm.xlu0 %413, %v283
      %v415 = vpop.permute.xlu0 %414
      %418 = vset.pattern.permute.xlu0 0
      %419 = vperm.xlu0 %418, %v284
      %v420 = vpop.permute.xlu0 %419
      %423 = vset.pattern.permute.xlu0 0
      %424 = vperm.xlu0 %423, %v285
      %v425 = vpop.permute.xlu0 %424
      %428 = vset.pattern.permute.xlu0 0
      %429 = vperm.xlu0 %428, %v286
      %v430 = vpop.permute.xlu0 %429
      %433 = vset.pattern.permute.xlu0 0
      %434 = vperm.xlu0 %433, %v287
      %v435 = vpop.permute.xlu0 %434
      %438 = vset.pattern.permute.xlu0 0
      %439 = vperm.xlu0 %438, %v288
      %v440 = vpop.permute.xlu0 %439
      %443 = vset.pattern.permute.xlu0 0
      %444 = vperm.xlu0 %443, %v289
      %v445 = vpop.permute.xlu0 %444
      %448 = vset.pattern.permute.xlu0 0
      %449 = vperm.xlu0 %448, %v290
      %v450 = vpop.permute.xlu0 %449
      %453 = vset.pattern.permute.xlu0 0
      %454 = vperm.xlu0 %453, %v291
      %v455 = vpop.permute.xlu0 %454
      %458 = vset.pattern.permute.xlu0 0
      %459 = vperm.xlu0 %458, %v292
      %v460 = vpop.permute.xlu0 %459
      %463 = vset.pattern.permute.xlu0 0
      %464 = vperm.xlu0 %463, %v293
      %v465 = vpop.permute.xlu0 %464
      %468 = vset.pattern.permute.xlu0 0
      %469 = vperm.xlu0 %468, %v294
      %v470 = vpop.permute.xlu0 %469
      %473 = vset.pattern.permute.xlu0 0
      %474 = vperm.xlu0 %473, %v295
      %v475 = vpop.permute.xlu0 %474
      %478 = vset.pattern.permute.xlu0 0
      %479 = vperm.xlu0 %478, %v296
      %v480 = vpop.permute.xlu0 %479
      %483 = vset.pattern.permute.xlu0 0
      %484 = vperm.xlu0 %483, %v297
      %v485 = vpop.permute.xlu0 %484
      %488 = vset.pattern.permute.xlu0 0
      %489 = vperm.xlu0 %488, %v298
      %v490 = vpop.permute.xlu0 %489
      %493 = vset.pattern.permute.xlu0 0
      %494 = vperm.xlu0 %493, %v299
      %v495 = vpop.permute.xlu0 %494
      %498 = vset.pattern.permute.xlu0 0
      %499 = vperm.xlu0 %498, %v300
      %v500 = vpop.permute.xlu0 %499
      %503 = vset.pattern.permute.xlu0 0
      %504 = vperm.xlu0 %503, %v301
      %v505 = vpop.permute.xlu0 %504
      %508 = vset.pattern.permute.xlu0 0
      %509 = vperm.xlu0 %508, %v302
      %v510 = vpop.permute.xlu0 %509
      %513 = vset.pattern.permute.xlu0 0
      %514 = vperm.xlu0 %513, %v303
      %v515 = vpop.permute.xlu0 %514
      %518 = vset.pattern.permute.xlu0 0
      %519 = vperm.xlu0 %518, %v304
      %v520 = vpop.permute.xlu0 %519
      %523 = vset.pattern.permute.xlu0 0
      %524 = vperm.xlu0 %523, %v305
      %v525 = vpop.permute.xlu0 %524
      %528 = vset.pattern.permute.xlu0 0
      %529 = vperm.xlu0 %528, %v306
      %v530 = vpop.permute.xlu0 %529
      %533 = vset.pattern.permute.xlu0 0
      %534 = vperm.xlu0 %533, %v307
      %v535 = vpop.permute.xlu0 %534
      %538 = vset.pattern.permute.xlu0 0
      %539 = vperm.xlu0 %538, %v308
      %v540 = vpop.permute.xlu0 %539
      %543 = vset.pattern.permute.xlu0 0
      %544 = vperm.xlu0 %543, %v309
      %v545 = vpop.permute.xlu0 %544
      %548 = vset.pattern.permute.xlu0 0
      %549 = vperm.xlu0 %548, %v310
      %v550 = vpop.permute.xlu0 %549
      %553 = vset.pattern.permute.xlu0 0
      %554 = vperm.xlu0 %553, %v311
      %v555 = vpop.permute.xlu0 %554
      %558 = vset.pattern.permute.xlu0 0
      %559 = vperm.xlu0 %558, %v312
      %v560 = vpop.permute.xlu0 %559
      %563 = vset.pattern.permute.xlu0 0
      %564 = vperm.xlu0 %563, %v313
      %v565 = vpop.permute.xlu0 %564
      %568 = vset.pattern.permute.xlu0 0
      %569 = vperm.xlu0 %568, %v314
      %v570 = vpop.permute.xlu0 %569
      %573 = vset.pattern.permute.xlu0 0
      %574 = vperm.xlu0 %573, %v315
      %v575 = vpop.permute.xlu0 %574
      %578 = vset.pattern.permute.xlu0 0
      %579 = vperm.xlu0 %578, %v316
      %v580 = vpop.permute.xlu0 %579
      %583 = vset.pattern.permute.xlu0 0
      %584 = vperm.xlu0 %583, %v317
      %v585 = vpop.permute.xlu0 %584
      %588 = vset.pattern.permute.xlu0 0
      %589 = vperm.xlu0 %588, %v318
      %v590 = vpop.permute.xlu0 %589
      %593 = vset.pattern.permute.xlu0 0
      %594 = vperm.xlu0 %593, %v319
      %v595 = vpop.permute.xlu0 %594
      %598 = vset.pattern.permute.xlu0 0
      %599 = vperm.xlu0 %598, %v320
      %v600 = vpop.permute.xlu0 %599
      %603 = vset.pattern.permute.xlu0 0
      %604 = vperm.xlu0 %603, %v321
      %v605 = vpop.permute.xlu0 %604
      %608 = vset.pattern.permute.xlu0 0
      %609 = vperm.xlu0 %608, %v322
      %v610 = vpop.permute.xlu0 %609
      %613 = vset.pattern.permute.xlu0 0
      %614 = vperm.xlu0 %613, %v323
      %v615 = vpop.permute.xlu0 %614
      %618 = vset.pattern.permute.xlu0 0
      %619 = vperm.xlu0 %618, %v324
      %v620 = vpop.permute.xlu0 %619
      %623 = vset.pattern.permute.xlu0 0
      %624 = vperm.xlu0 %623, %v325
      %v625 = vpop.permute.xlu0 %624
      %628 = vset.pattern.permute.xlu0 0
      %629 = vperm.xlu0 %628, %v326
      %v630 = vpop.permute.xlu0 %629
      %633 = vset.pattern.permute.xlu0 0
      %634 = vperm.xlu0 %633, %v327
      %v635 = vpop.permute.xlu0 %634
      %638 = vset.pattern.permute.xlu0 0
      %639 = vperm.xlu0 %638, %v328
      %v640 = vpop.permute.xlu0 %639
      %643 = vset.pattern.permute.xlu0 0
      %644 = vperm.xlu0 %643, %v329
      %v645 = vpop.permute.xlu0 %644
      %648 = vset.pattern.permute.xlu0 0
      %649 = vperm.xlu0 %648, %v330
      %v650 = vpop.permute.xlu0 %649
      %653 = vset.pattern.permute.xlu0 0
      %654 = vperm.xlu0 %653, %v331
      %v655 = vpop.permute.xlu0 %654
      %658 = vset.pattern.permute.xlu0 0
      %659 = vperm.xlu0 %658, %v332
      %v660 = vpop.permute.xlu0 %659
      %663 = vset.pattern.permute.xlu0 0
      %664 = vperm.xlu0 %663, %v333
      %v665 = vpop.permute.xlu0 %664
      %668 = vset.pattern.permute.xlu0 0
      %669 = vperm.xlu0 %668, %v334
      %v670 = vpop.permute.xlu0 %669
      %673 = vset.pattern.permute.xlu0 0
      %674 = vperm.xlu0 %673, %v335
      %v675 = vpop.permute.xlu0 %674
      %678 = vset.pattern.permute.xlu0 0
      %679 = vperm.xlu0 %678, %v336
      %v680 = vpop.permute.xlu0 %679
      %683 = vset.pattern.permute.xlu0 0
      %684 = vperm.xlu0 %683, %v337
      %v685 = vpop.permute.xlu0 %684
      %688 = vset.pattern.permute.xlu0 0
      %689 = vperm.xlu0 %688, %v338
      %v690 = vpop.permute.xlu0 %689
      %693 = vset.pattern.permute.xlu0 0
      %694 = vperm.xlu0 %693, %v339
      %v695 = vpop.permute.xlu0 %694
      %698 = vset.pattern.permute.xlu0 0
      %699 = vperm.xlu0 %698, %v340
      %v700 = vpop.permute.xlu0 %699
      %703 = vset.pattern.permute.xlu0 0
      %704 = vperm.xlu0 %703, %v341
      %v705 = vpop.permute.xlu0 %704
      %708 = vset.pattern.permute.xlu0 0
      %709 = vperm.xlu0 %708, %v342
      %v710 = vpop.permute.xlu0 %709
      %713 = vset.pattern.permute.xlu0 0
      %714 = vperm.xlu0 %713, %v343
      %v715 = vpop.permute.xlu0 %714
      %718 = vset.pattern.permute.xlu0 0
      %719 = vperm.xlu0 %718, %v344
      %v720 = vpop.permute.xlu0 %719
      %723 = vset.pattern.permute.xlu0 0
      %724 = vperm.xlu0 %723, %v345
      %v725 = vpop.permute.xlu0 %724
      %728 = vset.pattern.permute.xlu0 0
      %729 = vperm.xlu0 %728, %v346
      %v730 = vpop.permute.xlu0 %729
      %733 = vset.pattern.permute.xlu0 0
      %734 = vperm.xlu0 %733, %v347
      %v735 = vpop.permute.xlu0 %734
      %738 = vset.pattern.permute.xlu0 0
      %739 = vperm.xlu0 %738, %v348
      %v740 = vpop.permute.xlu0 %739
      %743 = vset.pattern.permute.xlu0 0
      %744 = vperm.xlu0 %743, %v349
      %v745 = vpop.permute.xlu0 %744
      %748 = vset.pattern.permute.xlu0 0
      %749 = vperm.xlu0 %748, %v350
      %v750 = vpop.permute.xlu0 %749
      %753 = vset.pattern.permute.xlu0 0
      %754 = vperm.xlu0 %753, %v351
      %v755 = vpop.permute.xlu0 %754
      %758 = vset.pattern.permute.xlu0 0
      %759 = vperm.xlu0 %758, %v352
      %v760 = vpop.permute.xlu0 %759
      %763 = vset.pattern.permute.xlu0 0
      %764 = vperm.xlu0 %763, %v353
      %v765 = vpop.permute.xlu0 %764
      %768 = vset.pattern.permute.xlu0 0
      %769 = vperm.xlu0 %768, %v354
      %v770 = vpop.permute.xlu0 %769
      %773 = vset.pattern.permute.xlu0 0
      %774 = vperm.xlu0 %773, %v355
      %v775 = vpop.permute.xlu0 %774
      %778 = vset.pattern.permute.xlu0 0
      %779 = vperm.xlu0 %778, %v356
      %v780 = vpop.permute.xlu0 %779
      %783 = vset.pattern.permute.xlu0 0
      %784 = vperm.xlu0 %783, %v357
      %v785 = vpop.permute.xlu0 %784
      %788 = vset.pattern.permute.xlu0 0
      %789 = vperm.xlu0 %788, %v358
      %v790 = vpop.permute.xlu0 %789
      %793 = vset.pattern.permute.xlu0 0
      %794 = vperm.xlu0 %793, %v359
      %v795 = vpop.permute.xlu0 %794
      %798 = vset.pattern.permute.xlu0 0
      %799 = vperm.xlu0 %798, %v360
      %v800 = vpop.permute.xlu0 %799
      %803 = vset.pattern.permute.xlu0 0
      %804 = vperm.xlu0 %803, %v361
      %v805 = vpop.permute.xlu0 %804
      %808 = vset.pattern.permute.xlu0 0
      %809 = vperm.xlu0 %808, %v362
      %v810 = vpop.permute.xlu0 %809
      %813 = vset.pattern.permute.xlu0 0
      %814 = vperm.xlu0 %813, %v363
      %v815 = vpop.permute.xlu0 %814
      %818 = vset.pattern.permute.xlu0 0
      %819 = vperm.xlu0 %818, %v364
      %v820 = vpop.permute.xlu0 %819
      %823 = vset.pattern.permute.xlu0 0
      %824 = vperm.xlu0 %823, %v365
      %v825 = vpop.permute.xlu0 %824
      %828 = vset.pattern.permute.xlu0 0
      %829 = vperm.xlu0 %828, %v366
      %v830 = vpop.permute.xlu0 %829
      %833 = vset.pattern.permute.xlu0 0
      %834 = vperm.xlu0 %833, %v367
      %v835 = vpop.permute.xlu0 %834
      %838 = vset.pattern.permute.xlu0 0
      %839 = vperm.xlu0 %838, %v368
      %v840 = vpop.permute.xlu0 %839
      %843 = vset.pattern.permute.xlu0 0
      %844 = vperm.xlu0 %843, %v369
      %v845 = vpop.permute.xlu0 %844
      %848 = vset.pattern.permute.xlu0 0
      %849 = vperm.xlu0 %848, %v370
      %v850 = vpop.permute.xlu0 %849
      %853 = vset.pattern.permute.xlu0 0
      %854 = vperm.xlu0 %853, %v371
      %v855 = vpop.permute.xlu0 %854
      %858 = vset.pattern.permute.xlu0 0
      %859 = vperm.xlu0 %858, %v372
      %v860 = vpop.permute.xlu0 %859
      %863 = vset.pattern.permute.xlu0 0
      %864 = vperm.xlu0 %863, %v373
      %v865 = vpop.permute.xlu0 %864
      %868 = vset.pattern.permute.xlu0 0
      %869 = vperm.xlu0 %868, %v374
      %v870 = vpop.permute.xlu0 %869
      %873 = vset.pattern.permute.xlu0 0
      %874 = vperm.xlu0 %873, %v375
      %v875 = vpop.permute.xlu0 %874
      %878 = vset.pattern.permute.xlu0 0
      %879 = vperm.xlu0 %878, %v376
      %v880 = vpop.permute.xlu0 %879
      %883 = vset.pattern.permute.xlu0 0
      %884 = vperm.xlu0 %883, %v377
      %v885 = vpop.permute.xlu0 %884
      %888 = vset.pattern.permute.xlu0 0
      %889 = vperm.xlu0 %888, %v378
      %v890 = vpop.permute.xlu0 %889
      %893 = vset.pattern.permute.xlu0 0
      %894 = vperm.xlu0 %893, %v379
      %v895 = vpop.permute.xlu0 %894
      %898 = vset.pattern.permute.xlu0 0
      %899 = vperm.xlu0 %898, %v380
      %v900 = vpop.permute.xlu0 %899
      %903 = vset.pattern.permute.xlu0 0
      %904 = vperm.xlu0 %903, %v381
      %v905 = vpop.permute.xlu0 %904
      %908 = vset.pattern.permute.xlu0 0
      %909 = vperm.xlu0 %908, %v382
      %v910 = vpop.permute.xlu0 %909
      %913 = vset.pattern.permute.xlu0 0
      %914 = vperm.xlu0 %913, %v383
      %v915 = vpop.permute.xlu0 %914
      %918 = vset.pattern.permute.xlu0 0
      %919 = vperm.xlu0 %918, %v384
      %v920 = vpop.permute.xlu0 %919
      %923 = vset.pattern.permute.xlu0 0
      %924 = vperm.xlu0 %923, %v385
      %v925 = vpop.permute.xlu0 %924
      %928 = vset.pattern.permute.xlu0 0
      %929 = vperm.xlu0 %928, %v386
      %v930 = vpop.permute.xlu0 %929
      %933 = vset.pattern.permute.xlu0 0
      %934 = vperm.xlu0 %933, %v387
      %v935 = vpop.permute.xlu0 %934
      %938 = vset.pattern.permute.xlu0 0
      %939 = vperm.xlu0 %938, %v388
      %v940 = vpop.permute.xlu0 %939
      %943 = vset.pattern.permute.xlu0 0
      %944 = vperm.xlu0 %943, %v389
      %v945 = vpop.permute.xlu0 %944
      %948 = vset.pattern.permute.xlu0 0
      %949 = vperm.xlu0 %948, %v390
      %v950 = vpop.permute.xlu0 %949
      %953 = vset.pattern.permute.xlu0 0
      %954 = vperm.xlu0 %953, %v391
      %v955 = vpop.permute.xlu0 %954
      %vm957 = vcmask 261120
      %958 = vst.msk [vmem:[#allocation2] sm:$0xff] %vm957, %v395
      %959 = vst.msk [vmem:[#allocation2 + $0x8] sm:$0xff] %vm957, %v400
      %960 = vst.msk [vmem:[#allocation2 + $0x10] sm:$0xff] %vm957, %v405
      %961 = vst.msk [vmem:[#allocation2 + $0x18] sm:$0xff] %vm957, %v410
      %962 = vst.msk [vmem:[#allocation2 + $0x20] sm:$0xff] %vm957, %v415
      %963 = vst.msk [vmem:[#allocation2 + $0x28] sm:$0xff] %vm957, %v420
      %964 = vst.msk [vmem:[#allocation2 + $0x30] sm:$0xff] %vm957, %v425
      %965 = vst.msk [vmem:[#allocation2 + $0x38] sm:$0xff] %vm957, %v430
      %966 = vst.msk [vmem:[#allocation2 + $0x40] sm:$0xff] %vm957, %v435
      %967 = vst.msk [vmem:[#allocation2 + $0x48] sm:$0xff] %vm957, %v440
      %968 = vst.msk [vmem:[#allocation2 + $0x50] sm:$0xff] %vm957, %v445
      %969 = vst.msk [vmem:[#allocation2 + $0x58] sm:$0xff] %vm957, %v450
      %970 = vst.msk [vmem:[#allocation2 + $0x60] sm:$0xff] %vm957, %v455
      %971 = vst.msk [vmem:[#allocation2 + $0x68] sm:$0xff] %vm957, %v460
      %972 = vst.msk [vmem:[#allocation2 + $0x70] sm:$0xff] %vm957, %v465
      %973 = vst.msk [vmem:[#allocation2 + $0x78] sm:$0xff] %vm957, %v470
      %974 = vst.msk [vmem:[#allocation2 + $0x80] sm:$0xff] %vm957, %v475
      %975 = vst.msk [vmem:[#allocation2 + $0x88] sm:$0xff] %vm957, %v480
      %976 = vst.msk [vmem:[#allocation2 + $0x90] sm:$0xff] %vm957, %v485
      %977 = vst.msk [vmem:[#allocation2 + $0x98] sm:$0xff] %vm957, %v490
      %978 = vst.msk [vmem:[#allocation2 + $0xa0] sm:$0xff] %vm957, %v495
      %979 = vst.msk [vmem:[#allocation2 + $0xa8] sm:$0xff] %vm957, %v500
      %980 = vst.msk [vmem:[#allocation2 + $0xb0] sm:$0xff] %vm957, %v505
      %981 = vst.msk [vmem:[#allocation2 + $0xb8] sm:$0xff] %vm957, %v510
      %982 = vst.msk [vmem:[#allocation2 + $0xc0] sm:$0xff] %vm957, %v515
      %983 = vst.msk [vmem:[#allocation2 + $0xc8] sm:$0xff] %vm957, %v520
      %984 = vst.msk [vmem:[#allocation2 + $0xd0] sm:$0xff] %vm957, %v525
      %985 = vst.msk [vmem:[#allocation2 + $0xd8] sm:$0xff] %vm957, %v530
      %986 = vst.msk [vmem:[#allocation2 + $0xe0] sm:$0xff] %vm957, %v535
      %987 = vst.msk [vmem:[#allocation2 + $0xe8] sm:$0xff] %vm957, %v540
      %988 = vst.msk [vmem:[#allocation2 + $0xf0] sm:$0xff] %vm957, %v545
      %989 = vst.msk [vmem:[#allocation2 + $0xf8] sm:$0xff] %vm957, %v550
      %990 = vst.msk [vmem:[#allocation2 + $0x100] sm:$0xff] %vm957, %v555
      %991 = vst.msk [vmem:[#allocation2 + $0x108] sm:$0xff] %vm957, %v560
      %992 = vst.msk [vmem:[#allocation2 + $0x110] sm:$0xff] %vm957, %v565
      %993 = vst.msk [vmem:[#allocation2 + $0x118] sm:$0xff] %vm957, %v570
      %994 = vst.msk [vmem:[#allocation2 + $0x120] sm:$0xff] %vm957, %v575
      %995 = vst.msk [vmem:[#allocation2 + $0x128] sm:$0xff] %vm957, %v580
      %996 = vst.msk [vmem:[#allocation2 + $0x130] sm:$0xff] %vm957, %v585
      %997 = vst.msk [vmem:[#allocation2 + $0x138] sm:$0xff] %vm957, %v590
      %998 = vst.msk [vmem:[#allocation2 + $0x140] sm:$0xff] %vm957, %v595
      %999 = vst.msk [vmem:[#allocation2 + $0x148] sm:$0xff] %vm957, %v600
      %1000 = vst.msk [vmem:[#allocation2 + $0x150] sm:$0xff] %vm957, %v605
      %1001 = vst.msk [vmem:[#allocation2 + $0x158] sm:$0xff] %vm957, %v610
      %1002 = vst.msk [vmem:[#allocation2 + $0x160] sm:$0xff] %vm957, %v615
      %1003 = vst.msk [vmem:[#allocation2 + $0x168] sm:$0xff] %vm957, %v620
      %1004 = vst.msk [vmem:[#allocation2 + $0x170] sm:$0xff] %vm957, %v625
      %1005 = vst.msk [vmem:[#allocation2 + $0x178] sm:$0xff] %vm957, %v630
      %1006 = vst.msk [vmem:[#allocation2 + $0x180] sm:$0xff] %vm957, %v635
      %1007 = vst.msk [vmem:[#allocation2 + $0x188] sm:$0xff] %vm957, %v640
      %1008 = vst.msk [vmem:[#allocation2 + $0x190] sm:$0xff] %vm957, %v645
      %1009 = vst.msk [vmem:[#allocation2 + $0x198] sm:$0xff] %vm957, %v650
      %1010 = vst.msk [vmem:[#allocation2 + $0x1a0] sm:$0xff] %vm957, %v655
      %1011 = vst.msk [vmem:[#allocation2 + $0x1a8] sm:$0xff] %vm957, %v660
      %1012 = vst.msk [vmem:[#allocation2 + $0x1b0] sm:$0xff] %vm957, %v665
      %1013 = vst.msk [vmem:[#allocation2 + $0x1b8] sm:$0xff] %vm957, %v670
      %1014 = vst.msk [vmem:[#allocation2 + $0x1c0] sm:$0xff] %vm957, %v675
      %1015 = vst.msk [vmem:[#allocation2 + $0x1c8] sm:$0xff] %vm957, %v680
      %1016 = vst.msk [vmem:[#allocation2 + $0x1d0] sm:$0xff] %vm957, %v685
      %1017 = vst.msk [vmem:[#allocation2 + $0x1d8] sm:$0xff] %vm957, %v690
      %1018 = vst.msk [vmem:[#allocation2 + $0x1e0] sm:$0xff] %vm957, %v695
      %1019 = vst.msk [vmem:[#allocation2 + $0x1e8] sm:$0xff] %vm957, %v700
      %1020 = vst.msk [vmem:[#allocation2 + $0x1f0] sm:$0xff] %vm957, %v705
      %1021 = vst.msk [vmem:[#allocation2 + $0x1f8] sm:$0xff] %vm957, %v710
      %1022 = vst.msk [vmem:[#allocation2 + $0x200] sm:$0xff] %vm957, %v715
      %1023 = vst.msk [vmem:[#allocation2 + $0x208] sm:$0xff] %vm957, %v720
      %1024 = vst.msk [vmem:[#allocation2 + $0x210] sm:$0xff] %vm957, %v725
      %1025 = vst.msk [vmem:[#allocation2 + $0x218] sm:$0xff] %vm957, %v730
      %1026 = vst.msk [vmem:[#allocation2 + $0x220] sm:$0xff] %vm957, %v735
      %1027 = vst.msk [vmem:[#allocation2 + $0x228] sm:$0xff] %vm957, %v740
      %1028 = vst.msk [vmem:[#allocation2 + $0x230] sm:$0xff] %vm957, %v745
      %1029 = vst.msk [vmem:[#allocation2 + $0x238] sm:$0xff] %vm957, %v750
      %1030 = vst.msk [vmem:[#allocation2 + $0x240] sm:$0xff] %vm957, %v755
      %1031 = vst.msk [vmem:[#allocation2 + $0x248] sm:$0xff] %vm957, %v760
      %1032 = vst.msk [vmem:[#allocation2 + $0x250] sm:$0xff] %vm957, %v765
      %1033 = vst.msk [vmem:[#allocation2 + $0x258] sm:$0xff] %vm957, %v770
      %1034 = vst.msk [vmem:[#allocation2 + $0x260] sm:$0xff] %vm957, %v775
      %1035 = vst.msk [vmem:[#allocation2 + $0x268] sm:$0xff] %vm957, %v780
      %1036 = vst.msk [vmem:[#allocation2 + $0x270] sm:$0xff] %vm957, %v785
      %1037 = vst.msk [vmem:[#allocation2 + $0x278] sm:$0xff] %vm957, %v790
      %1038 = vst.msk [vmem:[#allocation2 + $0x280] sm:$0xff] %vm957, %v795
      %1039 = vst.msk [vmem:[#allocation2 + $0x288] sm:$0xff] %vm957, %v800
      %1040 = vst.msk [vmem:[#allocation2 + $0x290] sm:$0xff] %vm957, %v805
      %1041 = vst.msk [vmem:[#allocation2 + $0x298] sm:$0xff] %vm957, %v810
      %1042 = vst.msk [vmem:[#allocation2 + $0x2a0] sm:$0xff] %vm957, %v815
      %1043 = vst.msk [vmem:[#allocation2 + $0x2a8] sm:$0xff] %vm957, %v820
      %1044 = vst.msk [vmem:[#allocation2 + $0x2b0] sm:$0xff] %vm957, %v825
      %1045 = vst.msk [vmem:[#allocation2 + $0x2b8] sm:$0xff] %vm957, %v830
      %1046 = vst.msk [vmem:[#allocation2 + $0x2c0] sm:$0xff] %vm957, %v835
      %1047 = vst.msk [vmem:[#allocation2 + $0x2c8] sm:$0xff] %vm957, %v840
      %1048 = vst.msk [vmem:[#allocation2 + $0x2d0] sm:$0xff] %vm957, %v845
      %1049 = vst.msk [vmem:[#allocation2 + $0x2d8] sm:$0xff] %vm957, %v850
      %1050 = vst.msk [vmem:[#allocation2 + $0x2e0] sm:$0xff] %vm957, %v855
      %1051 = vst.msk [vmem:[#allocation2 + $0x2e8] sm:$0xff] %vm957, %v860
      %1052 = vst.msk [vmem:[#allocation2 + $0x2f0] sm:$0xff] %vm957, %v865
      %1053 = vst.msk [vmem:[#allocation2 + $0x2f8] sm:$0xff] %vm957, %v870
      %1054 = vst.msk [vmem:[#allocation2 + $0x300] sm:$0xff] %vm957, %v875
      %1055 = vst.msk [vmem:[#allocation2 + $0x308] sm:$0xff] %vm957, %v880
      %1056 = vst.msk [vmem:[#allocation2 + $0x310] sm:$0xff] %vm957, %v885
      %1057 = vst.msk [vmem:[#allocation2 + $0x318] sm:$0xff] %vm957, %v890
      %1058 = vst.msk [vmem:[#allocation2 + $0x320] sm:$0xff] %vm957, %v895
      %1059 = vst.msk [vmem:[#allocation2 + $0x328] sm:$0xff] %vm957, %v900
      %1060 = vst.msk [vmem:[#allocation2 + $0x330] sm:$0xff] %vm957, %v905
      %1061 = vst.msk [vmem:[#allocation2 + $0x338] sm:$0xff] %vm957, %v910
      %1062 = vst.msk [vmem:[#allocation2 + $0x340] sm:$0xff] %vm957, %v915
      %1063 = vst.msk [vmem:[#allocation2 + $0x348] sm:$0xff] %vm957, %v920
      %1064 = vst.msk [vmem:[#allocation2 + $0x350] sm:$0xff] %vm957, %v925
      %1065 = vst.msk [vmem:[#allocation2 + $0x358] sm:$0xff] %vm957, %v930
      %1066 = vst.msk [vmem:[#allocation2 + $0x360] sm:$0xff] %vm957, %v935
      %1067 = vst.msk [vmem:[#allocation2 + $0x368] sm:$0xff] %vm957, %v940
      %1068 = vst.msk [vmem:[#allocation2 + $0x370] sm:$0xff] %vm957, %v945
      %1069 = vst.msk [vmem:[#allocation2 + $0x378] sm:$0xff] %vm957, %v950
      %vm1070 = vcmask 257024
      %1071 = vst.msk [vmem:[#allocation2 + $0x380] sm:$0xf] %vm1070, %v955
      %v1072 = vld [vmem:[#allocation2] sm:$0xff]
      %v1073 = vld [vmem:[#allocation2 + $0x8] sm:$0xff]
      %v1074 = vld [vmem:[#allocation2 + $0x10] sm:$0xff]
      %v1075 = vld [vmem:[#allocation2 + $0x18] sm:$0xff]
      %v1076 = vld [vmem:[#allocation2 + $0x20] sm:$0xff]
      %v1077 = vld [vmem:[#allocation2 + $0x28] sm:$0xff]
      %v1078 = vld [vmem:[#allocation2 + $0x30] sm:$0xff]
      %v1079 = vld [vmem:[#allocation2 + $0x38] sm:$0xff]
      %v1080 = vld [vmem:[#allocation2 + $0x40] sm:$0xff]
      %v1081 = vld [vmem:[#allocation2 + $0x48] sm:$0xff]
      %v1082 = vld [vmem:[#allocation2 + $0x50] sm:$0xff]
      %v1083 = vld [vmem:[#allocation2 + $0x58] sm:$0xff]
      %v1084 = vld [vmem:[#allocation2 + $0x60] sm:$0xff]
      %v1085 = vld [vmem:[#allocation2 + $0x68] sm:$0xff]
      %v1086 = vld [vmem:[#allocation2 + $0x70] sm:$0xff]
      %v1087 = vld [vmem:[#allocation2 + $0x78] sm:$0xff]
      %v1088 = vld [vmem:[#allocation2 + $0x80] sm:$0xff]
      %v1089 = vld [vmem:[#allocation2 + $0x88] sm:$0xff]
      %v1090 = vld [vmem:[#allocation2 + $0x90] sm:$0xff]
      %v1091 = vld [vmem:[#allocation2 + $0x98] sm:$0xff]
      %v1092 = vld [vmem:[#allocation2 + $0xa0] sm:$0xff]
      %v1093 = vld [vmem:[#allocation2 + $0xa8] sm:$0xff]
      %v1094 = vld [vmem:[#allocation2 + $0xb0] sm:$0xff]
      %v1095 = vld [vmem:[#allocation2 + $0xb8] sm:$0xff]
      %v1096 = vld [vmem:[#allocation2 + $0xc0] sm:$0xff]
      %v1097 = vld [vmem:[#allocation2 + $0xc8] sm:$0xff]
      %v1098 = vld [vmem:[#allocation2 + $0xd0] sm:$0xff]
      %v1099 = vld [vmem:[#allocation2 + $0xd8] sm:$0xff]
      %v1100 = vld [vmem:[#allocation2 + $0xe0] sm:$0xff]
      %v1101 = vld [vmem:[#allocation2 + $0xe8] sm:$0xff]
      %v1102 = vld [vmem:[#allocation2 + $0xf0] sm:$0xff]
      %v1103 = vld [vmem:[#allocation2 + $0xf8] sm:$0xff]
      %v1104 = vld [vmem:[#allocation2 + $0x100] sm:$0xff]
      %v1105 = vld [vmem:[#allocation2 + $0x108] sm:$0xff]
      %v1106 = vld [vmem:[#allocation2 + $0x110] sm:$0xff]
      %v1107 = vld [vmem:[#allocation2 + $0x118] sm:$0xff]
      %v1108 = vld [vmem:[#allocation2 + $0x120] sm:$0xff]
      %v1109 = vld [vmem:[#allocation2 + $0x128] sm:$0xff]
      %v1110 = vld [vmem:[#allocation2 + $0x130] sm:$0xff]
      %v1111 = vld [vmem:[#allocation2 + $0x138] sm:$0xff]
      %v1112 = vld [vmem:[#allocation2 + $0x140] sm:$0xff]
      %v1113 = vld [vmem:[#allocation2 + $0x148] sm:$0xff]
      %v1114 = vld [vmem:[#allocation2 + $0x150] sm:$0xff]
      %v1115 = vld [vmem:[#allocation2 + $0x158] sm:$0xff]
      %v1116 = vld [vmem:[#allocation2 + $0x160] sm:$0xff]
      %v1117 = vld [vmem:[#allocation2 + $0x168] sm:$0xff]
      %v1118 = vld [vmem:[#allocation2 + $0x170] sm:$0xff]
      %v1119 = vld [vmem:[#allocation2 + $0x178] sm:$0xff]
      %v1120 = vld [vmem:[#allocation2 + $0x180] sm:$0xff]
      %v1121 = vld [vmem:[#allocation2 + $0x188] sm:$0xff]
      %v1122 = vld [vmem:[#allocation2 + $0x190] sm:$0xff]
      %v1123 = vld [vmem:[#allocation2 + $0x198] sm:$0xff]
      %v1124 = vld [vmem:[#allocation2 + $0x1a0] sm:$0xff]
      %v1125 = vld [vmem:[#allocation2 + $0x1a8] sm:$0xff]
      %v1126 = vld [vmem:[#allocation2 + $0x1b0] sm:$0xff]
      %v1127 = vld [vmem:[#allocation2 + $0x1b8] sm:$0xff]
      %v1128 = vld [vmem:[#allocation2 + $0x1c0] sm:$0xff]
      %v1129 = vld [vmem:[#allocation2 + $0x1c8] sm:$0xff]
      %v1130 = vld [vmem:[#allocation2 + $0x1d0] sm:$0xff]
      %v1131 = vld [vmem:[#allocation2 + $0x1d8] sm:$0xff]
      %v1132 = vld [vmem:[#allocation2 + $0x1e0] sm:$0xff]
      %v1133 = vld [vmem:[#allocation2 + $0x1e8] sm:$0xff]
      %v1134 = vld [vmem:[#allocation2 + $0x1f0] sm:$0xff]
      %v1135 = vld [vmem:[#allocation2 + $0x1f8] sm:$0xff]
      %v1136 = vld [vmem:[#allocation2 + $0x200] sm:$0xff]
      %v1137 = vld [vmem:[#allocation2 + $0x208] sm:$0xff]
      %v1138 = vld [vmem:[#allocation2 + $0x210] sm:$0xff]
      %v1139 = vld [vmem:[#allocation2 + $0x218] sm:$0xff]
      %v1140 = vld [vmem:[#allocation2 + $0x220] sm:$0xff]
      %v1141 = vld [vmem:[#allocation2 + $0x228] sm:$0xff]
      %v1142 = vld [vmem:[#allocation2 + $0x230] sm:$0xff]
      %v1143 = vld [vmem:[#allocation2 + $0x238] sm:$0xff]
      %v1144 = vld [vmem:[#allocation2 + $0x240] sm:$0xff]
      %v1145 = vld [vmem:[#allocation2 + $0x248] sm:$0xff]
      %v1146 = vld [vmem:[#allocation2 + $0x250] sm:$0xff]
      %v1147 = vld [vmem:[#allocation2 + $0x258] sm:$0xff]
      %v1148 = vld [vmem:[#allocation2 + $0x260] sm:$0xff]
      %v1149 = vld [vmem:[#allocation2 + $0x268] sm:$0xff]
      %v1150 = vld [vmem:[#allocation2 + $0x270] sm:$0xff]
      %v1151 = vld [vmem:[#allocation2 + $0x278] sm:$0xff]
      %v1152 = vld [vmem:[#allocation2 + $0x280] sm:$0xff]
      %v1153 = vld [vmem:[#allocation2 + $0x288] sm:$0xff]
      %v1154 = vld [vmem:[#allocation2 + $0x290] sm:$0xff]
      %v1155 = vld [vmem:[#allocation2 + $0x298] sm:$0xff]
      %v1156 = vld [vmem:[#allocation2 + $0x2a0] sm:$0xff]
      %v1157 = vld [vmem:[#allocation2 + $0x2a8] sm:$0xff]
      %v1158 = vld [vmem:[#allocation2 + $0x2b0] sm:$0xff]
      %v1159 = vld [vmem:[#allocation2 + $0x2b8] sm:$0xff]
      %v1160 = vld [vmem:[#allocation2 + $0x2c0] sm:$0xff]
      %v1161 = vld [vmem:[#allocation2 + $0x2c8] sm:$0xff]
      %v1162 = vld [vmem:[#allocation2 + $0x2d0] sm:$0xff]
      %v1163 = vld [vmem:[#allocation2 + $0x2d8] sm:$0xff]
      %v1164 = vld [vmem:[#allocation2 + $0x2e0] sm:$0xff]
      %v1165 = vld [vmem:[#allocation2 + $0x2e8] sm:$0xff]
      %v1166 = vld [vmem:[#allocation2 + $0x2f0] sm:$0xff]
      %v1167 = vld [vmem:[#allocation2 + $0x2f8] sm:$0xff]
      %v1168 = vld [vmem:[#allocation2 + $0x300] sm:$0xff]
      %v1169 = vld [vmem:[#allocation2 + $0x308] sm:$0xff]
      %v1170 = vld [vmem:[#allocation2 + $0x310] sm:$0xff]
      %v1171 = vld [vmem:[#allocation2 + $0x318] sm:$0xff]
      %v1172 = vld [vmem:[#allocation2 + $0x320] sm:$0xff]
      %v1173 = vld [vmem:[#allocation2 + $0x328] sm:$0xff]
      %v1174 = vld [vmem:[#allocation2 + $0x330] sm:$0xff]
      %v1175 = vld [vmem:[#allocation2 + $0x338] sm:$0xff]
      %v1176 = vld [vmem:[#allocation2 + $0x340] sm:$0x3f]
      %v1177 = vld [vmem:[%s1] sm:$0x1]
      %v1178 = vlaneseq
      %v1179 = vshrl.u32 %v1178, 7
      %v1180 = vsub.s32 0, %v1179
      %v1181 = vrot.slane %v1177, %v1180
      %v1182 = vmul.f32 %v1072, %v1181
      %v1183 = vmul.f32 %v1073, %v1181
      %v1184 = vmul.f32 %v1074, %v1181
      %v1185 = vmul.f32 %v1075, %v1181
      %v1186 = vmul.f32 %v1076, %v1181
      %v1187 = vmul.f32 %v1077, %v1181
      %v1188 = vmul.f32 %v1078, %v1181
      %v1189 = vmul.f32 %v1079, %v1181
      %v1190 = vmul.f32 %v1080, %v1181
      %v1191 = vmul.f32 %v1081, %v1181
      %v1192 = vmul.f32 %v1082, %v1181
      %v1193 = vmul.f32 %v1083, %v1181
      %v1194 = vmul.f32 %v1084, %v1181
      %v1195 = vmul.f32 %v1085, %v1181
      %v1196 = vmul.f32 %v1086, %v1181
      %v1197 = vmul.f32 %v1087, %v1181
      %v1198 = vmul.f32 %v1088, %v1181
      %v1199 = vmul.f32 %v1089, %v1181
      %v1200 = vmul.f32 %v1090, %v1181
      %v1201 = vmul.f32 %v1091, %v1181
      %v1202 = vmul.f32 %v1092, %v1181
      %v1203 = vmul.f32 %v1093, %v1181
      %v1204 = vmul.f32 %v1094, %v1181
      %v1205 = vmul.f32 %v1095, %v1181
      %v1206 = vmul.f32 %v1096, %v1181
      %v1207 = vmul.f32 %v1097, %v1181
      %v1208 = vmul.f32 %v1098, %v1181
      %v1209 = vmul.f32 %v1099, %v1181
      %v1210 = vmul.f32 %v1100, %v1181
      %v1211 = vmul.f32 %v1101, %v1181
      %v1212 = vmul.f32 %v1102, %v1181
      %v1213 = vmul.f32 %v1103, %v1181
      %v1214 = vmul.f32 %v1104, %v1181
      %v1215 = vmul.f32 %v1105, %v1181
      %v1216 = vmul.f32 %v1106, %v1181
      %v1217 = vmul.f32 %v1107, %v1181
      %v1218 = vmul.f32 %v1108, %v1181
      %v1219 = vmul.f32 %v1109, %v1181
      %v1220 = vmul.f32 %v1110, %v1181
      %v1221 = vmul.f32 %v1111, %v1181
      %v1222 = vmul.f32 %v1112, %v1181
      %v1223 = vmul.f32 %v1113, %v1181
      %v1224 = vmul.f32 %v1114, %v1181
      %v1225 = vmul.f32 %v1115, %v1181
      %v1226 = vmul.f32 %v1116, %v1181
      %v1227 = vmul.f32 %v1117, %v1181
      %v1228 = vmul.f32 %v1118, %v1181
      %v1229 = vmul.f32 %v1119, %v1181
      %v1230 = vmul.f32 %v1120, %v1181
      %v1231 = vmul.f32 %v1121, %v1181
      %v1232 = vmul.f32 %v1122, %v1181
      %v1233 = vmul.f32 %v1123, %v1181
      %v1234 = vmul.f32 %v1124, %v1181
      %v1235 = vmul.f32 %v1125, %v1181
      %v1236 = vmul.f32 %v1126, %v1181
      %v1237 = vmul.f32 %v1127, %v1181
      %v1238 = vmul.f32 %v1128, %v1181
      %v1239 = vmul.f32 %v1129, %v1181
      %v1240 = vmul.f32 %v1130, %v1181
      %v1241 = vmul.f32 %v1131, %v1181
      %v1242 = vmul.f32 %v1132, %v1181
      %v1243 = vmul.f32 %v1133, %v1181
      %v1244 = vmul.f32 %v1134, %v1181
      %v1245 = vmul.f32 %v1135, %v1181
      %v1246 = vmul.f32 %v1136, %v1181
      %v1247 = vmul.f32 %v1137, %v1181
      %v1248 = vmul.f32 %v1138, %v1181
      %v1249 = vmul.f32 %v1139, %v1181
      %v1250 = vmul.f32 %v1140, %v1181
      %v1251 = vmul.f32 %v1141, %v1181
      %v1252 = vmul.f32 %v1142, %v1181
      %v1253 = vmul.f32 %v1143, %v1181
      %v1254 = vmul.f32 %v1144, %v1181
      %v1255 = vmul.f32 %v1145, %v1181
      %v1256 = vmul.f32 %v1146, %v1181
      %v1257 = vmul.f32 %v1147, %v1181
      %v1258 = vmul.f32 %v1148, %v1181
      %v1259 = vmul.f32 %v1149, %v1181
      %v1260 = vmul.f32 %v1150, %v1181
      %v1261 = vmul.f32 %v1151, %v1181
      %v1262 = vmul.f32 %v1152, %v1181
      %v1263 = vmul.f32 %v1153, %v1181
      %v1264 = vmul.f32 %v1154, %v1181
      %v1265 = vmul.f32 %v1155, %v1181
      %v1266 = vmul.f32 %v1156, %v1181
      %v1267 = vmul.f32 %v1157, %v1181
      %v1268 = vmul.f32 %v1158, %v1181
      %v1269 = vmul.f32 %v1159, %v1181
      %v1270 = vmul.f32 %v1160, %v1181
      %v1271 = vmul.f32 %v1161, %v1181
      %v1272 = vmul.f32 %v1162, %v1181
      %v1273 = vmul.f32 %v1163, %v1181
      %v1274 = vmul.f32 %v1164, %v1181
      %v1275 = vmul.f32 %v1165, %v1181
      %v1276 = vmul.f32 %v1166, %v1181
      %v1277 = vmul.f32 %v1167, %v1181
      %v1278 = vmul.f32 %v1168, %v1181
      %v1279 = vmul.f32 %v1169, %v1181
      %v1280 = vmul.f32 %v1170, %v1181
      %v1281 = vmul.f32 %v1171, %v1181
      %v1282 = vmul.f32 %v1172, %v1181
      %v1283 = vmul.f32 %v1173, %v1181
      %v1284 = vmul.f32 %v1174, %v1181
      %v1285 = vmul.f32 %v1175, %v1181
      %v1286 = vmul.f32 %v1176, %v1181
      %v1287 = vadd.f32 %v1182, 0.0
      %v1288 = vadd.f32 %v1183, 0.0
      %v1289 = vadd.f32 %v1184, 0.0
      %v1290 = vadd.f32 %v1185, 0.0
      %v1291 = vadd.f32 %v1186, 0.0
      %v1292 = vadd.f32 %v1187, 0.0
      %v1293 = vadd.f32 %v1188, 0.0
      %v1294 = vadd.f32 %v1189, 0.0
      %v1295 = vadd.f32 %v1190, 0.0
      %v1296 = vadd.f32 %v1191, 0.0
      %v1297 = vadd.f32 %v1192, 0.0
      %v1298 = vadd.f32 %v1193, 0.0
      %v1299 = vadd.f32 %v1194, 0.0
      %v1300 = vadd.f32 %v1195, 0.0
      %v1301 = vadd.f32 %v1196, 0.0
      %v1302 = vadd.f32 %v1197, 0.0
      %v1303 = vadd.f32 %v1198, 0.0
      %v1304 = vadd.f32 %v1199, 0.0
      %v1305 = vadd.f32 %v1200, 0.0
      %v1306 = vadd.f32 %v1201, 0.0
      %v1307 = vadd.f32 %v1202, 0.0
      %v1308 = vadd.f32 %v1203, 0.0
      %v1309 = vadd.f32 %v1204, 0.0
      %v1310 = vadd.f32 %v1205, 0.0
      %v1311 = vadd.f32 %v1206, 0.0
      %v1312 = vadd.f32 %v1207, 0.0
      %v1313 = vadd.f32 %v1208, 0.0
      %v1314 = vadd.f32 %v1209, 0.0
      %v1315 = vadd.f32 %v1210, 0.0
      %v1316 = vadd.f32 %v1211, 0.0
      %v1317 = vadd.f32 %v1212, 0.0
      %v1318 = vadd.f32 %v1213, 0.0
      %v1319 = vadd.f32 %v1214, 0.0
      %v1320 = vadd.f32 %v1215, 0.0
      %v1321 = vadd.f32 %v1216, 0.0
      %v1322 = vadd.f32 %v1217, 0.0
      %v1323 = vadd.f32 %v1218, 0.0
      %v1324 = vadd.f32 %v1219, 0.0
      %v1325 = vadd.f32 %v1220, 0.0
      %v1326 = vadd.f32 %v1221, 0.0
      %v1327 = vadd.f32 %v1222, 0.0
      %v1328 = vadd.f32 %v1223, 0.0
      %v1329 = vadd.f32 %v1224, 0.0
      %v1330 = vadd.f32 %v1225, 0.0
      %v1331 = vadd.f32 %v1226, 0.0
      %v1332 = vadd.f32 %v1227, 0.0
      %v1333 = vadd.f32 %v1228, 0.0
      %v1334 = vadd.f32 %v1229, 0.0
      %v1335 = vadd.f32 %v1230, 0.0
      %v1336 = vadd.f32 %v1231, 0.0
      %v1337 = vadd.f32 %v1232, 0.0
      %v1338 = vadd.f32 %v1233, 0.0
      %v1339 = vadd.f32 %v1234, 0.0
      %v1340 = vadd.f32 %v1235, 0.0
      %v1341 = vadd.f32 %v1236, 0.0
      %v1342 = vadd.f32 %v1237, 0.0
      %v1343 = vadd.f32 %v1238, 0.0
      %v1344 = vadd.f32 %v1239, 0.0
      %v1345 = vadd.f32 %v1240, 0.0
      %v1346 = vadd.f32 %v1241, 0.0
      %v1347 = vadd.f32 %v1242, 0.0
      %v1348 = vadd.f32 %v1243, 0.0
      %v1349 = vadd.f32 %v1244, 0.0
      %v1350 = vadd.f32 %v1245, 0.0
      %v1351 = vadd.f32 %v1246, 0.0
      %v1352 = vadd.f32 %v1247, 0.0
      %v1353 = vadd.f32 %v1248, 0.0
      %v1354 = vadd.f32 %v1249, 0.0
      %v1355 = vadd.f32 %v1250, 0.0
      %v1356 = vadd.f32 %v1251, 0.0
      %v1357 = vadd.f32 %v1252, 0.0
      %v1358 = vadd.f32 %v1253, 0.0
      %v1359 = vadd.f32 %v1254, 0.0
      %v1360 = vadd.f32 %v1255, 0.0
      %v1361 = vadd.f32 %v1256, 0.0
      %v1362 = vadd.f32 %v1257, 0.0
      %v1363 = vadd.f32 %v1258, 0.0
      %v1364 = vadd.f32 %v1259, 0.0
      %v1365 = vadd.f32 %v1260, 0.0
      %v1366 = vadd.f32 %v1261, 0.0
      %v1367 = vadd.f32 %v1262, 0.0
      %v1368 = vadd.f32 %v1263, 0.0
      %v1369 = vadd.f32 %v1264, 0.0
      %v1370 = vadd.f32 %v1265, 0.0
      %v1371 = vadd.f32 %v1266, 0.0
      %v1372 = vadd.f32 %v1267, 0.0
      %v1373 = vadd.f32 %v1268, 0.0
      %v1374 = vadd.f32 %v1269, 0.0
      %v1375 = vadd.f32 %v1270, 0.0
      %v1376 = vadd.f32 %v1271, 0.0
      %v1377 = vadd.f32 %v1272, 0.0
      %v1378 = vadd.f32 %v1273, 0.0
      %v1379 = vadd.f32 %v1274, 0.0
      %v1380 = vadd.f32 %v1275, 0.0
      %v1381 = vadd.f32 %v1276, 0.0
      %v1382 = vadd.f32 %v1277, 0.0
      %v1383 = vadd.f32 %v1278, 0.0
      %v1384 = vadd.f32 %v1279, 0.0
      %v1385 = vadd.f32 %v1280, 0.0
      %v1386 = vadd.f32 %v1281, 0.0
      %v1387 = vadd.f32 %v1282, 0.0
      %v1388 = vadd.f32 %v1283, 0.0
      %v1389 = vadd.f32 %v1284, 0.0
      %v1390 = vadd.f32 %v1285, 0.0
      %v1391 = vadd.f32 %v1286, 0.0
      %v1392 = vld [vmem:[#allocation2 + $0x1] sm:$0xff]
      %v1393 = vld [vmem:[#allocation2 + $0x9] sm:$0xff]
      %v1394 = vld [vmem:[#allocation2 + $0x11] sm:$0xff]
      %v1395 = vld [vmem:[#allocation2 + $0x19] sm:$0xff]
      %v1396 = vld [vmem:[#allocation2 + $0x21] sm:$0xff]
      %v1397 = vld [vmem:[#allocation2 + $0x29] sm:$0xff]
      %v1398 = vld [vmem:[#allocation2 + $0x31] sm:$0xff]
      %v1399 = vld [vmem:[#allocation2 + $0x39] sm:$0xff]
      %v1400 = vld [vmem:[#allocation2 + $0x41] sm:$0xff]
      %v1401 = vld [vmem:[#allocation2 + $0x49] sm:$0xff]
      %v1402 = vld [vmem:[#allocation2 + $0x51] sm:$0xff]
      %v1403 = vld [vmem:[#allocation2 + $0x59] sm:$0xff]
      %v1404 = vld [vmem:[#allocation2 + $0x61] sm:$0xff]
      %v1405 = vld [vmem:[#allocation2 + $0x69] sm:$0xff]
      %v1406 = vld [vmem:[#allocation2 + $0x71] sm:$0xff]
      %v1407 = vld [vmem:[#allocation2 + $0x79] sm:$0xff]
      %v1408 = vld [vmem:[#allocation2 + $0x81] sm:$0xff]
      %v1409 = vld [vmem:[#allocation2 + $0x89] sm:$0xff]
      %v1410 = vld [vmem:[#allocation2 + $0x91] sm:$0xff]
      %v1411 = vld [vmem:[#allocation2 + $0x99] sm:$0xff]
      %v1412 = vld [vmem:[#allocation2 + $0xa1] sm:$0xff]
      %v1413 = vld [vmem:[#allocation2 + $0xa9] sm:$0xff]
      %v1414 = vld [vmem:[#allocation2 + $0xb1] sm:$0xff]
      %v1415 = vld [vmem:[#allocation2 + $0xb9] sm:$0xff]
      %v1416 = vld [vmem:[#allocation2 + $0xc1] sm:$0xff]
      %v1417 = vld [vmem:[#allocation2 + $0xc9] sm:$0xff]
      %v1418 = vld [vmem:[#allocation2 + $0xd1] sm:$0xff]
      %v1419 = vld [vmem:[#allocation2 + $0xd9] sm:$0xff]
      %v1420 = vld [vmem:[#allocation2 + $0xe1] sm:$0xff]
      %v1421 = vld [vmem:[#allocation2 + $0xe9] sm:$0xff]
      %v1422 = vld [vmem:[#allocation2 + $0xf1] sm:$0xff]
      %v1423 = vld [vmem:[#allocation2 + $0xf9] sm:$0xff]
      %v1424 = vld [vmem:[#allocation2 + $0x101] sm:$0xff]
      %v1425 = vld [vmem:[#allocation2 + $0x109] sm:$0xff]
      %v1426 = vld [vmem:[#allocation2 + $0x111] sm:$0xff]
      %v1427 = vld [vmem:[#allocation2 + $0x119] sm:$0xff]
      %v1428 = vld [vmem:[#allocation2 + $0x121] sm:$0xff]
      %v1429 = vld [vmem:[#allocation2 + $0x129] sm:$0xff]
      %v1430 = vld [vmem:[#allocation2 + $0x131] sm:$0xff]
      %v1431 = vld [vmem:[#allocation2 + $0x139] sm:$0xff]
      %v1432 = vld [vmem:[#allocation2 + $0x141] sm:$0xff]
      %v1433 = vld [vmem:[#allocation2 + $0x149] sm:$0xff]
      %v1434 = vld [vmem:[#allocation2 + $0x151] sm:$0xff]
      %v1435 = vld [vmem:[#allocation2 + $0x159] sm:$0xff]
      %v1436 = vld [vmem:[#allocation2 + $0x161] sm:$0xff]
      %v1437 = vld [vmem:[#allocation2 + $0x169] sm:$0xff]
      %v1438 = vld [vmem:[#allocation2 + $0x171] sm:$0xff]
      %v1439 = vld [vmem:[#allocation2 + $0x179] sm:$0xff]
      %v1440 = vld [vmem:[#allocation2 + $0x181] sm:$0xff]
      %v1441 = vld [vmem:[#allocation2 + $0x189] sm:$0xff]
      %v1442 = vld [vmem:[#allocation2 + $0x191] sm:$0xff]
      %v1443 = vld [vmem:[#allocation2 + $0x199] sm:$0xff]
      %v1444 = vld [vmem:[#allocation2 + $0x1a1] sm:$0xff]
      %v1445 = vld [vmem:[#allocation2 + $0x1a9] sm:$0xff]
      %v1446 = vld [vmem:[#allocation2 + $0x1b1] sm:$0xff]
      %v1447 = vld [vmem:[#allocation2 + $0x1b9] sm:$0xff]
      %v1448 = vld [vmem:[#allocation2 + $0x1c1] sm:$0xff]
      %v1449 = vld [vmem:[#allocation2 + $0x1c9] sm:$0xff]
      %v1450 = vld [vmem:[#allocation2 + $0x1d1] sm:$0xff]
      %v1451 = vld [vmem:[#allocation2 + $0x1d9] sm:$0xff]
      %v1452 = vld [vmem:[#allocation2 + $0x1e1] sm:$0xff]
      %v1453 = vld [vmem:[#allocation2 + $0x1e9] sm:$0xff]
      %v1454 = vld [vmem:[#allocation2 + $0x1f1] sm:$0xff]
      %v1455 = vld [vmem:[#allocation2 + $0x1f9] sm:$0xff]
      %v1456 = vld [vmem:[#allocation2 + $0x201] sm:$0xff]
      %v1457 = vld [vmem:[#allocation2 + $0x209] sm:$0xff]
      %v1458 = vld [vmem:[#allocation2 + $0x211] sm:$0xff]
      %v1459 = vld [vmem:[#allocation2 + $0x219] sm:$0xff]
      %v1460 = vld [vmem:[#allocation2 + $0x221] sm:$0xff]
      %v1461 = vld [vmem:[#allocation2 + $0x229] sm:$0xff]
      %v1462 = vld [vmem:[#allocation2 + $0x231] sm:$0xff]
      %v1463 = vld [vmem:[#allocation2 + $0x239] sm:$0xff]
      %v1464 = vld [vmem:[#allocation2 + $0x241] sm:$0xff]
      %v1465 = vld [vmem:[#allocation2 + $0x249] sm:$0xff]
      %v1466 = vld [vmem:[#allocation2 + $0x251] sm:$0xff]
      %v1467 = vld [vmem:[#allocation2 + $0x259] sm:$0xff]
      %v1468 = vld [vmem:[#allocation2 + $0x261] sm:$0xff]
      %v1469 = vld [vmem:[#allocation2 + $0x269] sm:$0xff]
      %v1470 = vld [vmem:[#allocation2 + $0x271] sm:$0xff]
      %v1471 = vld [vmem:[#allocation2 + $0x279] sm:$0xff]
      %v1472 = vld [vmem:[#allocation2 + $0x281] sm:$0xff]
      %v1473 = vld [vmem:[#allocation2 + $0x289] sm:$0xff]
      %v1474 = vld [vmem:[#allocation2 + $0x291] sm:$0xff]
      %v1475 = vld [vmem:[#allocation2 + $0x299] sm:$0xff]
      %v1476 = vld [vmem:[#allocation2 + $0x2a1] sm:$0xff]
      %v1477 = vld [vmem:[#allocation2 + $0x2a9] sm:$0xff]
      %v1478 = vld [vmem:[#allocation2 + $0x2b1] sm:$0xff]
      %v1479 = vld [vmem:[#allocation2 + $0x2b9] sm:$0xff]
      %v1480 = vld [vmem:[#allocation2 + $0x2c1] sm:$0xff]
      %v1481 = vld [vmem:[#allocation2 + $0x2c9] sm:$0xff]
      %v1482 = vld [vmem:[#allocation2 + $0x2d1] sm:$0xff]
      %v1483 = vld [vmem:[#allocation2 + $0x2d9] sm:$0xff]
      %v1484 = vld [vmem:[#allocation2 + $0x2e1] sm:$0xff]
      %v1485 = vld [vmem:[#allocation2 + $0x2e9] sm:$0xff]
      %v1486 = vld [vmem:[#allocation2 + $0x2f1] sm:$0xff]
      %v1487 = vld [vmem:[#allocation2 + $0x2f9] sm:$0xff]
      %v1488 = vld [vmem:[#allocation2 + $0x301] sm:$0xff]
      %v1489 = vld [vmem:[#allocation2 + $0x309] sm:$0xff]
      %v1490 = vld [vmem:[#allocation2 + $0x311] sm:$0xff]
      %v1491 = vld [vmem:[#allocation2 + $0x319] sm:$0xff]
      %v1492 = vld [vmem:[#allocation2 + $0x321] sm:$0xff]
      %v1493 = vld [vmem:[#allocation2 + $0x329] sm:$0xff]
      %v1494 = vld [vmem:[#allocation2 + $0x331] sm:$0xff]
      %v1495 = vld [vmem:[#allocation2 + $0x339] sm:$0xff]
      %v1496 = vld [vmem:[#allocation2 + $0x341] sm:$0x3f]
      %v1497 = vld [vmem:[%s1 + $0x1] sm:$0x1]
      %v1498 = vlaneseq
      %v1499 = vshrl.u32 %v1498, 7
      %v1500 = vsub.s32 0, %v1499
      %v1501 = vrot.slane %v1497, %v1500
      %v1502 = vmul.f32 %v1392, %v1501
      %v1503 = vmul.f32 %v1393, %v1501
      %v1504 = vmul.f32 %v1394, %v1501
      %v1505 = vmul.f32 %v1395, %v1501
      %v1506 = vmul.f32 %v1396, %v1501
      %v1507 = vmul.f32 %v1397, %v1501
      %v1508 = vmul.f32 %v1398, %v1501
      %v1509 = vmul.f32 %v1399, %v1501
      %v1510 = vmul.f32 %v1400, %v1501
      %v1511 = vmul.f32 %v1401, %v1501
      %v1512 = vmul.f32 %v1402, %v1501
      %v1513 = vmul.f32 %v1403, %v1501
      %v1514 = vmul.f32 %v1404, %v1501
      %v1515 = vmul.f32 %v1405, %v1501
      %v1516 = vmul.f32 %v1406, %v1501
      %v1517 = vmul.f32 %v1407, %v1501
      %v1518 = vmul.f32 %v1408, %v1501
      %v1519 = vmul.f32 %v1409, %v1501
      %v1520 = vmul.f32 %v1410, %v1501
      %v1521 = vmul.f32 %v1411, %v1501
      %v1522 = vmul.f32 %v1412, %v1501
      %v1523 = vmul.f32 %v1413, %v1501
      %v1524 = vmul.f32 %v1414, %v1501
      %v1525 = vmul.f32 %v1415, %v1501
      %v1526 = vmul.f32 %v1416, %v1501
      %v1527 = vmul.f32 %v1417, %v1501
      %v1528 = vmul.f32 %v1418, %v1501
      %v1529 = vmul.f32 %v1419, %v1501
      %v1530 = vmul.f32 %v1420, %v1501
      %v1531 = vmul.f32 %v1421, %v1501
      %v1532 = vmul.f32 %v1422, %v1501
      %v1533 = vmul.f32 %v1423, %v1501
      %v1534 = vmul.f32 %v1424, %v1501
      %v1535 = vmul.f32 %v1425, %v1501
      %v1536 = vmul.f32 %v1426, %v1501
      %v1537 = vmul.f32 %v1427, %v1501
      %v1538 = vmul.f32 %v1428, %v1501
      %v1539 = vmul.f32 %v1429, %v1501
      %v1540 = vmul.f32 %v1430, %v1501
      %v1541 = vmul.f32 %v1431, %v1501
      %v1542 = vmul.f32 %v1432, %v1501
      %v1543 = vmul.f32 %v1433, %v1501
      %v1544 = vmul.f32 %v1434, %v1501
      %v1545 = vmul.f32 %v1435, %v1501
      %v1546 = vmul.f32 %v1436, %v1501
      %v1547 = vmul.f32 %v1437, %v1501
      %v1548 = vmul.f32 %v1438, %v1501
      %v1549 = vmul.f32 %v1439, %v1501
      %v1550 = vmul.f32 %v1440, %v1501
      %v1551 = vmul.f32 %v1441, %v1501
      %v1552 = vmul.f32 %v1442, %v1501
      %v1553 = vmul.f32 %v1443, %v1501
      %v1554 = vmul.f32 %v1444, %v1501
      %v1555 = vmul.f32 %v1445, %v1501
      %v1556 = vmul.f32 %v1446, %v1501
      %v1557 = vmul.f32 %v1447, %v1501
      %v1558 = vmul.f32 %v1448, %v1501
      %v1559 = vmul.f32 %v1449, %v1501
      %v1560 = vmul.f32 %v1450, %v1501
      %v1561 = vmul.f32 %v1451, %v1501
      %v1562 = vmul.f32 %v1452, %v1501
      %v1563 = vmul.f32 %v1453, %v1501
      %v1564 = vmul.f32 %v1454, %v1501
      %v1565 = vmul.f32 %v1455, %v1501
      %v1566 = vmul.f32 %v1456, %v1501
      %v1567 = vmul.f32 %v1457, %v1501
      %v1568 = vmul.f32 %v1458, %v1501
      %v1569 = vmul.f32 %v1459, %v1501
      %v1570 = vmul.f32 %v1460, %v1501
      %v1571 = vmul.f32 %v1461, %v1501
      %v1572 = vmul.f32 %v1462, %v1501
      %v1573 = vmul.f32 %v1463, %v1501
      %v1574 = vmul.f32 %v1464, %v1501
      %v1575 = vmul.f32 %v1465, %v1501
      %v1576 = vmul.f32 %v1466, %v1501
      %v1577 = vmul.f32 %v1467, %v1501
      %v1578 = vmul.f32 %v1468, %v1501
      %v1579 = vmul.f32 %v1469, %v1501
      %v1580 = vmul.f32 %v1470, %v1501
      %v1581 = vmul.f32 %v1471, %v1501
      %v1582 = vmul.f32 %v1472, %v1501
      %v1583 = vmul.f32 %v1473, %v1501
      %v1584 = vmul.f32 %v1474, %v1501
      %v1585 = vmul.f32 %v1475, %v1501
      %v1586 = vmul.f32 %v1476, %v1501
      %v1587 = vmul.f32 %v1477, %v1501
      %v1588 = vmul.f32 %v1478, %v1501
      %v1589 = vmul.f32 %v1479, %v1501
      %v1590 = vmul.f32 %v1480, %v1501
      %v1591 = vmul.f32 %v1481, %v1501
      %v1592 = vmul.f32 %v1482, %v1501
      %v1593 = vmul.f32 %v1483, %v1501
      %v1594 = vmul.f32 %v1484, %v1501
      %v1595 = vmul.f32 %v1485, %v1501
      %v1596 = vmul.f32 %v1486, %v1501
      %v1597 = vmul.f32 %v1487, %v1501
      %v1598 = vmul.f32 %v1488, %v1501
      %v1599 = vmul.f32 %v1489, %v1501
      %v1600 = vmul.f32 %v1490, %v1501
      %v1601 = vmul.f32 %v1491, %v1501
      %v1602 = vmul.f32 %v1492, %v1501
      %v1603 = vmul.f32 %v1493, %v1501
      %v1604 = vmul.f32 %v1494, %v1501
      %v1605 = vmul.f32 %v1495, %v1501
      %v1606 = vmul.f32 %v1496, %v1501
      %v1607 = vadd.f32 %v1287, %v1502
      %v1608 = vadd.f32 %v1288, %v1503
      %v1609 = vadd.f32 %v1289, %v1504
      %v1610 = vadd.f32 %v1290, %v1505
      %v1611 = vadd.f32 %v1291, %v1506
      %v1612 = vadd.f32 %v1292, %v1507
      %v1613 = vadd.f32 %v1293, %v1508
      %v1614 = vadd.f32 %v1294, %v1509
      %v1615 = vadd.f32 %v1295, %v1510
      %v1616 = vadd.f32 %v1296, %v1511
      %v1617 = vadd.f32 %v1297, %v1512
      %v1618 = vadd.f32 %v1298, %v1513
      %v1619 = vadd.f32 %v1299, %v1514
      %v1620 = vadd.f32 %v1300, %v1515
      %v1621 = vadd.f32 %v1301, %v1516
      %v1622 = vadd.f32 %v1302, %v1517
      %v1623 = vadd.f32 %v1303, %v1518
      %v1624 = vadd.f32 %v1304, %v1519
      %v1625 = vadd.f32 %v1305, %v1520
      %v1626 = vadd.f32 %v1306, %v1521
      %v1627 = vadd.f32 %v1307, %v1522
      %v1628 = vadd.f32 %v1308, %v1523
      %v1629 = vadd.f32 %v1309, %v1524
      %v1630 = vadd.f32 %v1310, %v1525
      %v1631 = vadd.f32 %v1311, %v1526
      %v1632 = vadd.f32 %v1312, %v1527
      %v1633 = vadd.f32 %v1313, %v1528
      %v1634 = vadd.f32 %v1314, %v1529
      %v1635 = vadd.f32 %v1315, %v1530
      %v1636 = vadd.f32 %v1316, %v1531
      %v1637 = vadd.f32 %v1317, %v1532
      %v1638 = vadd.f32 %v1318, %v1533
      %v1639 = vadd.f32 %v1319, %v1534
      %v1640 = vadd.f32 %v1320, %v1535
      %v1641 = vadd.f32 %v1321, %v1536
      %v1642 = vadd.f32 %v1322, %v1537
      %v1643 = vadd.f32 %v1323, %v1538
      %v1644 = vadd.f32 %v1324, %v1539
      %v1645 = vadd.f32 %v1325, %v1540
      %v1646 = vadd.f32 %v1326, %v1541
      %v1647 = vadd.f32 %v1327, %v1542
      %v1648 = vadd.f32 %v1328, %v1543
      %v1649 = vadd.f32 %v1329, %v1544
      %v1650 = vadd.f32 %v1330, %v1545
      %v1651 = vadd.f32 %v1331, %v1546
      %v1652 = vadd.f32 %v1332, %v1547
      %v1653 = vadd.f32 %v1333, %v1548
      %v1654 = vadd.f32 %v1334, %v1549
      %v1655 = vadd.f32 %v1335, %v1550
      %v1656 = vadd.f32 %v1336, %v1551
      %v1657 = vadd.f32 %v1337, %v1552
      %v1658 = vadd.f32 %v1338, %v1553
      %v1659 = vadd.f32 %v1339, %v1554
      %v1660 = vadd.f32 %v1340, %v1555
      %v1661 = vadd.f32 %v1341, %v1556
      %v1662 = vadd.f32 %v1342, %v1557
      %v1663 = vadd.f32 %v1343, %v1558
      %v1664 = vadd.f32 %v1344, %v1559
      %v1665 = vadd.f32 %v1345, %v1560
      %v1666 = vadd.f32 %v1346, %v1561
      %v1667 = vadd.f32 %v1347, %v1562
      %v1668 = vadd.f32 %v1348, %v1563
      %v1669 = vadd.f32 %v1349, %v1564
      %v1670 = vadd.f32 %v1350, %v1565
      %v1671 = vadd.f32 %v1351, %v1566
      %v1672 = vadd.f32 %v1352, %v1567
      %v1673 = vadd.f32 %v1353, %v1568
      %v1674 = vadd.f32 %v1354, %v1569
      %v1675 = vadd.f32 %v1355, %v1570
      %v1676 = vadd.f32 %v1356, %v1571
      %v1677 = vadd.f32 %v1357, %v1572
      %v1678 = vadd.f32 %v1358, %v1573
      %v1679 = vadd.f32 %v1359, %v1574
      %v1680 = vadd.f32 %v1360, %v1575
      %v1681 = vadd.f32 %v1361, %v1576
      %v1682 = vadd.f32 %v1362, %v1577
      %v1683 = vadd.f32 %v1363, %v1578
      %v1684 = vadd.f32 %v1364, %v1579
      %v1685 = vadd.f32 %v1365, %v1580
      %v1686 = vadd.f32 %v1366, %v1581
      %v1687 = vadd.f32 %v1367, %v1582
      %v1688 = vadd.f32 %v1368, %v1583
      %v1689 = vadd.f32 %v1369, %v1584
      %v1690 = vadd.f32 %v1370, %v1585
      %v1691 = vadd.f32 %v1371, %v1586
      %v1692 = vadd.f32 %v1372, %v1587
      %v1693 = vadd.f32 %v1373, %v1588
      %v1694 = vadd.f32 %v1374, %v1589
      %v1695 = vadd.f32 %v1375, %v1590
      %v1696 = vadd.f32 %v1376, %v1591
      %v1697 = vadd.f32 %v1377, %v1592
      %v1698 = vadd.f32 %v1378, %v1593
      %v1699 = vadd.f32 %v1379, %v1594
      %v1700 = vadd.f32 %v1380, %v1595
      %v1701 = vadd.f32 %v1381, %v1596
      %v1702 = vadd.f32 %v1382, %v1597
      %v1703 = vadd.f32 %v1383, %v1598
      %v1704 = vadd.f32 %v1384, %v1599
      %v1705 = vadd.f32 %v1385, %v1600
      %v1706 = vadd.f32 %v1386, %v1601
      %v1707 = vadd.f32 %v1387, %v1602
      %v1708 = vadd.f32 %v1388, %v1603
      %v1709 = vadd.f32 %v1389, %v1604
      %v1710 = vadd.f32 %v1390, %v1605
      %v1711 = vadd.f32 %v1391, %v1606
      %v1712 = vld [vmem:[#allocation2 + $0x2] sm:$0xff]
      %v1713 = vld [vmem:[#allocation2 + $0xa] sm:$0xff]
      %v1714 = vld [vmem:[#allocation2 + $0x12] sm:$0xff]
      %v1715 = vld [vmem:[#allocation2 + $0x1a] sm:$0xff]
      %v1716 = vld [vmem:[#allocation2 + $0x22] sm:$0xff]
      %v1717 = vld [vmem:[#allocation2 + $0x2a] sm:$0xff]
      %v1718 = vld [vmem:[#allocation2 + $0x32] sm:$0xff]
      %v1719 = vld [vmem:[#allocation2 + $0x3a] sm:$0xff]
      %v1720 = vld [vmem:[#allocation2 + $0x42] sm:$0xff]
      %v1721 = vld [vmem:[#allocation2 + $0x4a] sm:$0xff]
      %v1722 = vld [vmem:[#allocation2 + $0x52] sm:$0xff]
      %v1723 = vld [vmem:[#allocation2 + $0x5a] sm:$0xff]
      %v1724 = vld [vmem:[#allocation2 + $0x62] sm:$0xff]
      %v1725 = vld [vmem:[#allocation2 + $0x6a] sm:$0xff]
      %v1726 = vld [vmem:[#allocation2 + $0x72] sm:$0xff]
      %v1727 = vld [vmem:[#allocation2 + $0x7a] sm:$0xff]
      %v1728 = vld [vmem:[#allocation2 + $0x82] sm:$0xff]
      %v1729 = vld [vmem:[#allocation2 + $0x8a] sm:$0xff]
      %v1730 = vld [vmem:[#allocation2 + $0x92] sm:$0xff]
      %v1731 = vld [vmem:[#allocation2 + $0x9a] sm:$0xff]
      %v1732 = vld [vmem:[#allocation2 + $0xa2] sm:$0xff]
      %v1733 = vld [vmem:[#allocation2 + $0xaa] sm:$0xff]
      %v1734 = vld [vmem:[#allocation2 + $0xb2] sm:$0xff]
      %v1735 = vld [vmem:[#allocation2 + $0xba] sm:$0xff]
      %v1736 = vld [vmem:[#allocation2 + $0xc2] sm:$0xff]
      %v1737 = vld [vmem:[#allocation2 + $0xca] sm:$0xff]
      %v1738 = vld [vmem:[#allocation2 + $0xd2] sm:$0xff]
      %v1739 = vld [vmem:[#allocation2 + $0xda] sm:$0xff]
      %v1740 = vld [vmem:[#allocation2 + $0xe2] sm:$0xff]
      %v1741 = vld [vmem:[#allocation2 + $0xea] sm:$0xff]
      %v1742 = vld [vmem:[#allocation2 + $0xf2] sm:$0xff]
      %v1743 = vld [vmem:[#allocation2 + $0xfa] sm:$0xff]
      %v1744 = vld [vmem:[#allocation2 + $0x102] sm:$0xff]
      %v1745 = vld [vmem:[#allocation2 + $0x10a] sm:$0xff]
      %v1746 = vld [vmem:[#allocation2 + $0x112] sm:$0xff]
      %v1747 = vld [vmem:[#allocation2 + $0x11a] sm:$0xff]
      %v1748 = vld [vmem:[#allocation2 + $0x122] sm:$0xff]
      %v1749 = vld [vmem:[#allocation2 + $0x12a] sm:$0xff]
      %v1750 = vld [vmem:[#allocation2 + $0x132] sm:$0xff]
      %v1751 = vld [vmem:[#allocation2 + $0x13a] sm:$0xff]
      %v1752 = vld [vmem:[#allocation2 + $0x142] sm:$0xff]
      %v1753 = vld [vmem:[#allocation2 + $0x14a] sm:$0xff]
      %v1754 = vld [vmem:[#allocation2 + $0x152] sm:$0xff]
      %v1755 = vld [vmem:[#allocation2 + $0x15a] sm:$0xff]
      %v1756 = vld [vmem:[#allocation2 + $0x162] sm:$0xff]
      %v1757 = vld [vmem:[#allocation2 + $0x16a] sm:$0xff]
      %v1758 = vld [vmem:[#allocation2 + $0x172] sm:$0xff]
      %v1759 = vld [vmem:[#allocation2 + $0x17a] sm:$0xff]
      %v1760 = vld [vmem:[#allocation2 + $0x182] sm:$0xff]
      %v1761 = vld [vmem:[#allocation2 + $0x18a] sm:$0xff]
      %v1762 = vld [vmem:[#allocation2 + $0x192] sm:$0xff]
      %v1763 = vld [vmem:[#allocation2 + $0x19a] sm:$0xff]
      %v1764 = vld [vmem:[#allocation2 + $0x1a2] sm:$0xff]
      %v1765 = vld [vmem:[#allocation2 + $0x1aa] sm:$0xff]
      %v1766 = vld [vmem:[#allocation2 + $0x1b2] sm:$0xff]
      %v1767 = vld [vmem:[#allocation2 + $0x1ba] sm:$0xff]
      %v1768 = vld [vmem:[#allocation2 + $0x1c2] sm:$0xff]
      %v1769 = vld [vmem:[#allocation2 + $0x1ca] sm:$0xff]
      %v1770 = vld [vmem:[#allocation2 + $0x1d2] sm:$0xff]
      %v1771 = vld [vmem:[#allocation2 + $0x1da] sm:$0xff]
      %v1772 = vld [vmem:[#allocation2 + $0x1e2] sm:$0xff]
      %v1773 = vld [vmem:[#allocation2 + $0x1ea] sm:$0xff]
      %v1774 = vld [vmem:[#allocation2 + $0x1f2] sm:$0xff]
      %v1775 = vld [vmem:[#allocation2 + $0x1fa] sm:$0xff]
      %v1776 = vld [vmem:[#allocation2 + $0x202] sm:$0xff]
      %v1777 = vld [vmem:[#allocation2 + $0x20a] sm:$0xff]
      %v1778 = vld [vmem:[#allocation2 + $0x212] sm:$0xff]
      %v1779 = vld [vmem:[#allocation2 + $0x21a] sm:$0xff]
      %v1780 = vld [vmem:[#allocation2 + $0x222] sm:$0xff]
      %v1781 = vld [vmem:[#allocation2 + $0x22a] sm:$0xff]
      %v1782 = vld [vmem:[#allocation2 + $0x232] sm:$0xff]
      %v1783 = vld [vmem:[#allocation2 + $0x23a] sm:$0xff]
      %v1784 = vld [vmem:[#allocation2 + $0x242] sm:$0xff]
      %v1785 = vld [vmem:[#allocation2 + $0x24a] sm:$0xff]
      %v1786 = vld [vmem:[#allocation2 + $0x252] sm:$0xff]
      %v1787 = vld [vmem:[#allocation2 + $0x25a] sm:$0xff]
      %v1788 = vld [vmem:[#allocation2 + $0x262] sm:$0xff]
      %v1789 = vld [vmem:[#allocation2 + $0x26a] sm:$0xff]
      %v1790 = vld [vmem:[#allocation2 + $0x272] sm:$0xff]
      %v1791 = vld [vmem:[#allocation2 + $0x27a] sm:$0xff]
      %v1792 = vld [vmem:[#allocation2 + $0x282] sm:$0xff]
      %v1793 = vld [vmem:[#allocation2 + $0x28a] sm:$0xff]
      %v1794 = vld [vmem:[#allocation2 + $0x292] sm:$0xff]
      %v1795 = vld [vmem:[#allocation2 + $0x29a] sm:$0xff]
      %v1796 = vld [vmem:[#allocation2 + $0x2a2] sm:$0xff]
      %v1797 = vld [vmem:[#allocation2 + $0x2aa] sm:$0xff]
      %v1798 = vld [vmem:[#allocation2 + $0x2b2] sm:$0xff]
      %v1799 = vld [vmem:[#allocation2 + $0x2ba] sm:$0xff]
      %v1800 = vld [vmem:[#allocation2 + $0x2c2] sm:$0xff]
      %v1801 = vld [vmem:[#allocation2 + $0x2ca] sm:$0xff]
      %v1802 = vld [vmem:[#allocation2 + $0x2d2] sm:$0xff]
      %v1803 = vld [vmem:[#allocation2 + $0x2da] sm:$0xff]
      %v1804 = vld [vmem:[#allocation2 + $0x2e2] sm:$0xff]
      %v1805 = vld [vmem:[#allocation2 + $0x2ea] sm:$0xff]
      %v1806 = vld [vmem:[#allocation2 + $0x2f2] sm:$0xff]
      %v1807 = vld [vmem:[#allocation2 + $0x2fa] sm:$0xff]
      %v1808 = vld [vmem:[#allocation2 + $0x302] sm:$0xff]
      %v1809 = vld [vmem:[#allocation2 + $0x30a] sm:$0xff]
      %v1810 = vld [vmem:[#allocation2 + $0x312] sm:$0xff]
      %v1811 = vld [vmem:[#allocation2 + $0x31a] sm:$0xff]
      %v1812 = vld [vmem:[#allocation2 + $0x322] sm:$0xff]
      %v1813 = vld [vmem:[#allocation2 + $0x32a] sm:$0xff]
      %v1814 = vld [vmem:[#allocation2 + $0x332] sm:$0xff]
      %v1815 = vld [vmem:[#allocation2 + $0x33a] sm:$0xff]
      %v1816 = vld [vmem:[#allocation2 + $0x342] sm:$0x3f]
      %v1817 = vld [vmem:[%s1 + $0x2] sm:$0x1]
      %v1818 = vlaneseq
      %v1819 = vshrl.u32 %v1818, 7
      %v1820 = vsub.s32 0, %v1819
      %v1821 = vrot.slane %v1817, %v1820
      %v1822 = vmul.f32 %v1712, %v1821
      %v1823 = vmul.f32 %v1713, %v1821
      %v1824 = vmul.f32 %v1714, %v1821
      %v1825 = vmul.f32 %v1715, %v1821
      %v1826 = vmul.f32 %v1716, %v1821
      %v1827 = vmul.f32 %v1717, %v1821
      %v1828 = vmul.f32 %v1718, %v1821
      %v1829 = vmul.f32 %v1719, %v1821
      %v1830 = vmul.f32 %v1720, %v1821
      %v1831 = vmul.f32 %v1721, %v1821
      %v1832 = vmul.f32 %v1722, %v1821
      %v1833 = vmul.f32 %v1723, %v1821
      %v1834 = vmul.f32 %v1724, %v1821
      %v1835 = vmul.f32 %v1725, %v1821
      %v1836 = vmul.f32 %v1726, %v1821
      %v1837 = vmul.f32 %v1727, %v1821
      %v1838 = vmul.f32 %v1728, %v1821
      %v1839 = vmul.f32 %v1729, %v1821
      %v1840 = vmul.f32 %v1730, %v1821
      %v1841 = vmul.f32 %v1731, %v1821
      %v1842 = vmul.f32 %v1732, %v1821
      %v1843 = vmul.f32 %v1733, %v1821
      %v1844 = vmul.f32 %v1734, %v1821
      %v1845 = vmul.f32 %v1735, %v1821
      %v1846 = vmul.f32 %v1736, %v1821
      %v1847 = vmul.f32 %v1737, %v1821
      %v1848 = vmul.f32 %v1738, %v1821
      %v1849 = vmul.f32 %v1739, %v1821
      %v1850 = vmul.f32 %v1740, %v1821
      %v1851 = vmul.f32 %v1741, %v1821
      %v1852 = vmul.f32 %v1742, %v1821
      %v1853 = vmul.f32 %v1743, %v1821
      %v1854 = vmul.f32 %v1744, %v1821
      %v1855 = vmul.f32 %v1745, %v1821
      %v1856 = vmul.f32 %v1746, %v1821
      %v1857 = vmul.f32 %v1747, %v1821
      %v1858 = vmul.f32 %v1748, %v1821
      %v1859 = vmul.f32 %v1749, %v1821
      %v1860 = vmul.f32 %v1750, %v1821
      %v1861 = vmul.f32 %v1751, %v1821
      %v1862 = vmul.f32 %v1752, %v1821
      %v1863 = vmul.f32 %v1753, %v1821
      %v1864 = vmul.f32 %v1754, %v1821
      %v1865 = vmul.f32 %v1755, %v1821
      %v1866 = vmul.f32 %v1756, %v1821
      %v1867 = vmul.f32 %v1757, %v1821
      %v1868 = vmul.f32 %v1758, %v1821
      %v1869 = vmul.f32 %v1759, %v1821
      %v1870 = vmul.f32 %v1760, %v1821
      %v1871 = vmul.f32 %v1761, %v1821
      %v1872 = vmul.f32 %v1762, %v1821
      %v1873 = vmul.f32 %v1763, %v1821
      %v1874 = vmul.f32 %v1764, %v1821
      %v1875 = vmul.f32 %v1765, %v1821
      %v1876 = vmul.f32 %v1766, %v1821
      %v1877 = vmul.f32 %v1767, %v1821
      %v1878 = vmul.f32 %v1768, %v1821
      %v1879 = vmul.f32 %v1769, %v1821
      %v1880 = vmul.f32 %v1770, %v1821
      %v1881 = vmul.f32 %v1771, %v1821
      %v1882 = vmul.f32 %v1772, %v1821
      %v1883 = vmul.f32 %v1773, %v1821
      %v1884 = vmul.f32 %v1774, %v1821
      %v1885 = vmul.f32 %v1775, %v1821
      %v1886 = vmul.f32 %v1776, %v1821
      %v1887 = vmul.f32 %v1777, %v1821
      %v1888 = vmul.f32 %v1778, %v1821
      %v1889 = vmul.f32 %v1779, %v1821
      %v1890 = vmul.f32 %v1780, %v1821
      %v1891 = vmul.f32 %v1781, %v1821
      %v1892 = vmul.f32 %v1782, %v1821
      %v1893 = vmul.f32 %v1783, %v1821
      %v1894 = vmul.f32 %v1784, %v1821
      %v1895 = vmul.f32 %v1785, %v1821
      %v1896 = vmul.f32 %v1786, %v1821
      %v1897 = vmul.f32 %v1787, %v1821
      %v1898 = vmul.f32 %v1788, %v1821
      %v1899 = vmul.f32 %v1789, %v1821
      %v1900 = vmul.f32 %v1790, %v1821
      %v1901 = vmul.f32 %v1791, %v1821
      %v1902 = vmul.f32 %v1792, %v1821
      %v1903 = vmul.f32 %v1793, %v1821
      %v1904 = vmul.f32 %v1794, %v1821
      %v1905 = vmul.f32 %v1795, %v1821
      %v1906 = vmul.f32 %v1796, %v1821
      %v1907 = vmul.f32 %v1797, %v1821
      %v1908 = vmul.f32 %v1798, %v1821
      %v1909 = vmul.f32 %v1799, %v1821
      %v1910 = vmul.f32 %v1800, %v1821
      %v1911 = vmul.f32 %v1801, %v1821
      %v1912 = vmul.f32 %v1802, %v1821
      %v1913 = vmul.f32 %v1803, %v1821
      %v1914 = vmul.f32 %v1804, %v1821
      %v1915 = vmul.f32 %v1805, %v1821
      %v1916 = vmul.f32 %v1806, %v1821
      %v1917 = vmul.f32 %v1807, %v1821
      %v1918 = vmul.f32 %v1808, %v1821
      %v1919 = vmul.f32 %v1809, %v1821
      %v1920 = vmul.f32 %v1810, %v1821
      %v1921 = vmul.f32 %v1811, %v1821
      %v1922 = vmul.f32 %v1812, %v1821
      %v1923 = vmul.f32 %v1813, %v1821
      %v1924 = vmul.f32 %v1814, %v1821
      %v1925 = vmul.f32 %v1815, %v1821
      %v1926 = vmul.f32 %v1816, %v1821
      %v1927 = vadd.f32 %v1607, %v1822
      %v1928 = vadd.f32 %v1608, %v1823
      %v1929 = vadd.f32 %v1609, %v1824
      %v1930 = vadd.f32 %v1610, %v1825
      %v1931 = vadd.f32 %v1611, %v1826
      %v1932 = vadd.f32 %v1612, %v1827
      %v1933 = vadd.f32 %v1613, %v1828
      %v1934 = vadd.f32 %v1614, %v1829
      %v1935 = vadd.f32 %v1615, %v1830
      %v1936 = vadd.f32 %v1616, %v1831
      %v1937 = vadd.f32 %v1617, %v1832
      %v1938 = vadd.f32 %v1618, %v1833
      %v1939 = vadd.f32 %v1619, %v1834
      %v1940 = vadd.f32 %v1620, %v1835
      %v1941 = vadd.f32 %v1621, %v1836
      %v1942 = vadd.f32 %v1622, %v1837
      %v1943 = vadd.f32 %v1623, %v1838
      %v1944 = vadd.f32 %v1624, %v1839
      %v1945 = vadd.f32 %v1625, %v1840
      %v1946 = vadd.f32 %v1626, %v1841
      %v1947 = vadd.f32 %v1627, %v1842
      %v1948 = vadd.f32 %v1628, %v1843
      %v1949 = vadd.f32 %v1629, %v1844
      %v1950 = vadd.f32 %v1630, %v1845
      %v1951 = vadd.f32 %v1631, %v1846
      %v1952 = vadd.f32 %v1632, %v1847
      %v1953 = vadd.f32 %v1633, %v1848
      %v1954 = vadd.f32 %v1634, %v1849
      %v1955 = vadd.f32 %v1635, %v1850
      %v1956 = vadd.f32 %v1636, %v1851
      %v1957 = vadd.f32 %v1637, %v1852
      %v1958 = vadd.f32 %v1638, %v1853
      %v1959 = vadd.f32 %v1639, %v1854
      %v1960 = vadd.f32 %v1640, %v1855
      %v1961 = vadd.f32 %v1641, %v1856
      %v1962 = vadd.f32 %v1642, %v1857
      %v1963 = vadd.f32 %v1643, %v1858
      %v1964 = vadd.f32 %v1644, %v1859
      %v1965 = vadd.f32 %v1645, %v1860
      %v1966 = vadd.f32 %v1646, %v1861
      %v1967 = vadd.f32 %v1647, %v1862
      %v1968 = vadd.f32 %v1648, %v1863
      %v1969 = vadd.f32 %v1649, %v1864
      %v1970 = vadd.f32 %v1650, %v1865
      %v1971 = vadd.f32 %v1651, %v1866
      %v1972 = vadd.f32 %v1652, %v1867
      %v1973 = vadd.f32 %v1653, %v1868
      %v1974 = vadd.f32 %v1654, %v1869
      %v1975 = vadd.f32 %v1655, %v1870
      %v1976 = vadd.f32 %v1656, %v1871
      %v1977 = vadd.f32 %v1657, %v1872
      %v1978 = vadd.f32 %v1658, %v1873
      %v1979 = vadd.f32 %v1659, %v1874
      %v1980 = vadd.f32 %v1660, %v1875
      %v1981 = vadd.f32 %v1661, %v1876
      %v1982 = vadd.f32 %v1662, %v1877
      %v1983 = vadd.f32 %v1663, %v1878
      %v1984 = vadd.f32 %v1664, %v1879
      %v1985 = vadd.f32 %v1665, %v1880
      %v1986 = vadd.f32 %v1666, %v1881
      %v1987 = vadd.f32 %v1667, %v1882
      %v1988 = vadd.f32 %v1668, %v1883
      %v1989 = vadd.f32 %v1669, %v1884
      %v1990 = vadd.f32 %v1670, %v1885
      %v1991 = vadd.f32 %v1671, %v1886
      %v1992 = vadd.f32 %v1672, %v1887
      %v1993 = vadd.f32 %v1673, %v1888
      %v1994 = vadd.f32 %v1674, %v1889
      %v1995 = vadd.f32 %v1675, %v1890
      %v1996 = vadd.f32 %v1676, %v1891
      %v1997 = vadd.f32 %v1677, %v1892
      %v1998 = vadd.f32 %v1678, %v1893
      %v1999 = vadd.f32 %v1679, %v1894
      %v2000 = vadd.f32 %v1680, %v1895
      %v2001 = vadd.f32 %v1681, %v1896
      %v2002 = vadd.f32 %v1682, %v1897
      %v2003 = vadd.f32 %v1683, %v1898
      %v2004 = vadd.f32 %v1684, %v1899
      %v2005 = vadd.f32 %v1685, %v1900
      %v2006 = vadd.f32 %v1686, %v1901
      %v2007 = vadd.f32 %v1687, %v1902
      %v2008 = vadd.f32 %v1688, %v1903
      %v2009 = vadd.f32 %v1689, %v1904
      %v2010 = vadd.f32 %v1690, %v1905
      %v2011 = vadd.f32 %v1691, %v1906
      %v2012 = vadd.f32 %v1692, %v1907
      %v2013 = vadd.f32 %v1693, %v1908
      %v2014 = vadd.f32 %v1694, %v1909
      %v2015 = vadd.f32 %v1695, %v1910
      %v2016 = vadd.f32 %v1696, %v1911
      %v2017 = vadd.f32 %v1697, %v1912
      %v2018 = vadd.f32 %v1698, %v1913
      %v2019 = vadd.f32 %v1699, %v1914
      %v2020 = vadd.f32 %v1700, %v1915
      %v2021 = vadd.f32 %v1701, %v1916
      %v2022 = vadd.f32 %v1702, %v1917
      %v2023 = vadd.f32 %v1703, %v1918
      %v2024 = vadd.f32 %v1704, %v1919
      %v2025 = vadd.f32 %v1705, %v1920
      %v2026 = vadd.f32 %v1706, %v1921
      %v2027 = vadd.f32 %v1707, %v1922
      %v2028 = vadd.f32 %v1708, %v1923
      %v2029 = vadd.f32 %v1709, %v1924
      %v2030 = vadd.f32 %v1710, %v1925
      %v2031 = vadd.f32 %v1711, %v1926
      %v2032 = vld [vmem:[#allocation2 + $0x1e] sm:$0xff]
      %v2033 = vld [vmem:[#allocation2 + $0x26] sm:$0xff]
      %v2034 = vld [vmem:[#allocation2 + $0x2e] sm:$0xff]
      %v2035 = vld [vmem:[#allocation2 + $0x36] sm:$0xff]
      %v2036 = vld [vmem:[#allocation2 + $0x3e] sm:$0xff]
      %v2037 = vld [vmem:[#allocation2 + $0x46] sm:$0xff]
      %v2038 = vld [vmem:[#allocation2 + $0x4e] sm:$0xff]
      %v2039 = vld [vmem:[#allocation2 + $0x56] sm:$0xff]
      %v2040 = vld [vmem:[#allocation2 + $0x5e] sm:$0xff]
      %v2041 = vld [vmem:[#allocation2 + $0x66] sm:$0xff]
      %v2042 = vld [vmem:[#allocation2 + $0x6e] sm:$0xff]
      %v2043 = vld [vmem:[#allocation2 + $0x76] sm:$0xff]
      %v2044 = vld [vmem:[#allocation2 + $0x7e] sm:$0xff]
      %v2045 = vld [vmem:[#allocation2 + $0x86] sm:$0xff]
      %v2046 = vld [vmem:[#allocation2 + $0x8e] sm:$0xff]
      %v2047 = vld [vmem:[#allocation2 + $0x96] sm:$0xff]
      %v2048 = vld [vmem:[#allocation2 + $0x9e] sm:$0xff]
      %v2049 = vld [vmem:[#allocation2 + $0xa6] sm:$0xff]
      %v2050 = vld [vmem:[#allocation2 + $0xae] sm:$0xff]
      %v2051 = vld [vmem:[#allocation2 + $0xb6] sm:$0xff]
      %v2052 = vld [vmem:[#allocation2 + $0xbe] sm:$0xff]
      %v2053 = vld [vmem:[#allocation2 + $0xc6] sm:$0xff]
      %v2054 = vld [vmem:[#allocation2 + $0xce] sm:$0xff]
      %v2055 = vld [vmem:[#allocation2 + $0xd6] sm:$0xff]
      %v2056 = vld [vmem:[#allocation2 + $0xde] sm:$0xff]
      %v2057 = vld [vmem:[#allocation2 + $0xe6] sm:$0xff]
      %v2058 = vld [vmem:[#allocation2 + $0xee] sm:$0xff]
      %v2059 = vld [vmem:[#allocation2 + $0xf6] sm:$0xff]
      %v2060 = vld [vmem:[#allocation2 + $0xfe] sm:$0xff]
      %v2061 = vld [vmem:[#allocation2 + $0x106] sm:$0xff]
      %v2062 = vld [vmem:[#allocation2 + $0x10e] sm:$0xff]
      %v2063 = vld [vmem:[#allocation2 + $0x116] sm:$0xff]
      %v2064 = vld [vmem:[#allocation2 + $0x11e] sm:$0xff]
      %v2065 = vld [vmem:[#allocation2 + $0x126] sm:$0xff]
      %v2066 = vld [vmem:[#allocation2 + $0x12e] sm:$0xff]
      %v2067 = vld [vmem:[#allocation2 + $0x136] sm:$0xff]
      %v2068 = vld [vmem:[#allocation2 + $0x13e] sm:$0xff]
      %v2069 = vld [vmem:[#allocation2 + $0x146] sm:$0xff]
      %v2070 = vld [vmem:[#allocation2 + $0x14e] sm:$0xff]
      %v2071 = vld [vmem:[#allocation2 + $0x156] sm:$0xff]
      %v2072 = vld [vmem:[#allocation2 + $0x15e] sm:$0xff]
      %v2073 = vld [vmem:[#allocation2 + $0x166] sm:$0xff]
      %v2074 = vld [vmem:[#allocation2 + $0x16e] sm:$0xff]
      %v2075 = vld [vmem:[#allocation2 + $0x176] sm:$0xff]
      %v2076 = vld [vmem:[#allocation2 + $0x17e] sm:$0xff]
      %v2077 = vld [vmem:[#allocation2 + $0x186] sm:$0xff]
      %v2078 = vld [vmem:[#allocation2 + $0x18e] sm:$0xff]
      %v2079 = vld [vmem:[#allocation2 + $0x196] sm:$0xff]
      %v2080 = vld [vmem:[#allocation2 + $0x19e] sm:$0xff]
      %v2081 = vld [vmem:[#allocation2 + $0x1a6] sm:$0xff]
      %v2082 = vld [vmem:[#allocation2 + $0x1ae] sm:$0xff]
      %v2083 = vld [vmem:[#allocation2 + $0x1b6] sm:$0xff]
      %v2084 = vld [vmem:[#allocation2 + $0x1be] sm:$0xff]
      %v2085 = vld [vmem:[#allocation2 + $0x1c6] sm:$0xff]
      %v2086 = vld [vmem:[#allocation2 + $0x1ce] sm:$0xff]
      %v2087 = vld [vmem:[#allocation2 + $0x1d6] sm:$0xff]
      %v2088 = vld [vmem:[#allocation2 + $0x1de] sm:$0xff]
      %v2089 = vld [vmem:[#allocation2 + $0x1e6] sm:$0xff]
      %v2090 = vld [vmem:[#allocation2 + $0x1ee] sm:$0xff]
      %v2091 = vld [vmem:[#allocation2 + $0x1f6] sm:$0xff]
      %v2092 = vld [vmem:[#allocation2 + $0x1fe] sm:$0xff]
      %v2093 = vld [vmem:[#allocation2 + $0x206] sm:$0xff]
      %v2094 = vld [vmem:[#allocation2 + $0x20e] sm:$0xff]
      %v2095 = vld [vmem:[#allocation2 + $0x216] sm:$0xff]
      %v2096 = vld [vmem:[#allocation2 + $0x21e] sm:$0xff]
      %v2097 = vld [vmem:[#allocation2 + $0x226] sm:$0xff]
      %v2098 = vld [vmem:[#allocation2 + $0x22e] sm:$0xff]
      %v2099 = vld [vmem:[#allocation2 + $0x236] sm:$0xff]
      %v2100 = vld [vmem:[#allocation2 + $0x23e] sm:$0xff]
      %v2101 = vld [vmem:[#allocation2 + $0x246] sm:$0xff]
      %v2102 = vld [vmem:[#allocation2 + $0x24e] sm:$0xff]
      %v2103 = vld [vmem:[#allocation2 + $0x256] sm:$0xff]
      %v2104 = vld [vmem:[#allocation2 + $0x25e] sm:$0xff]
      %v2105 = vld [vmem:[#allocation2 + $0x266] sm:$0xff]
      %v2106 = vld [vmem:[#allocation2 + $0x26e] sm:$0xff]
      %v2107 = vld [vmem:[#allocation2 + $0x276] sm:$0xff]
      %v2108 = vld [vmem:[#allocation2 + $0x27e] sm:$0xff]
      %v2109 = vld [vmem:[#allocation2 + $0x286] sm:$0xff]
      %v2110 = vld [vmem:[#allocation2 + $0x28e] sm:$0xff]
      %v2111 = vld [vmem:[#allocation2 + $0x296] sm:$0xff]
      %v2112 = vld [vmem:[#allocation2 + $0x29e] sm:$0xff]
      %v2113 = vld [vmem:[#allocation2 + $0x2a6] sm:$0xff]
      %v2114 = vld [vmem:[#allocation2 + $0x2ae] sm:$0xff]
      %v2115 = vld [vmem:[#allocation2 + $0x2b6] sm:$0xff]
      %v2116 = vld [vmem:[#allocation2 + $0x2be] sm:$0xff]
      %v2117 = vld [vmem:[#allocation2 + $0x2c6] sm:$0xff]
      %v2118 = vld [vmem:[#allocation2 + $0x2ce] sm:$0xff]
      %v2119 = vld [vmem:[#allocation2 + $0x2d6] sm:$0xff]
      %v2120 = vld [vmem:[#allocation2 + $0x2de] sm:$0xff]
      %v2121 = vld [vmem:[#allocation2 + $0x2e6] sm:$0xff]
      %v2122 = vld [vmem:[#allocation2 + $0x2ee] sm:$0xff]
      %v2123 = vld [vmem:[#allocation2 + $0x2f6] sm:$0xff]
      %v2124 = vld [vmem:[#allocation2 + $0x2fe] sm:$0xff]
      %v2125 = vld [vmem:[#allocation2 + $0x306] sm:$0xff]
      %v2126 = vld [vmem:[#allocation2 + $0x30e] sm:$0xff]
      %v2127 = vld [vmem:[#allocation2 + $0x316] sm:$0xff]
      %v2128 = vld [vmem:[#allocation2 + $0x31e] sm:$0xff]
      %v2129 = vld [vmem:[#allocation2 + $0x326] sm:$0xff]
      %v2130 = vld [vmem:[#allocation2 + $0x32e] sm:$0xff]
      %v2131 = vld [vmem:[#allocation2 + $0x336] sm:$0xff]
      %v2132 = vld [vmem:[#allocation2 + $0x33e] sm:$0xff]
      %v2133 = vld [vmem:[#allocation2 + $0x346] sm:$0xff]
      %v2134 = vld [vmem:[#allocation2 + $0x34e] sm:$0xff]
      %v2135 = vld [vmem:[#allocation2 + $0x356] sm:$0xff]
      %v2136 = vld [vmem:[#allocation2 + $0x35e] sm:$0x3f]
      %v2137 = vld [vmem:[%s1 + $0x3] sm:$0x1]
      %v2138 = vlaneseq
      %v2139 = vshrl.u32 %v2138, 7
      %v2140 = vsub.s32 0, %v2139
      %v2141 = vrot.slane %v2137, %v2140
      %v2142 = vmul.f32 %v2032, %v2141
      %v2143 = vmul.f32 %v2033, %v2141
      %v2144 = vmul.f32 %v2034, %v2141
      %v2145 = vmul.f32 %v2035, %v2141
      %v2146 = vmul.f32 %v2036, %v2141
      %v2147 = vmul.f32 %v2037, %v2141
      %v2148 = vmul.f32 %v2038, %v2141
      %v2149 = vmul.f32 %v2039, %v2141
      %v2150 = vmul.f32 %v2040, %v2141
      %v2151 = vmul.f32 %v2041, %v2141
      %v2152 = vmul.f32 %v2042, %v2141
      %v2153 = vmul.f32 %v2043, %v2141
      %v2154 = vmul.f32 %v2044, %v2141
      %v2155 = vmul.f32 %v2045, %v2141
      %v2156 = vmul.f32 %v2046, %v2141
      %v2157 = vmul.f32 %v2047, %v2141
      %v2158 = vmul.f32 %v2048, %v2141
      %v2159 = vmul.f32 %v2049, %v2141
      %v2160 = vmul.f32 %v2050, %v2141
      %v2161 = vmul.f32 %v2051, %v2141
      %v2162 = vmul.f32 %v2052, %v2141
      %v2163 = vmul.f32 %v2053, %v2141
      %v2164 = vmul.f32 %v2054, %v2141
      %v2165 = vmul.f32 %v2055, %v2141
      %v2166 = vmul.f32 %v2056, %v2141
      %v2167 = vmul.f32 %v2057, %v2141
      %v2168 = vmul.f32 %v2058, %v2141
      %v2169 = vmul.f32 %v2059, %v2141
      %v2170 = vmul.f32 %v2060, %v2141
      %v2171 = vmul.f32 %v2061, %v2141
      %v2172 = vmul.f32 %v2062, %v2141
      %v2173 = vmul.f32 %v2063, %v2141
      %v2174 = vmul.f32 %v2064, %v2141
      %v2175 = vmul.f32 %v2065, %v2141
      %v2176 = vmul.f32 %v2066, %v2141
      %v2177 = vmul.f32 %v2067, %v2141
      %v2178 = vmul.f32 %v2068, %v2141
      %v2179 = vmul.f32 %v2069, %v2141
      %v2180 = vmul.f32 %v2070, %v2141
      %v2181 = vmul.f32 %v2071, %v2141
      %v2182 = vmul.f32 %v2072, %v2141
      %v2183 = vmul.f32 %v2073, %v2141
      %v2184 = vmul.f32 %v2074, %v2141
      %v2185 = vmul.f32 %v2075, %v2141
      %v2186 = vmul.f32 %v2076, %v2141
      %v2187 = vmul.f32 %v2077, %v2141
      %v2188 = vmul.f32 %v2078, %v2141
      %v2189 = vmul.f32 %v2079, %v2141
      %v2190 = vmul.f32 %v2080, %v2141
      %v2191 = vmul.f32 %v2081, %v2141
      %v2192 = vmul.f32 %v2082, %v2141
      %v2193 = vmul.f32 %v2083, %v2141
      %v2194 = vmul.f32 %v2084, %v2141
      %v2195 = vmul.f32 %v2085, %v2141
      %v2196 = vmul.f32 %v2086, %v2141
      %v2197 = vmul.f32 %v2087, %v2141
      %v2198 = vmul.f32 %v2088, %v2141
      %v2199 = vmul.f32 %v2089, %v2141
      %v2200 = vmul.f32 %v2090, %v2141
      %v2201 = vmul.f32 %v2091, %v2141
      %v2202 = vmul.f32 %v2092, %v2141
      %v2203 = vmul.f32 %v2093, %v2141
      %v2204 = vmul.f32 %v2094, %v2141
      %v2205 = vmul.f32 %v2095, %v2141
      %v2206 = vmul.f32 %v2096, %v2141
      %v2207 = vmul.f32 %v2097, %v2141
      %v2208 = vmul.f32 %v2098, %v2141
      %v2209 = vmul.f32 %v2099, %v2141
      %v2210 = vmul.f32 %v2100, %v2141
      %v2211 = vmul.f32 %v2101, %v2141
      %v2212 = vmul.f32 %v2102, %v2141
      %v2213 = vmul.f32 %v2103, %v2141
      %v2214 = vmul.f32 %v2104, %v2141
      %v2215 = vmul.f32 %v2105, %v2141
      %v2216 = vmul.f32 %v2106, %v2141
      %v2217 = vmul.f32 %v2107, %v2141
      %v2218 = vmul.f32 %v2108, %v2141
      %v2219 = vmul.f32 %v2109, %v2141
      %v2220 = vmul.f32 %v2110, %v2141
      %v2221 = vmul.f32 %v2111, %v2141
      %v2222 = vmul.f32 %v2112, %v2141
      %v2223 = vmul.f32 %v2113, %v2141
      %v2224 = vmul.f32 %v2114, %v2141
      %v2225 = vmul.f32 %v2115, %v2141
      %v2226 = vmul.f32 %v2116, %v2141
      %v2227 = vmul.f32 %v2117, %v2141
      %v2228 = vmul.f32 %v2118, %v2141
      %v2229 = vmul.f32 %v2119, %v2141
      %v2230 = vmul.f32 %v2120, %v2141
      %v2231 = vmul.f32 %v2121, %v2141
      %v2232 = vmul.f32 %v2122, %v2141
      %v2233 = vmul.f32 %v2123, %v2141
      %v2234 = vmul.f32 %v2124, %v2141
      %v2235 = vmul.f32 %v2125, %v2141
      %v2236 = vmul.f32 %v2126, %v2141
      %v2237 = vmul.f32 %v2127, %v2141
      %v2238 = vmul.f32 %v2128, %v2141
      %v2239 = vmul.f32 %v2129, %v2141
      %v2240 = vmul.f32 %v2130, %v2141
      %v2241 = vmul.f32 %v2131, %v2141
      %v2242 = vmul.f32 %v2132, %v2141
      %v2243 = vmul.f32 %v2133, %v2141
      %v2244 = vmul.f32 %v2134, %v2141
      %v2245 = vmul.f32 %v2135, %v2141
      %v2246 = vmul.f32 %v2136, %v2141
      %v2247 = vadd.f32 %v1927, %v2142
      %v2248 = vadd.f32 %v1928, %v2143
      %v2249 = vadd.f32 %v1929, %v2144
      %v2250 = vadd.f32 %v1930, %v2145
      %v2251 = vadd.f32 %v1931, %v2146
      %v2252 = vadd.f32 %v1932, %v2147
      %v2253 = vadd.f32 %v1933, %v2148
      %v2254 = vadd.f32 %v1934, %v2149
      %v2255 = vadd.f32 %v1935, %v2150
      %v2256 = vadd.f32 %v1936, %v2151
      %v2257 = vadd.f32 %v1937, %v2152
      %v2258 = vadd.f32 %v1938, %v2153
      %v2259 = vadd.f32 %v1939, %v2154
      %v2260 = vadd.f32 %v1940, %v2155
      %v2261 = vadd.f32 %v1941, %v2156
      %v2262 = vadd.f32 %v1942, %v2157
      %v2263 = vadd.f32 %v1943, %v2158
      %v2264 = vadd.f32 %v1944, %v2159
      %v2265 = vadd.f32 %v1945, %v2160
      %v2266 = vadd.f32 %v1946, %v2161
      %v2267 = vadd.f32 %v1947, %v2162
      %v2268 = vadd.f32 %v1948, %v2163
      %v2269 = vadd.f32 %v1949, %v2164
      %v2270 = vadd.f32 %v1950, %v2165
      %v2271 = vadd.f32 %v1951, %v2166
      %v2272 = vadd.f32 %v1952, %v2167
      %v2273 = vadd.f32 %v1953, %v2168
      %v2274 = vadd.f32 %v1954, %v2169
      %v2275 = vadd.f32 %v1955, %v2170
      %v2276 = vadd.f32 %v1956, %v2171
      %v2277 = vadd.f32 %v1957, %v2172
      %v2278 = vadd.f32 %v1958, %v2173
      %v2279 = vadd.f32 %v1959, %v2174
      %v2280 = vadd.f32 %v1960, %v2175
      %v2281 = vadd.f32 %v1961, %v2176
      %v2282 = vadd.f32 %v1962, %v2177
      %v2283 = vadd.f32 %v1963, %v2178
      %v2284 = vadd.f32 %v1964, %v2179
      %v2285 = vadd.f32 %v1965, %v2180
      %v2286 = vadd.f32 %v1966, %v2181
      %v2287 = vadd.f32 %v1967, %v2182
      %v2288 = vadd.f32 %v1968, %v2183
      %v2289 = vadd.f32 %v1969, %v2184
      %v2290 = vadd.f32 %v1970, %v2185
      %v2291 = vadd.f32 %v1971, %v2186
      %v2292 = vadd.f32 %v1972, %v2187
      %v2293 = vadd.f32 %v1973, %v2188
      %v2294 = vadd.f32 %v1974, %v2189
      %v2295 = vadd.f32 %v1975, %v2190
      %v2296 = vadd.f32 %v1976, %v2191
      %v2297 = vadd.f32 %v1977, %v2192
      %v2298 = vadd.f32 %v1978, %v2193
      %v2299 = vadd.f32 %v1979, %v2194
      %v2300 = vadd.f32 %v1980, %v2195
      %v2301 = vadd.f32 %v1981, %v2196
      %v2302 = vadd.f32 %v1982, %v2197
      %v2303 = vadd.f32 %v1983, %v2198
      %v2304 = vadd.f32 %v1984, %v2199
      %v2305 = vadd.f32 %v1985, %v2200
      %v2306 = vadd.f32 %v1986, %v2201
      %v2307 = vadd.f32 %v1987, %v2202
      %v2308 = vadd.f32 %v1988, %v2203
      %v2309 = vadd.f32 %v1989, %v2204
      %v2310 = vadd.f32 %v1990, %v2205
      %v2311 = vadd.f32 %v1991, %v2206
      %v2312 = vadd.f32 %v1992, %v2207
      %v2313 = vadd.f32 %v1993, %v2208
      %v2314 = vadd.f32 %v1994, %v2209
      %v2315 = vadd.f32 %v1995, %v2210
      %v2316 = vadd.f32 %v1996, %v2211
      %v2317 = vadd.f32 %v1997, %v2212
      %v2318 = vadd.f32 %v1998, %v2213
      %v2319 = vadd.f32 %v1999, %v2214
      %v2320 = vadd.f32 %v2000, %v2215
      %v2321 = vadd.f32 %v2001, %v2216
      %v2322 = vadd.f32 %v2002, %v2217
      %v2323 = vadd.f32 %v2003, %v2218
      %v2324 = vadd.f32 %v2004, %v2219
      %v2325 = vadd.f32 %v2005, %v2220
      %v2326 = vadd.f32 %v2006, %v2221
      %v2327 = vadd.f32 %v2007, %v2222
      %v2328 = vadd.f32 %v2008, %v2223
      %v2329 = vadd.f32 %v2009, %v2224
      %v2330 = vadd.f32 %v2010, %v2225
      %v2331 = vadd.f32 %v2011, %v2226
      %v2332 = vadd.f32 %v2012, %v2227
      %v2333 = vadd.f32 %v2013, %v2228
      %v2334 = vadd.f32 %v2014, %v2229
      %v2335 = vadd.f32 %v2015, %v2230
      %v2336 = vadd.f32 %v2016, %v2231
      %v2337 = vadd.f32 %v2017, %v2232
      %v2338 = vadd.f32 %v2018, %v2233
      %v2339 = vadd.f32 %v2019, %v2234
      %v2340 = vadd.f32 %v2020, %v2235
      %v2341 = vadd.f32 %v2021, %v2236
      %v2342 = vadd.f32 %v2022, %v2237
      %v2343 = vadd.f32 %v2023, %v2238
      %v2344 = vadd.f32 %v2024, %v2239
      %v2345 = vadd.f32 %v2025, %v2240
      %v2346 = vadd.f32 %v2026, %v2241
      %v2347 = vadd.f32 %v2027, %v2242
      %v2348 = vadd.f32 %v2028, %v2243
      %v2349 = vadd.f32 %v2029, %v2244
      %v2350 = vadd.f32 %v2030, %v2245
      %v2351 = vadd.f32 %v2031, %v2246
      %v2352 = vld [vmem:[#allocation2 + $0x1f] sm:$0xff]
      %v2353 = vld [vmem:[#allocation2 + $0x27] sm:$0xff]
      %v2354 = vld [vmem:[#allocation2 + $0x2f] sm:$0xff]
      %v2355 = vld [vmem:[#allocation2 + $0x37] sm:$0xff]
      %v2356 = vld [vmem:[#allocation2 + $0x3f] sm:$0xff]
      %v2357 = vld [vmem:[#allocation2 + $0x47] sm:$0xff]
      %v2358 = vld [vmem:[#allocation2 + $0x4f] sm:$0xff]
      %v2359 = vld [vmem:[#allocation2 + $0x57] sm:$0xff]
      %v2360 = vld [vmem:[#allocation2 + $0x5f] sm:$0xff]
      %v2361 = vld [vmem:[#allocation2 + $0x67] sm:$0xff]
      %v2362 = vld [vmem:[#allocation2 + $0x6f] sm:$0xff]
      %v2363 = vld [vmem:[#allocation2 + $0x77] sm:$0xff]
      %v2364 = vld [vmem:[#allocation2 + $0x7f] sm:$0xff]
      %v2365 = vld [vmem:[#allocation2 + $0x87] sm:$0xff]
      %v2366 = vld [vmem:[#allocation2 + $0x8f] sm:$0xff]
      %v2367 = vld [vmem:[#allocation2 + $0x97] sm:$0xff]
      %v2368 = vld [vmem:[#allocation2 + $0x9f] sm:$0xff]
      %v2369 = vld [vmem:[#allocation2 + $0xa7] sm:$0xff]
      %v2370 = vld [vmem:[#allocation2 + $0xaf] sm:$0xff]
      %v2371 = vld [vmem:[#allocation2 + $0xb7] sm:$0xff]
      %v2372 = vld [vmem:[#allocation2 + $0xbf] sm:$0xff]
      %v2373 = vld [vmem:[#allocation2 + $0xc7] sm:$0xff]
      %v2374 = vld [vmem:[#allocation2 + $0xcf] sm:$0xff]
      %v2375 = vld [vmem:[#allocation2 + $0xd7] sm:$0xff]
      %v2376 = vld [vmem:[#allocation2 + $0xdf] sm:$0xff]
      %v2377 = vld [vmem:[#allocation2 + $0xe7] sm:$0xff]
      %v2378 = vld [vmem:[#allocation2 + $0xef] sm:$0xff]
      %v2379 = vld [vmem:[#allocation2 + $0xf7] sm:$0xff]
      %v2380 = vld [vmem:[#allocation2 + $0xff] sm:$0xff]
      %v2381 = vld [vmem:[#allocation2 + $0x107] sm:$0xff]
      %v2382 = vld [vmem:[#allocation2 + $0x10f] sm:$0xff]
      %v2383 = vld [vmem:[#allocation2 + $0x117] sm:$0xff]
      %v2384 = vld [vmem:[#allocation2 + $0x11f] sm:$0xff]
      %v2385 = vld [vmem:[#allocation2 + $0x127] sm:$0xff]
      %v2386 = vld [vmem:[#allocation2 + $0x12f] sm:$0xff]
      %v2387 = vld [vmem:[#allocation2 + $0x137] sm:$0xff]
      %v2388 = vld [vmem:[#allocation2 + $0x13f] sm:$0xff]
      %v2389 = vld [vmem:[#allocation2 + $0x147] sm:$0xff]
      %v2390 = vld [vmem:[#allocation2 + $0x14f] sm:$0xff]
      %v2391 = vld [vmem:[#allocation2 + $0x157] sm:$0xff]
      %v2392 = vld [vmem:[#allocation2 + $0x15f] sm:$0xff]
      %v2393 = vld [vmem:[#allocation2 + $0x167] sm:$0xff]
      %v2394 = vld [vmem:[#allocation2 + $0x16f] sm:$0xff]
      %v2395 = vld [vmem:[#allocation2 + $0x177] sm:$0xff]
      %v2396 = vld [vmem:[#allocation2 + $0x17f] sm:$0xff]
      %v2397 = vld [vmem:[#allocation2 + $0x187] sm:$0xff]
      %v2398 = vld [vmem:[#allocation2 + $0x18f] sm:$0xff]
      %v2399 = vld [vmem:[#allocation2 + $0x197] sm:$0xff]
      %v2400 = vld [vmem:[#allocation2 + $0x19f] sm:$0xff]
      %v2401 = vld [vmem:[#allocation2 + $0x1a7] sm:$0xff]
      %v2402 = vld [vmem:[#allocation2 + $0x1af] sm:$0xff]
      %v2403 = vld [vmem:[#allocation2 + $0x1b7] sm:$0xff]
      %v2404 = vld [vmem:[#allocation2 + $0x1bf] sm:$0xff]
      %v2405 = vld [vmem:[#allocation2 + $0x1c7] sm:$0xff]
      %v2406 = vld [vmem:[#allocation2 + $0x1cf] sm:$0xff]
      %v2407 = vld [vmem:[#allocation2 + $0x1d7] sm:$0xff]
      %v2408 = vld [vmem:[#allocation2 + $0x1df] sm:$0xff]
      %v2409 = vld [vmem:[#allocation2 + $0x1e7] sm:$0xff]
      %v2410 = vld [vmem:[#allocation2 + $0x1ef] sm:$0xff]
      %v2411 = vld [vmem:[#allocation2 + $0x1f7] sm:$0xff]
      %v2412 = vld [vmem:[#allocation2 + $0x1ff] sm:$0xff]
      %v2413 = vld [vmem:[#allocation2 + $0x207] sm:$0xff]
      %v2414 = vld [vmem:[#allocation2 + $0x20f] sm:$0xff]
      %v2415 = vld [vmem:[#allocation2 + $0x217] sm:$0xff]
      %v2416 = vld [vmem:[#allocation2 + $0x21f] sm:$0xff]
      %v2417 = vld [vmem:[#allocation2 + $0x227] sm:$0xff]
      %v2418 = vld [vmem:[#allocation2 + $0x22f] sm:$0xff]
      %v2419 = vld [vmem:[#allocation2 + $0x237] sm:$0xff]
      %v2420 = vld [vmem:[#allocation2 + $0x23f] sm:$0xff]
      %v2421 = vld [vmem:[#allocation2 + $0x247] sm:$0xff]
      %v2422 = vld [vmem:[#allocation2 + $0x24f] sm:$0xff]
      %v2423 = vld [vmem:[#allocation2 + $0x257] sm:$0xff]
      %v2424 = vld [vmem:[#allocation2 + $0x25f] sm:$0xff]
      %v2425 = vld [vmem:[#allocation2 + $0x267] sm:$0xff]
      %v2426 = vld [vmem:[#allocation2 + $0x26f] sm:$0xff]
      %v2427 = vld [vmem:[#allocation2 + $0x277] sm:$0xff]
      %v2428 = vld [vmem:[#allocation2 + $0x27f] sm:$0xff]
      %v2429 = vld [vmem:[#allocation2 + $0x287] sm:$0xff]
      %v2430 = vld [vmem:[#allocation2 + $0x28f] sm:$0xff]
      %v2431 = vld [vmem:[#allocation2 + $0x297] sm:$0xff]
      %v2432 = vld [vmem:[#allocation2 + $0x29f] sm:$0xff]
      %v2433 = vld [vmem:[#allocation2 + $0x2a7] sm:$0xff]
      %v2434 = vld [vmem:[#allocation2 + $0x2af] sm:$0xff]
      %v2435 = vld [vmem:[#allocation2 + $0x2b7] sm:$0xff]
      %v2436 = vld [vmem:[#allocation2 + $0x2bf] sm:$0xff]
      %v2437 = vld [vmem:[#allocation2 + $0x2c7] sm:$0xff]
      %v2438 = vld [vmem:[#allocation2 + $0x2cf] sm:$0xff]
      %v2439 = vld [vmem:[#allocation2 + $0x2d7] sm:$0xff]
      %v2440 = vld [vmem:[#allocation2 + $0x2df] sm:$0xff]
      %v2441 = vld [vmem:[#allocation2 + $0x2e7] sm:$0xff]
      %v2442 = vld [vmem:[#allocation2 + $0x2ef] sm:$0xff]
      %v2443 = vld [vmem:[#allocation2 + $0x2f7] sm:$0xff]
      %v2444 = vld [vmem:[#allocation2 + $0x2ff] sm:$0xff]
      %v2445 = vld [vmem:[#allocation2 + $0x307] sm:$0xff]
      %v2446 = vld [vmem:[#allocation2 + $0x30f] sm:$0xff]
      %v2447 = vld [vmem:[#allocation2 + $0x317] sm:$0xff]
      %v2448 = vld [vmem:[#allocation2 + $0x31f] sm:$0xff]
      %v2449 = vld [vmem:[#allocation2 + $0x327] sm:$0xff]
      %v2450 = vld [vmem:[#allocation2 + $0x32f] sm:$0xff]
      %v2451 = vld [vmem:[#allocation2 + $0x337] sm:$0xff]
      %v2452 = vld [vmem:[#allocation2 + $0x33f] sm:$0xff]
      %v2453 = vld [vmem:[#allocation2 + $0x347] sm:$0xff]
      %v2454 = vld [vmem:[#allocation2 + $0x34f] sm:$0xff]
      %v2455 = vld [vmem:[#allocation2 + $0x357] sm:$0xff]
      %v2456 = vld [vmem:[#allocation2 + $0x35f] sm:$0x3f]
      %v2457 = vld [vmem:[%s1 + $0x4] sm:$0x1]
      %v2458 = vlaneseq
      %v2459 = vshrl.u32 %v2458, 7
      %v2460 = vsub.s32 0, %v2459
      %v2461 = vrot.slane %v2457, %v2460
      %v2462 = vmul.f32 %v2352, %v2461
      %v2463 = vmul.f32 %v2353, %v2461
      %v2464 = vmul.f32 %v2354, %v2461
      %v2465 = vmul.f32 %v2355, %v2461
      %v2466 = vmul.f32 %v2356, %v2461
      %v2467 = vmul.f32 %v2357, %v2461
      %v2468 = vmul.f32 %v2358, %v2461
      %v2469 = vmul.f32 %v2359, %v2461
      %v2470 = vmul.f32 %v2360, %v2461
      %v2471 = vmul.f32 %v2361, %v2461
      %v2472 = vmul.f32 %v2362, %v2461
      %v2473 = vmul.f32 %v2363, %v2461
      %v2474 = vmul.f32 %v2364, %v2461
      %v2475 = vmul.f32 %v2365, %v2461
      %v2476 = vmul.f32 %v2366, %v2461
      %v2477 = vmul.f32 %v2367, %v2461
      %v2478 = vmul.f32 %v2368, %v2461
      %v2479 = vmul.f32 %v2369, %v2461
      %v2480 = vmul.f32 %v2370, %v2461
      %v2481 = vmul.f32 %v2371, %v2461
      %v2482 = vmul.f32 %v2372, %v2461
      %v2483 = vmul.f32 %v2373, %v2461
      %v2484 = vmul.f32 %v2374, %v2461
      %v2485 = vmul.f32 %v2375, %v2461
      %v2486 = vmul.f32 %v2376, %v2461
      %v2487 = vmul.f32 %v2377, %v2461
      %v2488 = vmul.f32 %v2378, %v2461
      %v2489 = vmul.f32 %v2379, %v2461
      %v2490 = vmul.f32 %v2380, %v2461
      %v2491 = vmul.f32 %v2381, %v2461
      %v2492 = vmul.f32 %v2382, %v2461
      %v2493 = vmul.f32 %v2383, %v2461
      %v2494 = vmul.f32 %v2384, %v2461
      %v2495 = vmul.f32 %v2385, %v2461
      %v2496 = vmul.f32 %v2386, %v2461
      %v2497 = vmul.f32 %v2387, %v2461
      %v2498 = vmul.f32 %v2388, %v2461
      %v2499 = vmul.f32 %v2389, %v2461
      %v2500 = vmul.f32 %v2390, %v2461
      %v2501 = vmul.f32 %v2391, %v2461
      %v2502 = vmul.f32 %v2392, %v2461
      %v2503 = vmul.f32 %v2393, %v2461
      %v2504 = vmul.f32 %v2394, %v2461
      %v2505 = vmul.f32 %v2395, %v2461
      %v2506 = vmul.f32 %v2396, %v2461
      %v2507 = vmul.f32 %v2397, %v2461
      %v2508 = vmul.f32 %v2398, %v2461
      %v2509 = vmul.f32 %v2399, %v2461
      %v2510 = vmul.f32 %v2400, %v2461
      %v2511 = vmul.f32 %v2401, %v2461
      %v2512 = vmul.f32 %v2402, %v2461
      %v2513 = vmul.f32 %v2403, %v2461
      %v2514 = vmul.f32 %v2404, %v2461
      %v2515 = vmul.f32 %v2405, %v2461
      %v2516 = vmul.f32 %v2406, %v2461
      %v2517 = vmul.f32 %v2407, %v2461
      %v2518 = vmul.f32 %v2408, %v2461
      %v2519 = vmul.f32 %v2409, %v2461
      %v2520 = vmul.f32 %v2410, %v2461
      %v2521 = vmul.f32 %v2411, %v2461
      %v2522 = vmul.f32 %v2412, %v2461
      %v2523 = vmul.f32 %v2413, %v2461
      %v2524 = vmul.f32 %v2414, %v2461
      %v2525 = vmul.f32 %v2415, %v2461
      %v2526 = vmul.f32 %v2416, %v2461
      %v2527 = vmul.f32 %v2417, %v2461
      %v2528 = vmul.f32 %v2418, %v2461
      %v2529 = vmul.f32 %v2419, %v2461
      %v2530 = vmul.f32 %v2420, %v2461
      %v2531 = vmul.f32 %v2421, %v2461
      %v2532 = vmul.f32 %v2422, %v2461
      %v2533 = vmul.f32 %v2423, %v2461
      %v2534 = vmul.f32 %v2424, %v2461
      %v2535 = vmul.f32 %v2425, %v2461
      %v2536 = vmul.f32 %v2426, %v2461
      %v2537 = vmul.f32 %v2427, %v2461
      %v2538 = vmul.f32 %v2428, %v2461
      %v2539 = vmul.f32 %v2429, %v2461
      %v2540 = vmul.f32 %v2430, %v2461
      %v2541 = vmul.f32 %v2431, %v2461
      %v2542 = vmul.f32 %v2432, %v2461
      %v2543 = vmul.f32 %v2433, %v2461
      %v2544 = vmul.f32 %v2434, %v2461
      %v2545 = vmul.f32 %v2435, %v2461
      %v2546 = vmul.f32 %v2436, %v2461
      %v2547 = vmul.f32 %v2437, %v2461
      %v2548 = vmul.f32 %v2438, %v2461
      %v2549 = vmul.f32 %v2439, %v2461
      %v2550 = vmul.f32 %v2440, %v2461
      %v2551 = vmul.f32 %v2441, %v2461
      %v2552 = vmul.f32 %v2442, %v2461
      %v2553 = vmul.f32 %v2443, %v2461
      %v2554 = vmul.f32 %v2444, %v2461
      %v2555 = vmul.f32 %v2445, %v2461
      %v2556 = vmul.f32 %v2446, %v2461
      %v2557 = vmul.f32 %v2447, %v2461
      %v2558 = vmul.f32 %v2448, %v2461
      %v2559 = vmul.f32 %v2449, %v2461
      %v2560 = vmul.f32 %v2450, %v2461
      %v2561 = vmul.f32 %v2451, %v2461
      %v2562 = vmul.f32 %v2452, %v2461
      %v2563 = vmul.f32 %v2453, %v2461
      %v2564 = vmul.f32 %v2454, %v2461
      %v2565 = vmul.f32 %v2455, %v2461
      %v2566 = vmul.f32 %v2456, %v2461
      %v2567 = vadd.f32 %v2247, %v2462
      %v2568 = vadd.f32 %v2248, %v2463
      %v2569 = vadd.f32 %v2249, %v2464
      %v2570 = vadd.f32 %v2250, %v2465
      %v2571 = vadd.f32 %v2251, %v2466
      %v2572 = vadd.f32 %v2252, %v2467
      %v2573 = vadd.f32 %v2253, %v2468
      %v2574 = vadd.f32 %v2254, %v2469
      %v2575 = vadd.f32 %v2255, %v2470
      %v2576 = vadd.f32 %v2256, %v2471
      %v2577 = vadd.f32 %v2257, %v2472
      %v2578 = vadd.f32 %v2258, %v2473
      %v2579 = vadd.f32 %v2259, %v2474
      %v2580 = vadd.f32 %v2260, %v2475
      %v2581 = vadd.f32 %v2261, %v2476
      %v2582 = vadd.f32 %v2262, %v2477
      %v2583 = vadd.f32 %v2263, %v2478
      %v2584 = vadd.f32 %v2264, %v2479
      %v2585 = vadd.f32 %v2265, %v2480
      %v2586 = vadd.f32 %v2266, %v2481
      %v2587 = vadd.f32 %v2267, %v2482
      %v2588 = vadd.f32 %v2268, %v2483
      %v2589 = vadd.f32 %v2269, %v2484
      %v2590 = vadd.f32 %v2270, %v2485
      %v2591 = vadd.f32 %v2271, %v2486
      %v2592 = vadd.f32 %v2272, %v2487
      %v2593 = vadd.f32 %v2273, %v2488
      %v2594 = vadd.f32 %v2274, %v2489
      %v2595 = vadd.f32 %v2275, %v2490
      %v2596 = vadd.f32 %v2276, %v2491
      %v2597 = vadd.f32 %v2277, %v2492
      %v2598 = vadd.f32 %v2278, %v2493
      %v2599 = vadd.f32 %v2279, %v2494
      %v2600 = vadd.f32 %v2280, %v2495
      %v2601 = vadd.f32 %v2281, %v2496
      %v2602 = vadd.f32 %v2282, %v2497
      %v2603 = vadd.f32 %v2283, %v2498
      %v2604 = vadd.f32 %v2284, %v2499
      %v2605 = vadd.f32 %v2285, %v2500
      %v2606 = vadd.f32 %v2286, %v2501
      %v2607 = vadd.f32 %v2287, %v2502
      %v2608 = vadd.f32 %v2288, %v2503
      %v2609 = vadd.f32 %v2289, %v2504
      %v2610 = vadd.f32 %v2290, %v2505
      %v2611 = vadd.f32 %v2291, %v2506
      %v2612 = vadd.f32 %v2292, %v2507
      %v2613 = vadd.f32 %v2293, %v2508
      %v2614 = vadd.f32 %v2294, %v2509
      %v2615 = vadd.f32 %v2295, %v2510
      %v2616 = vadd.f32 %v2296, %v2511
      %v2617 = vadd.f32 %v2297, %v2512
      %v2618 = vadd.f32 %v2298, %v2513
      %v2619 = vadd.f32 %v2299, %v2514
      %v2620 = vadd.f32 %v2300, %v2515
      %v2621 = vadd.f32 %v2301, %v2516
      %v2622 = vadd.f32 %v2302, %v2517
      %v2623 = vadd.f32 %v2303, %v2518
      %v2624 = vadd.f32 %v2304, %v2519
      %v2625 = vadd.f32 %v2305, %v2520
      %v2626 = vadd.f32 %v2306, %v2521
      %v2627 = vadd.f32 %v2307, %v2522
      %v2628 = vadd.f32 %v2308, %v2523
      %v2629 = vadd.f32 %v2309, %v2524
      %v2630 = vadd.f32 %v2310, %v2525
      %v2631 = vadd.f32 %v2311, %v2526
      %v2632 = vadd.f32 %v2312, %v2527
      %v2633 = vadd.f32 %v2313, %v2528
      %v2634 = vadd.f32 %v2314, %v2529
      %v2635 = vadd.f32 %v2315, %v2530
      %v2636 = vadd.f32 %v2316, %v2531
      %v2637 = vadd.f32 %v2317, %v2532
      %v2638 = vadd.f32 %v2318, %v2533
      %v2639 = vadd.f32 %v2319, %v2534
      %v2640 = vadd.f32 %v2320, %v2535
      %v2641 = vadd.f32 %v2321, %v2536
      %v2642 = vadd.f32 %v2322, %v2537
      %v2643 = vadd.f32 %v2323, %v2538
      %v2644 = vadd.f32 %v2324, %v2539
      %v2645 = vadd.f32 %v2325, %v2540
      %v2646 = vadd.f32 %v2326, %v2541
      %v2647 = vadd.f32 %v2327, %v2542
      %v2648 = vadd.f32 %v2328, %v2543
      %v2649 = vadd.f32 %v2329, %v2544
      %v2650 = vadd.f32 %v2330, %v2545
      %v2651 = vadd.f32 %v2331, %v2546
      %v2652 = vadd.f32 %v2332, %v2547
      %v2653 = vadd.f32 %v2333, %v2548
      %v2654 = vadd.f32 %v2334, %v2549
      %v2655 = vadd.f32 %v2335, %v2550
      %v2656 = vadd.f32 %v2336, %v2551
      %v2657 = vadd.f32 %v2337, %v2552
      %v2658 = vadd.f32 %v2338, %v2553
      %v2659 = vadd.f32 %v2339, %v2554
      %v2660 = vadd.f32 %v2340, %v2555
      %v2661 = vadd.f32 %v2341, %v2556
      %v2662 = vadd.f32 %v2342, %v2557
      %v2663 = vadd.f32 %v2343, %v2558
      %v2664 = vadd.f32 %v2344, %v2559
      %v2665 = vadd.f32 %v2345, %v2560
      %v2666 = vadd.f32 %v2346, %v2561
      %v2667 = vadd.f32 %v2347, %v2562
      %v2668 = vadd.f32 %v2348, %v2563
      %v2669 = vadd.f32 %v2349, %v2564
      %v2670 = vadd.f32 %v2350, %v2565
      %v2671 = vadd.f32 %v2351, %v2566
      %v2672 = vld [vmem:[#allocation2 + $0x340] sm:$0xff]
      %v2673 = vld [vmem:[#allocation2 + $0x348] sm:$0xff]
      %v2674 = vld [vmem:[#allocation2 + $0x350] sm:$0xff]
      %v2675 = vld [vmem:[#allocation2 + $0x358] sm:$0xff]
      %v2676 = vld [vmem:[#allocation2 + $0x360] sm:$0x3f]
      %v2677 = vld [vmem:[%s1 + $0x5] sm:$0x1]
      %v2678 = vlaneseq
      %v2679 = vshrl.u32 %v2678, 7
      %v2680 = vsub.s32 0, %v2679
      %v2681 = vrot.slane %v2677, %v2680
      %v2682 = vmul.f32 %v1076, %v2681
      %v2683 = vmul.f32 %v1077, %v2681
      %v2684 = vmul.f32 %v1078, %v2681
      %v2685 = vmul.f32 %v1079, %v2681
      %v2686 = vmul.f32 %v1080, %v2681
      %v2687 = vmul.f32 %v1081, %v2681
      %v2688 = vmul.f32 %v1082, %v2681
      %v2689 = vmul.f32 %v1083, %v2681
      %v2690 = vmul.f32 %v1084, %v2681
      %v2691 = vmul.f32 %v1085, %v2681
      %v2692 = vmul.f32 %v1086, %v2681
      %v2693 = vmul.f32 %v1087, %v2681
      %v2694 = vmul.f32 %v1088, %v2681
      %v2695 = vmul.f32 %v1089, %v2681
      %v2696 = vmul.f32 %v1090, %v2681
      %v2697 = vmul.f32 %v1091, %v2681
      %v2698 = vmul.f32 %v1092, %v2681
      %v2699 = vmul.f32 %v1093, %v2681
      %v2700 = vmul.f32 %v1094, %v2681
      %v2701 = vmul.f32 %v1095, %v2681
      %v2702 = vmul.f32 %v1096, %v2681
      %v2703 = vmul.f32 %v1097, %v2681
      %v2704 = vmul.f32 %v1098, %v2681
      %v2705 = vmul.f32 %v1099, %v2681
      %v2706 = vmul.f32 %v1100, %v2681
      %v2707 = vmul.f32 %v1101, %v2681
      %v2708 = vmul.f32 %v1102, %v2681
      %v2709 = vmul.f32 %v1103, %v2681
      %v2710 = vmul.f32 %v1104, %v2681
      %v2711 = vmul.f32 %v1105, %v2681
      %v2712 = vmul.f32 %v1106, %v2681
      %v2713 = vmul.f32 %v1107, %v2681
      %v2714 = vmul.f32 %v1108, %v2681
      %v2715 = vmul.f32 %v1109, %v2681
      %v2716 = vmul.f32 %v1110, %v2681
      %v2717 = vmul.f32 %v1111, %v2681
      %v2718 = vmul.f32 %v1112, %v2681
      %v2719 = vmul.f32 %v1113, %v2681
      %v2720 = vmul.f32 %v1114, %v2681
      %v2721 = vmul.f32 %v1115, %v2681
      %v2722 = vmul.f32 %v1116, %v2681
      %v2723 = vmul.f32 %v1117, %v2681
      %v2724 = vmul.f32 %v1118, %v2681
      %v2725 = vmul.f32 %v1119, %v2681
      %v2726 = vmul.f32 %v1120, %v2681
      %v2727 = vmul.f32 %v1121, %v2681
      %v2728 = vmul.f32 %v1122, %v2681
      %v2729 = vmul.f32 %v1123, %v2681
      %v2730 = vmul.f32 %v1124, %v2681
      %v2731 = vmul.f32 %v1125, %v2681
      %v2732 = vmul.f32 %v1126, %v2681
      %v2733 = vmul.f32 %v1127, %v2681
      %v2734 = vmul.f32 %v1128, %v2681
      %v2735 = vmul.f32 %v1129, %v2681
      %v2736 = vmul.f32 %v1130, %v2681
      %v2737 = vmul.f32 %v1131, %v2681
      %v2738 = vmul.f32 %v1132, %v2681
      %v2739 = vmul.f32 %v1133, %v2681
      %v2740 = vmul.f32 %v1134, %v2681
      %v2741 = vmul.f32 %v1135, %v2681
      %v2742 = vmul.f32 %v1136, %v2681
      %v2743 = vmul.f32 %v1137, %v2681
      %v2744 = vmul.f32 %v1138, %v2681
      %v2745 = vmul.f32 %v1139, %v2681
      %v2746 = vmul.f32 %v1140, %v2681
      %v2747 = vmul.f32 %v1141, %v2681
      %v2748 = vmul.f32 %v1142, %v2681
      %v2749 = vmul.f32 %v1143, %v2681
      %v2750 = vmul.f32 %v1144, %v2681
      %v2751 = vmul.f32 %v1145, %v2681
      %v2752 = vmul.f32 %v1146, %v2681
      %v2753 = vmul.f32 %v1147, %v2681
      %v2754 = vmul.f32 %v1148, %v2681
      %v2755 = vmul.f32 %v1149, %v2681
      %v2756 = vmul.f32 %v1150, %v2681
      %v2757 = vmul.f32 %v1151, %v2681
      %v2758 = vmul.f32 %v1152, %v2681
      %v2759 = vmul.f32 %v1153, %v2681
      %v2760 = vmul.f32 %v1154, %v2681
      %v2761 = vmul.f32 %v1155, %v2681
      %v2762 = vmul.f32 %v1156, %v2681
      %v2763 = vmul.f32 %v1157, %v2681
      %v2764 = vmul.f32 %v1158, %v2681
      %v2765 = vmul.f32 %v1159, %v2681
      %v2766 = vmul.f32 %v1160, %v2681
      %v2767 = vmul.f32 %v1161, %v2681
      %v2768 = vmul.f32 %v1162, %v2681
      %v2769 = vmul.f32 %v1163, %v2681
      %v2770 = vmul.f32 %v1164, %v2681
      %v2771 = vmul.f32 %v1165, %v2681
      %v2772 = vmul.f32 %v1166, %v2681
      %v2773 = vmul.f32 %v1167, %v2681
      %v2774 = vmul.f32 %v1168, %v2681
      %v2775 = vmul.f32 %v1169, %v2681
      %v2776 = vmul.f32 %v1170, %v2681
      %v2777 = vmul.f32 %v1171, %v2681
      %v2778 = vmul.f32 %v1172, %v2681
      %v2779 = vmul.f32 %v1173, %v2681
      %v2780 = vmul.f32 %v1174, %v2681
      %v2781 = vmul.f32 %v1175, %v2681
      %v2782 = vmul.f32 %v2672, %v2681
      %v2783 = vmul.f32 %v2673, %v2681
      %v2784 = vmul.f32 %v2674, %v2681
      %v2785 = vmul.f32 %v2675, %v2681
      %v2786 = vmul.f32 %v2676, %v2681
      %v2787 = vadd.f32 %v2567, %v2682
      %v2788 = vadd.f32 %v2568, %v2683
      %v2789 = vadd.f32 %v2569, %v2684
      %v2790 = vadd.f32 %v2570, %v2685
      %v2791 = vadd.f32 %v2571, %v2686
      %v2792 = vadd.f32 %v2572, %v2687
      %v2793 = vadd.f32 %v2573, %v2688
      %v2794 = vadd.f32 %v2574, %v2689
      %v2795 = vadd.f32 %v2575, %v2690
      %v2796 = vadd.f32 %v2576, %v2691
      %v2797 = vadd.f32 %v2577, %v2692
      %v2798 = vadd.f32 %v2578, %v2693
      %v2799 = vadd.f32 %v2579, %v2694
      %v2800 = vadd.f32 %v2580, %v2695
      %v2801 = vadd.f32 %v2581, %v2696
      %v2802 = vadd.f32 %v2582, %v2697
      %v2803 = vadd.f32 %v2583, %v2698
      %v2804 = vadd.f32 %v2584, %v2699
      %v2805 = vadd.f32 %v2585, %v2700
      %v2806 = vadd.f32 %v2586, %v2701
      %v2807 = vadd.f32 %v2587, %v2702
      %v2808 = vadd.f32 %v2588, %v2703
      %v2809 = vadd.f32 %v2589, %v2704
      %v2810 = vadd.f32 %v2590, %v2705
      %v2811 = vadd.f32 %v2591, %v2706
      %v2812 = vadd.f32 %v2592, %v2707
      %v2813 = vadd.f32 %v2593, %v2708
      %v2814 = vadd.f32 %v2594, %v2709
      %v2815 = vadd.f32 %v2595, %v2710
      %v2816 = vadd.f32 %v2596, %v2711
      %v2817 = vadd.f32 %v2597, %v2712
      %v2818 = vadd.f32 %v2598, %v2713
      %v2819 = vadd.f32 %v2599, %v2714
      %v2820 = vadd.f32 %v2600, %v2715
      %v2821 = vadd.f32 %v2601, %v2716
      %v2822 = vadd.f32 %v2602, %v2717
      %v2823 = vadd.f32 %v2603, %v2718
      %v2824 = vadd.f32 %v2604, %v2719
      %v2825 = vadd.f32 %v2605, %v2720
      %v2826 = vadd.f32 %v2606, %v2721
      %v2827 = vadd.f32 %v2607, %v2722
      %v2828 = vadd.f32 %v2608, %v2723
      %v2829 = vadd.f32 %v2609, %v2724
      %v2830 = vadd.f32 %v2610, %v2725
      %v2831 = vadd.f32 %v2611, %v2726
      %v2832 = vadd.f32 %v2612, %v2727
      %v2833 = vadd.f32 %v2613, %v2728
      %v2834 = vadd.f32 %v2614, %v2729
      %v2835 = vadd.f32 %v2615, %v2730
      %v2836 = vadd.f32 %v2616, %v2731
      %v2837 = vadd.f32 %v2617, %v2732
      %v2838 = vadd.f32 %v2618, %v2733
      %v2839 = vadd.f32 %v2619, %v2734
      %v2840 = vadd.f32 %v2620, %v2735
      %v2841 = vadd.f32 %v2621, %v2736
      %v2842 = vadd.f32 %v2622, %v2737
      %v2843 = vadd.f32 %v2623, %v2738
      %v2844 = vadd.f32 %v2624, %v2739
      %v2845 = vadd.f32 %v2625, %v2740
      %v2846 = vadd.f32 %v2626, %v2741
      %v2847 = vadd.f32 %v2627, %v2742
      %v2848 = vadd.f32 %v2628, %v2743
      %v2849 = vadd.f32 %v2629, %v2744
      %v2850 = vadd.f32 %v2630, %v2745
      %v2851 = vadd.f32 %v2631, %v2746
      %v2852 = vadd.f32 %v2632, %v2747
      %v2853 = vadd.f32 %v2633, %v2748
      %v2854 = vadd.f32 %v2634, %v2749
      %v2855 = vadd.f32 %v2635, %v2750
      %v2856 = vadd.f32 %v2636, %v2751
      %v2857 = vadd.f32 %v2637, %v2752
      %v2858 = vadd.f32 %v2638, %v2753
      %v2859 = vadd.f32 %v2639, %v2754
      %v2860 = vadd.f32 %v2640, %v2755
      %v2861 = vadd.f32 %v2641, %v2756
      %v2862 = vadd.f32 %v2642, %v2757
      %v2863 = vadd.f32 %v2643, %v2758
      %v2864 = vadd.f32 %v2644, %v2759
      %v2865 = vadd.f32 %v2645, %v2760
      %v2866 = vadd.f32 %v2646, %v2761
      %v2867 = vadd.f32 %v2647, %v2762
      %v2868 = vadd.f32 %v2648, %v2763
      %v2869 = vadd.f32 %v2649, %v2764
      %v2870 = vadd.f32 %v2650, %v2765
      %v2871 = vadd.f32 %v2651, %v2766
      %v2872 = vadd.f32 %v2652, %v2767
      %v2873 = vadd.f32 %v2653, %v2768
      %v2874 = vadd.f32 %v2654, %v2769
      %v2875 = vadd.f32 %v2655, %v2770
      %v2876 = vadd.f32 %v2656, %v2771
      %v2877 = vadd.f32 %v2657, %v2772
      %v2878 = vadd.f32 %v2658, %v2773
      %v2879 = vadd.f32 %v2659, %v2774
      %v2880 = vadd.f32 %v2660, %v2775
      %v2881 = vadd.f32 %v2661, %v2776
      %v2882 = vadd.f32 %v2662, %v2777
      %v2883 = vadd.f32 %v2663, %v2778
      %v2884 = vadd.f32 %v2664, %v2779
      %v2885 = vadd.f32 %v2665, %v2780
      %v2886 = vadd.f32 %v2666, %v2781
      %v2887 = vadd.f32 %v2667, %v2782
      %v2888 = vadd.f32 %v2668, %v2783
      %v2889 = vadd.f32 %v2669, %v2784
      %v2890 = vadd.f32 %v2670, %v2785
      %v2891 = vadd.f32 %v2671, %v2786
      %v2892 = vld [vmem:[#allocation2 + $0x3c] sm:$0xff]
      %v2893 = vld [vmem:[#allocation2 + $0x44] sm:$0xff]
      %v2894 = vld [vmem:[#allocation2 + $0x4c] sm:$0xff]
      %v2895 = vld [vmem:[#allocation2 + $0x54] sm:$0xff]
      %v2896 = vld [vmem:[#allocation2 + $0x5c] sm:$0xff]
      %v2897 = vld [vmem:[#allocation2 + $0x64] sm:$0xff]
      %v2898 = vld [vmem:[#allocation2 + $0x6c] sm:$0xff]
      %v2899 = vld [vmem:[#allocation2 + $0x74] sm:$0xff]
      %v2900 = vld [vmem:[#allocation2 + $0x7c] sm:$0xff]
      %v2901 = vld [vmem:[#allocation2 + $0x84] sm:$0xff]
      %v2902 = vld [vmem:[#allocation2 + $0x8c] sm:$0xff]
      %v2903 = vld [vmem:[#allocation2 + $0x94] sm:$0xff]
      %v2904 = vld [vmem:[#allocation2 + $0x9c] sm:$0xff]
      %v2905 = vld [vmem:[#allocation2 + $0xa4] sm:$0xff]
      %v2906 = vld [vmem:[#allocation2 + $0xac] sm:$0xff]
      %v2907 = vld [vmem:[#allocation2 + $0xb4] sm:$0xff]
      %v2908 = vld [vmem:[#allocation2 + $0xbc] sm:$0xff]
      %v2909 = vld [vmem:[#allocation2 + $0xc4] sm:$0xff]
      %v2910 = vld [vmem:[#allocation2 + $0xcc] sm:$0xff]
      %v2911 = vld [vmem:[#allocation2 + $0xd4] sm:$0xff]
      %v2912 = vld [vmem:[#allocation2 + $0xdc] sm:$0xff]
      %v2913 = vld [vmem:[#allocation2 + $0xe4] sm:$0xff]
      %v2914 = vld [vmem:[#allocation2 + $0xec] sm:$0xff]
      %v2915 = vld [vmem:[#allocation2 + $0xf4] sm:$0xff]
      %v2916 = vld [vmem:[#allocation2 + $0xfc] sm:$0xff]
      %v2917 = vld [vmem:[#allocation2 + $0x104] sm:$0xff]
      %v2918 = vld [vmem:[#allocation2 + $0x10c] sm:$0xff]
      %v2919 = vld [vmem:[#allocation2 + $0x114] sm:$0xff]
      %v2920 = vld [vmem:[#allocation2 + $0x11c] sm:$0xff]
      %v2921 = vld [vmem:[#allocation2 + $0x124] sm:$0xff]
      %v2922 = vld [vmem:[#allocation2 + $0x12c] sm:$0xff]
      %v2923 = vld [vmem:[#allocation2 + $0x134] sm:$0xff]
      %v2924 = vld [vmem:[#allocation2 + $0x13c] sm:$0xff]
      %v2925 = vld [vmem:[#allocation2 + $0x144] sm:$0xff]
      %v2926 = vld [vmem:[#allocation2 + $0x14c] sm:$0xff]
      %v2927 = vld [vmem:[#allocation2 + $0x154] sm:$0xff]
      %v2928 = vld [vmem:[#allocation2 + $0x15c] sm:$0xff]
      %v2929 = vld [vmem:[#allocation2 + $0x164] sm:$0xff]
      %v2930 = vld [vmem:[#allocation2 + $0x16c] sm:$0xff]
      %v2931 = vld [vmem:[#allocation2 + $0x174] sm:$0xff]
      %v2932 = vld [vmem:[#allocation2 + $0x17c] sm:$0xff]
      %v2933 = vld [vmem:[#allocation2 + $0x184] sm:$0xff]
      %v2934 = vld [vmem:[#allocation2 + $0x18c] sm:$0xff]
      %v2935 = vld [vmem:[#allocation2 + $0x194] sm:$0xff]
      %v2936 = vld [vmem:[#allocation2 + $0x19c] sm:$0xff]
      %v2937 = vld [vmem:[#allocation2 + $0x1a4] sm:$0xff]
      %v2938 = vld [vmem:[#allocation2 + $0x1ac] sm:$0xff]
      %v2939 = vld [vmem:[#allocation2 + $0x1b4] sm:$0xff]
      %v2940 = vld [vmem:[#allocation2 + $0x1bc] sm:$0xff]
      %v2941 = vld [vmem:[#allocation2 + $0x1c4] sm:$0xff]
      %v2942 = vld [vmem:[#allocation2 + $0x1cc] sm:$0xff]
      %v2943 = vld [vmem:[#allocation2 + $0x1d4] sm:$0xff]
      %v2944 = vld [vmem:[#allocation2 + $0x1dc] sm:$0xff]
      %v2945 = vld [vmem:[#allocation2 + $0x1e4] sm:$0xff]
      %v2946 = vld [vmem:[#allocation2 + $0x1ec] sm:$0xff]
      %v2947 = vld [vmem:[#allocation2 + $0x1f4] sm:$0xff]
      %v2948 = vld [vmem:[#allocation2 + $0x1fc] sm:$0xff]
      %v2949 = vld [vmem:[#allocation2 + $0x204] sm:$0xff]
      %v2950 = vld [vmem:[#allocation2 + $0x20c] sm:$0xff]
      %v2951 = vld [vmem:[#allocation2 + $0x214] sm:$0xff]
      %v2952 = vld [vmem:[#allocation2 + $0x21c] sm:$0xff]
      %v2953 = vld [vmem:[#allocation2 + $0x224] sm:$0xff]
      %v2954 = vld [vmem:[#allocation2 + $0x22c] sm:$0xff]
      %v2955 = vld [vmem:[#allocation2 + $0x234] sm:$0xff]
      %v2956 = vld [vmem:[#allocation2 + $0x23c] sm:$0xff]
      %v2957 = vld [vmem:[#allocation2 + $0x244] sm:$0xff]
      %v2958 = vld [vmem:[#allocation2 + $0x24c] sm:$0xff]
      %v2959 = vld [vmem:[#allocation2 + $0x254] sm:$0xff]
      %v2960 = vld [vmem:[#allocation2 + $0x25c] sm:$0xff]
      %v2961 = vld [vmem:[#allocation2 + $0x264] sm:$0xff]
      %v2962 = vld [vmem:[#allocation2 + $0x26c] sm:$0xff]
      %v2963 = vld [vmem:[#allocation2 + $0x274] sm:$0xff]
      %v2964 = vld [vmem:[#allocation2 + $0x27c] sm:$0xff]
      %v2965 = vld [vmem:[#allocation2 + $0x284] sm:$0xff]
      %v2966 = vld [vmem:[#allocation2 + $0x28c] sm:$0xff]
      %v2967 = vld [vmem:[#allocation2 + $0x294] sm:$0xff]
      %v2968 = vld [vmem:[#allocation2 + $0x29c] sm:$0xff]
      %v2969 = vld [vmem:[#allocation2 + $0x2a4] sm:$0xff]
      %v2970 = vld [vmem:[#allocation2 + $0x2ac] sm:$0xff]
      %v2971 = vld [vmem:[#allocation2 + $0x2b4] sm:$0xff]
      %v2972 = vld [vmem:[#allocation2 + $0x2bc] sm:$0xff]
      %v2973 = vld [vmem:[#allocation2 + $0x2c4] sm:$0xff]
      %v2974 = vld [vmem:[#allocation2 + $0x2cc] sm:$0xff]
      %v2975 = vld [vmem:[#allocation2 + $0x2d4] sm:$0xff]
      %v2976 = vld [vmem:[#allocation2 + $0x2dc] sm:$0xff]
      %v2977 = vld [vmem:[#allocation2 + $0x2e4] sm:$0xff]
      %v2978 = vld [vmem:[#allocation2 + $0x2ec] sm:$0xff]
      %v2979 = vld [vmem:[#allocation2 + $0x2f4] sm:$0xff]
      %v2980 = vld [vmem:[#allocation2 + $0x2fc] sm:$0xff]
      %v2981 = vld [vmem:[#allocation2 + $0x304] sm:$0xff]
      %v2982 = vld [vmem:[#allocation2 + $0x30c] sm:$0xff]
      %v2983 = vld [vmem:[#allocation2 + $0x314] sm:$0xff]
      %v2984 = vld [vmem:[#allocation2 + $0x31c] sm:$0xff]
      %v2985 = vld [vmem:[#allocation2 + $0x324] sm:$0xff]
      %v2986 = vld [vmem:[#allocation2 + $0x32c] sm:$0xff]
      %v2987 = vld [vmem:[#allocation2 + $0x334] sm:$0xff]
      %v2988 = vld [vmem:[#allocation2 + $0x33c] sm:$0xff]
      %v2989 = vld [vmem:[#allocation2 + $0x344] sm:$0xff]
      %v2990 = vld [vmem:[#allocation2 + $0x34c] sm:$0xff]
      %v2991 = vld [vmem:[#allocation2 + $0x354] sm:$0xff]
      %v2992 = vld [vmem:[#allocation2 + $0x35c] sm:$0xff]
      %v2993 = vld [vmem:[#allocation2 + $0x364] sm:$0xff]
      %v2994 = vld [vmem:[#allocation2 + $0x36c] sm:$0xff]
      %v2995 = vld [vmem:[#allocation2 + $0x374] sm:$0xff]
      %v2996 = vld [vmem:[#allocation2 + $0x37c] sm:$0x3f]
      %v2997 = vld [vmem:[%s1 + $0x6] sm:$0x1]
      %v2998 = vlaneseq
      %v2999 = vshrl.u32 %v2998, 7
      %v3000 = vsub.s32 0, %v2999
      %v3001 = vrot.slane %v2997, %v3000
      %v3002 = vmul.f32 %v2892, %v3001
      %v3003 = vmul.f32 %v2893, %v3001
      %v3004 = vmul.f32 %v2894, %v3001
      %v3005 = vmul.f32 %v2895, %v3001
      %v3006 = vmul.f32 %v2896, %v3001
      %v3007 = vmul.f32 %v2897, %v3001
      %v3008 = vmul.f32 %v2898, %v3001
      %v3009 = vmul.f32 %v2899, %v3001
      %v3010 = vmul.f32 %v2900, %v3001
      %v3011 = vmul.f32 %v2901, %v3001
      %v3012 = vmul.f32 %v2902, %v3001
      %v3013 = vmul.f32 %v2903, %v3001
      %v3014 = vmul.f32 %v2904, %v3001
      %v3015 = vmul.f32 %v2905, %v3001
      %v3016 = vmul.f32 %v2906, %v3001
      %v3017 = vmul.f32 %v2907, %v3001
      %v3018 = vmul.f32 %v2908, %v3001
      %v3019 = vmul.f32 %v2909, %v3001
      %v3020 = vmul.f32 %v2910, %v3001
      %v3021 = vmul.f32 %v2911, %v3001
      %v3022 = vmul.f32 %v2912, %v3001
      %v3023 = vmul.f32 %v2913, %v3001
      %v3024 = vmul.f32 %v2914, %v3001
      %v3025 = vmul.f32 %v2915, %v3001
      %v3026 = vmul.f32 %v2916, %v3001
      %v3027 = vmul.f32 %v2917, %v3001
      %v3028 = vmul.f32 %v2918, %v3001
      %v3029 = vmul.f32 %v2919, %v3001
      %v3030 = vmul.f32 %v2920, %v3001
      %v3031 = vmul.f32 %v2921, %v3001
      %v3032 = vmul.f32 %v2922, %v3001
      %v3033 = vmul.f32 %v2923, %v3001
      %v3034 = vmul.f32 %v2924, %v3001
      %v3035 = vmul.f32 %v2925, %v3001
      %v3036 = vmul.f32 %v2926, %v3001
      %v3037 = vmul.f32 %v2927, %v3001
      %v3038 = vmul.f32 %v2928, %v3001
      %v3039 = vmul.f32 %v2929, %v3001
      %v3040 = vmul.f32 %v2930, %v3001
      %v3041 = vmul.f32 %v2931, %v3001
      %v3042 = vmul.f32 %v2932, %v3001
      %v3043 = vmul.f32 %v2933, %v3001
      %v3044 = vmul.f32 %v2934, %v3001
      %v3045 = vmul.f32 %v2935, %v3001
      %v3046 = vmul.f32 %v2936, %v3001
      %v3047 = vmul.f32 %v2937, %v3001
      %v3048 = vmul.f32 %v2938, %v3001
      %v3049 = vmul.f32 %v2939, %v3001
      %v3050 = vmul.f32 %v2940, %v3001
      %v3051 = vmul.f32 %v2941, %v3001
      %v3052 = vmul.f32 %v2942, %v3001
      %v3053 = vmul.f32 %v2943, %v3001
      %v3054 = vmul.f32 %v2944, %v3001
      %v3055 = vmul.f32 %v2945, %v3001
      %v3056 = vmul.f32 %v2946, %v3001
      %v3057 = vmul.f32 %v2947, %v3001
      %v3058 = vmul.f32 %v2948, %v3001
      %v3059 = vmul.f32 %v2949, %v3001
      %v3060 = vmul.f32 %v2950, %v3001
      %v3061 = vmul.f32 %v2951, %v3001
      %v3062 = vmul.f32 %v2952, %v3001
      %v3063 = vmul.f32 %v2953, %v3001
      %v3064 = vmul.f32 %v2954, %v3001
      %v3065 = vmul.f32 %v2955, %v3001
      %v3066 = vmul.f32 %v2956, %v3001
      %v3067 = vmul.f32 %v2957, %v3001
      %v3068 = vmul.f32 %v2958, %v3001
      %v3069 = vmul.f32 %v2959, %v3001
      %v3070 = vmul.f32 %v2960, %v3001
      %v3071 = vmul.f32 %v2961, %v3001
      %v3072 = vmul.f32 %v2962, %v3001
      %v3073 = vmul.f32 %v2963, %v3001
      %v3074 = vmul.f32 %v2964, %v3001
      %v3075 = vmul.f32 %v2965, %v3001
      %v3076 = vmul.f32 %v2966, %v3001
      %v3077 = vmul.f32 %v2967, %v3001
      %v3078 = vmul.f32 %v2968, %v3001
      %v3079 = vmul.f32 %v2969, %v3001
      %v3080 = vmul.f32 %v2970, %v3001
      %v3081 = vmul.f32 %v2971, %v3001
      %v3082 = vmul.f32 %v2972, %v3001
      %v3083 = vmul.f32 %v2973, %v3001
      %v3084 = vmul.f32 %v2974, %v3001
      %v3085 = vmul.f32 %v2975, %v3001
      %v3086 = vmul.f32 %v2976, %v3001
      %v3087 = vmul.f32 %v2977, %v3001
      %v3088 = vmul.f32 %v2978, %v3001
      %v3089 = vmul.f32 %v2979, %v3001
      %v3090 = vmul.f32 %v2980, %v3001
      %v3091 = vmul.f32 %v2981, %v3001
      %v3092 = vmul.f32 %v2982, %v3001
      %v3093 = vmul.f32 %v2983, %v3001
      %v3094 = vmul.f32 %v2984, %v3001
      %v3095 = vmul.f32 %v2985, %v3001
      %v3096 = vmul.f32 %v2986, %v3001
      %v3097 = vmul.f32 %v2987, %v3001
      %v3098 = vmul.f32 %v2988, %v3001
      %v3099 = vmul.f32 %v2989, %v3001
      %v3100 = vmul.f32 %v2990, %v3001
      %v3101 = vmul.f32 %v2991, %v3001
      %v3102 = vmul.f32 %v2992, %v3001
      %v3103 = vmul.f32 %v2993, %v3001
      %v3104 = vmul.f32 %v2994, %v3001
      %v3105 = vmul.f32 %v2995, %v3001
      %v3106 = vmul.f32 %v2996, %v3001
      %v3107 = vadd.f32 %v2787, %v3002
      %v3108 = vadd.f32 %v2788, %v3003
      %v3109 = vadd.f32 %v2789, %v3004
      %v3110 = vadd.f32 %v2790, %v3005
      %v3111 = vadd.f32 %v2791, %v3006
      %v3112 = vadd.f32 %v2792, %v3007
      %v3113 = vadd.f32 %v2793, %v3008
      %v3114 = vadd.f32 %v2794, %v3009
      %v3115 = vadd.f32 %v2795, %v3010
      %v3116 = vadd.f32 %v2796, %v3011
      %v3117 = vadd.f32 %v2797, %v3012
      %v3118 = vadd.f32 %v2798, %v3013
      %v3119 = vadd.f32 %v2799, %v3014
      %v3120 = vadd.f32 %v2800, %v3015
      %v3121 = vadd.f32 %v2801, %v3016
      %v3122 = vadd.f32 %v2802, %v3017
      %v3123 = vadd.f32 %v2803, %v3018
      %v3124 = vadd.f32 %v2804, %v3019
      %v3125 = vadd.f32 %v2805, %v3020
      %v3126 = vadd.f32 %v2806, %v3021
      %v3127 = vadd.f32 %v2807, %v3022
      %v3128 = vadd.f32 %v2808, %v3023
      %v3129 = vadd.f32 %v2809, %v3024
      %v3130 = vadd.f32 %v2810, %v3025
      %v3131 = vadd.f32 %v2811, %v3026
      %v3132 = vadd.f32 %v2812, %v3027
      %v3133 = vadd.f32 %v2813, %v3028
      %v3134 = vadd.f32 %v2814, %v3029
      %v3135 = vadd.f32 %v2815, %v3030
      %v3136 = vadd.f32 %v2816, %v3031
      %v3137 = vadd.f32 %v2817, %v3032
      %v3138 = vadd.f32 %v2818, %v3033
      %v3139 = vadd.f32 %v2819, %v3034
      %v3140 = vadd.f32 %v2820, %v3035
      %v3141 = vadd.f32 %v2821, %v3036
      %v3142 = vadd.f32 %v2822, %v3037
      %v3143 = vadd.f32 %v2823, %v3038
      %v3144 = vadd.f32 %v2824, %v3039
      %v3145 = vadd.f32 %v2825, %v3040
      %v3146 = vadd.f32 %v2826, %v3041
      %v3147 = vadd.f32 %v2827, %v3042
      %v3148 = vadd.f32 %v2828, %v3043
      %v3149 = vadd.f32 %v2829, %v3044
      %v3150 = vadd.f32 %v2830, %v3045
      %v3151 = vadd.f32 %v2831, %v3046
      %v3152 = vadd.f32 %v2832, %v3047
      %v3153 = vadd.f32 %v2833, %v3048
      %v3154 = vadd.f32 %v2834, %v3049
      %v3155 = vadd.f32 %v2835, %v3050
      %v3156 = vadd.f32 %v2836, %v3051
      %v3157 = vadd.f32 %v2837, %v3052
      %v3158 = vadd.f32 %v2838, %v3053
      %v3159 = vadd.f32 %v2839, %v3054
      %v3160 = vadd.f32 %v2840, %v3055
      %v3161 = vadd.f32 %v2841, %v3056
      %v3162 = vadd.f32 %v2842, %v3057
      %v3163 = vadd.f32 %v2843, %v3058
      %v3164 = vadd.f32 %v2844, %v3059
      %v3165 = vadd.f32 %v2845, %v3060
      %v3166 = vadd.f32 %v2846, %v3061
      %v3167 = vadd.f32 %v2847, %v3062
      %v3168 = vadd.f32 %v2848, %v3063
      %v3169 = vadd.f32 %v2849, %v3064
      %v3170 = vadd.f32 %v2850, %v3065
      %v3171 = vadd.f32 %v2851, %v3066
      %v3172 = vadd.f32 %v2852, %v3067
      %v3173 = vadd.f32 %v2853, %v3068
      %v3174 = vadd.f32 %v2854, %v3069
      %v3175 = vadd.f32 %v2855, %v3070
      %v3176 = vadd.f32 %v2856, %v3071
      %v3177 = vadd.f32 %v2857, %v3072
      %v3178 = vadd.f32 %v2858, %v3073
      %v3179 = vadd.f32 %v2859, %v3074
      %v3180 = vadd.f32 %v2860, %v3075
      %v3181 = vadd.f32 %v2861, %v3076
      %v3182 = vadd.f32 %v2862, %v3077
      %v3183 = vadd.f32 %v2863, %v3078
      %v3184 = vadd.f32 %v2864, %v3079
      %v3185 = vadd.f32 %v2865, %v3080
      %v3186 = vadd.f32 %v2866, %v3081
      %v3187 = vadd.f32 %v2867, %v3082
      %v3188 = vadd.f32 %v2868, %v3083
      %v3189 = vadd.f32 %v2869, %v3084
      %v3190 = vadd.f32 %v2870, %v3085
      %v3191 = vadd.f32 %v2871, %v3086
      %v3192 = vadd.f32 %v2872, %v3087
      %v3193 = vadd.f32 %v2873, %v3088
      %v3194 = vadd.f32 %v2874, %v3089
      %v3195 = vadd.f32 %v2875, %v3090
      %v3196 = vadd.f32 %v2876, %v3091
      %v3197 = vadd.f32 %v2877, %v3092
      %v3198 = vadd.f32 %v2878, %v3093
      %v3199 = vadd.f32 %v2879, %v3094
      %v3200 = vadd.f32 %v2880, %v3095
      %v3201 = vadd.f32 %v2881, %v3096
      %v3202 = vadd.f32 %v2882, %v3097
      %v3203 = vadd.f32 %v2883, %v3098
      %v3204 = vadd.f32 %v2884, %v3099
      %v3205 = vadd.f32 %v2885, %v3100
      %v3206 = vadd.f32 %v2886, %v3101
      %v3207 = vadd.f32 %v2887, %v3102
      %v3208 = vadd.f32 %v2888, %v3103
      %v3209 = vadd.f32 %v2889, %v3104
      %v3210 = vadd.f32 %v2890, %v3105
      %v3211 = vadd.f32 %v2891, %v3106
      %v3212 = vld [vmem:[#allocation2 + $0x3d] sm:$0xff]
      %v3213 = vld [vmem:[#allocation2 + $0x45] sm:$0xff]
      %v3214 = vld [vmem:[#allocation2 + $0x4d] sm:$0xff]
      %v3215 = vld [vmem:[#allocation2 + $0x55] sm:$0xff]
      %v3216 = vld [vmem:[#allocation2 + $0x5d] sm:$0xff]
      %v3217 = vld [vmem:[#allocation2 + $0x65] sm:$0xff]
      %v3218 = vld [vmem:[#allocation2 + $0x6d] sm:$0xff]
      %v3219 = vld [vmem:[#allocation2 + $0x75] sm:$0xff]
      %v3220 = vld [vmem:[#allocation2 + $0x7d] sm:$0xff]
      %v3221 = vld [vmem:[#allocation2 + $0x85] sm:$0xff]
      %v3222 = vld [vmem:[#allocation2 + $0x8d] sm:$0xff]
      %v3223 = vld [vmem:[#allocation2 + $0x95] sm:$0xff]
      %v3224 = vld [vmem:[#allocation2 + $0x9d] sm:$0xff]
      %v3225 = vld [vmem:[#allocation2 + $0xa5] sm:$0xff]
      %v3226 = vld [vmem:[#allocation2 + $0xad] sm:$0xff]
      %v3227 = vld [vmem:[#allocation2 + $0xb5] sm:$0xff]
      %v3228 = vld [vmem:[#allocation2 + $0xbd] sm:$0xff]
      %v3229 = vld [vmem:[#allocation2 + $0xc5] sm:$0xff]
      %v3230 = vld [vmem:[#allocation2 + $0xcd] sm:$0xff]
      %v3231 = vld [vmem:[#allocation2 + $0xd5] sm:$0xff]
      %v3232 = vld [vmem:[#allocation2 + $0xdd] sm:$0xff]
      %v3233 = vld [vmem:[#allocation2 + $0xe5] sm:$0xff]
      %v3234 = vld [vmem:[#allocation2 + $0xed] sm:$0xff]
      %v3235 = vld [vmem:[#allocation2 + $0xf5] sm:$0xff]
      %v3236 = vld [vmem:[#allocation2 + $0xfd] sm:$0xff]
      %v3237 = vld [vmem:[#allocation2 + $0x105] sm:$0xff]
      %v3238 = vld [vmem:[#allocation2 + $0x10d] sm:$0xff]
      %v3239 = vld [vmem:[#allocation2 + $0x115] sm:$0xff]
      %v3240 = vld [vmem:[#allocation2 + $0x11d] sm:$0xff]
      %v3241 = vld [vmem:[#allocation2 + $0x125] sm:$0xff]
      %v3242 = vld [vmem:[#allocation2 + $0x12d] sm:$0xff]
      %v3243 = vld [vmem:[#allocation2 + $0x135] sm:$0xff]
      %v3244 = vld [vmem:[#allocation2 + $0x13d] sm:$0xff]
      %v3245 = vld [vmem:[#allocation2 + $0x145] sm:$0xff]
      %v3246 = vld [vmem:[#allocation2 + $0x14d] sm:$0xff]
      %v3247 = vld [vmem:[#allocation2 + $0x155] sm:$0xff]
      %v3248 = vld [vmem:[#allocation2 + $0x15d] sm:$0xff]
      %v3249 = vld [vmem:[#allocation2 + $0x165] sm:$0xff]
      %v3250 = vld [vmem:[#allocation2 + $0x16d] sm:$0xff]
      %v3251 = vld [vmem:[#allocation2 + $0x175] sm:$0xff]
      %v3252 = vld [vmem:[#allocation2 + $0x17d] sm:$0xff]
      %v3253 = vld [vmem:[#allocation2 + $0x185] sm:$0xff]
      %v3254 = vld [vmem:[#allocation2 + $0x18d] sm:$0xff]
      %v3255 = vld [vmem:[#allocation2 + $0x195] sm:$0xff]
      %v3256 = vld [vmem:[#allocation2 + $0x19d] sm:$0xff]
      %v3257 = vld [vmem:[#allocation2 + $0x1a5] sm:$0xff]
      %v3258 = vld [vmem:[#allocation2 + $0x1ad] sm:$0xff]
      %v3259 = vld [vmem:[#allocation2 + $0x1b5] sm:$0xff]
      %v3260 = vld [vmem:[#allocation2 + $0x1bd] sm:$0xff]
      %v3261 = vld [vmem:[#allocation2 + $0x1c5] sm:$0xff]
      %v3262 = vld [vmem:[#allocation2 + $0x1cd] sm:$0xff]
      %v3263 = vld [vmem:[#allocation2 + $0x1d5] sm:$0xff]
      %v3264 = vld [vmem:[#allocation2 + $0x1dd] sm:$0xff]
      %v3265 = vld [vmem:[#allocation2 + $0x1e5] sm:$0xff]
      %v3266 = vld [vmem:[#allocation2 + $0x1ed] sm:$0xff]
      %v3267 = vld [vmem:[#allocation2 + $0x1f5] sm:$0xff]
      %v3268 = vld [vmem:[#allocation2 + $0x1fd] sm:$0xff]
      %v3269 = vld [vmem:[#allocation2 + $0x205] sm:$0xff]
      %v3270 = vld [vmem:[#allocation2 + $0x20d] sm:$0xff]
      %v3271 = vld [vmem:[#allocation2 + $0x215] sm:$0xff]
      %v3272 = vld [vmem:[#allocation2 + $0x21d] sm:$0xff]
      %v3273 = vld [vmem:[#allocation2 + $0x225] sm:$0xff]
      %v3274 = vld [vmem:[#allocation2 + $0x22d] sm:$0xff]
      %v3275 = vld [vmem:[#allocation2 + $0x235] sm:$0xff]
      %v3276 = vld [vmem:[#allocation2 + $0x23d] sm:$0xff]
      %v3277 = vld [vmem:[#allocation2 + $0x245] sm:$0xff]
      %v3278 = vld [vmem:[#allocation2 + $0x24d] sm:$0xff]
      %v3279 = vld [vmem:[#allocation2 + $0x255] sm:$0xff]
      %v3280 = vld [vmem:[#allocation2 + $0x25d] sm:$0xff]
      %v3281 = vld [vmem:[#allocation2 + $0x265] sm:$0xff]
      %v3282 = vld [vmem:[#allocation2 + $0x26d] sm:$0xff]
      %v3283 = vld [vmem:[#allocation2 + $0x275] sm:$0xff]
      %v3284 = vld [vmem:[#allocation2 + $0x27d] sm:$0xff]
      %v3285 = vld [vmem:[#allocation2 + $0x285] sm:$0xff]
      %v3286 = vld [vmem:[#allocation2 + $0x28d] sm:$0xff]
      %v3287 = vld [vmem:[#allocation2 + $0x295] sm:$0xff]
      %v3288 = vld [vmem:[#allocation2 + $0x29d] sm:$0xff]
      %v3289 = vld [vmem:[#allocation2 + $0x2a5] sm:$0xff]
      %v3290 = vld [vmem:[#allocation2 + $0x2ad] sm:$0xff]
      %v3291 = vld [vmem:[#allocation2 + $0x2b5] sm:$0xff]
      %v3292 = vld [vmem:[#allocation2 + $0x2bd] sm:$0xff]
      %v3293 = vld [vmem:[#allocation2 + $0x2c5] sm:$0xff]
      %v3294 = vld [vmem:[#allocation2 + $0x2cd] sm:$0xff]
      %v3295 = vld [vmem:[#allocation2 + $0x2d5] sm:$0xff]
      %v3296 = vld [vmem:[#allocation2 + $0x2dd] sm:$0xff]
      %v3297 = vld [vmem:[#allocation2 + $0x2e5] sm:$0xff]
      %v3298 = vld [vmem:[#allocation2 + $0x2ed] sm:$0xff]
      %v3299 = vld [vmem:[#allocation2 + $0x2f5] sm:$0xff]
      %v3300 = vld [vmem:[#allocation2 + $0x2fd] sm:$0xff]
      %v3301 = vld [vmem:[#allocation2 + $0x305] sm:$0xff]
      %v3302 = vld [vmem:[#allocation2 + $0x30d] sm:$0xff]
      %v3303 = vld [vmem:[#allocation2 + $0x315] sm:$0xff]
      %v3304 = vld [vmem:[#allocation2 + $0x31d] sm:$0xff]
      %v3305 = vld [vmem:[#allocation2 + $0x325] sm:$0xff]
      %v3306 = vld [vmem:[#allocation2 + $0x32d] sm:$0xff]
      %v3307 = vld [vmem:[#allocation2 + $0x335] sm:$0xff]
      %v3308 = vld [vmem:[#allocation2 + $0x33d] sm:$0xff]
      %v3309 = vld [vmem:[#allocation2 + $0x345] sm:$0xff]
      %v3310 = vld [vmem:[#allocation2 + $0x34d] sm:$0xff]
      %v3311 = vld [vmem:[#allocation2 + $0x355] sm:$0xff]
      %v3312 = vld [vmem:[#allocation2 + $0x35d] sm:$0xff]
      %v3313 = vld [vmem:[#allocation2 + $0x365] sm:$0xff]
      %v3314 = vld [vmem:[#allocation2 + $0x36d] sm:$0xff]
      %v3315 = vld [vmem:[#allocation2 + $0x375] sm:$0xff]
      %v3316 = vld [vmem:[#allocation2 + $0x37d] sm:$0x3f]
      %v3317 = vld [vmem:[%s1 + $0x7] sm:$0x1]
      %v3318 = vlaneseq
      %v3319 = vshrl.u32 %v3318, 7
      %v3320 = vsub.s32 0, %v3319
      %v3321 = vrot.slane %v3317, %v3320
      %v3322 = vmul.f32 %v3212, %v3321
      %v3323 = vmul.f32 %v3213, %v3321
      %v3324 = vmul.f32 %v3214, %v3321
      %v3325 = vmul.f32 %v3215, %v3321
      %v3326 = vmul.f32 %v3216, %v3321
      %v3327 = vmul.f32 %v3217, %v3321
      %v3328 = vmul.f32 %v3218, %v3321
      %v3329 = vmul.f32 %v3219, %v3321
      %v3330 = vmul.f32 %v3220, %v3321
      %v3331 = vmul.f32 %v3221, %v3321
      %v3332 = vmul.f32 %v3222, %v3321
      %v3333 = vmul.f32 %v3223, %v3321
      %v3334 = vmul.f32 %v3224, %v3321
      %v3335 = vmul.f32 %v3225, %v3321
      %v3336 = vmul.f32 %v3226, %v3321
      %v3337 = vmul.f32 %v3227, %v3321
      %v3338 = vmul.f32 %v3228, %v3321
      %v3339 = vmul.f32 %v3229, %v3321
      %v3340 = vmul.f32 %v3230, %v3321
      %v3341 = vmul.f32 %v3231, %v3321
      %v3342 = vmul.f32 %v3232, %v3321
      %v3343 = vmul.f32 %v3233, %v3321
      %v3344 = vmul.f32 %v3234, %v3321
      %v3345 = vmul.f32 %v3235, %v3321
      %v3346 = vmul.f32 %v3236, %v3321
      %v3347 = vmul.f32 %v3237, %v3321
      %v3348 = vmul.f32 %v3238, %v3321
      %v3349 = vmul.f32 %v3239, %v3321
      %v3350 = vmul.f32 %v3240, %v3321
      %v3351 = vmul.f32 %v3241, %v3321
      %v3352 = vmul.f32 %v3242, %v3321
      %v3353 = vmul.f32 %v3243, %v3321
      %v3354 = vmul.f32 %v3244, %v3321
      %v3355 = vmul.f32 %v3245, %v3321
      %v3356 = vmul.f32 %v3246, %v3321
      %v3357 = vmul.f32 %v3247, %v3321
      %v3358 = vmul.f32 %v3248, %v3321
      %v3359 = vmul.f32 %v3249, %v3321
      %v3360 = vmul.f32 %v3250, %v3321
      %v3361 = vmul.f32 %v3251, %v3321
      %v3362 = vmul.f32 %v3252, %v3321
      %v3363 = vmul.f32 %v3253, %v3321
      %v3364 = vmul.f32 %v3254, %v3321
      %v3365 = vmul.f32 %v3255, %v3321
      %v3366 = vmul.f32 %v3256, %v3321
      %v3367 = vmul.f32 %v3257, %v3321
      %v3368 = vmul.f32 %v3258, %v3321
      %v3369 = vmul.f32 %v3259, %v3321
      %v3370 = vmul.f32 %v3260, %v3321
      %v3371 = vmul.f32 %v3261, %v3321
      %v3372 = vmul.f32 %v3262, %v3321
      %v3373 = vmul.f32 %v3263, %v3321
      %v3374 = vmul.f32 %v3264, %v3321
      %v3375 = vmul.f32 %v3265, %v3321
      %v3376 = vmul.f32 %v3266, %v3321
      %v3377 = vmul.f32 %v3267, %v3321
      %v3378 = vmul.f32 %v3268, %v3321
      %v3379 = vmul.f32 %v3269, %v3321
      %v3380 = vmul.f32 %v3270, %v3321
      %v3381 = vmul.f32 %v3271, %v3321
      %v3382 = vmul.f32 %v3272, %v3321
      %v3383 = vmul.f32 %v3273, %v3321
      %v3384 = vmul.f32 %v3274, %v3321
      %v3385 = vmul.f32 %v3275, %v3321
      %v3386 = vmul.f32 %v3276, %v3321
      %v3387 = vmul.f32 %v3277, %v3321
      %v3388 = vmul.f32 %v3278, %v3321
      %v3389 = vmul.f32 %v3279, %v3321
      %v3390 = vmul.f32 %v3280, %v3321
      %v3391 = vmul.f32 %v3281, %v3321
      %v3392 = vmul.f32 %v3282, %v3321
      %v3393 = vmul.f32 %v3283, %v3321
      %v3394 = vmul.f32 %v3284, %v3321
      %v3395 = vmul.f32 %v3285, %v3321
      %v3396 = vmul.f32 %v3286, %v3321
      %v3397 = vmul.f32 %v3287, %v3321
      %v3398 = vmul.f32 %v3288, %v3321
      %v3399 = vmul.f32 %v3289, %v3321
      %v3400 = vmul.f32 %v3290, %v3321
      %v3401 = vmul.f32 %v3291, %v3321
      %v3402 = vmul.f32 %v3292, %v3321
      %v3403 = vmul.f32 %v3293, %v3321
      %v3404 = vmul.f32 %v3294, %v3321
      %v3405 = vmul.f32 %v3295, %v3321
      %v3406 = vmul.f32 %v3296, %v3321
      %v3407 = vmul.f32 %v3297, %v3321
      %v3408 = vmul.f32 %v3298, %v3321
      %v3409 = vmul.f32 %v3299, %v3321
      %v3410 = vmul.f32 %v3300, %v3321
      %v3411 = vmul.f32 %v3301, %v3321
      %v3412 = vmul.f32 %v3302, %v3321
      %v3413 = vmul.f32 %v3303, %v3321
      %v3414 = vmul.f32 %v3304, %v3321
      %v3415 = vmul.f32 %v3305, %v3321
      %v3416 = vmul.f32 %v3306, %v3321
      %v3417 = vmul.f32 %v3307, %v3321
      %v3418 = vmul.f32 %v3308, %v3321
      %v3419 = vmul.f32 %v3309, %v3321
      %v3420 = vmul.f32 %v3310, %v3321
      %v3421 = vmul.f32 %v3311, %v3321
      %v3422 = vmul.f32 %v3312, %v3321
      %v3423 = vmul.f32 %v3313, %v3321
      %v3424 = vmul.f32 %v3314, %v3321
      %v3425 = vmul.f32 %v3315, %v3321
      %v3426 = vmul.f32 %v3316, %v3321
      %v3427 = vadd.f32 %v3107, %v3322
      %v3428 = vadd.f32 %v3108, %v3323
      %v3429 = vadd.f32 %v3109, %v3324
      %v3430 = vadd.f32 %v3110, %v3325
      %v3431 = vadd.f32 %v3111, %v3326
      %v3432 = vadd.f32 %v3112, %v3327
      %v3433 = vadd.f32 %v3113, %v3328
      %v3434 = vadd.f32 %v3114, %v3329
      %v3435 = vadd.f32 %v3115, %v3330
      %v3436 = vadd.f32 %v3116, %v3331
      %v3437 = vadd.f32 %v3117, %v3332
      %v3438 = vadd.f32 %v3118, %v3333
      %v3439 = vadd.f32 %v3119, %v3334
      %v3440 = vadd.f32 %v3120, %v3335
      %v3441 = vadd.f32 %v3121, %v3336
      %v3442 = vadd.f32 %v3122, %v3337
      %v3443 = vadd.f32 %v3123, %v3338
      %v3444 = vadd.f32 %v3124, %v3339
      %v3445 = vadd.f32 %v3125, %v3340
      %v3446 = vadd.f32 %v3126, %v3341
      %v3447 = vadd.f32 %v3127, %v3342
      %v3448 = vadd.f32 %v3128, %v3343
      %v3449 = vadd.f32 %v3129, %v3344
      %v3450 = vadd.f32 %v3130, %v3345
      %v3451 = vadd.f32 %v3131, %v3346
      %v3452 = vadd.f32 %v3132, %v3347
      %v3453 = vadd.f32 %v3133, %v3348
      %v3454 = vadd.f32 %v3134, %v3349
      %v3455 = vadd.f32 %v3135, %v3350
      %v3456 = vadd.f32 %v3136, %v3351
      %v3457 = vadd.f32 %v3137, %v3352
      %v3458 = vadd.f32 %v3138, %v3353
      %v3459 = vadd.f32 %v3139, %v3354
      %v3460 = vadd.f32 %v3140, %v3355
      %v3461 = vadd.f32 %v3141, %v3356
      %v3462 = vadd.f32 %v3142, %v3357
      %v3463 = vadd.f32 %v3143, %v3358
      %v3464 = vadd.f32 %v3144, %v3359
      %v3465 = vadd.f32 %v3145, %v3360
      %v3466 = vadd.f32 %v3146, %v3361
      %v3467 = vadd.f32 %v3147, %v3362
      %v3468 = vadd.f32 %v3148, %v3363
      %v3469 = vadd.f32 %v3149, %v3364
      %v3470 = vadd.f32 %v3150, %v3365
      %v3471 = vadd.f32 %v3151, %v3366
      %v3472 = vadd.f32 %v3152, %v3367
      %v3473 = vadd.f32 %v3153, %v3368
      %v3474 = vadd.f32 %v3154, %v3369
      %v3475 = vadd.f32 %v3155, %v3370
      %v3476 = vadd.f32 %v3156, %v3371
      %v3477 = vadd.f32 %v3157, %v3372
      %v3478 = vadd.f32 %v3158, %v3373
      %v3479 = vadd.f32 %v3159, %v3374
      %v3480 = vadd.f32 %v3160, %v3375
      %v3481 = vadd.f32 %v3161, %v3376
      %v3482 = vadd.f32 %v3162, %v3377
      %v3483 = vadd.f32 %v3163, %v3378
      %v3484 = vadd.f32 %v3164, %v3379
      %v3485 = vadd.f32 %v3165, %v3380
      %v3486 = vadd.f32 %v3166, %v3381
      %v3487 = vadd.f32 %v3167, %v3382
      %v3488 = vadd.f32 %v3168, %v3383
      %v3489 = vadd.f32 %v3169, %v3384
      %v3490 = vadd.f32 %v3170, %v3385
      %v3491 = vadd.f32 %v3171, %v3386
      %v3492 = vadd.f32 %v3172, %v3387
      %v3493 = vadd.f32 %v3173, %v3388
      %v3494 = vadd.f32 %v3174, %v3389
      %v3495 = vadd.f32 %v3175, %v3390
      %v3496 = vadd.f32 %v3176, %v3391
      %v3497 = vadd.f32 %v3177, %v3392
      %v3498 = vadd.f32 %v3178, %v3393
      %v3499 = vadd.f32 %v3179, %v3394
      %v3500 = vadd.f32 %v3180, %v3395
      %v3501 = vadd.f32 %v3181, %v3396
      %v3502 = vadd.f32 %v3182, %v3397
      %v3503 = vadd.f32 %v3183, %v3398
      %v3504 = vadd.f32 %v3184, %v3399
      %v3505 = vadd.f32 %v3185, %v3400
      %v3506 = vadd.f32 %v3186, %v3401
      %v3507 = vadd.f32 %v3187, %v3402
      %v3508 = vadd.f32 %v3188, %v3403
      %v3509 = vadd.f32 %v3189, %v3404
      %v3510 = vadd.f32 %v3190, %v3405
      %v3511 = vadd.f32 %v3191, %v3406
      %v3512 = vadd.f32 %v3192, %v3407
      %v3513 = vadd.f32 %v3193, %v3408
      %v3514 = vadd.f32 %v3194, %v3409
      %v3515 = vadd.f32 %v3195, %v3410
      %v3516 = vadd.f32 %v3196, %v3411
      %v3517 = vadd.f32 %v3197, %v3412
      %v3518 = vadd.f32 %v3198, %v3413
      %v3519 = vadd.f32 %v3199, %v3414
      %v3520 = vadd.f32 %v3200, %v3415
      %v3521 = vadd.f32 %v3201, %v3416
      %v3522 = vadd.f32 %v3202, %v3417
      %v3523 = vadd.f32 %v3203, %v3418
      %v3524 = vadd.f32 %v3204, %v3419
      %v3525 = vadd.f32 %v3205, %v3420
      %v3526 = vadd.f32 %v3206, %v3421
      %v3527 = vadd.f32 %v3207, %v3422
      %v3528 = vadd.f32 %v3208, %v3423
      %v3529 = vadd.f32 %v3209, %v3424
      %v3530 = vadd.f32 %v3210, %v3425
      %v3531 = vadd.f32 %v3211, %v3426
      %v3532 = vld [vmem:[#allocation2 + $0x35e] sm:$0xff]
      %v3533 = vld [vmem:[#allocation2 + $0x366] sm:$0xff]
      %v3534 = vld [vmem:[#allocation2 + $0x36e] sm:$0xff]
      %v3535 = vld [vmem:[#allocation2 + $0x376] sm:$0xff]
      %v3536 = vld [vmem:[#allocation2 + $0x37e] sm:$0x3f]
      %v3537 = vld [vmem:[%s1 + $0x8] sm:$0x1]
      %v3538 = vlaneseq
      %v3539 = vshrl.u32 %v3538, 7
      %v3540 = vsub.s32 0, %v3539
      %v3541 = vrot.slane %v3537, %v3540
      %v3542 = vmul.f32 %v2036, %v3541
      %v3543 = vmul.f32 %v2037, %v3541
      %v3544 = vmul.f32 %v2038, %v3541
      %v3545 = vmul.f32 %v2039, %v3541
      %v3546 = vmul.f32 %v2040, %v3541
      %v3547 = vmul.f32 %v2041, %v3541
      %v3548 = vmul.f32 %v2042, %v3541
      %v3549 = vmul.f32 %v2043, %v3541
      %v3550 = vmul.f32 %v2044, %v3541
      %v3551 = vmul.f32 %v2045, %v3541
      %v3552 = vmul.f32 %v2046, %v3541
      %v3553 = vmul.f32 %v2047, %v3541
      %v3554 = vmul.f32 %v2048, %v3541
      %v3555 = vmul.f32 %v2049, %v3541
      %v3556 = vmul.f32 %v2050, %v3541
      %v3557 = vmul.f32 %v2051, %v3541
      %v3558 = vmul.f32 %v2052, %v3541
      %v3559 = vmul.f32 %v2053, %v3541
      %v3560 = vmul.f32 %v2054, %v3541
      %v3561 = vmul.f32 %v2055, %v3541
      %v3562 = vmul.f32 %v2056, %v3541
      %v3563 = vmul.f32 %v2057, %v3541
      %v3564 = vmul.f32 %v2058, %v3541
      %v3565 = vmul.f32 %v2059, %v3541
      %v3566 = vmul.f32 %v2060, %v3541
      %v3567 = vmul.f32 %v2061, %v3541
      %v3568 = vmul.f32 %v2062, %v3541
      %v3569 = vmul.f32 %v2063, %v3541
      %v3570 = vmul.f32 %v2064, %v3541
      %v3571 = vmul.f32 %v2065, %v3541
      %v3572 = vmul.f32 %v2066, %v3541
      %v3573 = vmul.f32 %v2067, %v3541
      %v3574 = vmul.f32 %v2068, %v3541
      %v3575 = vmul.f32 %v2069, %v3541
      %v3576 = vmul.f32 %v2070, %v3541
      %v3577 = vmul.f32 %v2071, %v3541
      %v3578 = vmul.f32 %v2072, %v3541
      %v3579 = vmul.f32 %v2073, %v3541
      %v3580 = vmul.f32 %v2074, %v3541
      %v3581 = vmul.f32 %v2075, %v3541
      %v3582 = vmul.f32 %v2076, %v3541
      %v3583 = vmul.f32 %v2077, %v3541
      %v3584 = vmul.f32 %v2078, %v3541
      %v3585 = vmul.f32 %v2079, %v3541
      %v3586 = vmul.f32 %v2080, %v3541
      %v3587 = vmul.f32 %v2081, %v3541
      %v3588 = vmul.f32 %v2082, %v3541
      %v3589 = vmul.f32 %v2083, %v3541
      %v3590 = vmul.f32 %v2084, %v3541
      %v3591 = vmul.f32 %v2085, %v3541
      %v3592 = vmul.f32 %v2086, %v3541
      %v3593 = vmul.f32 %v2087, %v3541
      %v3594 = vmul.f32 %v2088, %v3541
      %v3595 = vmul.f32 %v2089, %v3541
      %v3596 = vmul.f32 %v2090, %v3541
      %v3597 = vmul.f32 %v2091, %v3541
      %v3598 = vmul.f32 %v2092, %v3541
      %v3599 = vmul.f32 %v2093, %v3541
      %v3600 = vmul.f32 %v2094, %v3541
      %v3601 = vmul.f32 %v2095, %v3541
      %v3602 = vmul.f32 %v2096, %v3541
      %v3603 = vmul.f32 %v2097, %v3541
      %v3604 = vmul.f32 %v2098, %v3541
      %v3605 = vmul.f32 %v2099, %v3541
      %v3606 = vmul.f32 %v2100, %v3541
      %v3607 = vmul.f32 %v2101, %v3541
      %v3608 = vmul.f32 %v2102, %v3541
      %v3609 = vmul.f32 %v2103, %v3541
      %v3610 = vmul.f32 %v2104, %v3541
      %v3611 = vmul.f32 %v2105, %v3541
      %v3612 = vmul.f32 %v2106, %v3541
      %v3613 = vmul.f32 %v2107, %v3541
      %v3614 = vmul.f32 %v2108, %v3541
      %v3615 = vmul.f32 %v2109, %v3541
      %v3616 = vmul.f32 %v2110, %v3541
      %v3617 = vmul.f32 %v2111, %v3541
      %v3618 = vmul.f32 %v2112, %v3541
      %v3619 = vmul.f32 %v2113, %v3541
      %v3620 = vmul.f32 %v2114, %v3541
      %v3621 = vmul.f32 %v2115, %v3541
      %v3622 = vmul.f32 %v2116, %v3541
      %v3623 = vmul.f32 %v2117, %v3541
      %v3624 = vmul.f32 %v2118, %v3541
      %v3625 = vmul.f32 %v2119, %v3541
      %v3626 = vmul.f32 %v2120, %v3541
      %v3627 = vmul.f32 %v2121, %v3541
      %v3628 = vmul.f32 %v2122, %v3541
      %v3629 = vmul.f32 %v2123, %v3541
      %v3630 = vmul.f32 %v2124, %v3541
      %v3631 = vmul.f32 %v2125, %v3541
      %v3632 = vmul.f32 %v2126, %v3541
      %v3633 = vmul.f32 %v2127, %v3541
      %v3634 = vmul.f32 %v2128, %v3541
      %v3635 = vmul.f32 %v2129, %v3541
      %v3636 = vmul.f32 %v2130, %v3541
      %v3637 = vmul.f32 %v2131, %v3541
      %v3638 = vmul.f32 %v2132, %v3541
      %v3639 = vmul.f32 %v2133, %v3541
      %v3640 = vmul.f32 %v2134, %v3541
      %v3641 = vmul.f32 %v2135, %v3541
      %v3642 = vmul.f32 %v3532, %v3541
      %v3643 = vmul.f32 %v3533, %v3541
      %v3644 = vmul.f32 %v3534, %v3541
      %v3645 = vmul.f32 %v3535, %v3541
      %v3646 = vmul.f32 %v3536, %v3541
      %v3647 = vadd.f32 %v3427, %v3542
      %v3648 = vadd.f32 %v3428, %v3543
      %v3649 = vadd.f32 %v3429, %v3544
      %v3650 = vadd.f32 %v3430, %v3545
      %v3651 = vadd.f32 %v3431, %v3546
      %v3652 = vadd.f32 %v3432, %v3547
      %v3653 = vadd.f32 %v3433, %v3548
      %v3654 = vadd.f32 %v3434, %v3549
      %v3655 = vadd.f32 %v3435, %v3550
      %v3656 = vadd.f32 %v3436, %v3551
      %v3657 = vadd.f32 %v3437, %v3552
      %v3658 = vadd.f32 %v3438, %v3553
      %v3659 = vadd.f32 %v3439, %v3554
      %v3660 = vadd.f32 %v3440, %v3555
      %v3661 = vadd.f32 %v3441, %v3556
      %v3662 = vadd.f32 %v3442, %v3557
      %v3663 = vadd.f32 %v3443, %v3558
      %v3664 = vadd.f32 %v3444, %v3559
      %v3665 = vadd.f32 %v3445, %v3560
      %v3666 = vadd.f32 %v3446, %v3561
      %v3667 = vadd.f32 %v3447, %v3562
      %v3668 = vadd.f32 %v3448, %v3563
      %v3669 = vadd.f32 %v3449, %v3564
      %v3670 = vadd.f32 %v3450, %v3565
      %v3671 = vadd.f32 %v3451, %v3566
      %v3672 = vadd.f32 %v3452, %v3567
      %v3673 = vadd.f32 %v3453, %v3568
      %v3674 = vadd.f32 %v3454, %v3569
      %v3675 = vadd.f32 %v3455, %v3570
      %v3676 = vadd.f32 %v3456, %v3571
      %v3677 = vadd.f32 %v3457, %v3572
      %v3678 = vadd.f32 %v3458, %v3573
      %v3679 = vadd.f32 %v3459, %v3574
      %v3680 = vadd.f32 %v3460, %v3575
      %v3681 = vadd.f32 %v3461, %v3576
      %v3682 = vadd.f32 %v3462, %v3577
      %v3683 = vadd.f32 %v3463, %v3578
      %v3684 = vadd.f32 %v3464, %v3579
      %v3685 = vadd.f32 %v3465, %v3580
      %v3686 = vadd.f32 %v3466, %v3581
      %v3687 = vadd.f32 %v3467, %v3582
      %v3688 = vadd.f32 %v3468, %v3583
      %v3689 = vadd.f32 %v3469, %v3584
      %v3690 = vadd.f32 %v3470, %v3585
      %v3691 = vadd.f32 %v3471, %v3586
      %v3692 = vadd.f32 %v3472, %v3587
      %v3693 = vadd.f32 %v3473, %v3588
      %v3694 = vadd.f32 %v3474, %v3589
      %v3695 = vadd.f32 %v3475, %v3590
      %v3696 = vadd.f32 %v3476, %v3591
      %v3697 = vadd.f32 %v3477, %v3592
      %v3698 = vadd.f32 %v3478, %v3593
      %v3699 = vadd.f32 %v3479, %v3594
      %v3700 = vadd.f32 %v3480, %v3595
      %v3701 = vadd.f32 %v3481, %v3596
      %v3702 = vadd.f32 %v3482, %v3597
      %v3703 = vadd.f32 %v3483, %v3598
      %v3704 = vadd.f32 %v3484, %v3599
      %v3705 = vadd.f32 %v3485, %v3600
      %v3706 = vadd.f32 %v3486, %v3601
      %v3707 = vadd.f32 %v3487, %v3602
      %v3708 = vadd.f32 %v3488, %v3603
      %v3709 = vadd.f32 %v3489, %v3604
      %v3710 = vadd.f32 %v3490, %v3605
      %v3711 = vadd.f32 %v3491, %v3606
      %v3712 = vadd.f32 %v3492, %v3607
      %v3713 = vadd.f32 %v3493, %v3608
      %v3714 = vadd.f32 %v3494, %v3609
      %v3715 = vadd.f32 %v3495, %v3610
      %v3716 = vadd.f32 %v3496, %v3611
      %v3717 = vadd.f32 %v3497, %v3612
      %v3718 = vadd.f32 %v3498, %v3613
      %v3719 = vadd.f32 %v3499, %v3614
      %v3720 = vadd.f32 %v3500, %v3615
      %v3721 = vadd.f32 %v3501, %v3616
      %v3722 = vadd.f32 %v3502, %v3617
      %v3723 = vadd.f32 %v3503, %v3618
      %v3724 = vadd.f32 %v3504, %v3619
      %v3725 = vadd.f32 %v3505, %v3620
      %v3726 = vadd.f32 %v3506, %v3621
      %v3727 = vadd.f32 %v3507, %v3622
      %v3728 = vadd.f32 %v3508, %v3623
      %v3729 = vadd.f32 %v3509, %v3624
      %v3730 = vadd.f32 %v3510, %v3625
      %v3731 = vadd.f32 %v3511, %v3626
      %v3732 = vadd.f32 %v3512, %v3627
      %v3733 = vadd.f32 %v3513, %v3628
      %v3734 = vadd.f32 %v3514, %v3629
      %v3735 = vadd.f32 %v3515, %v3630
      %v3736 = vadd.f32 %v3516, %v3631
      %v3737 = vadd.f32 %v3517, %v3632
      %v3738 = vadd.f32 %v3518, %v3633
      %v3739 = vadd.f32 %v3519, %v3634
      %v3740 = vadd.f32 %v3520, %v3635
      %v3741 = vadd.f32 %v3521, %v3636
      %v3742 = vadd.f32 %v3522, %v3637
      %v3743 = vadd.f32 %v3523, %v3638
      %v3744 = vadd.f32 %v3524, %v3639
      %v3745 = vadd.f32 %v3525, %v3640
      %v3746 = vadd.f32 %v3526, %v3641
      %v3747 = vadd.f32 %v3527, %v3642
      %v3748 = vadd.f32 %v3528, %v3643
      %v3749 = vadd.f32 %v3529, %v3644
      %v3750 = vadd.f32 %v3530, %v3645
      %v3751 = vadd.f32 %v3531, %v3646
      %v3752 = vld [vmem:[%s2] sm:$0x1]
      %v3754 = vlaneseq
      %v3755 = vshrl.u32 %v3754, 7
      %v3756 = vsub.s32 0, %v3755
      %v3757 = vrot.slane %v3752, %v3756
      %v3759 = vadd.f32 %v3647, %v3757
      %v3760 = vadd.f32 %v3648, %v3757
      %v3761 = vadd.f32 %v3649, %v3757
      %v3762 = vadd.f32 %v3650, %v3757
      %v3763 = vadd.f32 %v3651, %v3757
      %v3764 = vadd.f32 %v3652, %v3757
      %v3765 = vadd.f32 %v3653, %v3757
      %v3766 = vadd.f32 %v3654, %v3757
      %v3767 = vadd.f32 %v3655, %v3757
      %v3768 = vadd.f32 %v3656, %v3757
      %v3769 = vadd.f32 %v3657, %v3757
      %v3770 = vadd.f32 %v3658, %v3757
      %v3771 = vadd.f32 %v3659, %v3757
      %v3772 = vadd.f32 %v3660, %v3757
      %v3773 = vadd.f32 %v3661, %v3757
      %v3774 = vadd.f32 %v3662, %v3757
      %v3775 = vadd.f32 %v3663, %v3757
      %v3776 = vadd.f32 %v3664, %v3757
      %v3777 = vadd.f32 %v3665, %v3757
      %v3778 = vadd.f32 %v3666, %v3757
      %v3779 = vadd.f32 %v3667, %v3757
      %v3780 = vadd.f32 %v3668, %v3757
      %v3781 = vadd.f32 %v3669, %v3757
      %v3782 = vadd.f32 %v3670, %v3757
      %v3783 = vadd.f32 %v3671, %v3757
      %v3784 = vadd.f32 %v3672, %v3757
      %v3785 = vadd.f32 %v3673, %v3757
      %v3786 = vadd.f32 %v3674, %v3757
      %v3787 = vadd.f32 %v3675, %v3757
      %v3788 = vadd.f32 %v3676, %v3757
      %v3789 = vadd.f32 %v3677, %v3757
      %v3790 = vadd.f32 %v3678, %v3757
      %v3791 = vadd.f32 %v3679, %v3757
      %v3792 = vadd.f32 %v3680, %v3757
      %v3793 = vadd.f32 %v3681, %v3757
      %v3794 = vadd.f32 %v3682, %v3757
      %v3795 = vadd.f32 %v3683, %v3757
      %v3796 = vadd.f32 %v3684, %v3757
      %v3797 = vadd.f32 %v3685, %v3757
      %v3798 = vadd.f32 %v3686, %v3757
      %v3799 = vadd.f32 %v3687, %v3757
      %v3800 = vadd.f32 %v3688, %v3757
      %v3801 = vadd.f32 %v3689, %v3757
      %v3802 = vadd.f32 %v3690, %v3757
      %v3803 = vadd.f32 %v3691, %v3757
      %v3804 = vadd.f32 %v3692, %v3757
      %v3805 = vadd.f32 %v3693, %v3757
      %v3806 = vadd.f32 %v3694, %v3757
      %v3807 = vadd.f32 %v3695, %v3757
      %v3808 = vadd.f32 %v3696, %v3757
      %v3809 = vadd.f32 %v3697, %v3757
      %v3810 = vadd.f32 %v3698, %v3757
      %v3811 = vadd.f32 %v3699, %v3757
      %v3812 = vadd.f32 %v3700, %v3757
      %v3813 = vadd.f32 %v3701, %v3757
      %v3814 = vadd.f32 %v3702, %v3757
      %v3815 = vadd.f32 %v3703, %v3757
      %v3816 = vadd.f32 %v3704, %v3757
      %v3817 = vadd.f32 %v3705, %v3757
      %v3818 = vadd.f32 %v3706, %v3757
      %v3819 = vadd.f32 %v3707, %v3757
      %v3820 = vadd.f32 %v3708, %v3757
      %v3821 = vadd.f32 %v3709, %v3757
      %v3822 = vadd.f32 %v3710, %v3757
      %v3823 = vadd.f32 %v3711, %v3757
      %v3824 = vadd.f32 %v3712, %v3757
      %v3825 = vadd.f32 %v3713, %v3757
      %v3826 = vadd.f32 %v3714, %v3757
      %v3827 = vadd.f32 %v3715, %v3757
      %v3828 = vadd.f32 %v3716, %v3757
      %v3829 = vadd.f32 %v3717, %v3757
      %v3830 = vadd.f32 %v3718, %v3757
      %v3831 = vadd.f32 %v3719, %v3757
      %v3832 = vadd.f32 %v3720, %v3757
      %v3833 = vadd.f32 %v3721, %v3757
      %v3834 = vadd.f32 %v3722, %v3757
      %v3835 = vadd.f32 %v3723, %v3757
      %v3836 = vadd.f32 %v3724, %v3757
      %v3837 = vadd.f32 %v3725, %v3757
      %v3838 = vadd.f32 %v3726, %v3757
      %v3839 = vadd.f32 %v3727, %v3757
      %v3840 = vadd.f32 %v3728, %v3757
      %v3841 = vadd.f32 %v3729, %v3757
      %v3842 = vadd.f32 %v3730, %v3757
      %v3843 = vadd.f32 %v3731, %v3757
      %v3844 = vadd.f32 %v3732, %v3757
      %v3845 = vadd.f32 %v3733, %v3757
      %v3846 = vadd.f32 %v3734, %v3757
      %v3847 = vadd.f32 %v3735, %v3757
      %v3848 = vadd.f32 %v3736, %v3757
      %v3849 = vadd.f32 %v3737, %v3757
      %v3850 = vadd.f32 %v3738, %v3757
      %v3851 = vadd.f32 %v3739, %v3757
      %v3852 = vadd.f32 %v3740, %v3757
      %v3853 = vadd.f32 %v3741, %v3757
      %v3854 = vadd.f32 %v3742, %v3757
      %v3855 = vadd.f32 %v3743, %v3757
      %v3856 = vadd.f32 %v3744, %v3757
      %v3857 = vadd.f32 %v3745, %v3757
      %v3858 = vadd.f32 %v3746, %v3757
      %v3859 = vadd.f32 %v3747, %v3757
      %v3860 = vadd.f32 %v3748, %v3757
      %v3861 = vadd.f32 %v3749, %v3757
      %v3862 = vadd.f32 %v3750, %v3757
      %v3863 = vadd.f32 %v3751, %v3757
      %v3864 = vmax.f32 %v3759, 0.0
      %v3865 = vmax.f32 %v3760, 0.0
      %v3866 = vmax.f32 %v3761, 0.0
      %v3867 = vmax.f32 %v3762, 0.0
      %v3868 = vmax.f32 %v3763, 0.0
      %v3869 = vmax.f32 %v3764, 0.0
      %v3870 = vmax.f32 %v3765, 0.0
      %v3871 = vmax.f32 %v3766, 0.0
      %v3872 = vmax.f32 %v3767, 0.0
      %v3873 = vmax.f32 %v3768, 0.0
      %v3874 = vmax.f32 %v3769, 0.0
      %v3875 = vmax.f32 %v3770, 0.0
      %v3876 = vmax.f32 %v3771, 0.0
      %v3877 = vmax.f32 %v3772, 0.0
      %v3878 = vmax.f32 %v3773, 0.0
      %v3879 = vmax.f32 %v3774, 0.0
      %v3880 = vmax.f32 %v3775, 0.0
      %v3881 = vmax.f32 %v3776, 0.0
      %v3882 = vmax.f32 %v3777, 0.0
      %v3883 = vmax.f32 %v3778, 0.0
      %v3884 = vmax.f32 %v3779, 0.0
      %v3885 = vmax.f32 %v3780, 0.0
      %v3886 = vmax.f32 %v3781, 0.0
      %v3887 = vmax.f32 %v3782, 0.0
      %v3888 = vmax.f32 %v3783, 0.0
      %v3889 = vmax.f32 %v3784, 0.0
      %v3890 = vmax.f32 %v3785, 0.0
      %v3891 = vmax.f32 %v3786, 0.0
      %v3892 = vmax.f32 %v3787, 0.0
      %v3893 = vmax.f32 %v3788, 0.0
      %v3894 = vmax.f32 %v3789, 0.0
      %v3895 = vmax.f32 %v3790, 0.0
      %v3896 = vmax.f32 %v3791, 0.0
      %v3897 = vmax.f32 %v3792, 0.0
      %v3898 = vmax.f32 %v3793, 0.0
      %v3899 = vmax.f32 %v3794, 0.0
      %v3900 = vmax.f32 %v3795, 0.0
      %v3901 = vmax.f32 %v3796, 0.0
      %v3902 = vmax.f32 %v3797, 0.0
      %v3903 = vmax.f32 %v3798, 0.0
      %v3904 = vmax.f32 %v3799, 0.0
      %v3905 = vmax.f32 %v3800, 0.0
      %v3906 = vmax.f32 %v3801, 0.0
      %v3907 = vmax.f32 %v3802, 0.0
      %v3908 = vmax.f32 %v3803, 0.0
      %v3909 = vmax.f32 %v3804, 0.0
      %v3910 = vmax.f32 %v3805, 0.0
      %v3911 = vmax.f32 %v3806, 0.0
      %v3912 = vmax.f32 %v3807, 0.0
      %v3913 = vmax.f32 %v3808, 0.0
      %v3914 = vmax.f32 %v3809, 0.0
      %v3915 = vmax.f32 %v3810, 0.0
      %v3916 = vmax.f32 %v3811, 0.0
      %v3917 = vmax.f32 %v3812, 0.0
      %v3918 = vmax.f32 %v3813, 0.0
      %v3919 = vmax.f32 %v3814, 0.0
      %v3920 = vmax.f32 %v3815, 0.0
      %v3921 = vmax.f32 %v3816, 0.0
      %v3922 = vmax.f32 %v3817, 0.0
      %v3923 = vmax.f32 %v3818, 0.0
      %v3924 = vmax.f32 %v3819, 0.0
      %v3925 = vmax.f32 %v3820, 0.0
      %v3926 = vmax.f32 %v3821, 0.0
      %v3927 = vmax.f32 %v3822, 0.0
      %v3928 = vmax.f32 %v3823, 0.0
      %v3929 = vmax.f32 %v3824, 0.0
      %v3930 = vmax.f32 %v3825, 0.0
      %v3931 = vmax.f32 %v3826, 0.0
      %v3932 = vmax.f32 %v3827, 0.0
      %v3933 = vmax.f32 %v3828, 0.0
      %v3934 = vmax.f32 %v3829, 0.0
      %v3935 = vmax.f32 %v3830, 0.0
      %v3936 = vmax.f32 %v3831, 0.0
      %v3937 = vmax.f32 %v3832, 0.0
      %v3938 = vmax.f32 %v3833, 0.0
      %v3939 = vmax.f32 %v3834, 0.0
      %v3940 = vmax.f32 %v3835, 0.0
      %v3941 = vmax.f32 %v3836, 0.0
      %v3942 = vmax.f32 %v3837, 0.0
      %v3943 = vmax.f32 %v3838, 0.0
      %v3944 = vmax.f32 %v3839, 0.0
      %v3945 = vmax.f32 %v3840, 0.0
      %v3946 = vmax.f32 %v3841, 0.0
      %v3947 = vmax.f32 %v3842, 0.0
      %v3948 = vmax.f32 %v3843, 0.0
      %v3949 = vmax.f32 %v3844, 0.0
      %v3950 = vmax.f32 %v3845, 0.0
      %v3951 = vmax.f32 %v3846, 0.0
      %v3952 = vmax.f32 %v3847, 0.0
      %v3953 = vmax.f32 %v3848, 0.0
      %v3954 = vmax.f32 %v3849, 0.0
      %v3955 = vmax.f32 %v3850, 0.0
      %v3956 = vmax.f32 %v3851, 0.0
      %v3957 = vmax.f32 %v3852, 0.0
      %v3958 = vmax.f32 %v3853, 0.0
      %v3959 = vmax.f32 %v3854, 0.0
      %v3960 = vmax.f32 %v3855, 0.0
      %v3961 = vmax.f32 %v3856, 0.0
      %v3962 = vmax.f32 %v3857, 0.0
      %v3963 = vmax.f32 %v3858, 0.0
      %v3964 = vmax.f32 %v3859, 0.0
      %v3965 = vmax.f32 %v3860, 0.0
      %v3966 = vmax.f32 %v3861, 0.0
      %v3967 = vmax.f32 %v3862, 0.0
      %v3968 = vmax.f32 %v3863, 0.0
      %3969 = vst.msk [vmem:[#allocation3] sm:$0xff] %vm957, %v3864
      %3970 = vst.msk [vmem:[#allocation3 + $0x8] sm:$0xff] %vm957, %v3865
      %3971 = vst.msk [vmem:[#allocation3 + $0x10] sm:$0xff] %vm957, %v3866
      %3972 = vst.msk [vmem:[#allocation3 + $0x18] sm:$0xff] %vm957, %v3867
      %3973 = vst.msk [vmem:[#allocation3 + $0x20] sm:$0xff] %vm957, %v3868
      %3974 = vst.msk [vmem:[#allocation3 + $0x28] sm:$0xff] %vm957, %v3869
      %3975 = vst.msk [vmem:[#allocation3 + $0x30] sm:$0xff] %vm957, %v3870
      %3976 = vst.msk [vmem:[#allocation3 + $0x38] sm:$0xff] %vm957, %v3871
      %3977 = vst.msk [vmem:[#allocation3 + $0x40] sm:$0xff] %vm957, %v3872
      %3978 = vst.msk [vmem:[#allocation3 + $0x48] sm:$0xff] %vm957, %v3873
      %3979 = vst.msk [vmem:[#allocation3 + $0x50] sm:$0xff] %vm957, %v3874
      %3980 = vst.msk [vmem:[#allocation3 + $0x58] sm:$0xff] %vm957, %v3875
      %3981 = vst.msk [vmem:[#allocation3 + $0x60] sm:$0xff] %vm957, %v3876
      %3982 = vst.msk [vmem:[#allocation3 + $0x68] sm:$0xff] %vm957, %v3877
      %3983 = vst.msk [vmem:[#allocation3 + $0x70] sm:$0xff] %vm957, %v3878
      %3984 = vst.msk [vmem:[#allocation3 + $0x78] sm:$0xff] %vm957, %v3879
      %3985 = vst.msk [vmem:[#allocation3 + $0x80] sm:$0xff] %vm957, %v3880
      %3986 = vst.msk [vmem:[#allocation3 + $0x88] sm:$0xff] %vm957, %v3881
      %3987 = vst.msk [vmem:[#allocation3 + $0x90] sm:$0xff] %vm957, %v3882
      %3988 = vst.msk [vmem:[#allocation3 + $0x98] sm:$0xff] %vm957, %v3883
      %3989 = vst.msk [vmem:[#allocation3 + $0xa0] sm:$0xff] %vm957, %v3884
      %3990 = vst.msk [vmem:[#allocation3 + $0xa8] sm:$0xff] %vm957, %v3885
      %3991 = vst.msk [vmem:[#allocation3 + $0xb0] sm:$0xff] %vm957, %v3886
      %3992 = vst.msk [vmem:[#allocation3 + $0xb8] sm:$0xff] %vm957, %v3887
      %3993 = vst.msk [vmem:[#allocation3 + $0xc0] sm:$0xff] %vm957, %v3888
      %3994 = vst.msk [vmem:[#allocation3 + $0xc8] sm:$0xff] %vm957, %v3889
      %3995 = vst.msk [vmem:[#allocation3 + $0xd0] sm:$0xff] %vm957, %v3890
      %3996 = vst.msk [vmem:[#allocation3 + $0xd8] sm:$0xff] %vm957, %v3891
      %3997 = vst.msk [vmem:[#allocation3 + $0xe0] sm:$0xff] %vm957, %v3892
      %3998 = vst.msk [vmem:[#allocation3 + $0xe8] sm:$0xff] %vm957, %v3893
      %3999 = vst.msk [vmem:[#allocation3 + $0xf0] sm:$0xff] %vm957, %v3894
      %4000 = vst.msk [vmem:[#allocation3 + $0xf8] sm:$0xff] %vm957, %v3895
      %4001 = vst.msk [vmem:[#allocation3 + $0x100] sm:$0xff] %vm957, %v3896
      %4002 = vst.msk [vmem:[#allocation3 + $0x108] sm:$0xff] %vm957, %v3897
      %4003 = vst.msk [vmem:[#allocation3 + $0x110] sm:$0xff] %vm957, %v3898
      %4004 = vst.msk [vmem:[#allocation3 + $0x118] sm:$0xff] %vm957, %v3899
      %4005 = vst.msk [vmem:[#allocation3 + $0x120] sm:$0xff] %vm957, %v3900
      %4006 = vst.msk [vmem:[#allocation3 + $0x128] sm:$0xff] %vm957, %v3901
      %4007 = vst.msk [vmem:[#allocation3 + $0x130] sm:$0xff] %vm957, %v3902
      %4008 = vst.msk [vmem:[#allocation3 + $0x138] sm:$0xff] %vm957, %v3903
      %4009 = vst.msk [vmem:[#allocation3 + $0x140] sm:$0xff] %vm957, %v3904
      %4010 = vst.msk [vmem:[#allocation3 + $0x148] sm:$0xff] %vm957, %v3905
      %4011 = vst.msk [vmem:[#allocation3 + $0x150] sm:$0xff] %vm957, %v3906
      %4012 = vst.msk [vmem:[#allocation3 + $0x158] sm:$0xff] %vm957, %v3907
      %4013 = vst.msk [vmem:[#allocation3 + $0x160] sm:$0xff] %vm957, %v3908
      %4014 = vst.msk [vmem:[#allocation3 + $0x168] sm:$0xff] %vm957, %v3909
      %4015 = vst.msk [vmem:[#allocation3 + $0x170] sm:$0xff] %vm957, %v3910
      %4016 = vst.msk [vmem:[#allocation3 + $0x178] sm:$0xff] %vm957, %v3911
      %4017 = vst.msk [vmem:[#allocation3 + $0x180] sm:$0xff] %vm957, %v3912
      %4018 = vst.msk [vmem:[#allocation3 + $0x188] sm:$0xff] %vm957, %v3913
      %4019 = vst.msk [vmem:[#allocation3 + $0x190] sm:$0xff] %vm957, %v3914
      %4020 = vst.msk [vmem:[#allocation3 + $0x198] sm:$0xff] %vm957, %v3915
      %4021 = vst.msk [vmem:[#allocation3 + $0x1a0] sm:$0xff] %vm957, %v3916
      %4022 = vst.msk [vmem:[#allocation3 + $0x1a8] sm:$0xff] %vm957, %v3917
      %4023 = vst.msk [vmem:[#allocation3 + $0x1b0] sm:$0xff] %vm957, %v3918
      %4024 = vst.msk [vmem:[#allocation3 + $0x1b8] sm:$0xff] %vm957, %v3919
      %4025 = vst.msk [vmem:[#allocation3 + $0x1c0] sm:$0xff] %vm957, %v3920
      %4026 = vst.msk [vmem:[#allocation3 + $0x1c8] sm:$0xff] %vm957, %v3921
      %4027 = vst.msk [vmem:[#allocation3 + $0x1d0] sm:$0xff] %vm957, %v3922
      %4028 = vst.msk [vmem:[#allocation3 + $0x1d8] sm:$0xff] %vm957, %v3923
      %4029 = vst.msk [vmem:[#allocation3 + $0x1e0] sm:$0xff] %vm957, %v3924
      %4030 = vst.msk [vmem:[#allocation3 + $0x1e8] sm:$0xff] %vm957, %v3925
      %4031 = vst.msk [vmem:[#allocation3 + $0x1f0] sm:$0xff] %vm957, %v3926
      %4032 = vst.msk [vmem:[#allocation3 + $0x1f8] sm:$0xff] %vm957, %v3927
      %4033 = vst.msk [vmem:[#allocation3 + $0x200] sm:$0xff] %vm957, %v3928
      %4034 = vst.msk [vmem:[#allocation3 + $0x208] sm:$0xff] %vm957, %v3929
      %4035 = vst.msk [vmem:[#allocation3 + $0x210] sm:$0xff] %vm957, %v3930
      %4036 = vst.msk [vmem:[#allocation3 + $0x218] sm:$0xff] %vm957, %v3931
      %4037 = vst.msk [vmem:[#allocation3 + $0x220] sm:$0xff] %vm957, %v3932
      %4038 = vst.msk [vmem:[#allocation3 + $0x228] sm:$0xff] %vm957, %v3933
      %4039 = vst.msk [vmem:[#allocation3 + $0x230] sm:$0xff] %vm957, %v3934
      %4040 = vst.msk [vmem:[#allocation3 + $0x238] sm:$0xff] %vm957, %v3935
      %4041 = vst.msk [vmem:[#allocation3 + $0x240] sm:$0xff] %vm957, %v3936
      %4042 = vst.msk [vmem:[#allocation3 + $0x248] sm:$0xff] %vm957, %v3937
      %4043 = vst.msk [vmem:[#allocation3 + $0x250] sm:$0xff] %vm957, %v3938
      %4044 = vst.msk [vmem:[#allocation3 + $0x258] sm:$0xff] %vm957, %v3939
      %4045 = vst.msk [vmem:[#allocation3 + $0x260] sm:$0xff] %vm957, %v3940
      %4046 = vst.msk [vmem:[#allocation3 + $0x268] sm:$0xff] %vm957, %v3941
      %4047 = vst.msk [vmem:[#allocation3 + $0x270] sm:$0xff] %vm957, %v3942
      %4048 = vst.msk [vmem:[#allocation3 + $0x278] sm:$0xff] %vm957, %v3943
      %4049 = vst.msk [vmem:[#allocation3 + $0x280] sm:$0xff] %vm957, %v3944
      %4050 = vst.msk [vmem:[#allocation3 + $0x288] sm:$0xff] %vm957, %v3945
      %4051 = vst.msk [vmem:[#allocation3 + $0x290] sm:$0xff] %vm957, %v3946
      %4052 = vst.msk [vmem:[#allocation3 + $0x298] sm:$0xff] %vm957, %v3947
      %4053 = vst.msk [vmem:[#allocation3 + $0x2a0] sm:$0xff] %vm957, %v3948
      %4054 = vst.msk [vmem:[#allocation3 + $0x2a8] sm:$0xff] %vm957, %v3949
      %4055 = vst.msk [vmem:[#allocation3 + $0x2b0] sm:$0xff] %vm957, %v3950
      %4056 = vst.msk [vmem:[#allocation3 + $0x2b8] sm:$0xff] %vm957, %v3951
      %4057 = vst.msk [vmem:[#allocation3 + $0x2c0] sm:$0xff] %vm957, %v3952
      %4058 = vst.msk [vmem:[#allocation3 + $0x2c8] sm:$0xff] %vm957, %v3953
      %4059 = vst.msk [vmem:[#allocation3 + $0x2d0] sm:$0xff] %vm957, %v3954
      %4060 = vst.msk [vmem:[#allocation3 + $0x2d8] sm:$0xff] %vm957, %v3955
      %4061 = vst.msk [vmem:[#allocation3 + $0x2e0] sm:$0xff] %vm957, %v3956
      %4062 = vst.msk [vmem:[#allocation3 + $0x2e8] sm:$0xff] %vm957, %v3957
      %4063 = vst.msk [vmem:[#allocation3 + $0x2f0] sm:$0xff] %vm957, %v3958
      %4064 = vst.msk [vmem:[#allocation3 + $0x2f8] sm:$0xff] %vm957, %v3959
      %4065 = vst.msk [vmem:[#allocation3 + $0x300] sm:$0xff] %vm957, %v3960
      %4066 = vst.msk [vmem:[#allocation3 + $0x308] sm:$0xff] %vm957, %v3961
      %4067 = vst.msk [vmem:[#allocation3 + $0x310] sm:$0xff] %vm957, %v3962
      %4068 = vst.msk [vmem:[#allocation3 + $0x318] sm:$0xff] %vm957, %v3963
      %4069 = vst.msk [vmem:[#allocation3 + $0x320] sm:$0xff] %vm957, %v3964
      %4070 = vst.msk [vmem:[#allocation3 + $0x328] sm:$0xff] %vm957, %v3965
      %4071 = vst.msk [vmem:[#allocation3 + $0x330] sm:$0xff] %vm957, %v3966
      %4072 = vst.msk [vmem:[#allocation3 + $0x338] sm:$0xff] %vm957, %v3967
      %vm4073 = vcmask 259072
      %4074 = vst.msk [vmem:[#allocation3 + $0x340] sm:$0x3f] %vm4073, %v3968
      %v4075 = vld [vmem:[#allocation3] sm:$0xff]
      %v4076 = vld [vmem:[#allocation3 + $0x8] sm:$0xff]
      %v4077 = vld [vmem:[#allocation3 + $0x10] sm:$0xff]
      %v4078 = vld [vmem:[#allocation3 + $0x18] sm:$0xff]
      %v4079 = vld [vmem:[#allocation3 + $0x20] sm:$0xff]
      %v4080 = vld [vmem:[#allocation3 + $0x28] sm:$0xff]
      %v4081 = vld [vmem:[#allocation3 + $0x30] sm:$0xff]
      %v4082 = vld [vmem:[#allocation3 + $0x38] sm:$0xff]
      %v4083 = vld [vmem:[#allocation3 + $0x40] sm:$0xff]
      %v4084 = vld [vmem:[#allocation3 + $0x48] sm:$0xff]
      %v4085 = vld [vmem:[#allocation3 + $0x50] sm:$0xff]
      %v4086 = vld [vmem:[#allocation3 + $0x58] sm:$0xff]
      %v4087 = vld [vmem:[#allocation3 + $0x60] sm:$0xff]
      %v4088 = vld [vmem:[#allocation3 + $0x68] sm:$0xff]
      %v4089 = vld [vmem:[#allocation3 + $0x70] sm:$0xff]
      %v4090 = vld [vmem:[#allocation3 + $0x78] sm:$0xff]
      %v4091 = vld [vmem:[#allocation3 + $0x80] sm:$0xff]
      %v4092 = vld [vmem:[#allocation3 + $0x88] sm:$0xff]
      %v4093 = vld [vmem:[#allocation3 + $0x90] sm:$0xff]
      %v4094 = vld [vmem:[#allocation3 + $0x98] sm:$0xff]
      %v4095 = vld [vmem:[#allocation3 + $0xa0] sm:$0xff]
      %v4096 = vld [vmem:[#allocation3 + $0xa8] sm:$0xff]
      %v4097 = vld [vmem:[#allocation3 + $0xb0] sm:$0xff]
      %v4098 = vld [vmem:[#allocation3 + $0xb8] sm:$0xff]
      %v4099 = vld [vmem:[#allocation3 + $0xc0] sm:$0xff]
      %v4100 = vld [vmem:[#allocation3 + $0xc8] sm:$0xff]
      %v4101 = vld [vmem:[#allocation3 + $0xd0] sm:$0xff]
      %v4102 = vld [vmem:[#allocation3 + $0xd8] sm:$0xff]
      %v4103 = vld [vmem:[#allocation3 + $0xe0] sm:$0xff]
      %v4104 = vld [vmem:[#allocation3 + $0xe8] sm:$0xff]
      %v4105 = vld [vmem:[#allocation3 + $0xf0] sm:$0xff]
      %v4106 = vld [vmem:[#allocation3 + $0xf8] sm:$0xff]
      %v4107 = vld [vmem:[#allocation3 + $0x100] sm:$0xff]
      %v4108 = vld [vmem:[#allocation3 + $0x108] sm:$0xff]
      %v4109 = vld [vmem:[#allocation3 + $0x110] sm:$0xff]
      %v4110 = vld [vmem:[#allocation3 + $0x118] sm:$0xff]
      %v4111 = vld [vmem:[#allocation3 + $0x120] sm:$0xff]
      %v4112 = vld [vmem:[#allocation3 + $0x128] sm:$0xff]
      %v4113 = vld [vmem:[#allocation3 + $0x130] sm:$0xff]
      %v4114 = vld [vmem:[#allocation3 + $0x138] sm:$0xff]
      %v4115 = vld [vmem:[#allocation3 + $0x140] sm:$0xff]
      %v4116 = vld [vmem:[#allocation3 + $0x148] sm:$0xff]
      %v4117 = vld [vmem:[#allocation3 + $0x150] sm:$0xff]
      %v4118 = vld [vmem:[#allocation3 + $0x158] sm:$0xff]
      %v4119 = vld [vmem:[#allocation3 + $0x160] sm:$0xff]
      %v4120 = vld [vmem:[#allocation3 + $0x168] sm:$0xff]
      %v4121 = vld [vmem:[#allocation3 + $0x170] sm:$0xff]
      %v4122 = vld [vmem:[#allocation3 + $0x178] sm:$0xff]
      %v4123 = vld [vmem:[#allocation3 + $0x180] sm:$0xff]
      %v4124 = vld [vmem:[#allocation3 + $0x188] sm:$0xff]
      %v4125 = vld [vmem:[#allocation3 + $0x190] sm:$0xff]
      %v4126 = vld [vmem:[#allocation3 + $0x198] sm:$0xff]
      %v4127 = vld [vmem:[#allocation3 + $0x1a0] sm:$0xff]
      %v4128 = vld [vmem:[#allocation3 + $0x1a8] sm:$0xff]
      %v4129 = vld [vmem:[#allocation3 + $0x1b0] sm:$0xff]
      %v4130 = vld [vmem:[#allocation3 + $0x1b8] sm:$0xff]
      %v4131 = vld [vmem:[#allocation3 + $0x1c0] sm:$0xff]
      %v4132 = vld [vmem:[#allocation3 + $0x1c8] sm:$0xff]
      %v4133 = vld [vmem:[#allocation3 + $0x1d0] sm:$0xff]
      %v4134 = vld [vmem:[#allocation3 + $0x1d8] sm:$0xff]
      %v4135 = vld [vmem:[#allocation3 + $0x1e0] sm:$0xff]
      %v4136 = vld [vmem:[#allocation3 + $0x1e8] sm:$0xff]
      %v4137 = vld [vmem:[#allocation3 + $0x1f0] sm:$0xff]
      %v4138 = vld [vmem:[#allocation3 + $0x1f8] sm:$0xff]
      %v4139 = vld [vmem:[#allocation3 + $0x200] sm:$0xff]
      %v4140 = vld [vmem:[#allocation3 + $0x208] sm:$0xff]
      %v4141 = vld [vmem:[#allocation3 + $0x210] sm:$0xff]
      %v4142 = vld [vmem:[#allocation3 + $0x218] sm:$0xff]
      %v4143 = vld [vmem:[#allocation3 + $0x220] sm:$0xff]
      %v4144 = vld [vmem:[#allocation3 + $0x228] sm:$0xff]
      %v4145 = vld [vmem:[#allocation3 + $0x230] sm:$0xff]
      %v4146 = vld [vmem:[#allocation3 + $0x238] sm:$0xff]
      %v4147 = vld [vmem:[#allocation3 + $0x240] sm:$0xff]
      %v4148 = vld [vmem:[#allocation3 + $0x248] sm:$0xff]
      %v4149 = vld [vmem:[#allocation3 + $0x250] sm:$0xff]
      %v4150 = vld [vmem:[#allocation3 + $0x258] sm:$0xff]
      %v4151 = vld [vmem:[#allocation3 + $0x260] sm:$0xff]
      %v4152 = vld [vmem:[#allocation3 + $0x268] sm:$0xff]
      %v4153 = vld [vmem:[#allocation3 + $0x270] sm:$0xff]
      %v4154 = vld [vmem:[#allocation3 + $0x278] sm:$0xff]
      %v4155 = vld [vmem:[#allocation3 + $0x280] sm:$0xff]
      %v4156 = vld [vmem:[#allocation3 + $0x288] sm:$0xff]
      %v4157 = vld [vmem:[#allocation3 + $0x290] sm:$0xff]
      %v4158 = vld [vmem:[#allocation3 + $0x298] sm:$0xff]
      %v4159 = vld [vmem:[#allocation3 + $0x2a0] sm:$0xff]
      %v4160 = vld [vmem:[#allocation3 + $0x2a8] sm:$0xff]
      %v4161 = vld [vmem:[#allocation3 + $0x2b0] sm:$0xff]
      %v4162 = vld [vmem:[#allocation3 + $0x2b8] sm:$0xff]
      %v4163 = vld [vmem:[#allocation3 + $0x2c0] sm:$0xff]
      %v4164 = vld [vmem:[#allocation3 + $0x2c8] sm:$0xff]
      %v4165 = vld [vmem:[#allocation3 + $0x2d0] sm:$0xff]
      %v4166 = vld [vmem:[#allocation3 + $0x2d8] sm:$0xff]
      %v4167 = vld [vmem:[#allocation3 + $0x2e0] sm:$0xff]
      %v4168 = vld [vmem:[#allocation3 + $0x2e8] sm:$0xff]
      %v4169 = vld [vmem:[#allocation3 + $0x2f0] sm:$0xff]
      %v4170 = vld [vmem:[#allocation3 + $0x2f8] sm:$0xff]
      %v4171 = vld [vmem:[#allocation3 + $0x300] sm:$0xff]
      %v4172 = vld [vmem:[#allocation3 + $0x308] sm:$0xff]
      %v4173 = vld [vmem:[#allocation3 + $0x310] sm:$0xff]
      %v4174 = vld [vmem:[#allocation3 + $0x318] sm:$0xff]
      %v4175 = vld [vmem:[#allocation3 + $0x320] sm:$0x7f]
      %v4176 = vld [vmem:[#allocation3 + $0x1] sm:$0xff]
      %v4177 = vld [vmem:[#allocation3 + $0x9] sm:$0xff]
      %v4178 = vld [vmem:[#allocation3 + $0x11] sm:$0xff]
      %v4179 = vld [vmem:[#allocation3 + $0x19] sm:$0xff]
      %v4180 = vld [vmem:[#allocation3 + $0x21] sm:$0xff]
      %v4181 = vld [vmem:[#allocation3 + $0x29] sm:$0xff]
      %v4182 = vld [vmem:[#allocation3 + $0x31] sm:$0xff]
      %v4183 = vld [vmem:[#allocation3 + $0x39] sm:$0xff]
      %v4184 = vld [vmem:[#allocation3 + $0x41] sm:$0xff]
      %v4185 = vld [vmem:[#allocation3 + $0x49] sm:$0xff]
      %v4186 = vld [vmem:[#allocation3 + $0x51] sm:$0xff]
      %v4187 = vld [vmem:[#allocation3 + $0x59] sm:$0xff]
      %v4188 = vld [vmem:[#allocation3 + $0x61] sm:$0xff]
      %v4189 = vld [vmem:[#allocation3 + $0x69] sm:$0xff]
      %v4190 = vld [vmem:[#allocation3 + $0x71] sm:$0xff]
      %v4191 = vld [vmem:[#allocation3 + $0x79] sm:$0xff]
      %v4192 = vld [vmem:[#allocation3 + $0x81] sm:$0xff]
      %v4193 = vld [vmem:[#allocation3 + $0x89] sm:$0xff]
      %v4194 = vld [vmem:[#allocation3 + $0x91] sm:$0xff]
      %v4195 = vld [vmem:[#allocation3 + $0x99] sm:$0xff]
      %v4196 = vld [vmem:[#allocation3 + $0xa1] sm:$0xff]
      %v4197 = vld [vmem:[#allocation3 + $0xa9] sm:$0xff]
      %v4198 = vld [vmem:[#allocation3 + $0xb1] sm:$0xff]
      %v4199 = vld [vmem:[#allocation3 + $0xb9] sm:$0xff]
      %v4200 = vld [vmem:[#allocation3 + $0xc1] sm:$0xff]
      %v4201 = vld [vmem:[#allocation3 + $0xc9] sm:$0xff]
      %v4202 = vld [vmem:[#allocation3 + $0xd1] sm:$0xff]
      %v4203 = vld [vmem:[#allocation3 + $0xd9] sm:$0xff]
      %v4204 = vld [vmem:[#allocation3 + $0xe1] sm:$0xff]
      %v4205 = vld [vmem:[#allocation3 + $0xe9] sm:$0xff]
      %v4206 = vld [vmem:[#allocation3 + $0xf1] sm:$0xff]
      %v4207 = vld [vmem:[#allocation3 + $0xf9] sm:$0xff]
      %v4208 = vld [vmem:[#allocation3 + $0x101] sm:$0xff]
      %v4209 = vld [vmem:[#allocation3 + $0x109] sm:$0xff]
      %v4210 = vld [vmem:[#allocation3 + $0x111] sm:$0xff]
      %v4211 = vld [vmem:[#allocation3 + $0x119] sm:$0xff]
      %v4212 = vld [vmem:[#allocation3 + $0x121] sm:$0xff]
      %v4213 = vld [vmem:[#allocation3 + $0x129] sm:$0xff]
      %v4214 = vld [vmem:[#allocation3 + $0x131] sm:$0xff]
      %v4215 = vld [vmem:[#allocation3 + $0x139] sm:$0xff]
      %v4216 = vld [vmem:[#allocation3 + $0x141] sm:$0xff]
      %v4217 = vld [vmem:[#allocation3 + $0x149] sm:$0xff]
      %v4218 = vld [vmem:[#allocation3 + $0x151] sm:$0xff]
      %v4219 = vld [vmem:[#allocation3 + $0x159] sm:$0xff]
      %v4220 = vld [vmem:[#allocation3 + $0x161] sm:$0xff]
      %v4221 = vld [vmem:[#allocation3 + $0x169] sm:$0xff]
      %v4222 = vld [vmem:[#allocation3 + $0x171] sm:$0xff]
      %v4223 = vld [vmem:[#allocation3 + $0x179] sm:$0xff]
      %v4224 = vld [vmem:[#allocation3 + $0x181] sm:$0xff]
      %v4225 = vld [vmem:[#allocation3 + $0x189] sm:$0xff]
      %v4226 = vld [vmem:[#allocation3 + $0x191] sm:$0xff]
      %v4227 = vld [vmem:[#allocation3 + $0x199] sm:$0xff]
      %v4228 = vld [vmem:[#allocation3 + $0x1a1] sm:$0xff]
      %v4229 = vld [vmem:[#allocation3 + $0x1a9] sm:$0xff]
      %v4230 = vld [vmem:[#allocation3 + $0x1b1] sm:$0xff]
      %v4231 = vld [vmem:[#allocation3 + $0x1b9] sm:$0xff]
      %v4232 = vld [vmem:[#allocation3 + $0x1c1] sm:$0xff]
      %v4233 = vld [vmem:[#allocation3 + $0x1c9] sm:$0xff]
      %v4234 = vld [vmem:[#allocation3 + $0x1d1] sm:$0xff]
      %v4235 = vld [vmem:[#allocation3 + $0x1d9] sm:$0xff]
      %v4236 = vld [vmem:[#allocation3 + $0x1e1] sm:$0xff]
      %v4237 = vld [vmem:[#allocation3 + $0x1e9] sm:$0xff]
      %v4238 = vld [vmem:[#allocation3 + $0x1f1] sm:$0xff]
      %v4239 = vld [vmem:[#allocation3 + $0x1f9] sm:$0xff]
      %v4240 = vld [vmem:[#allocation3 + $0x201] sm:$0xff]
      %v4241 = vld [vmem:[#allocation3 + $0x209] sm:$0xff]
      %v4242 = vld [vmem:[#allocation3 + $0x211] sm:$0xff]
      %v4243 = vld [vmem:[#allocation3 + $0x219] sm:$0xff]
      %v4244 = vld [vmem:[#allocation3 + $0x221] sm:$0xff]
      %v4245 = vld [vmem:[#allocation3 + $0x229] sm:$0xff]
      %v4246 = vld [vmem:[#allocation3 + $0x231] sm:$0xff]
      %v4247 = vld [vmem:[#allocation3 + $0x239] sm:$0xff]
      %v4248 = vld [vmem:[#allocation3 + $0x241] sm:$0xff]
      %v4249 = vld [vmem:[#allocation3 + $0x249] sm:$0xff]
      %v4250 = vld [vmem:[#allocation3 + $0x251] sm:$0xff]
      %v4251 = vld [vmem:[#allocation3 + $0x259] sm:$0xff]
      %v4252 = vld [vmem:[#allocation3 + $0x261] sm:$0xff]
      %v4253 = vld [vmem:[#allocation3 + $0x269] sm:$0xff]
      %v4254 = vld [vmem:[#allocation3 + $0x271] sm:$0xff]
      %v4255 = vld [vmem:[#allocation3 + $0x279] sm:$0xff]
      %v4256 = vld [vmem:[#allocation3 + $0x281] sm:$0xff]
      %v4257 = vld [vmem:[#allocation3 + $0x289] sm:$0xff]
      %v4258 = vld [vmem:[#allocation3 + $0x291] sm:$0xff]
      %v4259 = vld [vmem:[#allocation3 + $0x299] sm:$0xff]
      %v4260 = vld [vmem:[#allocation3 + $0x2a1] sm:$0xff]
      %v4261 = vld [vmem:[#allocation3 + $0x2a9] sm:$0xff]
      %v4262 = vld [vmem:[#allocation3 + $0x2b1] sm:$0xff]
      %v4263 = vld [vmem:[#allocation3 + $0x2b9] sm:$0xff]
      %v4264 = vld [vmem:[#allocation3 + $0x2c1] sm:$0xff]
      %v4265 = vld [vmem:[#allocation3 + $0x2c9] sm:$0xff]
      %v4266 = vld [vmem:[#allocation3 + $0x2d1] sm:$0xff]
      %v4267 = vld [vmem:[#allocation3 + $0x2d9] sm:$0xff]
      %v4268 = vld [vmem:[#allocation3 + $0x2e1] sm:$0xff]
      %v4269 = vld [vmem:[#allocation3 + $0x2e9] sm:$0xff]
      %v4270 = vld [vmem:[#allocation3 + $0x2f1] sm:$0xff]
      %v4271 = vld [vmem:[#allocation3 + $0x2f9] sm:$0xff]
      %v4272 = vld [vmem:[#allocation3 + $0x301] sm:$0xff]
      %v4273 = vld [vmem:[#allocation3 + $0x309] sm:$0xff]
      %v4274 = vld [vmem:[#allocation3 + $0x311] sm:$0xff]
      %v4275 = vld [vmem:[#allocation3 + $0x319] sm:$0xff]
      %v4276 = vld [vmem:[#allocation3 + $0x321] sm:$0x7f]
      %v4277 = vmax.f32 %v4075, %v4176
      %v4278 = vmax.f32 %v4076, %v4177
      %v4279 = vmax.f32 %v4077, %v4178
      %v4280 = vmax.f32 %v4078, %v4179
      %v4281 = vmax.f32 %v4079, %v4180
      %v4282 = vmax.f32 %v4080, %v4181
      %v4283 = vmax.f32 %v4081, %v4182
      %v4284 = vmax.f32 %v4082, %v4183
      %v4285 = vmax.f32 %v4083, %v4184
      %v4286 = vmax.f32 %v4084, %v4185
      %v4287 = vmax.f32 %v4085, %v4186
      %v4288 = vmax.f32 %v4086, %v4187
      %v4289 = vmax.f32 %v4087, %v4188
      %v4290 = vmax.f32 %v4088, %v4189
      %v4291 = vmax.f32 %v4089, %v4190
      %v4292 = vmax.f32 %v4090, %v4191
      %v4293 = vmax.f32 %v4091, %v4192
      %v4294 = vmax.f32 %v4092, %v4193
      %v4295 = vmax.f32 %v4093, %v4194
      %v4296 = vmax.f32 %v4094, %v4195
      %v4297 = vmax.f32 %v4095, %v4196
      %v4298 = vmax.f32 %v4096, %v4197
      %v4299 = vmax.f32 %v4097, %v4198
      %v4300 = vmax.f32 %v4098, %v4199
      %v4301 = vmax.f32 %v4099, %v4200
      %v4302 = vmax.f32 %v4100, %v4201
      %v4303 = vmax.f32 %v4101, %v4202
      %v4304 = vmax.f32 %v4102, %v4203
      %v4305 = vmax.f32 %v4103, %v4204
      %v4306 = vmax.f32 %v4104, %v4205
      %v4307 = vmax.f32 %v4105, %v4206
      %v4308 = vmax.f32 %v4106, %v4207
      %v4309 = vmax.f32 %v4107, %v4208
      %v4310 = vmax.f32 %v4108, %v4209
      %v4311 = vmax.f32 %v4109, %v4210
      %v4312 = vmax.f32 %v4110, %v4211
      %v4313 = vmax.f32 %v4111, %v4212
      %v4314 = vmax.f32 %v4112, %v4213
      %v4315 = vmax.f32 %v4113, %v4214
      %v4316 = vmax.f32 %v4114, %v4215
      %v4317 = vmax.f32 %v4115, %v4216
      %v4318 = vmax.f32 %v4116, %v4217
      %v4319 = vmax.f32 %v4117, %v4218
      %v4320 = vmax.f32 %v4118, %v4219
      %v4321 = vmax.f32 %v4119, %v4220
      %v4322 = vmax.f32 %v4120, %v4221
      %v4323 = vmax.f32 %v4121, %v4222
      %v4324 = vmax.f32 %v4122, %v4223
      %v4325 = vmax.f32 %v4123, %v4224
      %v4326 = vmax.f32 %v4124, %v4225
      %v4327 = vmax.f32 %v4125, %v4226
      %v4328 = vmax.f32 %v4126, %v4227
      %v4329 = vmax.f32 %v4127, %v4228
      %v4330 = vmax.f32 %v4128, %v4229
      %v4331 = vmax.f32 %v4129, %v4230
      %v4332 = vmax.f32 %v4130, %v4231
      %v4333 = vmax.f32 %v4131, %v4232
      %v4334 = vmax.f32 %v4132, %v4233
      %v4335 = vmax.f32 %v4133, %v4234
      %v4336 = vmax.f32 %v4134, %v4235
      %v4337 = vmax.f32 %v4135, %v4236
      %v4338 = vmax.f32 %v4136, %v4237
      %v4339 = vmax.f32 %v4137, %v4238
      %v4340 = vmax.f32 %v4138, %v4239
      %v4341 = vmax.f32 %v4139, %v4240
      %v4342 = vmax.f32 %v4140, %v4241
      %v4343 = vmax.f32 %v4141, %v4242
      %v4344 = vmax.f32 %v4142, %v4243
      %v4345 = vmax.f32 %v4143, %v4244
      %v4346 = vmax.f32 %v4144, %v4245
      %v4347 = vmax.f32 %v4145, %v4246
      %v4348 = vmax.f32 %v4146, %v4247
      %v4349 = vmax.f32 %v4147, %v4248
      %v4350 = vmax.f32 %v4148, %v4249
      %v4351 = vmax.f32 %v4149, %v4250
      %v4352 = vmax.f32 %v4150, %v4251
      %v4353 = vmax.f32 %v4151, %v4252
      %v4354 = vmax.f32 %v4152, %v4253
      %v4355 = vmax.f32 %v4153, %v4254
      %v4356 = vmax.f32 %v4154, %v4255
      %v4357 = vmax.f32 %v4155, %v4256
      %v4358 = vmax.f32 %v4156, %v4257
      %v4359 = vmax.f32 %v4157, %v4258
      %v4360 = vmax.f32 %v4158, %v4259
      %v4361 = vmax.f32 %v4159, %v4260
      %v4362 = vmax.f32 %v4160, %v4261
      %v4363 = vmax.f32 %v4161, %v4262
      %v4364 = vmax.f32 %v4162, %v4263
      %v4365 = vmax.f32 %v4163, %v4264
      %v4366 = vmax.f32 %v4164, %v4265
      %v4367 = vmax.f32 %v4165, %v4266
      %v4368 = vmax.f32 %v4166, %v4267
      %v4369 = vmax.f32 %v4167, %v4268
      %v4370 = vmax.f32 %v4168, %v4269
      %v4371 = vmax.f32 %v4169, %v4270
      %v4372 = vmax.f32 %v4170, %v4271
      %v4373 = vmax.f32 %v4171, %v4272
      %v4374 = vmax.f32 %v4172, %v4273
      %v4375 = vmax.f32 %v4173, %v4274
      %v4376 = vmax.f32 %v4174, %v4275
      %v4377 = vmax.f32 %v4175, %v4276
      %v4378 = vld [vmem:[#allocation3 + $0x1e] sm:$0xff]
      %v4379 = vld [vmem:[#allocation3 + $0x26] sm:$0xff]
      %v4380 = vld [vmem:[#allocation3 + $0x2e] sm:$0xff]
      %v4381 = vld [vmem:[#allocation3 + $0x36] sm:$0xff]
      %v4382 = vld [vmem:[#allocation3 + $0x3e] sm:$0xff]
      %v4383 = vld [vmem:[#allocation3 + $0x46] sm:$0xff]
      %v4384 = vld [vmem:[#allocation3 + $0x4e] sm:$0xff]
      %v4385 = vld [vmem:[#allocation3 + $0x56] sm:$0xff]
      %v4386 = vld [vmem:[#allocation3 + $0x5e] sm:$0xff]
      %v4387 = vld [vmem:[#allocation3 + $0x66] sm:$0xff]
      %v4388 = vld [vmem:[#allocation3 + $0x6e] sm:$0xff]
      %v4389 = vld [vmem:[#allocation3 + $0x76] sm:$0xff]
      %v4390 = vld [vmem:[#allocation3 + $0x7e] sm:$0xff]
      %v4391 = vld [vmem:[#allocation3 + $0x86] sm:$0xff]
      %v4392 = vld [vmem:[#allocation3 + $0x8e] sm:$0xff]
      %v4393 = vld [vmem:[#allocation3 + $0x96] sm:$0xff]
      %v4394 = vld [vmem:[#allocation3 + $0x9e] sm:$0xff]
      %v4395 = vld [vmem:[#allocation3 + $0xa6] sm:$0xff]
      %v4396 = vld [vmem:[#allocation3 + $0xae] sm:$0xff]
      %v4397 = vld [vmem:[#allocation3 + $0xb6] sm:$0xff]
      %v4398 = vld [vmem:[#allocation3 + $0xbe] sm:$0xff]
      %v4399 = vld [vmem:[#allocation3 + $0xc6] sm:$0xff]
      %v4400 = vld [vmem:[#allocation3 + $0xce] sm:$0xff]
      %v4401 = vld [vmem:[#allocation3 + $0xd6] sm:$0xff]
      %v4402 = vld [vmem:[#allocation3 + $0xde] sm:$0xff]
      %v4403 = vld [vmem:[#allocation3 + $0xe6] sm:$0xff]
      %v4404 = vld [vmem:[#allocation3 + $0xee] sm:$0xff]
      %v4405 = vld [vmem:[#allocation3 + $0xf6] sm:$0xff]
      %v4406 = vld [vmem:[#allocation3 + $0xfe] sm:$0xff]
      %v4407 = vld [vmem:[#allocation3 + $0x106] sm:$0xff]
      %v4408 = vld [vmem:[#allocation3 + $0x10e] sm:$0xff]
      %v4409 = vld [vmem:[#allocation3 + $0x116] sm:$0xff]
      %v4410 = vld [vmem:[#allocation3 + $0x11e] sm:$0xff]
      %v4411 = vld [vmem:[#allocation3 + $0x126] sm:$0xff]
      %v4412 = vld [vmem:[#allocation3 + $0x12e] sm:$0xff]
      %v4413 = vld [vmem:[#allocation3 + $0x136] sm:$0xff]
      %v4414 = vld [vmem:[#allocation3 + $0x13e] sm:$0xff]
      %v4415 = vld [vmem:[#allocation3 + $0x146] sm:$0xff]
      %v4416 = vld [vmem:[#allocation3 + $0x14e] sm:$0xff]
      %v4417 = vld [vmem:[#allocation3 + $0x156] sm:$0xff]
      %v4418 = vld [vmem:[#allocation3 + $0x15e] sm:$0xff]
      %v4419 = vld [vmem:[#allocation3 + $0x166] sm:$0xff]
      %v4420 = vld [vmem:[#allocation3 + $0x16e] sm:$0xff]
      %v4421 = vld [vmem:[#allocation3 + $0x176] sm:$0xff]
      %v4422 = vld [vmem:[#allocation3 + $0x17e] sm:$0xff]
      %v4423 = vld [vmem:[#allocation3 + $0x186] sm:$0xff]
      %v4424 = vld [vmem:[#allocation3 + $0x18e] sm:$0xff]
      %v4425 = vld [vmem:[#allocation3 + $0x196] sm:$0xff]
      %v4426 = vld [vmem:[#allocation3 + $0x19e] sm:$0xff]
      %v4427 = vld [vmem:[#allocation3 + $0x1a6] sm:$0xff]
      %v4428 = vld [vmem:[#allocation3 + $0x1ae] sm:$0xff]
      %v4429 = vld [vmem:[#allocation3 + $0x1b6] sm:$0xff]
      %v4430 = vld [vmem:[#allocation3 + $0x1be] sm:$0xff]
      %v4431 = vld [vmem:[#allocation3 + $0x1c6] sm:$0xff]
      %v4432 = vld [vmem:[#allocation3 + $0x1ce] sm:$0xff]
      %v4433 = vld [vmem:[#allocation3 + $0x1d6] sm:$0xff]
      %v4434 = vld [vmem:[#allocation3 + $0x1de] sm:$0xff]
      %v4435 = vld [vmem:[#allocation3 + $0x1e6] sm:$0xff]
      %v4436 = vld [vmem:[#allocation3 + $0x1ee] sm:$0xff]
      %v4437 = vld [vmem:[#allocation3 + $0x1f6] sm:$0xff]
      %v4438 = vld [vmem:[#allocation3 + $0x1fe] sm:$0xff]
      %v4439 = vld [vmem:[#allocation3 + $0x206] sm:$0xff]
      %v4440 = vld [vmem:[#allocation3 + $0x20e] sm:$0xff]
      %v4441 = vld [vmem:[#allocation3 + $0x216] sm:$0xff]
      %v4442 = vld [vmem:[#allocation3 + $0x21e] sm:$0xff]
      %v4443 = vld [vmem:[#allocation3 + $0x226] sm:$0xff]
      %v4444 = vld [vmem:[#allocation3 + $0x22e] sm:$0xff]
      %v4445 = vld [vmem:[#allocation3 + $0x236] sm:$0xff]
      %v4446 = vld [vmem:[#allocation3 + $0x23e] sm:$0xff]
      %v4447 = vld [vmem:[#allocation3 + $0x246] sm:$0xff]
      %v4448 = vld [vmem:[#allocation3 + $0x24e] sm:$0xff]
      %v4449 = vld [vmem:[#allocation3 + $0x256] sm:$0xff]
      %v4450 = vld [vmem:[#allocation3 + $0x25e] sm:$0xff]
      %v4451 = vld [vmem:[#allocation3 + $0x266] sm:$0xff]
      %v4452 = vld [vmem:[#allocation3 + $0x26e] sm:$0xff]
      %v4453 = vld [vmem:[#allocation3 + $0x276] sm:$0xff]
      %v4454 = vld [vmem:[#allocation3 + $0x27e] sm:$0xff]
      %v4455 = vld [vmem:[#allocation3 + $0x286] sm:$0xff]
      %v4456 = vld [vmem:[#allocation3 + $0x28e] sm:$0xff]
      %v4457 = vld [vmem:[#allocation3 + $0x296] sm:$0xff]
      %v4458 = vld [vmem:[#allocation3 + $0x29e] sm:$0xff]
      %v4459 = vld [vmem:[#allocation3 + $0x2a6] sm:$0xff]
      %v4460 = vld [vmem:[#allocation3 + $0x2ae] sm:$0xff]
      %v4461 = vld [vmem:[#allocation3 + $0x2b6] sm:$0xff]
      %v4462 = vld [vmem:[#allocation3 + $0x2be] sm:$0xff]
      %v4463 = vld [vmem:[#allocation3 + $0x2c6] sm:$0xff]
      %v4464 = vld [vmem:[#allocation3 + $0x2ce] sm:$0xff]
      %v4465 = vld [vmem:[#allocation3 + $0x2d6] sm:$0xff]
      %v4466 = vld [vmem:[#allocation3 + $0x2de] sm:$0xff]
      %v4467 = vld [vmem:[#allocation3 + $0x2e6] sm:$0xff]
      %v4468 = vld [vmem:[#allocation3 + $0x2ee] sm:$0xff]
      %v4469 = vld [vmem:[#allocation3 + $0x2f6] sm:$0xff]
      %v4470 = vld [vmem:[#allocation3 + $0x2fe] sm:$0xff]
      %v4471 = vld [vmem:[#allocation3 + $0x306] sm:$0xff]
      %v4472 = vld [vmem:[#allocation3 + $0x30e] sm:$0xff]
      %v4473 = vld [vmem:[#allocation3 + $0x316] sm:$0xff]
      %v4474 = vld [vmem:[#allocation3 + $0x31e] sm:$0xff]
      %v4475 = vld [vmem:[#allocation3 + $0x326] sm:$0xff]
      %v4476 = vld [vmem:[#allocation3 + $0x32e] sm:$0xff]
      %v4477 = vld [vmem:[#allocation3 + $0x336] sm:$0xff]
      %v4478 = vld [vmem:[#allocation3 + $0x33e] sm:$0x7f]
      %v4479 = vld [vmem:[#allocation3 + $0x1f] sm:$0xff]
      %v4480 = vld [vmem:[#allocation3 + $0x27] sm:$0xff]
      %v4481 = vld [vmem:[#allocation3 + $0x2f] sm:$0xff]
      %v4482 = vld [vmem:[#allocation3 + $0x37] sm:$0xff]
      %v4483 = vld [vmem:[#allocation3 + $0x3f] sm:$0xff]
      %v4484 = vld [vmem:[#allocation3 + $0x47] sm:$0xff]
      %v4485 = vld [vmem:[#allocation3 + $0x4f] sm:$0xff]
      %v4486 = vld [vmem:[#allocation3 + $0x57] sm:$0xff]
      %v4487 = vld [vmem:[#allocation3 + $0x5f] sm:$0xff]
      %v4488 = vld [vmem:[#allocation3 + $0x67] sm:$0xff]
      %v4489 = vld [vmem:[#allocation3 + $0x6f] sm:$0xff]
      %v4490 = vld [vmem:[#allocation3 + $0x77] sm:$0xff]
      %v4491 = vld [vmem:[#allocation3 + $0x7f] sm:$0xff]
      %v4492 = vld [vmem:[#allocation3 + $0x87] sm:$0xff]
      %v4493 = vld [vmem:[#allocation3 + $0x8f] sm:$0xff]
      %v4494 = vld [vmem:[#allocation3 + $0x97] sm:$0xff]
      %v4495 = vld [vmem:[#allocation3 + $0x9f] sm:$0xff]
      %v4496 = vld [vmem:[#allocation3 + $0xa7] sm:$0xff]
      %v4497 = vld [vmem:[#allocation3 + $0xaf] sm:$0xff]
      %v4498 = vld [vmem:[#allocation3 + $0xb7] sm:$0xff]
      %v4499 = vld [vmem:[#allocation3 + $0xbf] sm:$0xff]
      %v4500 = vld [vmem:[#allocation3 + $0xc7] sm:$0xff]
      %v4501 = vld [vmem:[#allocation3 + $0xcf] sm:$0xff]
      %v4502 = vld [vmem:[#allocation3 + $0xd7] sm:$0xff]
      %v4503 = vld [vmem:[#allocation3 + $0xdf] sm:$0xff]
      %v4504 = vld [vmem:[#allocation3 + $0xe7] sm:$0xff]
      %v4505 = vld [vmem:[#allocation3 + $0xef] sm:$0xff]
      %v4506 = vld [vmem:[#allocation3 + $0xf7] sm:$0xff]
      %v4507 = vld [vmem:[#allocation3 + $0xff] sm:$0xff]
      %v4508 = vld [vmem:[#allocation3 + $0x107] sm:$0xff]
      %v4509 = vld [vmem:[#allocation3 + $0x10f] sm:$0xff]
      %v4510 = vld [vmem:[#allocation3 + $0x117] sm:$0xff]
      %v4511 = vld [vmem:[#allocation3 + $0x11f] sm:$0xff]
      %v4512 = vld [vmem:[#allocation3 + $0x127] sm:$0xff]
      %v4513 = vld [vmem:[#allocation3 + $0x12f] sm:$0xff]
      %v4514 = vld [vmem:[#allocation3 + $0x137] sm:$0xff]
      %v4515 = vld [vmem:[#allocation3 + $0x13f] sm:$0xff]
      %v4516 = vld [vmem:[#allocation3 + $0x147] sm:$0xff]
      %v4517 = vld [vmem:[#allocation3 + $0x14f] sm:$0xff]
      %v4518 = vld [vmem:[#allocation3 + $0x157] sm:$0xff]
      %v4519 = vld [vmem:[#allocation3 + $0x15f] sm:$0xff]
      %v4520 = vld [vmem:[#allocation3 + $0x167] sm:$0xff]
      %v4521 = vld [vmem:[#allocation3 + $0x16f] sm:$0xff]
      %v4522 = vld [vmem:[#allocation3 + $0x177] sm:$0xff]
      %v4523 = vld [vmem:[#allocation3 + $0x17f] sm:$0xff]
      %v4524 = vld [vmem:[#allocation3 + $0x187] sm:$0xff]
      %v4525 = vld [vmem:[#allocation3 + $0x18f] sm:$0xff]
      %v4526 = vld [vmem:[#allocation3 + $0x197] sm:$0xff]
      %v4527 = vld [vmem:[#allocation3 + $0x19f] sm:$0xff]
      %v4528 = vld [vmem:[#allocation3 + $0x1a7] sm:$0xff]
      %v4529 = vld [vmem:[#allocation3 + $0x1af] sm:$0xff]
      %v4530 = vld [vmem:[#allocation3 + $0x1b7] sm:$0xff]
      %v4531 = vld [vmem:[#allocation3 + $0x1bf] sm:$0xff]
      %v4532 = vld [vmem:[#allocation3 + $0x1c7] sm:$0xff]
      %v4533 = vld [vmem:[#allocation3 + $0x1cf] sm:$0xff]
      %v4534 = vld [vmem:[#allocation3 + $0x1d7] sm:$0xff]
      %v4535 = vld [vmem:[#allocation3 + $0x1df] sm:$0xff]
      %v4536 = vld [vmem:[#allocation3 + $0x1e7] sm:$0xff]
      %v4537 = vld [vmem:[#allocation3 + $0x1ef] sm:$0xff]
      %v4538 = vld [vmem:[#allocation3 + $0x1f7] sm:$0xff]
      %v4539 = vld [vmem:[#allocation3 + $0x1ff] sm:$0xff]
      %v4540 = vld [vmem:[#allocation3 + $0x207] sm:$0xff]
      %v4541 = vld [vmem:[#allocation3 + $0x20f] sm:$0xff]
      %v4542 = vld [vmem:[#allocation3 + $0x217] sm:$0xff]
      %v4543 = vld [vmem:[#allocation3 + $0x21f] sm:$0xff]
      %v4544 = vld [vmem:[#allocation3 + $0x227] sm:$0xff]
      %v4545 = vld [vmem:[#allocation3 + $0x22f] sm:$0xff]
      %v4546 = vld [vmem:[#allocation3 + $0x237] sm:$0xff]
      %v4547 = vld [vmem:[#allocation3 + $0x23f] sm:$0xff]
      %v4548 = vld [vmem:[#allocation3 + $0x247] sm:$0xff]
      %v4549 = vld [vmem:[#allocation3 + $0x24f] sm:$0xff]
      %v4550 = vld [vmem:[#allocation3 + $0x257] sm:$0xff]
      %v4551 = vld [vmem:[#allocation3 + $0x25f] sm:$0xff]
      %v4552 = vld [vmem:[#allocation3 + $0x267] sm:$0xff]
      %v4553 = vld [vmem:[#allocation3 + $0x26f] sm:$0xff]
      %v4554 = vld [vmem:[#allocation3 + $0x277] sm:$0xff]
      %v4555 = vld [vmem:[#allocation3 + $0x27f] sm:$0xff]
      %v4556 = vld [vmem:[#allocation3 + $0x287] sm:$0xff]
      %v4557 = vld [vmem:[#allocation3 + $0x28f] sm:$0xff]
      %v4558 = vld [vmem:[#allocation3 + $0x297] sm:$0xff]
      %v4559 = vld [vmem:[#allocation3 + $0x29f] sm:$0xff]
      %v4560 = vld [vmem:[#allocation3 + $0x2a7] sm:$0xff]
      %v4561 = vld [vmem:[#allocation3 + $0x2af] sm:$0xff]
      %v4562 = vld [vmem:[#allocation3 + $0x2b7] sm:$0xff]
      %v4563 = vld [vmem:[#allocation3 + $0x2bf] sm:$0xff]
      %v4564 = vld [vmem:[#allocation3 + $0x2c7] sm:$0xff]
      %v4565 = vld [vmem:[#allocation3 + $0x2cf] sm:$0xff]
      %v4566 = vld [vmem:[#allocation3 + $0x2d7] sm:$0xff]
      %v4567 = vld [vmem:[#allocation3 + $0x2df] sm:$0xff]
      %v4568 = vld [vmem:[#allocation3 + $0x2e7] sm:$0xff]
      %v4569 = vld [vmem:[#allocation3 + $0x2ef] sm:$0xff]
      %v4570 = vld [vmem:[#allocation3 + $0x2f7] sm:$0xff]
      %v4571 = vld [vmem:[#allocation3 + $0x2ff] sm:$0xff]
      %v4572 = vld [vmem:[#allocation3 + $0x307] sm:$0xff]
      %v4573 = vld [vmem:[#allocation3 + $0x30f] sm:$0xff]
      %v4574 = vld [vmem:[#allocation3 + $0x317] sm:$0xff]
      %v4575 = vld [vmem:[#allocation3 + $0x31f] sm:$0xff]
      %v4576 = vld [vmem:[#allocation3 + $0x327] sm:$0xff]
      %v4577 = vld [vmem:[#allocation3 + $0x32f] sm:$0xff]
      %v4578 = vld [vmem:[#allocation3 + $0x337] sm:$0xff]
      %v4579 = vld [vmem:[#allocation3 + $0x33f] sm:$0x7f]
      %v4580 = vmax.f32 %v4378, %v4479
      %v4581 = vmax.f32 %v4379, %v4480
      %v4582 = vmax.f32 %v4380, %v4481
      %v4583 = vmax.f32 %v4381, %v4482
      %v4584 = vmax.f32 %v4382, %v4483
      %v4585 = vmax.f32 %v4383, %v4484
      %v4586 = vmax.f32 %v4384, %v4485
      %v4587 = vmax.f32 %v4385, %v4486
      %v4588 = vmax.f32 %v4386, %v4487
      %v4589 = vmax.f32 %v4387, %v4488
      %v4590 = vmax.f32 %v4388, %v4489
      %v4591 = vmax.f32 %v4389, %v4490
      %v4592 = vmax.f32 %v4390, %v4491
      %v4593 = vmax.f32 %v4391, %v4492
      %v4594 = vmax.f32 %v4392, %v4493
      %v4595 = vmax.f32 %v4393, %v4494
      %v4596 = vmax.f32 %v4394, %v4495
      %v4597 = vmax.f32 %v4395, %v4496
      %v4598 = vmax.f32 %v4396, %v4497
      %v4599 = vmax.f32 %v4397, %v4498
      %v4600 = vmax.f32 %v4398, %v4499
      %v4601 = vmax.f32 %v4399, %v4500
      %v4602 = vmax.f32 %v4400, %v4501
      %v4603 = vmax.f32 %v4401, %v4502
      %v4604 = vmax.f32 %v4402, %v4503
      %v4605 = vmax.f32 %v4403, %v4504
      %v4606 = vmax.f32 %v4404, %v4505
      %v4607 = vmax.f32 %v4405, %v4506
      %v4608 = vmax.f32 %v4406, %v4507
      %v4609 = vmax.f32 %v4407, %v4508
      %v4610 = vmax.f32 %v4408, %v4509
      %v4611 = vmax.f32 %v4409, %v4510
      %v4612 = vmax.f32 %v4410, %v4511
      %v4613 = vmax.f32 %v4411, %v4512
      %v4614 = vmax.f32 %v4412, %v4513
      %v4615 = vmax.f32 %v4413, %v4514
      %v4616 = vmax.f32 %v4414, %v4515
      %v4617 = vmax.f32 %v4415, %v4516
      %v4618 = vmax.f32 %v4416, %v4517
      %v4619 = vmax.f32 %v4417, %v4518
      %v4620 = vmax.f32 %v4418, %v4519
      %v4621 = vmax.f32 %v4419, %v4520
      %v4622 = vmax.f32 %v4420, %v4521
      %v4623 = vmax.f32 %v4421, %v4522
      %v4624 = vmax.f32 %v4422, %v4523
      %v4625 = vmax.f32 %v4423, %v4524
      %v4626 = vmax.f32 %v4424, %v4525
      %v4627 = vmax.f32 %v4425, %v4526
      %v4628 = vmax.f32 %v4426, %v4527
      %v4629 = vmax.f32 %v4427, %v4528
      %v4630 = vmax.f32 %v4428, %v4529
      %v4631 = vmax.f32 %v4429, %v4530
      %v4632 = vmax.f32 %v4430, %v4531
      %v4633 = vmax.f32 %v4431, %v4532
      %v4634 = vmax.f32 %v4432, %v4533
      %v4635 = vmax.f32 %v4433, %v4534
      %v4636 = vmax.f32 %v4434, %v4535
      %v4637 = vmax.f32 %v4435, %v4536
      %v4638 = vmax.f32 %v4436, %v4537
      %v4639 = vmax.f32 %v4437, %v4538
      %v4640 = vmax.f32 %v4438, %v4539
      %v4641 = vmax.f32 %v4439, %v4540
      %v4642 = vmax.f32 %v4440, %v4541
      %v4643 = vmax.f32 %v4441, %v4542
      %v4644 = vmax.f32 %v4442, %v4543
      %v4645 = vmax.f32 %v4443, %v4544
      %v4646 = vmax.f32 %v4444, %v4545
      %v4647 = vmax.f32 %v4445, %v4546
      %v4648 = vmax.f32 %v4446, %v4547
      %v4649 = vmax.f32 %v4447, %v4548
      %v4650 = vmax.f32 %v4448, %v4549
      %v4651 = vmax.f32 %v4449, %v4550
      %v4652 = vmax.f32 %v4450, %v4551
      %v4653 = vmax.f32 %v4451, %v4552
      %v4654 = vmax.f32 %v4452, %v4553
      %v4655 = vmax.f32 %v4453, %v4554
      %v4656 = vmax.f32 %v4454, %v4555
      %v4657 = vmax.f32 %v4455, %v4556
      %v4658 = vmax.f32 %v4456, %v4557
      %v4659 = vmax.f32 %v4457, %v4558
      %v4660 = vmax.f32 %v4458, %v4559
      %v4661 = vmax.f32 %v4459, %v4560
      %v4662 = vmax.f32 %v4460, %v4561
      %v4663 = vmax.f32 %v4461, %v4562
      %v4664 = vmax.f32 %v4462, %v4563
      %v4665 = vmax.f32 %v4463, %v4564
      %v4666 = vmax.f32 %v4464, %v4565
      %v4667 = vmax.f32 %v4465, %v4566
      %v4668 = vmax.f32 %v4466, %v4567
      %v4669 = vmax.f32 %v4467, %v4568
      %v4670 = vmax.f32 %v4468, %v4569
      %v4671 = vmax.f32 %v4469, %v4570
      %v4672 = vmax.f32 %v4470, %v4571
      %v4673 = vmax.f32 %v4471, %v4572
      %v4674 = vmax.f32 %v4472, %v4573
      %v4675 = vmax.f32 %v4473, %v4574
      %v4676 = vmax.f32 %v4474, %v4575
      %v4677 = vmax.f32 %v4475, %v4576
      %v4678 = vmax.f32 %v4476, %v4577
      %v4679 = vmax.f32 %v4477, %v4578
      %v4680 = vmax.f32 %v4478, %v4579
      %v4681 = vmax.f32 %v4277, %v4580
      %v4682 = vmax.f32 %v4278, %v4581
      %v4683 = vmax.f32 %v4279, %v4582
      %v4684 = vmax.f32 %v4280, %v4583
      %v4685 = vmax.f32 %v4281, %v4584
      %v4686 = vmax.f32 %v4282, %v4585
      %v4687 = vmax.f32 %v4283, %v4586
      %v4688 = vmax.f32 %v4284, %v4587
      %v4689 = vmax.f32 %v4285, %v4588
      %v4690 = vmax.f32 %v4286, %v4589
      %v4691 = vmax.f32 %v4287, %v4590
      %v4692 = vmax.f32 %v4288, %v4591
      %v4693 = vmax.f32 %v4289, %v4592
      %v4694 = vmax.f32 %v4290, %v4593
      %v4695 = vmax.f32 %v4291, %v4594
      %v4696 = vmax.f32 %v4292, %v4595
      %v4697 = vmax.f32 %v4293, %v4596
      %v4698 = vmax.f32 %v4294, %v4597
      %v4699 = vmax.f32 %v4295, %v4598
      %v4700 = vmax.f32 %v4296, %v4599
      %v4701 = vmax.f32 %v4297, %v4600
      %v4702 = vmax.f32 %v4298, %v4601
      %v4703 = vmax.f32 %v4299, %v4602
      %v4704 = vmax.f32 %v4300, %v4603
      %v4705 = vmax.f32 %v4301, %v4604
      %v4706 = vmax.f32 %v4302, %v4605
      %v4707 = vmax.f32 %v4303, %v4606
      %v4708 = vmax.f32 %v4304, %v4607
      %v4709 = vmax.f32 %v4305, %v4608
      %v4710 = vmax.f32 %v4306, %v4609
      %v4711 = vmax.f32 %v4307, %v4610
      %v4712 = vmax.f32 %v4308, %v4611
      %v4713 = vmax.f32 %v4309, %v4612
      %v4714 = vmax.f32 %v4310, %v4613
      %v4715 = vmax.f32 %v4311, %v4614
      %v4716 = vmax.f32 %v4312, %v4615
      %v4717 = vmax.f32 %v4313, %v4616
      %v4718 = vmax.f32 %v4314, %v4617
      %v4719 = vmax.f32 %v4315, %v4618
      %v4720 = vmax.f32 %v4316, %v4619
      %v4721 = vmax.f32 %v4317, %v4620
      %v4722 = vmax.f32 %v4318, %v4621
      %v4723 = vmax.f32 %v4319, %v4622
      %v4724 = vmax.f32 %v4320, %v4623
      %v4725 = vmax.f32 %v4321, %v4624
      %v4726 = vmax.f32 %v4322, %v4625
      %v4727 = vmax.f32 %v4323, %v4626
      %v4728 = vmax.f32 %v4324, %v4627
      %v4729 = vmax.f32 %v4325, %v4628
      %v4730 = vmax.f32 %v4326, %v4629
      %v4731 = vmax.f32 %v4327, %v4630
      %v4732 = vmax.f32 %v4328, %v4631
      %v4733 = vmax.f32 %v4329, %v4632
      %v4734 = vmax.f32 %v4330, %v4633
      %v4735 = vmax.f32 %v4331, %v4634
      %v4736 = vmax.f32 %v4332, %v4635
      %v4737 = vmax.f32 %v4333, %v4636
      %v4738 = vmax.f32 %v4334, %v4637
      %v4739 = vmax.f32 %v4335, %v4638
      %v4740 = vmax.f32 %v4336, %v4639
      %v4741 = vmax.f32 %v4337, %v4640
      %v4742 = vmax.f32 %v4338, %v4641
      %v4743 = vmax.f32 %v4339, %v4642
      %v4744 = vmax.f32 %v4340, %v4643
      %v4745 = vmax.f32 %v4341, %v4644
      %v4746 = vmax.f32 %v4342, %v4645
      %v4747 = vmax.f32 %v4343, %v4646
      %v4748 = vmax.f32 %v4344, %v4647
      %v4749 = vmax.f32 %v4345, %v4648
      %v4750 = vmax.f32 %v4346, %v4649
      %v4751 = vmax.f32 %v4347, %v4650
      %v4752 = vmax.f32 %v4348, %v4651
      %v4753 = vmax.f32 %v4349, %v4652
      %v4754 = vmax.f32 %v4350, %v4653
      %v4755 = vmax.f32 %v4351, %v4654
      %v4756 = vmax.f32 %v4352, %v4655
      %v4757 = vmax.f32 %v4353, %v4656
      %v4758 = vmax.f32 %v4354, %v4657
      %v4759 = vmax.f32 %v4355, %v4658
      %v4760 = vmax.f32 %v4356, %v4659
      %v4761 = vmax.f32 %v4357, %v4660
      %v4762 = vmax.f32 %v4358, %v4661
      %v4763 = vmax.f32 %v4359, %v4662
      %v4764 = vmax.f32 %v4360, %v4663
      %v4765 = vmax.f32 %v4361, %v4664
      %v4766 = vmax.f32 %v4362, %v4665
      %v4767 = vmax.f32 %v4363, %v4666
      %v4768 = vmax.f32 %v4364, %v4667
      %v4769 = vmax.f32 %v4365, %v4668
      %v4770 = vmax.f32 %v4366, %v4669
      %v4771 = vmax.f32 %v4367, %v4670
      %v4772 = vmax.f32 %v4368, %v4671
      %v4773 = vmax.f32 %v4369, %v4672
      %v4774 = vmax.f32 %v4370, %v4673
      %v4775 = vmax.f32 %v4371, %v4674
      %v4776 = vmax.f32 %v4372, %v4675
      %v4777 = vmax.f32 %v4373, %v4676
      %v4778 = vmax.f32 %v4374, %v4677
      %v4779 = vmax.f32 %v4375, %v4678
      %v4780 = vmax.f32 %v4376, %v4679
      %v4781 = vmax.f32 %v4377, %v4680
      %v4782 = vld [vmem:[%s5] sm:$0xff]
      %v4783 = vld [vmem:[%s5 + $0x8] sm:$0xff]
      %v4784 = vld [vmem:[%s5 + $0x10] sm:$0xff]
      %v4785 = vld [vmem:[%s5 + $0x18] sm:$0xff]
      %v4786 = vld [vmem:[%s5 + $0x20] sm:$0xff]
      %v4787 = vld [vmem:[%s5 + $0x28] sm:$0xff]
      %v4788 = vld [vmem:[%s5 + $0x30] sm:$0xff]
      %v4789 = vld [vmem:[%s5 + $0x38] sm:$0xff]
      %v4790 = vld [vmem:[%s5 + $0x40] sm:$0xff]
      %v4791 = vld [vmem:[%s5 + $0x48] sm:$0xff]
      %v4792 = vld [vmem:[%s5 + $0x50] sm:$0xff]
      %v4793 = vld [vmem:[%s5 + $0x58] sm:$0xff]
      %v4794 = vld [vmem:[%s5 + $0x60] sm:$0xff]
      %v4795 = vld [vmem:[%s5 + $0x68] sm:$0xff]
      %v4796 = vld [vmem:[%s5 + $0x70] sm:$0xff]
      %v4797 = vld [vmem:[%s5 + $0x78] sm:$0xff]
      %v4798 = vld [vmem:[%s5 + $0x80] sm:$0xff]
      %v4799 = vld [vmem:[%s5 + $0x88] sm:$0xff]
      %v4800 = vld [vmem:[%s5 + $0x90] sm:$0xff]
      %v4801 = vld [vmem:[%s5 + $0x98] sm:$0xff]
      %v4802 = vld [vmem:[%s5 + $0xa0] sm:$0xff]
      %v4803 = vld [vmem:[%s5 + $0xa8] sm:$0xff]
      %v4804 = vld [vmem:[%s5 + $0xb0] sm:$0xff]
      %v4805 = vld [vmem:[%s5 + $0xb8] sm:$0xff]
      %v4806 = vld [vmem:[%s5 + $0xc0] sm:$0xff]
      %v4807 = vld [vmem:[%s5 + $0xc8] sm:$0xff]
      %v4808 = vld [vmem:[%s5 + $0xd0] sm:$0xff]
      %v4809 = vld [vmem:[%s5 + $0xd8] sm:$0xff]
      %v4810 = vld [vmem:[%s5 + $0xe0] sm:$0xff]
      %v4811 = vld [vmem:[%s5 + $0xe8] sm:$0xff]
      %v4812 = vld [vmem:[%s5 + $0xf0] sm:$0xff]
      %v4813 = vld [vmem:[%s5 + $0xf8] sm:$0xff]
      %v4814 = vld [vmem:[%s5 + $0x100] sm:$0xff]
      %v4815 = vld [vmem:[%s5 + $0x108] sm:$0xff]
      %v4816 = vld [vmem:[%s5 + $0x110] sm:$0xff]
      %v4817 = vld [vmem:[%s5 + $0x118] sm:$0xff]
      %v4818 = vld [vmem:[%s5 + $0x120] sm:$0xff]
      %v4819 = vld [vmem:[%s5 + $0x128] sm:$0xff]
      %v4820 = vld [vmem:[%s5 + $0x130] sm:$0xff]
      %v4821 = vld [vmem:[%s5 + $0x138] sm:$0xff]
      %v4822 = vld [vmem:[%s5 + $0x140] sm:$0xff]
      %v4823 = vld [vmem:[%s5 + $0x148] sm:$0xff]
      %v4824 = vld [vmem:[%s5 + $0x150] sm:$0xff]
      %v4825 = vld [vmem:[%s5 + $0x158] sm:$0xff]
      %v4826 = vld [vmem:[%s5 + $0x160] sm:$0xff]
      %v4827 = vld [vmem:[%s5 + $0x168] sm:$0xff]
      %v4828 = vld [vmem:[%s5 + $0x170] sm:$0xff]
      %v4829 = vld [vmem:[%s5 + $0x178] sm:$0xff]
      %v4830 = vld [vmem:[%s5 + $0x180] sm:$0xff]
      %v4831 = vld [vmem:[%s5 + $0x188] sm:$0xff]
      %v4832 = vld [vmem:[%s5 + $0x190] sm:$0xff]
      %v4833 = vld [vmem:[%s5 + $0x198] sm:$0xff]
      %v4834 = vld [vmem:[%s5 + $0x1a0] sm:$0xff]
      %v4835 = vld [vmem:[%s5 + $0x1a8] sm:$0xff]
      %v4836 = vld [vmem:[%s5 + $0x1b0] sm:$0xff]
      %v4837 = vld [vmem:[%s5 + $0x1b8] sm:$0xff]
      %v4838 = vld [vmem:[%s5 + $0x1c0] sm:$0xff]
      %v4839 = vld [vmem:[%s5 + $0x1c8] sm:$0xff]
      %v4840 = vld [vmem:[%s5 + $0x1d0] sm:$0xff]
      %v4841 = vld [vmem:[%s5 + $0x1d8] sm:$0xff]
      %v4842 = vld [vmem:[%s5 + $0x1e0] sm:$0xff]
      %v4843 = vld [vmem:[%s5 + $0x1e8] sm:$0xff]
      %v4844 = vld [vmem:[%s5 + $0x1f0] sm:$0xff]
      %v4845 = vld [vmem:[%s5 + $0x1f8] sm:$0xff]
      %v4846 = vld [vmem:[%s5 + $0x200] sm:$0xff]
      %v4847 = vld [vmem:[%s5 + $0x208] sm:$0xff]
      %v4848 = vld [vmem:[%s5 + $0x210] sm:$0xff]
      %v4849 = vld [vmem:[%s5 + $0x218] sm:$0xff]
      %v4850 = vld [vmem:[%s5 + $0x220] sm:$0xff]
      %v4851 = vld [vmem:[%s5 + $0x228] sm:$0xff]
      %v4852 = vld [vmem:[%s5 + $0x230] sm:$0xff]
      %v4853 = vld [vmem:[%s5 + $0x238] sm:$0xff]
      %v4854 = vld [vmem:[%s5 + $0x240] sm:$0xff]
      %v4855 = vld [vmem:[%s5 + $0x248] sm:$0xff]
      %v4856 = vld [vmem:[%s5 + $0x250] sm:$0xff]
      %v4857 = vld [vmem:[%s5 + $0x258] sm:$0xff]
      %v4858 = vld [vmem:[%s5 + $0x260] sm:$0xff]
      %v4859 = vld [vmem:[%s5 + $0x268] sm:$0xff]
      %v4860 = vld [vmem:[%s5 + $0x270] sm:$0xff]
      %v4861 = vld [vmem:[%s5 + $0x278] sm:$0xff]
      %v4862 = vld [vmem:[%s5 + $0x280] sm:$0xff]
      %v4863 = vld [vmem:[%s5 + $0x288] sm:$0xff]
      %v4864 = vld [vmem:[%s5 + $0x290] sm:$0xff]
      %v4865 = vld [vmem:[%s5 + $0x298] sm:$0xff]
      %v4866 = vld [vmem:[%s5 + $0x2a0] sm:$0xff]
      %v4867 = vld [vmem:[%s5 + $0x2a8] sm:$0xff]
      %v4868 = vld [vmem:[%s5 + $0x2b0] sm:$0xff]
      %v4869 = vld [vmem:[%s5 + $0x2b8] sm:$0xff]
      %v4870 = vld [vmem:[%s5 + $0x2c0] sm:$0xff]
      %v4871 = vld [vmem:[%s5 + $0x2c8] sm:$0xff]
      %v4872 = vld [vmem:[%s5 + $0x2d0] sm:$0xff]
      %v4873 = vld [vmem:[%s5 + $0x2d8] sm:$0xff]
      %v4874 = vld [vmem:[%s5 + $0x2e0] sm:$0xff]
      %v4875 = vld [vmem:[%s5 + $0x2e8] sm:$0xff]
      %v4876 = vld [vmem:[%s5 + $0x2f0] sm:$0xff]
      %v4877 = vld [vmem:[%s5 + $0x2f8] sm:$0xff]
      %v4878 = vld [vmem:[%s5 + $0x300] sm:$0xff]
      %v4879 = vld [vmem:[%s5 + $0x308] sm:$0xff]
      %v4880 = vld [vmem:[%s5 + $0x310] sm:$0xff]
      %v4881 = vld [vmem:[%s5 + $0x318] sm:$0xff]
      %v4882 = vld [vmem:[%s5 + $0x320] sm:$0xff]
      %v4883 = vld [vmem:[%s5 + $0x328] sm:$0xff]
      %v4884 = vld [vmem:[%s5 + $0x330] sm:$0xff]
      %v4885 = vld [vmem:[%s5 + $0x338] sm:$0xff]
      %v4886 = vld [vmem:[%s5 + $0x340] sm:$0xff]
      %v4887 = vld [vmem:[%s5 + $0x348] sm:$0xff]
      %v4888 = vld [vmem:[%s5 + $0x350] sm:$0xff]
      %v4889 = vld [vmem:[%s5 + $0x358] sm:$0xff]
      %v4890 = vld [vmem:[%s5 + $0x360] sm:$0xff]
      %v4891 = vld [vmem:[%s5 + $0x368] sm:$0xff]
      %v4892 = vld [vmem:[%s5 + $0x370] sm:$0xff]
      %v4893 = vld [vmem:[%s5 + $0x378] sm:$0xff]
      %v4894 = vld [vmem:[%s5 + $0x380] sm:$0xff]
      %v4895 = vld [vmem:[%s5 + $0x388] sm:$0xff]
      %v4896 = vld [vmem:[%s5 + $0x390] sm:$0xff]
      %v4897 = vld [vmem:[%s5 + $0x398] sm:$0xff]
      %v4898 = vld [vmem:[%s5 + $0x3a0] sm:$0xff]
      %v4899 = vld [vmem:[%s5 + $0x3a8] sm:$0xff]
      %v4900 = vld [vmem:[%s5 + $0x3b0] sm:$0xff]
      %v4901 = vld [vmem:[%s5 + $0x3b8] sm:$0xff]
      %v4902 = vld [vmem:[%s5 + $0x3c0] sm:$0xff]
      %v4903 = vld [vmem:[%s5 + $0x3c8] sm:$0xff]
      %v4904 = vld [vmem:[%s5 + $0x3d0] sm:$0xff]
      %v4905 = vld [vmem:[%s5 + $0x3d8] sm:$0xff]
      %v4906 = vld [vmem:[%s5 + $0x3e0] sm:$0xff]
      %v4907 = vld [vmem:[%s5 + $0x3e8] sm:$0xff]
      %v4908 = vld [vmem:[%s5 + $0x3f0] sm:$0xff]
      %v4909 = vld [vmem:[%s5 + $0x3f8] sm:$0xff]
      %v4910 = vld [vmem:[%s5 + $0x400] sm:$0xff]
      %v4911 = vld [vmem:[%s5 + $0x408] sm:$0xff]
      %v4912 = vld [vmem:[%s5 + $0x410] sm:$0xff]
      %v4913 = vld [vmem:[%s5 + $0x418] sm:$0xff]
      %v4914 = vld [vmem:[%s5 + $0x420] sm:$0xff]
      %v4915 = vld [vmem:[%s5 + $0x428] sm:$0xff]
      %v4916 = vld [vmem:[%s5 + $0x430] sm:$0xff]
      %v4917 = vld [vmem:[%s5 + $0x438] sm:$0xff]
      %v4918 = vld [vmem:[%s5 + $0x440] sm:$0xff]
      %v4919 = vld [vmem:[%s5 + $0x448] sm:$0xff]
      %v4920 = vld [vmem:[%s5 + $0x450] sm:$0xff]
      %v4921 = vld [vmem:[%s5 + $0x458] sm:$0xff]
      %v4922 = vld [vmem:[%s5 + $0x460] sm:$0xff]
      %v4923 = vld [vmem:[%s5 + $0x468] sm:$0xff]
      %v4924 = vld [vmem:[%s5 + $0x470] sm:$0xff]
      %v4925 = vld [vmem:[%s5 + $0x478] sm:$0xff]
      %v4926 = vld [vmem:[%s5 + $0x480] sm:$0xff]
      %v4927 = vld [vmem:[%s5 + $0x488] sm:$0xff]
      %v4928 = vld [vmem:[%s5 + $0x490] sm:$0xff]
      %v4929 = vld [vmem:[%s5 + $0x498] sm:$0xff]
      %v4930 = vld [vmem:[%s5 + $0x4a0] sm:$0xff]
      %v4931 = vld [vmem:[%s5 + $0x4a8] sm:$0xff]
      %v4932 = vld [vmem:[%s5 + $0x4b0] sm:$0xff]
      %v4933 = vld [vmem:[%s5 + $0x4b8] sm:$0xff]
      %v4934 = vld [vmem:[%s5 + $0x4c0] sm:$0xff]
      %v4935 = vld [vmem:[%s5 + $0x4c8] sm:$0xff]
      %v4936 = vld [vmem:[%s5 + $0x4d0] sm:$0xff]
      %v4937 = vld [vmem:[%s5 + $0x4d8] sm:$0xff]
      %v4938 = vld [vmem:[%s5 + $0x4e0] sm:$0xff]
      %v4939 = vld [vmem:[%s5 + $0x4e8] sm:$0xff]
      %v4940 = vld [vmem:[%s5 + $0x4f0] sm:$0xff]
      %v4941 = vld [vmem:[%s5 + $0x4f8] sm:$0xff]
      %v4942 = vld [vmem:[%s5 + $0x500] sm:$0xff]
      %v4943 = vld [vmem:[%s5 + $0x508] sm:$0xff]
      %v4944 = vld [vmem:[%s5 + $0x510] sm:$0xff]
      %v4945 = vld [vmem:[%s5 + $0x518] sm:$0xff]
      %v4946 = vld [vmem:[%s5 + $0x520] sm:$0xff]
      %v4947 = vld [vmem:[%s5 + $0x528] sm:$0xff]
      %v4948 = vld [vmem:[%s5 + $0x530] sm:$0xff]
      %v4949 = vld [vmem:[%s5 + $0x538] sm:$0xff]
      %v4950 = vld [vmem:[%s5 + $0x540] sm:$0xff]
      %v4951 = vld [vmem:[%s5 + $0x548] sm:$0xff]
      %v4952 = vld [vmem:[%s5 + $0x550] sm:$0xff]
      %v4953 = vld [vmem:[%s5 + $0x558] sm:$0xff]
      %v4954 = vld [vmem:[%s5 + $0x560] sm:$0xff]
      %v4955 = vld [vmem:[%s5 + $0x568] sm:$0xff]
      %v4956 = vld [vmem:[%s5 + $0x570] sm:$0xff]
      %v4957 = vld [vmem:[%s5 + $0x578] sm:$0xff]
      %v4958 = vld [vmem:[%s5 + $0x580] sm:$0xff]
      %v4959 = vld [vmem:[%s5 + $0x588] sm:$0xff]
      %v4960 = vld [vmem:[%s5 + $0x590] sm:$0xff]
      %v4961 = vld [vmem:[%s5 + $0x598] sm:$0xff]
      %v4962 = vld [vmem:[%s5 + $0x5a0] sm:$0xff]
      %v4963 = vld [vmem:[%s5 + $0x5a8] sm:$0xff]
      %v4964 = vld [vmem:[%s5 + $0x5b0] sm:$0xff]
      %v4965 = vld [vmem:[%s5 + $0x5b8] sm:$0xff]
      %v4966 = vld [vmem:[%s5 + $0x5c0] sm:$0xff]
      %v4967 = vld [vmem:[%s5 + $0x5c8] sm:$0xff]
      %v4968 = vld [vmem:[%s5 + $0x5d0] sm:$0xff]
      %v4969 = vld [vmem:[%s5 + $0x5d8] sm:$0xff]
      %v4970 = vld [vmem:[%s5 + $0x5e0] sm:$0xff]
      %v4971 = vld [vmem:[%s5 + $0x5e8] sm:$0xff]
      %v4972 = vld [vmem:[%s5 + $0x5f0] sm:$0xff]
      %v4973 = vld [vmem:[%s5 + $0x5f8] sm:$0xff]
      %v4974 = vld [vmem:[%s5 + $0x600] sm:$0xff]
      %v4975 = vld [vmem:[%s5 + $0x608] sm:$0xff]
      %v4976 = vld [vmem:[%s5 + $0x610] sm:$0xff]
      %v4977 = vld [vmem:[%s5 + $0x618] sm:$0xff]
      %v4978 = vld [vmem:[%s5 + $0x620] sm:$0xff]
      %v4979 = vld [vmem:[%s5 + $0x628] sm:$0xff]
      %v4980 = vld [vmem:[%s5 + $0x630] sm:$0xff]
      %v4981 = vld [vmem:[%s5 + $0x638] sm:$0xff]
      %v4982 = vld [vmem:[%s5 + $0x640] sm:$0xff]
      %v4983 = vld [vmem:[%s5 + $0x648] sm:$0xff]
      %v4984 = vld [vmem:[%s5 + $0x650] sm:$0xff]
      %v4985 = vld [vmem:[%s5 + $0x658] sm:$0xff]
      %v4986 = vld [vmem:[%s5 + $0x660] sm:$0xff]
      %v4987 = vld [vmem:[%s5 + $0x668] sm:$0xff]
      %v4988 = vld [vmem:[%s5 + $0x670] sm:$0xff]
      %v4989 = vld [vmem:[%s5 + $0x678] sm:$0xff]
      %v4990 = vld [vmem:[%s5 + $0x680] sm:$0xff]
      %v4991 = vld [vmem:[%s5 + $0x688] sm:$0xff]
      %v4992 = vld [vmem:[%s5 + $0x690] sm:$0xff]
      %v4993 = vld [vmem:[%s5 + $0x698] sm:$0xff]
      %v4994 = vld [vmem:[%s5 + $0x6a0] sm:$0xff]
      %v4995 = vld [vmem:[%s5 + $0x6a8] sm:$0xff]
      %v4996 = vld [vmem:[%s5 + $0x6b0] sm:$0xff]
      %v4997 = vld [vmem:[%s5 + $0x6b8] sm:$0xff]
      %v4998 = vld [vmem:[%s5 + $0x6c0] sm:$0xff]
      %v4999 = vld [vmem:[%s5 + $0x6c8] sm:$0xff]
      %v5000 = vld [vmem:[%s5 + $0x6d0] sm:$0xff]
      %v5001 = vld [vmem:[%s5 + $0x6d8] sm:$0xff]
      %v5002 = vld [vmem:[%s5 + $0x6e0] sm:$0xff]
      %v5003 = vld [vmem:[%s5 + $0x6e8] sm:$0xff]
      %v5004 = vld [vmem:[%s5 + $0x6f0] sm:$0xff]
      %v5005 = vld [vmem:[%s5 + $0x6f8] sm:$0xff]
      %vm5006 = vcmask 318464
      %v5008 = vsel %vm5006, %v4788, 0
      %v5011 = vsel %vm5006, %v4795, 0
      %v5014 = vsel %vm5006, %v4802, 0
      %v5017 = vsel %vm5006, %v4809, 0
      %v5020 = vsel %vm5006, %v4816, 0
      %v5023 = vsel %vm5006, %v4823, 0
      %v5026 = vsel %vm5006, %v4830, 0
      %v5029 = vsel %vm5006, %v4837, 0
      %v5032 = vsel %vm5006, %v4844, 0
      %v5035 = vsel %vm5006, %v4851, 0
      %v5038 = vsel %vm5006, %v4858, 0
      %v5041 = vsel %vm5006, %v4865, 0
      %v5044 = vsel %vm5006, %v4872, 0
      %v5047 = vsel %vm5006, %v4879, 0
      %v5050 = vsel %vm5006, %v4886, 0
      %v5053 = vsel %vm5006, %v4893, 0
      %v5056 = vsel %vm5006, %v4900, 0
      %v5059 = vsel %vm5006, %v4907, 0
      %v5062 = vsel %vm5006, %v4914, 0
      %v5065 = vsel %vm5006, %v4921, 0
      %v5068 = vsel %vm5006, %v4928, 0
      %v5071 = vsel %vm5006, %v4935, 0
      %v5074 = vsel %vm5006, %v4942, 0
      %v5077 = vsel %vm5006, %v4949, 0
      %v5080 = vsel %vm5006, %v4956, 0
      %v5083 = vsel %vm5006, %v4963, 0
      %v5086 = vsel %vm5006, %v4970, 0
      %v5089 = vsel %vm5006, %v4977, 0
      %v5092 = vsel %vm5006, %v4984, 0
      %v5095 = vsel %vm5006, %v4991, 0
      %v5098 = vsel %vm5006, %v4998, 0
      %v5101 = vsel %vm5006, %v5005, 0
      %vm5103 = vcmask 1046528
      %v5105 = vsel %vm5103, %v4781, 0
      %5107 = vmatprep.subr.mxu0 0.0
      %5108 = vmatpush1.msra.mxu0 %v4696
      %5109 = vmatprep.subr.mxu0 0.0
      %5110 = vmatpush1.msra.mxu0 %v4695
      %5111 = vmatprep.subr.mxu0 0.0
      %5112 = vmatpush1.msra.mxu0 %v4694
      %5113 = vmatprep.subr.mxu0 0.0
      %5114 = vmatpush1.msra.mxu0 %v4693
      %5115 = vmatprep.subr.mxu0 0.0
      %5116 = vmatpush1.msra.mxu0 %v4692
      %5117 = vmatprep.subr.mxu0 0.0
      %5118 = vmatpush1.msra.mxu0 %v4691
      %5119 = vmatprep.subr.mxu0 0.0
      %5120 = vmatpush1.msra.mxu0 %v4690
      %5121 = vmatprep.subr.mxu0 0.0
      %5122 = vmatpush1.msra.mxu0 %v4689
      %5123 = vmatprep.subr.mxu0 0.0
      %5124 = vmatpush1.msra.mxu0 %v4688
      %5125 = vmatprep.subr.mxu0 0.0
      %5126 = vmatpush1.msra.mxu0 %v4687
      %5127 = vmatprep.subr.mxu0 0.0
      %5128 = vmatpush1.msra.mxu0 %v4686
      %5129 = vmatprep.subr.mxu0 0.0
      %5130 = vmatpush1.msra.mxu0 %v4685
      %5131 = vmatprep.subr.mxu0 0.0
      %5132 = vmatpush1.msra.mxu0 %v4684
      %5133 = vmatprep.subr.mxu0 0.0
      %5134 = vmatpush1.msra.mxu0 %v4683
      %5135 = vmatprep.subr.mxu0 0.0
      %5136 = vmatpush1.msra.mxu0 %v4682
      %5137 = vmatprep.subr.mxu0 0.0
      %5138 = vmatpush1.msra.mxu0 %v4681
      %5139 = vmatprep.subr.mxu0 0.0
      %5140 = vmatpush2.msra.mxu0 %v4712
      %5141 = vmatprep.subr.mxu0 0.0
      %5142 = vmatpush2.msra.mxu0 %v4711
      %5143 = vmatprep.subr.mxu0 0.0
      %5144 = vmatpush2.msra.mxu0 %v4710
      %5145 = vmatprep.subr.mxu0 0.0
      %5146 = vmatpush2.msra.mxu0 %v4709
      %5147 = vmatprep.subr.mxu0 0.0
      %5148 = vmatpush2.msra.mxu0 %v4708
      %5149 = vmatprep.subr.mxu0 0.0
      %5150 = vmatpush2.msra.mxu0 %v4707
      %5151 = vmatprep.subr.mxu0 0.0
      %5152 = vmatpush2.msra.mxu0 %v4706
      %5153 = vmatprep.subr.mxu0 0.0
      %5154 = vmatpush2.msra.mxu0 %v4705
      %5155 = vmatprep.subr.mxu0 0.0
      %5156 = vmatpush2.msra.mxu0 %v4704
      %5157 = vmatprep.subr.mxu0 0.0
      %5158 = vmatpush2.msra.mxu0 %v4703
      %5159 = vmatprep.subr.mxu0 0.0
      %5160 = vmatpush2.msra.mxu0 %v4702
      %5161 = vmatprep.subr.mxu0 0.0
      %5162 = vmatpush2.msra.mxu0 %v4701
      %5163 = vmatprep.subr.mxu0 0.0
      %5164 = vmatpush2.msra.mxu0 %v4700
      %5165 = vmatprep.subr.mxu0 0.0
      %5166 = vmatpush2.msra.mxu0 %v4699
      %5167 = vmatprep.subr.mxu0 0.0
      %5168 = vmatpush2.msra.mxu0 %v4698
      %5169 = vmatprep.subr.mxu0 0.0
      %5170 = vmatpush2.msra.mxu0 %v4697
      %5171 = vmatprep.mubr.f32.mxu0 %v4783
      %5172 = vmatmul.mubr.f32.gmra.mxu0 %v4782
      %v5173 = vpop.f32.mrf.mxu0
      %v5174 = vadd.f32 0.0, %v5173
      %v5175 = vpop.f32.mrf.mxu0
      %5176 = vmatprep.mubr.f32.mxu0 %v4790
      %5177 = vmatmul.mubr.f32.gmra.mxu0 %v4789
      %v5178 = vpop.f32.mrf.mxu0
      %v5179 = vadd.f32 0.0, %v5178
      %v5180 = vpop.f32.mrf.mxu0
      %5181 = vmatprep.mubr.f32.mxu0 %v4797
      %5182 = vmatmul.mubr.f32.gmra.mxu0 %v4796
      %v5183 = vpop.f32.mrf.mxu0
      %v5184 = vadd.f32 0.0, %v5183
      %v5185 = vpop.f32.mrf.mxu0
      %5186 = vmatprep.mubr.f32.mxu0 %v4804
      %5187 = vmatmul.mubr.f32.gmra.mxu0 %v4803
      %v5188 = vpop.f32.mrf.mxu0
      %v5189 = vadd.f32 0.0, %v5188
      %v5190 = vpop.f32.mrf.mxu0
      %5191 = vmatprep.mubr.f32.mxu0 %v4811
      %5192 = vmatmul.mubr.f32.gmra.mxu0 %v4810
      %v5193 = vpop.f32.mrf.mxu0
      %v5194 = vadd.f32 0.0, %v5193
      %v5195 = vpop.f32.mrf.mxu0
      %5196 = vmatprep.mubr.f32.mxu0 %v4818
      %5197 = vmatmul.mubr.f32.gmra.mxu0 %v4817
      %v5198 = vpop.f32.mrf.mxu0
      %v5199 = vadd.f32 0.0, %v5198
      %v5200 = vpop.f32.mrf.mxu0
      %5201 = vmatprep.mubr.f32.mxu0 %v4825
      %5202 = vmatmul.mubr.f32.gmra.mxu0 %v4824
      %v5203 = vpop.f32.mrf.mxu0
      %v5204 = vadd.f32 0.0, %v5203
      %v5205 = vpop.f32.mrf.mxu0
      %5206 = vmatprep.mubr.f32.mxu0 %v4832
      %5207 = vmatmul.mubr.f32.gmra.mxu0 %v4831
      %v5208 = vpop.f32.mrf.mxu0
      %v5209 = vadd.f32 0.0, %v5208
      %v5210 = vpop.f32.mrf.mxu0
      %5211 = vmatprep.mubr.f32.mxu0 %v4839
      %5212 = vmatmul.mubr.f32.gmra.mxu0 %v4838
      %v5213 = vpop.f32.mrf.mxu0
      %v5214 = vadd.f32 0.0, %v5213
      %v5215 = vpop.f32.mrf.mxu0
      %5216 = vmatprep.mubr.f32.mxu0 %v4846
      %5217 = vmatmul.mubr.f32.gmra.mxu0 %v4845
      %v5218 = vpop.f32.mrf.mxu0
      %v5219 = vadd.f32 0.0, %v5218
      %v5220 = vpop.f32.mrf.mxu0
      %5221 = vmatprep.mubr.f32.mxu0 %v4853
      %5222 = vmatmul.mubr.f32.gmra.mxu0 %v4852
      %v5223 = vpop.f32.mrf.mxu0
      %v5224 = vadd.f32 0.0, %v5223
      %v5225 = vpop.f32.mrf.mxu0
      %5226 = vmatprep.mubr.f32.mxu0 %v4860
      %5227 = vmatmul.mubr.f32.gmra.mxu0 %v4859
      %v5228 = vpop.f32.mrf.mxu0
      %v5229 = vadd.f32 0.0, %v5228
      %v5230 = vpop.f32.mrf.mxu0
      %5231 = vmatprep.mubr.f32.mxu0 %v4867
      %5232 = vmatmul.mubr.f32.gmra.mxu0 %v4866
      %v5233 = vpop.f32.mrf.mxu0
      %v5234 = vadd.f32 0.0, %v5233
      %v5235 = vpop.f32.mrf.mxu0
      %5236 = vmatprep.mubr.f32.mxu0 %v4874
      %5237 = vmatmul.mubr.f32.gmra.mxu0 %v4873
      %v5238 = vpop.f32.mrf.mxu0
      %v5239 = vadd.f32 0.0, %v5238
      %v5240 = vpop.f32.mrf.mxu0
      %5241 = vmatprep.mubr.f32.mxu0 %v4881
      %5242 = vmatmul.mubr.f32.gmra.mxu0 %v4880
      %v5243 = vpop.f32.mrf.mxu0
      %v5244 = vadd.f32 0.0, %v5243
      %v5245 = vpop.f32.mrf.mxu0
      %5246 = vmatprep.mubr.f32.mxu0 %v4888
      %5247 = vmatmul.mubr.f32.gmra.mxu0 %v4887
      %v5248 = vpop.f32.mrf.mxu0
      %v5249 = vadd.f32 0.0, %v5248
      %v5250 = vpop.f32.mrf.mxu0
      %5251 = vmatprep.mubr.f32.mxu0 %v4895
      %5252 = vmatmul.mubr.f32.gmra.mxu0 %v4894
      %v5253 = vpop.f32.mrf.mxu0
      %v5254 = vadd.f32 0.0, %v5253
      %v5255 = vpop.f32.mrf.mxu0
      %5256 = vmatprep.mubr.f32.mxu0 %v4902
      %5257 = vmatmul.mubr.f32.gmra.mxu0 %v4901
      %v5258 = vpop.f32.mrf.mxu0
      %v5259 = vadd.f32 0.0, %v5258
      %v5260 = vpop.f32.mrf.mxu0
      %5261 = vmatprep.mubr.f32.mxu0 %v4909
      %5262 = vmatmul.mubr.f32.gmra.mxu0 %v4908
      %v5263 = vpop.f32.mrf.mxu0
      %v5264 = vadd.f32 0.0, %v5263
      %v5265 = vpop.f32.mrf.mxu0
      %5266 = vmatprep.mubr.f32.mxu0 %v4916
      %5267 = vmatmul.mubr.f32.gmra.mxu0 %v4915
      %v5268 = vpop.f32.mrf.mxu0
      %v5269 = vadd.f32 0.0, %v5268
      %v5270 = vpop.f32.mrf.mxu0
      %5271 = vmatprep.mubr.f32.mxu0 %v4923
      %5272 = vmatmul.mubr.f32.gmra.mxu0 %v4922
      %v5273 = vpop.f32.mrf.mxu0
      %v5274 = vadd.f32 0.0, %v5273
      %v5275 = vpop.f32.mrf.mxu0
      %5276 = vmatprep.mubr.f32.mxu0 %v4930
      %5277 = vmatmul.mubr.f32.gmra.mxu0 %v4929
      %v5278 = vpop.f32.mrf.mxu0
      %v5279 = vadd.f32 0.0, %v5278
      %v5280 = vpop.f32.mrf.mxu0
      %5281 = vmatprep.mubr.f32.mxu0 %v4937
      %5282 = vmatmul.mubr.f32.gmra.mxu0 %v4936
      %v5283 = vpop.f32.mrf.mxu0
      %v5284 = vadd.f32 0.0, %v5283
      %v5285 = vpop.f32.mrf.mxu0
      %5286 = vmatprep.mubr.f32.mxu0 %v4944
      %5287 = vmatmul.mubr.f32.gmra.mxu0 %v4943
      %v5288 = vpop.f32.mrf.mxu0
      %v5289 = vadd.f32 0.0, %v5288
      %v5290 = vpop.f32.mrf.mxu0
      %5291 = vmatprep.mubr.f32.mxu0 %v4951
      %5292 = vmatmul.mubr.f32.gmra.mxu0 %v4950
      %v5293 = vpop.f32.mrf.mxu0
      %v5294 = vadd.f32 0.0, %v5293
      %v5295 = vpop.f32.mrf.mxu0
      %5296 = vmatprep.mubr.f32.mxu0 %v4958
      %5297 = vmatmul.mubr.f32.gmra.mxu0 %v4957
      %v5298 = vpop.f32.mrf.mxu0
      %v5299 = vadd.f32 0.0, %v5298
      %v5300 = vpop.f32.mrf.mxu0
      %5301 = vmatprep.mubr.f32.mxu0 %v4965
      %5302 = vmatmul.mubr.f32.gmra.mxu0 %v4964
      %v5303 = vpop.f32.mrf.mxu0
      %v5304 = vadd.f32 0.0, %v5303
      %v5305 = vpop.f32.mrf.mxu0
      %5306 = vmatprep.mubr.f32.mxu0 %v4972
      %5307 = vmatmul.mubr.f32.gmra.mxu0 %v4971
      %v5308 = vpop.f32.mrf.mxu0
      %v5309 = vadd.f32 0.0, %v5308
      %v5310 = vpop.f32.mrf.mxu0
      %5311 = vmatprep.mubr.f32.mxu0 %v4979
      %5312 = vmatmul.mubr.f32.gmra.mxu0 %v4978
      %v5313 = vpop.f32.mrf.mxu0
      %v5314 = vadd.f32 0.0, %v5313
      %v5315 = vpop.f32.mrf.mxu0
      %5316 = vmatprep.mubr.f32.mxu0 %v4986
      %5317 = vmatmul.mubr.f32.gmra.mxu0 %v4985
      %v5318 = vpop.f32.mrf.mxu0
      %v5319 = vadd.f32 0.0, %v5318
      %v5320 = vpop.f32.mrf.mxu0
      %5321 = vmatprep.mubr.f32.mxu0 %v4993
      %5322 = vmatmul.mubr.f32.gmra.mxu0 %v4992
      %v5323 = vpop.f32.mrf.mxu0
      %v5324 = vadd.f32 0.0, %v5323
      %v5325 = vpop.f32.mrf.mxu0
      %5326 = vmatprep.mubr.f32.mxu0 %v5000
      %5327 = vmatmul.mubr.f32.gmra.mxu0 %v4999
      %v5328 = vpop.f32.mrf.mxu0
      %v5329 = vadd.f32 0.0, %v5328
      %v5330 = vpop.f32.mrf.mxu0
      %5331 = vdwg.mxu0
      %5332 = vmatprep.subr.mxu0 0.0
      %5333 = vmatpush1.msra.mxu0 %v4728
      %5334 = vmatprep.subr.mxu0 0.0
      %5335 = vmatpush1.msra.mxu0 %v4727
      %5336 = vmatprep.subr.mxu0 0.0
      %5337 = vmatpush1.msra.mxu0 %v4726
      %5338 = vmatprep.subr.mxu0 0.0
      %5339 = vmatpush1.msra.mxu0 %v4725
      %5340 = vmatprep.subr.mxu0 0.0
      %5341 = vmatpush1.msra.mxu0 %v4724
      %5342 = vmatprep.subr.mxu0 0.0
      %5343 = vmatpush1.msra.mxu0 %v4723
      %5344 = vmatprep.subr.mxu0 0.0
      %5345 = vmatpush1.msra.mxu0 %v4722
      %5346 = vmatprep.subr.mxu0 0.0
      %5347 = vmatpush1.msra.mxu0 %v4721
      %5348 = vmatprep.subr.mxu0 0.0
      %5349 = vmatpush1.msra.mxu0 %v4720
      %5350 = vmatprep.subr.mxu0 0.0
      %5351 = vmatpush1.msra.mxu0 %v4719
      %5352 = vmatprep.subr.mxu0 0.0
      %5353 = vmatpush1.msra.mxu0 %v4718
      %5354 = vmatprep.subr.mxu0 0.0
      %5355 = vmatpush1.msra.mxu0 %v4717
      %5356 = vmatprep.subr.mxu0 0.0
      %5357 = vmatpush1.msra.mxu0 %v4716
      %5358 = vmatprep.subr.mxu0 0.0
      %5359 = vmatpush1.msra.mxu0 %v4715
      %5360 = vmatprep.subr.mxu0 0.0
      %5361 = vmatpush1.msra.mxu0 %v4714
      %5362 = vmatprep.subr.mxu0 0.0
      %5363 = vmatpush1.msra.mxu0 %v4713
      %5364 = vmatprep.subr.mxu0 0.0
      %5365 = vmatpush2.msra.mxu0 %v4744
      %5366 = vmatprep.subr.mxu0 0.0
      %5367 = vmatpush2.msra.mxu0 %v4743
      %5368 = vmatprep.subr.mxu0 0.0
      %5369 = vmatpush2.msra.mxu0 %v4742
      %5370 = vmatprep.subr.mxu0 0.0
      %5371 = vmatpush2.msra.mxu0 %v4741
      %5372 = vmatprep.subr.mxu0 0.0
      %5373 = vmatpush2.msra.mxu0 %v4740
      %5374 = vmatprep.subr.mxu0 0.0
      %5375 = vmatpush2.msra.mxu0 %v4739
      %5376 = vmatprep.subr.mxu0 0.0
      %5377 = vmatpush2.msra.mxu0 %v4738
      %5378 = vmatprep.subr.mxu0 0.0
      %5379 = vmatpush2.msra.mxu0 %v4737
      %5380 = vmatprep.subr.mxu0 0.0
      %5381 = vmatpush2.msra.mxu0 %v4736
      %5382 = vmatprep.subr.mxu0 0.0
      %5383 = vmatpush2.msra.mxu0 %v4735
      %5384 = vmatprep.subr.mxu0 0.0
      %5385 = vmatpush2.msra.mxu0 %v4734
      %5386 = vmatprep.subr.mxu0 0.0
      %5387 = vmatpush2.msra.mxu0 %v4733
      %5388 = vmatprep.subr.mxu0 0.0
      %5389 = vmatpush2.msra.mxu0 %v4732
      %5390 = vmatprep.subr.mxu0 0.0
      %5391 = vmatpush2.msra.mxu0 %v4731
      %5392 = vmatprep.subr.mxu0 0.0
      %5393 = vmatpush2.msra.mxu0 %v4730
      %5394 = vmatprep.subr.mxu0 0.0
      %5395 = vmatpush2.msra.mxu0 %v4729
      %5396 = vmatprep.mubr.f32.mxu0 %v4785
      %5397 = vmatmul.mubr.f32.gmra.mxu0 %v4784
      %v5398 = vpop.f32.mrf.mxu0
      %v5399 = vadd.f32 %v5174, %v5398
      %v5400 = vpop.f32.mrf.mxu0
      %5401 = vmatprep.mubr.f32.mxu0 %v4792
      %5402 = vmatmul.mubr.f32.gmra.mxu0 %v4791
      %v5403 = vpop.f32.mrf.mxu0
      %v5404 = vadd.f32 %v5179, %v5403
      %v5405 = vpop.f32.mrf.mxu0
      %5406 = vmatprep.mubr.f32.mxu0 %v4799
      %5407 = vmatmul.mubr.f32.gmra.mxu0 %v4798
      %v5408 = vpop.f32.mrf.mxu0
      %v5409 = vadd.f32 %v5184, %v5408
      %v5410 = vpop.f32.mrf.mxu0
      %5411 = vmatprep.mubr.f32.mxu0 %v4806
      %5412 = vmatmul.mubr.f32.gmra.mxu0 %v4805
      %v5413 = vpop.f32.mrf.mxu0
      %v5414 = vadd.f32 %v5189, %v5413
      %v5415 = vpop.f32.mrf.mxu0
      %5416 = vmatprep.mubr.f32.mxu0 %v4813
      %5417 = vmatmul.mubr.f32.gmra.mxu0 %v4812
      %v5418 = vpop.f32.mrf.mxu0
      %v5419 = vadd.f32 %v5194, %v5418
      %v5420 = vpop.f32.mrf.mxu0
      %5421 = vmatprep.mubr.f32.mxu0 %v4820
      %5422 = vmatmul.mubr.f32.gmra.mxu0 %v4819
      %v5423 = vpop.f32.mrf.mxu0
      %v5424 = vadd.f32 %v5199, %v5423
      %v5425 = vpop.f32.mrf.mxu0
      %5426 = vmatprep.mubr.f32.mxu0 %v4827
      %5427 = vmatmul.mubr.f32.gmra.mxu0 %v4826
      %v5428 = vpop.f32.mrf.mxu0
      %v5429 = vadd.f32 %v5204, %v5428
      %v5430 = vpop.f32.mrf.mxu0
      %5431 = vmatprep.mubr.f32.mxu0 %v4834
      %5432 = vmatmul.mubr.f32.gmra.mxu0 %v4833
      %v5433 = vpop.f32.mrf.mxu0
      %v5434 = vadd.f32 %v5209, %v5433
      %v5435 = vpop.f32.mrf.mxu0
      %5436 = vmatprep.mubr.f32.mxu0 %v4841
      %5437 = vmatmul.mubr.f32.gmra.mxu0 %v4840
      %v5438 = vpop.f32.mrf.mxu0
      %v5439 = vadd.f32 %v5214, %v5438
      %v5440 = vpop.f32.mrf.mxu0
      %5441 = vmatprep.mubr.f32.mxu0 %v4848
      %5442 = vmatmul.mubr.f32.gmra.mxu0 %v4847
      %v5443 = vpop.f32.mrf.mxu0
      %v5444 = vadd.f32 %v5219, %v5443
      %v5445 = vpop.f32.mrf.mxu0
      %5446 = vmatprep.mubr.f32.mxu0 %v4855
      %5447 = vmatmul.mubr.f32.gmra.mxu0 %v4854
      %v5448 = vpop.f32.mrf.mxu0
      %v5449 = vadd.f32 %v5224, %v5448
      %v5450 = vpop.f32.mrf.mxu0
      %5451 = vmatprep.mubr.f32.mxu0 %v4862
      %5452 = vmatmul.mubr.f32.gmra.mxu0 %v4861
      %v5453 = vpop.f32.mrf.mxu0
      %v5454 = vadd.f32 %v5229, %v5453
      %v5455 = vpop.f32.mrf.mxu0
      %5456 = vmatprep.mubr.f32.mxu0 %v4869
      %5457 = vmatmul.mubr.f32.gmra.mxu0 %v4868
      %v5458 = vpop.f32.mrf.mxu0
      %v5459 = vadd.f32 %v5234, %v5458
      %v5460 = vpop.f32.mrf.mxu0
      %5461 = vmatprep.mubr.f32.mxu0 %v4876
      %5462 = vmatmul.mubr.f32.gmra.mxu0 %v4875
      %v5463 = vpop.f32.mrf.mxu0
      %v5464 = vadd.f32 %v5239, %v5463
      %v5465 = vpop.f32.mrf.mxu0
      %5466 = vmatprep.mubr.f32.mxu0 %v4883
      %5467 = vmatmul.mubr.f32.gmra.mxu0 %v4882
      %v5468 = vpop.f32.mrf.mxu0
      %v5469 = vadd.f32 %v5244, %v5468
      %v5470 = vpop.f32.mrf.mxu0
      %5471 = vmatprep.mubr.f32.mxu0 %v4890
      %5472 = vmatmul.mubr.f32.gmra.mxu0 %v4889
      %v5473 = vpop.f32.mrf.mxu0
      %v5474 = vadd.f32 %v5249, %v5473
      %v5475 = vpop.f32.mrf.mxu0
      %5476 = vmatprep.mubr.f32.mxu0 %v4897
      %5477 = vmatmul.mubr.f32.gmra.mxu0 %v4896
      %v5478 = vpop.f32.mrf.mxu0
      %v5479 = vadd.f32 %v5254, %v5478
      %v5480 = vpop.f32.mrf.mxu0
      %5481 = vmatprep.mubr.f32.mxu0 %v4904
      %5482 = vmatmul.mubr.f32.gmra.mxu0 %v4903
      %v5483 = vpop.f32.mrf.mxu0
      %v5484 = vadd.f32 %v5259, %v5483
      %v5485 = vpop.f32.mrf.mxu0
      %5486 = vmatprep.mubr.f32.mxu0 %v4911
      %5487 = vmatmul.mubr.f32.gmra.mxu0 %v4910
      %v5488 = vpop.f32.mrf.mxu0
      %v5489 = vadd.f32 %v5264, %v5488
      %v5490 = vpop.f32.mrf.mxu0
      %5491 = vmatprep.mubr.f32.mxu0 %v4918
      %5492 = vmatmul.mubr.f32.gmra.mxu0 %v4917
      %v5493 = vpop.f32.mrf.mxu0
      %v5494 = vadd.f32 %v5269, %v5493
      %v5495 = vpop.f32.mrf.mxu0
      %5496 = vmatprep.mubr.f32.mxu0 %v4925
      %5497 = vmatmul.mubr.f32.gmra.mxu0 %v4924
      %v5498 = vpop.f32.mrf.mxu0
      %v5499 = vadd.f32 %v5274, %v5498
      %v5500 = vpop.f32.mrf.mxu0
      %5501 = vmatprep.mubr.f32.mxu0 %v4932
      %5502 = vmatmul.mubr.f32.gmra.mxu0 %v4931
      %v5503 = vpop.f32.mrf.mxu0
      %v5504 = vadd.f32 %v5279, %v5503
      %v5505 = vpop.f32.mrf.mxu0
      %5506 = vmatprep.mubr.f32.mxu0 %v4939
      %5507 = vmatmul.mubr.f32.gmra.mxu0 %v4938
      %v5508 = vpop.f32.mrf.mxu0
      %v5509 = vadd.f32 %v5284, %v5508
      %v5510 = vpop.f32.mrf.mxu0
      %5511 = vmatprep.mubr.f32.mxu0 %v4946
      %5512 = vmatmul.mubr.f32.gmra.mxu0 %v4945
      %v5513 = vpop.f32.mrf.mxu0
      %v5514 = vadd.f32 %v5289, %v5513
      %v5515 = vpop.f32.mrf.mxu0
      %5516 = vmatprep.mubr.f32.mxu0 %v4953
      %5517 = vmatmul.mubr.f32.gmra.mxu0 %v4952
      %v5518 = vpop.f32.mrf.mxu0
      %v5519 = vadd.f32 %v5294, %v5518
      %v5520 = vpop.f32.mrf.mxu0
      %5521 = vmatprep.mubr.f32.mxu0 %v4960
      %5522 = vmatmul.mubr.f32.gmra.mxu0 %v4959
      %v5523 = vpop.f32.mrf.mxu0
      %v5524 = vadd.f32 %v5299, %v5523
      %v5525 = vpop.f32.mrf.mxu0
      %5526 = vmatprep.mubr.f32.mxu0 %v4967
      %5527 = vmatmul.mubr.f32.gmra.mxu0 %v4966
      %v5528 = vpop.f32.mrf.mxu0
      %v5529 = vadd.f32 %v5304, %v5528
      %v5530 = vpop.f32.mrf.mxu0
      %5531 = vmatprep.mubr.f32.mxu0 %v4974
      %5532 = vmatmul.mubr.f32.gmra.mxu0 %v4973
      %v5533 = vpop.f32.mrf.mxu0
      %v5534 = vadd.f32 %v5309, %v5533
      %v5535 = vpop.f32.mrf.mxu0
      %5536 = vmatprep.mubr.f32.mxu0 %v4981
      %5537 = vmatmul.mubr.f32.gmra.mxu0 %v4980
      %v5538 = vpop.f32.mrf.mxu0
      %v5539 = vadd.f32 %v5314, %v5538
      %v5540 = vpop.f32.mrf.mxu0
      %5541 = vmatprep.mubr.f32.mxu0 %v4988
      %5542 = vmatmul.mubr.f32.gmra.mxu0 %v4987
      %v5543 = vpop.f32.mrf.mxu0
      %v5544 = vadd.f32 %v5319, %v5543
      %v5545 = vpop.f32.mrf.mxu0
      %5546 = vmatprep.mubr.f32.mxu0 %v4995
      %5547 = vmatmul.mubr.f32.gmra.mxu0 %v4994
      %v5548 = vpop.f32.mrf.mxu0
      %v5549 = vadd.f32 %v5324, %v5548
      %v5550 = vpop.f32.mrf.mxu0
      %5551 = vmatprep.mubr.f32.mxu0 %v5002
      %5552 = vmatmul.mubr.f32.gmra.mxu0 %v5001
      %v5553 = vpop.f32.mrf.mxu0
      %v5554 = vadd.f32 %v5329, %v5553
      %v5555 = vpop.f32.mrf.mxu0
      %5556 = vdwg.mxu0
      %5557 = vmatprep.subr.mxu0 0.0
      %5558 = vmatpush1.msra.mxu0 %v4760
      %5559 = vmatprep.subr.mxu0 0.0
      %5560 = vmatpush1.msra.mxu0 %v4759
      %5561 = vmatprep.subr.mxu0 0.0
      %5562 = vmatpush1.msra.mxu0 %v4758
      %5563 = vmatprep.subr.mxu0 0.0
      %5564 = vmatpush1.msra.mxu0 %v4757
      %5565 = vmatprep.subr.mxu0 0.0
      %5566 = vmatpush1.msra.mxu0 %v4756
      %5567 = vmatprep.subr.mxu0 0.0
      %5568 = vmatpush1.msra.mxu0 %v4755
      %5569 = vmatprep.subr.mxu0 0.0
      %5570 = vmatpush1.msra.mxu0 %v4754
      %5571 = vmatprep.subr.mxu0 0.0
      %5572 = vmatpush1.msra.mxu0 %v4753
      %5573 = vmatprep.subr.mxu0 0.0
      %5574 = vmatpush1.msra.mxu0 %v4752
      %5575 = vmatprep.subr.mxu0 0.0
      %5576 = vmatpush1.msra.mxu0 %v4751
      %5577 = vmatprep.subr.mxu0 0.0
      %5578 = vmatpush1.msra.mxu0 %v4750
      %5579 = vmatprep.subr.mxu0 0.0
      %5580 = vmatpush1.msra.mxu0 %v4749
      %5581 = vmatprep.subr.mxu0 0.0
      %5582 = vmatpush1.msra.mxu0 %v4748
      %5583 = vmatprep.subr.mxu0 0.0
      %5584 = vmatpush1.msra.mxu0 %v4747
      %5585 = vmatprep.subr.mxu0 0.0
      %5586 = vmatpush1.msra.mxu0 %v4746
      %5587 = vmatprep.subr.mxu0 0.0
      %5588 = vmatpush1.msra.mxu0 %v4745
      %5589 = vmatprep.subr.mxu0 0.0
      %5590 = vmatpush2.msra.mxu0 %v4776
      %5591 = vmatprep.subr.mxu0 0.0
      %5592 = vmatpush2.msra.mxu0 %v4775
      %5593 = vmatprep.subr.mxu0 0.0
      %5594 = vmatpush2.msra.mxu0 %v4774
      %5595 = vmatprep.subr.mxu0 0.0
      %5596 = vmatpush2.msra.mxu0 %v4773
      %5597 = vmatprep.subr.mxu0 0.0
      %5598 = vmatpush2.msra.mxu0 %v4772
      %5599 = vmatprep.subr.mxu0 0.0
      %5600 = vmatpush2.msra.mxu0 %v4771
      %5601 = vmatprep.subr.mxu0 0.0
      %5602 = vmatpush2.msra.mxu0 %v4770
      %5603 = vmatprep.subr.mxu0 0.0
      %5604 = vmatpush2.msra.mxu0 %v4769
      %5605 = vmatprep.subr.mxu0 0.0
      %5606 = vmatpush2.msra.mxu0 %v4768
      %5607 = vmatprep.subr.mxu0 0.0
      %5608 = vmatpush2.msra.mxu0 %v4767
      %5609 = vmatprep.subr.mxu0 0.0
      %5610 = vmatpush2.msra.mxu0 %v4766
      %5611 = vmatprep.subr.mxu0 0.0
      %5612 = vmatpush2.msra.mxu0 %v4765
      %5613 = vmatprep.subr.mxu0 0.0
      %5614 = vmatpush2.msra.mxu0 %v4764
      %5615 = vmatprep.subr.mxu0 0.0
      %5616 = vmatpush2.msra.mxu0 %v4763
      %5617 = vmatprep.subr.mxu0 0.0
      %5618 = vmatpush2.msra.mxu0 %v4762
      %5619 = vmatprep.subr.mxu0 0.0
      %5620 = vmatpush2.msra.mxu0 %v4761
      %5621 = vmatprep.mubr.f32.mxu0 %v4787
      %5622 = vmatmul.mubr.f32.gmra.mxu0 %v4786
      %v5623 = vpop.f32.mrf.mxu0
      %v5624 = vadd.f32 %v5399, %v5623
      %v5625 = vpop.f32.mrf.mxu0
      %5626 = vmatprep.mubr.f32.mxu0 %v4794
      %5627 = vmatmul.mubr.f32.gmra.mxu0 %v4793
      %v5628 = vpop.f32.mrf.mxu0
      %v5629 = vadd.f32 %v5404, %v5628
      %v5630 = vpop.f32.mrf.mxu0
      %5631 = vmatprep.mubr.f32.mxu0 %v4801
      %5632 = vmatmul.mubr.f32.gmra.mxu0 %v4800
      %v5633 = vpop.f32.mrf.mxu0
      %v5634 = vadd.f32 %v5409, %v5633
      %v5635 = vpop.f32.mrf.mxu0
      %5636 = vmatprep.mubr.f32.mxu0 %v4808
      %5637 = vmatmul.mubr.f32.gmra.mxu0 %v4807
      %v5638 = vpop.f32.mrf.mxu0
      %v5639 = vadd.f32 %v5414, %v5638
      %v5640 = vpop.f32.mrf.mxu0
      %5641 = vmatprep.mubr.f32.mxu0 %v4815
      %5642 = vmatmul.mubr.f32.gmra.mxu0 %v4814
      %v5643 = vpop.f32.mrf.mxu0
      %v5644 = vadd.f32 %v5419, %v5643
      %v5645 = vpop.f32.mrf.mxu0
      %5646 = vmatprep.mubr.f32.mxu0 %v4822
      %5647 = vmatmul.mubr.f32.gmra.mxu0 %v4821
      %v5648 = vpop.f32.mrf.mxu0
      %v5649 = vadd.f32 %v5424, %v5648
      %v5650 = vpop.f32.mrf.mxu0
      %5651 = vmatprep.mubr.f32.mxu0 %v4829
      %5652 = vmatmul.mubr.f32.gmra.mxu0 %v4828
      %v5653 = vpop.f32.mrf.mxu0
      %v5654 = vadd.f32 %v5429, %v5653
      %v5655 = vpop.f32.mrf.mxu0
      %5656 = vmatprep.mubr.f32.mxu0 %v4836
      %5657 = vmatmul.mubr.f32.gmra.mxu0 %v4835
      %v5658 = vpop.f32.mrf.mxu0
      %v5659 = vadd.f32 %v5434, %v5658
      %v5660 = vpop.f32.mrf.mxu0
      %5661 = vmatprep.mubr.f32.mxu0 %v4843
      %5662 = vmatmul.mubr.f32.gmra.mxu0 %v4842
      %v5663 = vpop.f32.mrf.mxu0
      %v5664 = vadd.f32 %v5439, %v5663
      %v5665 = vpop.f32.mrf.mxu0
      %5666 = vmatprep.mubr.f32.mxu0 %v4850
      %5667 = vmatmul.mubr.f32.gmra.mxu0 %v4849
      %v5668 = vpop.f32.mrf.mxu0
      %v5669 = vadd.f32 %v5444, %v5668
      %v5670 = vpop.f32.mrf.mxu0
      %5671 = vmatprep.mubr.f32.mxu0 %v4857
      %5672 = vmatmul.mubr.f32.gmra.mxu0 %v4856
      %v5673 = vpop.f32.mrf.mxu0
      %v5674 = vadd.f32 %v5449, %v5673
      %v5675 = vpop.f32.mrf.mxu0
      %5676 = vmatprep.mubr.f32.mxu0 %v4864
      %5677 = vmatmul.mubr.f32.gmra.mxu0 %v4863
      %v5678 = vpop.f32.mrf.mxu0
      %v5679 = vadd.f32 %v5454, %v5678
      %v5680 = vpop.f32.mrf.mxu0
      %5681 = vmatprep.mubr.f32.mxu0 %v4871
      %5682 = vmatmul.mubr.f32.gmra.mxu0 %v4870
      %v5683 = vpop.f32.mrf.mxu0
      %v5684 = vadd.f32 %v5459, %v5683
      %v5685 = vpop.f32.mrf.mxu0
      %5686 = vmatprep.mubr.f32.mxu0 %v4878
      %5687 = vmatmul.mubr.f32.gmra.mxu0 %v4877
      %v5688 = vpop.f32.mrf.mxu0
      %v5689 = vadd.f32 %v5464, %v5688
      %v5690 = vpop.f32.mrf.mxu0
      %5691 = vmatprep.mubr.f32.mxu0 %v4885
      %5692 = vmatmul.mubr.f32.gmra.mxu0 %v4884
      %v5693 = vpop.f32.mrf.mxu0
      %v5694 = vadd.f32 %v5469, %v5693
      %v5695 = vpop.f32.mrf.mxu0
      %5696 = vmatprep.mubr.f32.mxu0 %v4892
      %5697 = vmatmul.mubr.f32.gmra.mxu0 %v4891
      %v5698 = vpop.f32.mrf.mxu0
      %v5699 = vadd.f32 %v5474, %v5698
      %v5700 = vpop.f32.mrf.mxu0
      %5701 = vmatprep.mubr.f32.mxu0 %v4899
      %5702 = vmatmul.mubr.f32.gmra.mxu0 %v4898
      %v5703 = vpop.f32.mrf.mxu0
      %v5704 = vadd.f32 %v5479, %v5703
      %v5705 = vpop.f32.mrf.mxu0
      %5706 = vmatprep.mubr.f32.mxu0 %v4906
      %5707 = vmatmul.mubr.f32.gmra.mxu0 %v4905
      %v5708 = vpop.f32.mrf.mxu0
      %v5709 = vadd.f32 %v5484, %v5708
      %v5710 = vpop.f32.mrf.mxu0
      %5711 = vmatprep.mubr.f32.mxu0 %v4913
      %5712 = vmatmul.mubr.f32.gmra.mxu0 %v4912
      %v5713 = vpop.f32.mrf.mxu0
      %v5714 = vadd.f32 %v5489, %v5713
      %v5715 = vpop.f32.mrf.mxu0
      %5716 = vmatprep.mubr.f32.mxu0 %v4920
      %5717 = vmatmul.mubr.f32.gmra.mxu0 %v4919
      %v5718 = vpop.f32.mrf.mxu0
      %v5719 = vadd.f32 %v5494, %v5718
      %v5720 = vpop.f32.mrf.mxu0
      %5721 = vmatprep.mubr.f32.mxu0 %v4927
      %5722 = vmatmul.mubr.f32.gmra.mxu0 %v4926
      %v5723 = vpop.f32.mrf.mxu0
      %v5724 = vadd.f32 %v5499, %v5723
      %v5725 = vpop.f32.mrf.mxu0
      %5726 = vmatprep.mubr.f32.mxu0 %v4934
      %5727 = vmatmul.mubr.f32.gmra.mxu0 %v4933
      %v5728 = vpop.f32.mrf.mxu0
      %v5729 = vadd.f32 %v5504, %v5728
      %v5730 = vpop.f32.mrf.mxu0
      %5731 = vmatprep.mubr.f32.mxu0 %v4941
      %5732 = vmatmul.mubr.f32.gmra.mxu0 %v4940
      %v5733 = vpop.f32.mrf.mxu0
      %v5734 = vadd.f32 %v5509, %v5733
      %v5735 = vpop.f32.mrf.mxu0
      %5736 = vmatprep.mubr.f32.mxu0 %v4948
      %5737 = vmatmul.mubr.f32.gmra.mxu0 %v4947
      %v5738 = vpop.f32.mrf.mxu0
      %v5739 = vadd.f32 %v5514, %v5738
      %v5740 = vpop.f32.mrf.mxu0
      %5741 = vmatprep.mubr.f32.mxu0 %v4955
      %5742 = vmatmul.mubr.f32.gmra.mxu0 %v4954
      %v5743 = vpop.f32.mrf.mxu0
      %v5744 = vadd.f32 %v5519, %v5743
      %v5745 = vpop.f32.mrf.mxu0
      %5746 = vmatprep.mubr.f32.mxu0 %v4962
      %5747 = vmatmul.mubr.f32.gmra.mxu0 %v4961
      %v5748 = vpop.f32.mrf.mxu0
      %v5749 = vadd.f32 %v5524, %v5748
      %v5750 = vpop.f32.mrf.mxu0
      %5751 = vmatprep.mubr.f32.mxu0 %v4969
      %5752 = vmatmul.mubr.f32.gmra.mxu0 %v4968
      %v5753 = vpop.f32.mrf.mxu0
      %v5754 = vadd.f32 %v5529, %v5753
      %v5755 = vpop.f32.mrf.mxu0
      %5756 = vmatprep.mubr.f32.mxu0 %v4976
      %5757 = vmatmul.mubr.f32.gmra.mxu0 %v4975
      %v5758 = vpop.f32.mrf.mxu0
      %v5759 = vadd.f32 %v5534, %v5758
      %v5760 = vpop.f32.mrf.mxu0
      %5761 = vmatprep.mubr.f32.mxu0 %v4983
      %5762 = vmatmul.mubr.f32.gmra.mxu0 %v4982
      %v5763 = vpop.f32.mrf.mxu0
      %v5764 = vadd.f32 %v5539, %v5763
      %v5765 = vpop.f32.mrf.mxu0
      %5766 = vmatprep.mubr.f32.mxu0 %v4990
      %5767 = vmatmul.mubr.f32.gmra.mxu0 %v4989
      %v5768 = vpop.f32.mrf.mxu0
      %v5769 = vadd.f32 %v5544, %v5768
      %v5770 = vpop.f32.mrf.mxu0
      %5771 = vmatprep.mubr.f32.mxu0 %v4997
      %5772 = vmatmul.mubr.f32.gmra.mxu0 %v4996
      %v5773 = vpop.f32.mrf.mxu0
      %v5774 = vadd.f32 %v5549, %v5773
      %v5775 = vpop.f32.mrf.mxu0
      %5776 = vmatprep.mubr.f32.mxu0 %v5004
      %5777 = vmatmul.mubr.f32.gmra.mxu0 %v5003
      %v5778 = vpop.f32.mrf.mxu0
      %v5779 = vadd.f32 %v5554, %v5778
      %v5780 = vpop.f32.mrf.mxu0
      %5781 = vdwg.mxu0
      %5782 = vmatprep.subr.mxu0 0.0
      %5783 = vmatpush1.msra.mxu0 0.0
      %5784 = vmatprep.subr.mxu0 0.0
      %5785 = vmatpush1.msra.mxu0 0.0
      %5786 = vmatprep.subr.mxu0 0.0
      %5787 = vmatpush1.msra.mxu0 0.0
      %5788 = vmatprep.subr.mxu0 0.0
      %5789 = vmatpush1.msra.mxu0 0.0
      %5790 = vmatprep.subr.mxu0 0.0
      %5791 = vmatpush1.msra.mxu0 0.0
      %5792 = vmatprep.subr.mxu0 0.0
      %5793 = vmatpush1.msra.mxu0 0.0
      %5794 = vmatprep.subr.mxu0 0.0
      %5795 = vmatpush1.msra.mxu0 0.0
      %5796 = vmatprep.subr.mxu0 0.0
      %5797 = vmatpush1.msra.mxu0 0.0
      %5798 = vmatprep.subr.mxu0 0.0
      %5799 = vmatpush1.msra.mxu0 0.0
      %5800 = vmatprep.subr.mxu0 0.0
      %5801 = vmatpush1.msra.mxu0 0.0
      %5802 = vmatprep.subr.mxu0 0.0
      %5803 = vmatpush1.msra.mxu0 0.0
      %5804 = vmatprep.subr.mxu0 0.0
      %5805 = vmatpush1.msra.mxu0 %v5105
      %5806 = vmatprep.subr.mxu0 0.0
      %5807 = vmatpush1.msra.mxu0 %v4780
      %5808 = vmatprep.subr.mxu0 0.0
      %5809 = vmatpush1.msra.mxu0 %v4779
      %5810 = vmatprep.subr.mxu0 0.0
      %5811 = vmatpush1.msra.mxu0 %v4778
      %5812 = vmatprep.subr.mxu0 0.0
      %5813 = vmatpush1.msra.mxu0 %v4777
      %5814 = vmatprep.subr.mxu0 0.0
      %5815 = vmatpush2.msra.mxu0 0.0
      %5816 = vmatprep.subr.mxu0 0.0
      %5817 = vmatpush2.msra.mxu0 0.0
      %5818 = vmatprep.subr.mxu0 0.0
      %5819 = vmatpush2.msra.mxu0 0.0
      %5820 = vmatprep.subr.mxu0 0.0
      %5821 = vmatpush2.msra.mxu0 0.0
      %5822 = vmatprep.subr.mxu0 0.0
      %5823 = vmatpush2.msra.mxu0 0.0
      %5824 = vmatprep.subr.mxu0 0.0
      %5825 = vmatpush2.msra.mxu0 0.0
      %5826 = vmatprep.subr.mxu0 0.0
      %5827 = vmatpush2.msra.mxu0 0.0
      %5828 = vmatprep.subr.mxu0 0.0
      %5829 = vmatpush2.msra.mxu0 0.0
      %5830 = vmatprep.subr.mxu0 0.0
      %5831 = vmatpush2.msra.mxu0 0.0
      %5832 = vmatprep.subr.mxu0 0.0
      %5833 = vmatpush2.msra.mxu0 0.0
      %5834 = vmatprep.subr.mxu0 0.0
      %5835 = vmatpush2.msra.mxu0 0.0
      %5836 = vmatprep.subr.mxu0 0.0
      %5837 = vmatpush2.msra.mxu0 0.0
      %5838 = vmatprep.subr.mxu0 0.0
      %5839 = vmatpush2.msra.mxu0 0.0
      %5840 = vmatprep.subr.mxu0 0.0
      %5841 = vmatpush2.msra.mxu0 0.0
      %5842 = vmatprep.subr.mxu0 0.0
      %5843 = vmatpush2.msra.mxu0 0.0
      %5844 = vmatprep.subr.mxu0 0.0
      %5845 = vmatpush2.msra.mxu0 0.0
      %5846 = vmatprep.mubr.f32.mxu0 0.0
      %5847 = vmatmul.mubr.f32.gmra.mxu0 %v5008
      %v5848 = vpop.f32.mrf.mxu0
      %v5849 = vadd.f32 %v5624, %v5848
      %v5850 = vpop.f32.mrf.mxu0
      %5851 = vmatprep.mubr.f32.mxu0 0.0
      %5852 = vmatmul.mubr.f32.gmra.mxu0 %v5011
      %v5853 = vpop.f32.mrf.mxu0
      %v5854 = vadd.f32 %v5629, %v5853
      %v5855 = vpop.f32.mrf.mxu0
      %5856 = vmatprep.mubr.f32.mxu0 0.0
      %5857 = vmatmul.mubr.f32.gmra.mxu0 %v5014
      %v5858 = vpop.f32.mrf.mxu0
      %v5859 = vadd.f32 %v5634, %v5858
      %v5860 = vpop.f32.mrf.mxu0
      %5861 = vmatprep.mubr.f32.mxu0 0.0
      %5862 = vmatmul.mubr.f32.gmra.mxu0 %v5017
      %v5863 = vpop.f32.mrf.mxu0
      %v5864 = vadd.f32 %v5639, %v5863
      %v5865 = vpop.f32.mrf.mxu0
      %5866 = vmatprep.mubr.f32.mxu0 0.0
      %5867 = vmatmul.mubr.f32.gmra.mxu0 %v5020
      %v5868 = vpop.f32.mrf.mxu0
      %v5869 = vadd.f32 %v5644, %v5868
      %v5870 = vpop.f32.mrf.mxu0
      %5871 = vmatprep.mubr.f32.mxu0 0.0
      %5872 = vmatmul.mubr.f32.gmra.mxu0 %v5023
      %v5873 = vpop.f32.mrf.mxu0
      %v5874 = vadd.f32 %v5649, %v5873
      %v5875 = vpop.f32.mrf.mxu0
      %5876 = vmatprep.mubr.f32.mxu0 0.0
      %5877 = vmatmul.mubr.f32.gmra.mxu0 %v5026
      %v5878 = vpop.f32.mrf.mxu0
      %v5879 = vadd.f32 %v5654, %v5878
      %v5880 = vpop.f32.mrf.mxu0
      %5881 = vmatprep.mubr.f32.mxu0 0.0
      %5882 = vmatmul.mubr.f32.gmra.mxu0 %v5029
      %v5883 = vpop.f32.mrf.mxu0
      %v5884 = vadd.f32 %v5659, %v5883
      %v5885 = vpop.f32.mrf.mxu0
      %5886 = vmatprep.mubr.f32.mxu0 0.0
      %5887 = vmatmul.mubr.f32.gmra.mxu0 %v5032
      %v5888 = vpop.f32.mrf.mxu0
      %v5889 = vadd.f32 %v5664, %v5888
      %v5890 = vpop.f32.mrf.mxu0
      %5891 = vmatprep.mubr.f32.mxu0 0.0
      %5892 = vmatmul.mubr.f32.gmra.mxu0 %v5035
      %v5893 = vpop.f32.mrf.mxu0
      %v5894 = vadd.f32 %v5669, %v5893
      %v5895 = vpop.f32.mrf.mxu0
      %5896 = vmatprep.mubr.f32.mxu0 0.0
      %5897 = vmatmul.mubr.f32.gmra.mxu0 %v5038
      %v5898 = vpop.f32.mrf.mxu0
      %v5899 = vadd.f32 %v5674, %v5898
      %v5900 = vpop.f32.mrf.mxu0
      %5901 = vmatprep.mubr.f32.mxu0 0.0
      %5902 = vmatmul.mubr.f32.gmra.mxu0 %v5041
      %v5903 = vpop.f32.mrf.mxu0
      %v5904 = vadd.f32 %v5679, %v5903
      %v5905 = vpop.f32.mrf.mxu0
      %5906 = vmatprep.mubr.f32.mxu0 0.0
      %5907 = vmatmul.mubr.f32.gmra.mxu0 %v5044
      %v5908 = vpop.f32.mrf.mxu0
      %v5909 = vadd.f32 %v5684, %v5908
      %v5910 = vpop.f32.mrf.mxu0
      %5911 = vmatprep.mubr.f32.mxu0 0.0
      %5912 = vmatmul.mubr.f32.gmra.mxu0 %v5047
      %v5913 = vpop.f32.mrf.mxu0
      %v5914 = vadd.f32 %v5689, %v5913
      %v5915 = vpop.f32.mrf.mxu0
      %5916 = vmatprep.mubr.f32.mxu0 0.0
      %5917 = vmatmul.mubr.f32.gmra.mxu0 %v5050
      %v5918 = vpop.f32.mrf.mxu0
      %v5919 = vadd.f32 %v5694, %v5918
      %v5920 = vpop.f32.mrf.mxu0
      %5921 = vmatprep.mubr.f32.mxu0 0.0
      %5922 = vmatmul.mubr.f32.gmra.mxu0 %v5053
      %v5923 = vpop.f32.mrf.mxu0
      %v5924 = vadd.f32 %v5699, %v5923
      %v5925 = vpop.f32.mrf.mxu0
      %5926 = vmatprep.mubr.f32.mxu0 0.0
      %5927 = vmatmul.mubr.f32.gmra.mxu0 %v5056
      %v5928 = vpop.f32.mrf.mxu0
      %v5929 = vadd.f32 %v5704, %v5928
      %v5930 = vpop.f32.mrf.mxu0
      %5931 = vmatprep.mubr.f32.mxu0 0.0
      %5932 = vmatmul.mubr.f32.gmra.mxu0 %v5059
      %v5933 = vpop.f32.mrf.mxu0
      %v5934 = vadd.f32 %v5709, %v5933
      %v5935 = vpop.f32.mrf.mxu0
      %5936 = vmatprep.mubr.f32.mxu0 0.0
      %5937 = vmatmul.mubr.f32.gmra.mxu0 %v5062
      %v5938 = vpop.f32.mrf.mxu0
      %v5939 = vadd.f32 %v5714, %v5938
      %v5940 = vpop.f32.mrf.mxu0
      %5941 = vmatprep.mubr.f32.mxu0 0.0
      %5942 = vmatmul.mubr.f32.gmra.mxu0 %v5065
      %v5943 = vpop.f32.mrf.mxu0
      %v5944 = vadd.f32 %v5719, %v5943
      %v5945 = vpop.f32.mrf.mxu0
      %5946 = vmatprep.mubr.f32.mxu0 0.0
      %5947 = vmatmul.mubr.f32.gmra.mxu0 %v5068
      %v5948 = vpop.f32.mrf.mxu0
      %v5949 = vadd.f32 %v5724, %v5948
      %v5950 = vpop.f32.mrf.mxu0
      %5951 = vmatprep.mubr.f32.mxu0 0.0
      %5952 = vmatmul.mubr.f32.gmra.mxu0 %v5071
      %v5953 = vpop.f32.mrf.mxu0
      %v5954 = vadd.f32 %v5729, %v5953
      %v5955 = vpop.f32.mrf.mxu0
      %5956 = vmatprep.mubr.f32.mxu0 0.0
      %5957 = vmatmul.mubr.f32.gmra.mxu0 %v5074
      %v5958 = vpop.f32.mrf.mxu0
      %v5959 = vadd.f32 %v5734, %v5958
      %v5960 = vpop.f32.mrf.mxu0
      %5961 = vmatprep.mubr.f32.mxu0 0.0
      %5962 = vmatmul.mubr.f32.gmra.mxu0 %v5077
      %v5963 = vpop.f32.mrf.mxu0
      %v5964 = vadd.f32 %v5739, %v5963
      %v5965 = vpop.f32.mrf.mxu0
      %5966 = vmatprep.mubr.f32.mxu0 0.0
      %5967 = vmatmul.mubr.f32.gmra.mxu0 %v5080
      %v5968 = vpop.f32.mrf.mxu0
      %v5969 = vadd.f32 %v5744, %v5968
      %v5970 = vpop.f32.mrf.mxu0
      %5971 = vmatprep.mubr.f32.mxu0 0.0
      %5972 = vmatmul.mubr.f32.gmra.mxu0 %v5083
      %v5973 = vpop.f32.mrf.mxu0
      %v5974 = vadd.f32 %v5749, %v5973
      %v5975 = vpop.f32.mrf.mxu0
      %5976 = vmatprep.mubr.f32.mxu0 0.0
      %5977 = vmatmul.mubr.f32.gmra.mxu0 %v5086
      %v5978 = vpop.f32.mrf.mxu0
      %v5979 = vadd.f32 %v5754, %v5978
      %v5980 = vpop.f32.mrf.mxu0
      %5981 = vmatprep.mubr.f32.mxu0 0.0
      %5982 = vmatmul.mubr.f32.gmra.mxu0 %v5089
      %v5983 = vpop.f32.mrf.mxu0
      %v5984 = vadd.f32 %v5759, %v5983
      %v5985 = vpop.f32.mrf.mxu0
      %5986 = vmatprep.mubr.f32.mxu0 0.0
      %5987 = vmatmul.mubr.f32.gmra.mxu0 %v5092
      %v5988 = vpop.f32.mrf.mxu0
      %v5989 = vadd.f32 %v5764, %v5988
      %v5990 = vpop.f32.mrf.mxu0
      %5991 = vmatprep.mubr.f32.mxu0 0.0
      %5992 = vmatmul.mubr.f32.gmra.mxu0 %v5095
      %v5993 = vpop.f32.mrf.mxu0
      %v5994 = vadd.f32 %v5769, %v5993
      %v5995 = vpop.f32.mrf.mxu0
      %5996 = vmatprep.mubr.f32.mxu0 0.0
      %5997 = vmatmul.mubr.f32.gmra.mxu0 %v5098
      %v5998 = vpop.f32.mrf.mxu0
      %v5999 = vadd.f32 %v5774, %v5998
      %v6000 = vpop.f32.mrf.mxu0
      %6001 = vmatprep.mubr.f32.mxu0 0.0
      %6002 = vmatmul.mubr.f32.gmra.mxu0 %v5101
      %v6003 = vpop.f32.mrf.mxu0
      %v6004 = vadd.f32 %v5779, %v6003
      %v6005 = vpop.f32.mrf.mxu0
      %6006 = vdwg.mxu0
      %6007 = vst.msk [vmem:[#allocation4] sm:$0xff] %vm957, %v5849
      %6008 = vst.msk [vmem:[#allocation4 + $0x8] sm:$0xff] %vm957, %v5854
      %6009 = vst.msk [vmem:[#allocation4 + $0x10] sm:$0xff] %vm957, %v5859
      %6010 = vst.msk [vmem:[#allocation4 + $0x18] sm:$0xff] %vm957, %v5864
      %6011 = vst.msk [vmem:[#allocation4 + $0x20] sm:$0xff] %vm957, %v5869
      %6012 = vst.msk [vmem:[#allocation4 + $0x28] sm:$0xff] %vm957, %v5874
      %6013 = vst.msk [vmem:[#allocation4 + $0x30] sm:$0xff] %vm957, %v5879
      %6014 = vst.msk [vmem:[#allocation4 + $0x38] sm:$0xff] %vm957, %v5884
      %6015 = vst.msk [vmem:[#allocation4 + $0x40] sm:$0xff] %vm957, %v5889
      %6016 = vst.msk [vmem:[#allocation4 + $0x48] sm:$0xff] %vm957, %v5894
      %6017 = vst.msk [vmem:[#allocation4 + $0x50] sm:$0xff] %vm957, %v5899
      %6018 = vst.msk [vmem:[#allocation4 + $0x58] sm:$0xff] %vm957, %v5904
      %6019 = vst.msk [vmem:[#allocation4 + $0x60] sm:$0xff] %vm957, %v5909
      %6020 = vst.msk [vmem:[#allocation4 + $0x68] sm:$0xff] %vm957, %v5914
      %6021 = vst.msk [vmem:[#allocation4 + $0x70] sm:$0xff] %vm957, %v5919
      %6022 = vst.msk [vmem:[#allocation4 + $0x78] sm:$0xff] %vm957, %v5924
      %6023 = vst.msk [vmem:[#allocation4 + $0x80] sm:$0xff] %vm957, %v5929
      %6024 = vst.msk [vmem:[#allocation4 + $0x88] sm:$0xff] %vm957, %v5934
      %6025 = vst.msk [vmem:[#allocation4 + $0x90] sm:$0xff] %vm957, %v5939
      %6026 = vst.msk [vmem:[#allocation4 + $0x98] sm:$0xff] %vm957, %v5944
      %6027 = vst.msk [vmem:[#allocation4 + $0xa0] sm:$0xff] %vm957, %v5949
      %6028 = vst.msk [vmem:[#allocation4 + $0xa8] sm:$0xff] %vm957, %v5954
      %6029 = vst.msk [vmem:[#allocation4 + $0xb0] sm:$0xff] %vm957, %v5959
      %6030 = vst.msk [vmem:[#allocation4 + $0xb8] sm:$0xff] %vm957, %v5964
      %6031 = vst.msk [vmem:[#allocation4 + $0xc0] sm:$0xff] %vm957, %v5969
      %6032 = vst.msk [vmem:[#allocation4 + $0xc8] sm:$0xff] %vm957, %v5974
      %6033 = vst.msk [vmem:[#allocation4 + $0xd0] sm:$0xff] %vm957, %v5979
      %6034 = vst.msk [vmem:[#allocation4 + $0xd8] sm:$0xff] %vm957, %v5984
      %6035 = vst.msk [vmem:[#allocation4 + $0xe0] sm:$0xff] %vm957, %v5989
      %6036 = vst.msk [vmem:[#allocation4 + $0xe8] sm:$0xff] %vm957, %v5994
      %6037 = vst.msk [vmem:[#allocation4 + $0xf0] sm:$0xff] %vm957, %v5999
      %6038 = vst.msk [vmem:[#allocation4 + $0xf8] sm:$0xff] %vm957, %v6004
      %v6039 = vld [vmem:[#allocation4] sm:$0xff]
      %v6040 = vld [vmem:[#allocation4 + $0x8] sm:$0xff]
      %v6041 = vld [vmem:[#allocation4 + $0x10] sm:$0xff]
      %v6042 = vld [vmem:[#allocation4 + $0x18] sm:$0xff]
      %v6043 = vld [vmem:[#allocation4 + $0x20] sm:$0xff]
      %v6044 = vld [vmem:[#allocation4 + $0x28] sm:$0xff]
      %v6045 = vld [vmem:[#allocation4 + $0x30] sm:$0xff]
      %v6046 = vld [vmem:[#allocation4 + $0x38] sm:$0xff]
      %v6047 = vld [vmem:[#allocation4 + $0x40] sm:$0xff]
      %v6048 = vld [vmem:[#allocation4 + $0x48] sm:$0xff]
      %v6049 = vld [vmem:[#allocation4 + $0x50] sm:$0xff]
      %v6050 = vld [vmem:[#allocation4 + $0x58] sm:$0xff]
      %v6051 = vld [vmem:[#allocation4 + $0x60] sm:$0xff]
      %v6052 = vld [vmem:[#allocation4 + $0x68] sm:$0xff]
      %v6053 = vld [vmem:[#allocation4 + $0x70] sm:$0xff]
      %v6054 = vld [vmem:[#allocation4 + $0x78] sm:$0xff]
      %v6055 = vld [vmem:[#allocation4 + $0x80] sm:$0xff]
      %v6056 = vld [vmem:[#allocation4 + $0x88] sm:$0xff]
      %v6057 = vld [vmem:[#allocation4 + $0x90] sm:$0xff]
      %v6058 = vld [vmem:[#allocation4 + $0x98] sm:$0xff]
      %v6059 = vld [vmem:[#allocation4 + $0xa0] sm:$0xff]
      %v6060 = vld [vmem:[#allocation4 + $0xa8] sm:$0xff]
      %v6061 = vld [vmem:[#allocation4 + $0xb0] sm:$0xff]
      %v6062 = vld [vmem:[#allocation4 + $0xb8] sm:$0xff]
      %v6063 = vld [vmem:[#allocation4 + $0xc0] sm:$0xff]
      %v6064 = vld [vmem:[#allocation4 + $0xc8] sm:$0xff]
      %v6065 = vld [vmem:[#allocation4 + $0xd0] sm:$0xff]
      %v6066 = vld [vmem:[#allocation4 + $0xd8] sm:$0x3f]
      %v6067 = vld [vmem:[%s3] sm:$0xff]
      %v6068 = vld [vmem:[%s3 + $0x8] sm:$0xff]
      %v6069 = vld [vmem:[%s3 + $0x10] sm:$0xff]
      %v6070 = vld [vmem:[%s3 + $0x18] sm:$0xff]
      %v6071 = vld [vmem:[#allocation4 + $0x1] sm:$0xff]
      %v6072 = vld [vmem:[#allocation4 + $0x9] sm:$0xff]
      %v6073 = vld [vmem:[#allocation4 + $0x11] sm:$0xff]
      %v6074 = vld [vmem:[#allocation4 + $0x19] sm:$0xff]
      %v6075 = vld [vmem:[#allocation4 + $0x21] sm:$0xff]
      %v6076 = vld [vmem:[#allocation4 + $0x29] sm:$0xff]
      %v6077 = vld [vmem:[#allocation4 + $0x31] sm:$0xff]
      %v6078 = vld [vmem:[#allocation4 + $0x39] sm:$0xff]
      %v6079 = vld [vmem:[#allocation4 + $0x41] sm:$0xff]
      %v6080 = vld [vmem:[#allocation4 + $0x49] sm:$0xff]
      %v6081 = vld [vmem:[#allocation4 + $0x51] sm:$0xff]
      %v6082 = vld [vmem:[#allocation4 + $0x59] sm:$0xff]
      %v6083 = vld [vmem:[#allocation4 + $0x61] sm:$0xff]
      %v6084 = vld [vmem:[#allocation4 + $0x69] sm:$0xff]
      %v6085 = vld [vmem:[#allocation4 + $0x71] sm:$0xff]
      %v6086 = vld [vmem:[#allocation4 + $0x79] sm:$0xff]
      %v6087 = vld [vmem:[#allocation4 + $0x81] sm:$0xff]
      %v6088 = vld [vmem:[#allocation4 + $0x89] sm:$0xff]
      %v6089 = vld [vmem:[#allocation4 + $0x91] sm:$0xff]
      %v6090 = vld [vmem:[#allocation4 + $0x99] sm:$0xff]
      %v6091 = vld [vmem:[#allocation4 + $0xa1] sm:$0xff]
      %v6092 = vld [vmem:[#allocation4 + $0xa9] sm:$0xff]
      %v6093 = vld [vmem:[#allocation4 + $0xb1] sm:$0xff]
      %v6094 = vld [vmem:[#allocation4 + $0xb9] sm:$0xff]
      %v6095 = vld [vmem:[#allocation4 + $0xc1] sm:$0xff]
      %v6096 = vld [vmem:[#allocation4 + $0xc9] sm:$0xff]
      %v6097 = vld [vmem:[#allocation4 + $0xd1] sm:$0xff]
      %v6098 = vld [vmem:[#allocation4 + $0xd9] sm:$0x3f]
      %s6099 = scalar_lea.vmem %s3, 32
      %v6100 = vld [vmem:[%s6099] sm:$0xff]
      %v6101 = vld [vmem:[%s6099 + $0x8] sm:$0xff]
      %v6102 = vld [vmem:[%s6099 + $0x10] sm:$0xff]
      %v6103 = vld [vmem:[%s6099 + $0x18] sm:$0xff]
      %v6105 = vsel %vm957, %v6071, 0
      %v6108 = vsel %vm957, %v6072, 0
      %v6111 = vsel %vm957, %v6073, 0
      %v6114 = vsel %vm957, %v6074, 0
      %v6117 = vsel %vm957, %v6075, 0
      %v6120 = vsel %vm957, %v6076, 0
      %v6123 = vsel %vm957, %v6077, 0
      %v6126 = vsel %vm957, %v6078, 0
      %v6129 = vsel %vm957, %v6079, 0
      %v6132 = vsel %vm957, %v6080, 0
      %v6135 = vsel %vm957, %v6081, 0
      %v6138 = vsel %vm957, %v6082, 0
      %v6141 = vsel %vm957, %v6083, 0
      %v6144 = vsel %vm957, %v6084, 0
      %v6147 = vsel %vm957, %v6085, 0
      %v6150 = vsel %vm957, %v6086, 0
      %v6153 = vsel %vm957, %v6087, 0
      %v6156 = vsel %vm957, %v6088, 0
      %v6159 = vsel %vm957, %v6089, 0
      %v6162 = vsel %vm957, %v6090, 0
      %v6165 = vsel %vm957, %v6091, 0
      %v6168 = vsel %vm957, %v6092, 0
      %v6171 = vsel %vm957, %v6093, 0
      %v6174 = vsel %vm957, %v6094, 0
      %v6177 = vsel %vm957, %v6095, 0
      %v6180 = vsel %vm957, %v6096, 0
      %v6183 = vsel %vm957, %v6097, 0
      %v6186 = vsel %vm957, %v6098, 0
      %6188 = vmatprep.subr.mxu0 0.0
      %6189 = vmatpush1.msra.mxu0 0.0
      %6190 = vmatprep.subr.mxu0 0.0
      %6191 = vmatpush1.msra.mxu0 0.0
      %6192 = vmatprep.subr.mxu0 0.0
      %6193 = vmatpush1.msra.mxu0 0.0
      %6194 = vmatprep.subr.mxu0 0.0
      %6195 = vmatpush1.msra.mxu0 0.0
      %6196 = vmatprep.subr.mxu0 0.0
      %6197 = vmatpush1.msra.mxu0 0.0
      %6198 = vmatprep.subr.mxu0 0.0
      %6199 = vmatpush1.msra.mxu0 0.0
      %6200 = vmatprep.subr.mxu0 0.0
      %6201 = vmatpush1.msra.mxu0 0.0
      %6202 = vmatprep.subr.mxu0 0.0
      %6203 = vmatpush1.msra.mxu0 0.0
      %6204 = vmatprep.subr.mxu0 0.0
      %6205 = vmatpush1.msra.mxu0 0.0
      %6206 = vmatprep.subr.mxu0 0.0
      %6207 = vmatpush1.msra.mxu0 0.0
      %6208 = vmatprep.subr.mxu0 0.0
      %6209 = vmatpush1.msra.mxu0 0.0
      %6210 = vmatprep.subr.mxu0 0.0
      %6211 = vmatpush1.msra.mxu0 0.0
      %6212 = vmatprep.subr.mxu0 0.0
      %6213 = vmatpush1.msra.mxu0 %v6103
      %6214 = vmatprep.subr.mxu0 0.0
      %6215 = vmatpush1.msra.mxu0 %v6102
      %6216 = vmatprep.subr.mxu0 0.0
      %6217 = vmatpush1.msra.mxu0 %v6101
      %6218 = vmatprep.subr.mxu0 0.0
      %6219 = vmatpush1.msra.mxu0 %v6100
      %6220 = vmatprep.subr.mxu0 0.0
      %6221 = vmatpush2.msra.mxu0 0.0
      %6222 = vmatprep.subr.mxu0 0.0
      %6223 = vmatpush2.msra.mxu0 0.0
      %6224 = vmatprep.subr.mxu0 0.0
      %6225 = vmatpush2.msra.mxu0 0.0
      %6226 = vmatprep.subr.mxu0 0.0
      %6227 = vmatpush2.msra.mxu0 0.0
      %6228 = vmatprep.subr.mxu0 0.0
      %6229 = vmatpush2.msra.mxu0 0.0
      %6230 = vmatprep.subr.mxu0 0.0
      %6231 = vmatpush2.msra.mxu0 0.0
      %6232 = vmatprep.subr.mxu0 0.0
      %6233 = vmatpush2.msra.mxu0 0.0
      %6234 = vmatprep.subr.mxu0 0.0
      %6235 = vmatpush2.msra.mxu0 0.0
      %6236 = vmatprep.subr.mxu0 0.0
      %6237 = vmatpush2.msra.mxu0 0.0
      %6238 = vmatprep.subr.mxu0 0.0
      %6239 = vmatpush2.msra.mxu0 0.0
      %6240 = vmatprep.subr.mxu0 0.0
      %6241 = vmatpush2.msra.mxu0 0.0
      %6242 = vmatprep.subr.mxu0 0.0
      %6243 = vmatpush2.msra.mxu0 0.0
      %6244 = vmatprep.subr.mxu0 0.0
      %6245 = vmatpush2.msra.mxu0 0.0
      %6246 = vmatprep.subr.mxu0 0.0
      %6247 = vmatpush2.msra.mxu0 0.0
      %6248 = vmatprep.subr.mxu0 0.0
      %6249 = vmatpush2.msra.mxu0 0.0
      %6250 = vmatprep.subr.mxu0 0.0
      %6251 = vmatpush2.msra.mxu0 0.0
      %6252 = vmatprep.mubr.f32.mxu0 0.0
      %6253 = vmatmul.mubr.f32.gmra.mxu0 %v6105
      %v6254 = vpop.f32.mrf.mxu0
      %v6255 = vadd.f32 0.0, %v6254
      %v6256 = vpop.f32.mrf.mxu0
      %6257 = vmatprep.mubr.f32.mxu0 0.0
      %6258 = vmatmul.mubr.f32.gmra.mxu0 %v6108
      %v6259 = vpop.f32.mrf.mxu0
      %v6260 = vadd.f32 0.0, %v6259
      %v6261 = vpop.f32.mrf.mxu0
      %6262 = vmatprep.mubr.f32.mxu0 0.0
      %6263 = vmatmul.mubr.f32.gmra.mxu0 %v6111
      %v6264 = vpop.f32.mrf.mxu0
      %v6265 = vadd.f32 0.0, %v6264
      %v6266 = vpop.f32.mrf.mxu0
      %6267 = vmatprep.mubr.f32.mxu0 0.0
      %6268 = vmatmul.mubr.f32.gmra.mxu0 %v6114
      %v6269 = vpop.f32.mrf.mxu0
      %v6270 = vadd.f32 0.0, %v6269
      %v6271 = vpop.f32.mrf.mxu0
      %6272 = vmatprep.mubr.f32.mxu0 0.0
      %6273 = vmatmul.mubr.f32.gmra.mxu0 %v6117
      %v6274 = vpop.f32.mrf.mxu0
      %v6275 = vadd.f32 0.0, %v6274
      %v6276 = vpop.f32.mrf.mxu0
      %6277 = vmatprep.mubr.f32.mxu0 0.0
      %6278 = vmatmul.mubr.f32.gmra.mxu0 %v6120
      %v6279 = vpop.f32.mrf.mxu0
      %v6280 = vadd.f32 0.0, %v6279
      %v6281 = vpop.f32.mrf.mxu0
      %6282 = vmatprep.mubr.f32.mxu0 0.0
      %6283 = vmatmul.mubr.f32.gmra.mxu0 %v6123
      %v6284 = vpop.f32.mrf.mxu0
      %v6285 = vadd.f32 0.0, %v6284
      %v6286 = vpop.f32.mrf.mxu0
      %6287 = vmatprep.mubr.f32.mxu0 0.0
      %6288 = vmatmul.mubr.f32.gmra.mxu0 %v6126
      %v6289 = vpop.f32.mrf.mxu0
      %v6290 = vadd.f32 0.0, %v6289
      %v6291 = vpop.f32.mrf.mxu0
      %6292 = vmatprep.mubr.f32.mxu0 0.0
      %6293 = vmatmul.mubr.f32.gmra.mxu0 %v6129
      %v6294 = vpop.f32.mrf.mxu0
      %v6295 = vadd.f32 0.0, %v6294
      %v6296 = vpop.f32.mrf.mxu0
      %6297 = vmatprep.mubr.f32.mxu0 0.0
      %6298 = vmatmul.mubr.f32.gmra.mxu0 %v6132
      %v6299 = vpop.f32.mrf.mxu0
      %v6300 = vadd.f32 0.0, %v6299
      %v6301 = vpop.f32.mrf.mxu0
      %6302 = vmatprep.mubr.f32.mxu0 0.0
      %6303 = vmatmul.mubr.f32.gmra.mxu0 %v6135
      %v6304 = vpop.f32.mrf.mxu0
      %v6305 = vadd.f32 0.0, %v6304
      %v6306 = vpop.f32.mrf.mxu0
      %6307 = vmatprep.mubr.f32.mxu0 0.0
      %6308 = vmatmul.mubr.f32.gmra.mxu0 %v6138
      %v6309 = vpop.f32.mrf.mxu0
      %v6310 = vadd.f32 0.0, %v6309
      %v6311 = vpop.f32.mrf.mxu0
      %6312 = vmatprep.mubr.f32.mxu0 0.0
      %6313 = vmatmul.mubr.f32.gmra.mxu0 %v6141
      %v6314 = vpop.f32.mrf.mxu0
      %v6315 = vadd.f32 0.0, %v6314
      %v6316 = vpop.f32.mrf.mxu0
      %6317 = vmatprep.mubr.f32.mxu0 0.0
      %6318 = vmatmul.mubr.f32.gmra.mxu0 %v6144
      %v6319 = vpop.f32.mrf.mxu0
      %v6320 = vadd.f32 0.0, %v6319
      %v6321 = vpop.f32.mrf.mxu0
      %6322 = vmatprep.mubr.f32.mxu0 0.0
      %6323 = vmatmul.mubr.f32.gmra.mxu0 %v6147
      %v6324 = vpop.f32.mrf.mxu0
      %v6325 = vadd.f32 0.0, %v6324
      %v6326 = vpop.f32.mrf.mxu0
      %6327 = vmatprep.mubr.f32.mxu0 0.0
      %6328 = vmatmul.mubr.f32.gmra.mxu0 %v6150
      %v6329 = vpop.f32.mrf.mxu0
      %v6330 = vadd.f32 0.0, %v6329
      %v6331 = vpop.f32.mrf.mxu0
      %6332 = vmatprep.mubr.f32.mxu0 0.0
      %6333 = vmatmul.mubr.f32.gmra.mxu0 %v6153
      %v6334 = vpop.f32.mrf.mxu0
      %v6335 = vadd.f32 0.0, %v6334
      %v6336 = vpop.f32.mrf.mxu0
      %6337 = vmatprep.mubr.f32.mxu0 0.0
      %6338 = vmatmul.mubr.f32.gmra.mxu0 %v6156
      %v6339 = vpop.f32.mrf.mxu0
      %v6340 = vadd.f32 0.0, %v6339
      %v6341 = vpop.f32.mrf.mxu0
      %6342 = vmatprep.mubr.f32.mxu0 0.0
      %6343 = vmatmul.mubr.f32.gmra.mxu0 %v6159
      %v6344 = vpop.f32.mrf.mxu0
      %v6345 = vadd.f32 0.0, %v6344
      %v6346 = vpop.f32.mrf.mxu0
      %6347 = vmatprep.mubr.f32.mxu0 0.0
      %6348 = vmatmul.mubr.f32.gmra.mxu0 %v6162
      %v6349 = vpop.f32.mrf.mxu0
      %v6350 = vadd.f32 0.0, %v6349
      %v6351 = vpop.f32.mrf.mxu0
      %6352 = vmatprep.mubr.f32.mxu0 0.0
      %6353 = vmatmul.mubr.f32.gmra.mxu0 %v6165
      %v6354 = vpop.f32.mrf.mxu0
      %v6355 = vadd.f32 0.0, %v6354
      %v6356 = vpop.f32.mrf.mxu0
      %6357 = vmatprep.mubr.f32.mxu0 0.0
      %6358 = vmatmul.mubr.f32.gmra.mxu0 %v6168
      %v6359 = vpop.f32.mrf.mxu0
      %v6360 = vadd.f32 0.0, %v6359
      %v6361 = vpop.f32.mrf.mxu0
      %6362 = vmatprep.mubr.f32.mxu0 0.0
      %6363 = vmatmul.mubr.f32.gmra.mxu0 %v6171
      %v6364 = vpop.f32.mrf.mxu0
      %v6365 = vadd.f32 0.0, %v6364
      %v6366 = vpop.f32.mrf.mxu0
      %6367 = vmatprep.mubr.f32.mxu0 0.0
      %6368 = vmatmul.mubr.f32.gmra.mxu0 %v6174
      %v6369 = vpop.f32.mrf.mxu0
      %v6370 = vadd.f32 0.0, %v6369
      %v6371 = vpop.f32.mrf.mxu0
      %6372 = vmatprep.mubr.f32.mxu0 0.0
      %6373 = vmatmul.mubr.f32.gmra.mxu0 %v6177
      %v6374 = vpop.f32.mrf.mxu0
      %v6375 = vadd.f32 0.0, %v6374
      %v6376 = vpop.f32.mrf.mxu0
      %6377 = vmatprep.mubr.f32.mxu0 0.0
      %6378 = vmatmul.mubr.f32.gmra.mxu0 %v6180
      %v6379 = vpop.f32.mrf.mxu0
      %v6380 = vadd.f32 0.0, %v6379
      %v6381 = vpop.f32.mrf.mxu0
      %6382 = vmatprep.mubr.f32.mxu0 0.0
      %6383 = vmatmul.mubr.f32.gmra.mxu0 %v6183
      %v6384 = vpop.f32.mrf.mxu0
      %v6385 = vadd.f32 0.0, %v6384
      %v6386 = vpop.f32.mrf.mxu0
      %6387 = vmatprep.mubr.f32.mxu0 0.0
      %6388 = vmatmul.mubr.f32.gmra.mxu0 %v6186
      %v6389 = vpop.f32.mrf.mxu0
      %v6390 = vadd.f32 0.0, %v6389
      %v6391 = vpop.f32.mrf.mxu0
      %6392 = vdwg.mxu0
      %v6394 = vsel %vm957, %v6039, 0
      %v6397 = vsel %vm957, %v6040, 0
      %v6400 = vsel %vm957, %v6041, 0
      %v6403 = vsel %vm957, %v6042, 0
      %v6406 = vsel %vm957, %v6043, 0
      %v6409 = vsel %vm957, %v6044, 0
      %v6412 = vsel %vm957, %v6045, 0
      %v6415 = vsel %vm957, %v6046, 0
      %v6418 = vsel %vm957, %v6047, 0
      %v6421 = vsel %vm957, %v6048, 0
      %v6424 = vsel %vm957, %v6049, 0
      %v6427 = vsel %vm957, %v6050, 0
      %v6430 = vsel %vm957, %v6051, 0
      %v6433 = vsel %vm957, %v6052, 0
      %v6436 = vsel %vm957, %v6053, 0
      %v6439 = vsel %vm957, %v6054, 0
      %v6442 = vsel %vm957, %v6055, 0
      %v6445 = vsel %vm957, %v6056, 0
      %v6448 = vsel %vm957, %v6057, 0
      %v6451 = vsel %vm957, %v6058, 0
      %v6454 = vsel %vm957, %v6059, 0
      %v6457 = vsel %vm957, %v6060, 0
      %v6460 = vsel %vm957, %v6061, 0
      %v6463 = vsel %vm957, %v6062, 0
      %v6466 = vsel %vm957, %v6063, 0
      %v6469 = vsel %vm957, %v6064, 0
      %v6472 = vsel %vm957, %v6065, 0
      %v6475 = vsel %vm957, %v6066, 0
      %6477 = vmatprep.subr.mxu0 0.0
      %6478 = vmatpush1.msra.mxu0 0.0
      %6479 = vmatprep.subr.mxu0 0.0
      %6480 = vmatpush1.msra.mxu0 0.0
      %6481 = vmatprep.subr.mxu0 0.0
      %6482 = vmatpush1.msra.mxu0 0.0
      %6483 = vmatprep.subr.mxu0 0.0
      %6484 = vmatpush1.msra.mxu0 0.0
      %6485 = vmatprep.subr.mxu0 0.0
      %6486 = vmatpush1.msra.mxu0 0.0
      %6487 = vmatprep.subr.mxu0 0.0
      %6488 = vmatpush1.msra.mxu0 0.0
      %6489 = vmatprep.subr.mxu0 0.0
      %6490 = vmatpush1.msra.mxu0 0.0
      %6491 = vmatprep.subr.mxu0 0.0
      %6492 = vmatpush1.msra.mxu0 0.0
      %6493 = vmatprep.subr.mxu0 0.0
      %6494 = vmatpush1.msra.mxu0 0.0
      %6495 = vmatprep.subr.mxu0 0.0
      %6496 = vmatpush1.msra.mxu0 0.0
      %6497 = vmatprep.subr.mxu0 0.0
      %6498 = vmatpush1.msra.mxu0 0.0
      %6499 = vmatprep.subr.mxu0 0.0
      %6500 = vmatpush1.msra.mxu0 0.0
      %6501 = vmatprep.subr.mxu0 0.0
      %6502 = vmatpush1.msra.mxu0 %v6070
      %6503 = vmatprep.subr.mxu0 0.0
      %6504 = vmatpush1.msra.mxu0 %v6069
      %6505 = vmatprep.subr.mxu0 0.0
      %6506 = vmatpush1.msra.mxu0 %v6068
      %6507 = vmatprep.subr.mxu0 0.0
      %6508 = vmatpush1.msra.mxu0 %v6067
      %6509 = vmatprep.subr.mxu0 0.0
      %6510 = vmatpush2.msra.mxu0 0.0
      %6511 = vmatprep.subr.mxu0 0.0
      %6512 = vmatpush2.msra.mxu0 0.0
      %6513 = vmatprep.subr.mxu0 0.0
      %6514 = vmatpush2.msra.mxu0 0.0
      %6515 = vmatprep.subr.mxu0 0.0
      %6516 = vmatpush2.msra.mxu0 0.0
      %6517 = vmatprep.subr.mxu0 0.0
      %6518 = vmatpush2.msra.mxu0 0.0
      %6519 = vmatprep.subr.mxu0 0.0
      %6520 = vmatpush2.msra.mxu0 0.0
      %6521 = vmatprep.subr.mxu0 0.0
      %6522 = vmatpush2.msra.mxu0 0.0
      %6523 = vmatprep.subr.mxu0 0.0
      %6524 = vmatpush2.msra.mxu0 0.0
      %6525 = vmatprep.subr.mxu0 0.0
      %6526 = vmatpush2.msra.mxu0 0.0
      %6527 = vmatprep.subr.mxu0 0.0
      %6528 = vmatpush2.msra.mxu0 0.0
      %6529 = vmatprep.subr.mxu0 0.0
      %6530 = vmatpush2.msra.mxu0 0.0
      %6531 = vmatprep.subr.mxu0 0.0
      %6532 = vmatpush2.msra.mxu0 0.0
      %6533 = vmatprep.subr.mxu0 0.0
      %6534 = vmatpush2.msra.mxu0 0.0
      %6535 = vmatprep.subr.mxu0 0.0
      %6536 = vmatpush2.msra.mxu0 0.0
      %6537 = vmatprep.subr.mxu0 0.0
      %6538 = vmatpush2.msra.mxu0 0.0
      %6539 = vmatprep.subr.mxu0 0.0
      %6540 = vmatpush2.msra.mxu0 0.0
      %6541 = vmatprep.mubr.f32.mxu0 0.0
      %6542 = vmatmul.mubr.f32.gmra.mxu0 %v6394
      %v6543 = vpop.f32.mrf.mxu0
      %v6544 = vadd.f32 %v6255, %v6543
      %v6545 = vpop.f32.mrf.mxu0
      %6546 = vmatprep.mubr.f32.mxu0 0.0
      %6547 = vmatmul.mubr.f32.gmra.mxu0 %v6397
      %v6548 = vpop.f32.mrf.mxu0
      %v6549 = vadd.f32 %v6260, %v6548
      %v6550 = vpop.f32.mrf.mxu0
      %6551 = vmatprep.mubr.f32.mxu0 0.0
      %6552 = vmatmul.mubr.f32.gmra.mxu0 %v6400
      %v6553 = vpop.f32.mrf.mxu0
      %v6554 = vadd.f32 %v6265, %v6553
      %v6555 = vpop.f32.mrf.mxu0
      %6556 = vmatprep.mubr.f32.mxu0 0.0
      %6557 = vmatmul.mubr.f32.gmra.mxu0 %v6403
      %v6558 = vpop.f32.mrf.mxu0
      %v6559 = vadd.f32 %v6270, %v6558
      %v6560 = vpop.f32.mrf.mxu0
      %6561 = vmatprep.mubr.f32.mxu0 0.0
      %6562 = vmatmul.mubr.f32.gmra.mxu0 %v6406
      %v6563 = vpop.f32.mrf.mxu0
      %v6564 = vadd.f32 %v6275, %v6563
      %v6565 = vpop.f32.mrf.mxu0
      %6566 = vmatprep.mubr.f32.mxu0 0.0
      %6567 = vmatmul.mubr.f32.gmra.mxu0 %v6409
      %v6568 = vpop.f32.mrf.mxu0
      %v6569 = vadd.f32 %v6280, %v6568
      %v6570 = vpop.f32.mrf.mxu0
      %6571 = vmatprep.mubr.f32.mxu0 0.0
      %6572 = vmatmul.mubr.f32.gmra.mxu0 %v6412
      %v6573 = vpop.f32.mrf.mxu0
      %v6574 = vadd.f32 %v6285, %v6573
      %v6575 = vpop.f32.mrf.mxu0
      %6576 = vmatprep.mubr.f32.mxu0 0.0
      %6577 = vmatmul.mubr.f32.gmra.mxu0 %v6415
      %v6578 = vpop.f32.mrf.mxu0
      %v6579 = vadd.f32 %v6290, %v6578
      %v6580 = vpop.f32.mrf.mxu0
      %6581 = vmatprep.mubr.f32.mxu0 0.0
      %6582 = vmatmul.mubr.f32.gmra.mxu0 %v6418
      %v6583 = vpop.f32.mrf.mxu0
      %v6584 = vadd.f32 %v6295, %v6583
      %v6585 = vpop.f32.mrf.mxu0
      %6586 = vmatprep.mubr.f32.mxu0 0.0
      %6587 = vmatmul.mubr.f32.gmra.mxu0 %v6421
      %v6588 = vpop.f32.mrf.mxu0
      %v6589 = vadd.f32 %v6300, %v6588
      %v6590 = vpop.f32.mrf.mxu0
      %6591 = vmatprep.mubr.f32.mxu0 0.0
      %6592 = vmatmul.mubr.f32.gmra.mxu0 %v6424
      %v6593 = vpop.f32.mrf.mxu0
      %v6594 = vadd.f32 %v6305, %v6593
      %v6595 = vpop.f32.mrf.mxu0
      %6596 = vmatprep.mubr.f32.mxu0 0.0
      %6597 = vmatmul.mubr.f32.gmra.mxu0 %v6427
      %v6598 = vpop.f32.mrf.mxu0
      %v6599 = vadd.f32 %v6310, %v6598
      %v6600 = vpop.f32.mrf.mxu0
      %6601 = vmatprep.mubr.f32.mxu0 0.0
      %6602 = vmatmul.mubr.f32.gmra.mxu0 %v6430
      %v6603 = vpop.f32.mrf.mxu0
      %v6604 = vadd.f32 %v6315, %v6603
      %v6605 = vpop.f32.mrf.mxu0
      %6606 = vmatprep.mubr.f32.mxu0 0.0
      %6607 = vmatmul.mubr.f32.gmra.mxu0 %v6433
      %v6608 = vpop.f32.mrf.mxu0
      %v6609 = vadd.f32 %v6320, %v6608
      %v6610 = vpop.f32.mrf.mxu0
      %6611 = vmatprep.mubr.f32.mxu0 0.0
      %6612 = vmatmul.mubr.f32.gmra.mxu0 %v6436
      %v6613 = vpop.f32.mrf.mxu0
      %v6614 = vadd.f32 %v6325, %v6613
      %v6615 = vpop.f32.mrf.mxu0
      %6616 = vmatprep.mubr.f32.mxu0 0.0
      %6617 = vmatmul.mubr.f32.gmra.mxu0 %v6439
      %v6618 = vpop.f32.mrf.mxu0
      %v6619 = vadd.f32 %v6330, %v6618
      %v6620 = vpop.f32.mrf.mxu0
      %6621 = vmatprep.mubr.f32.mxu0 0.0
      %6622 = vmatmul.mubr.f32.gmra.mxu0 %v6442
      %v6623 = vpop.f32.mrf.mxu0
      %v6624 = vadd.f32 %v6335, %v6623
      %v6625 = vpop.f32.mrf.mxu0
      %6626 = vmatprep.mubr.f32.mxu0 0.0
      %6627 = vmatmul.mubr.f32.gmra.mxu0 %v6445
      %v6628 = vpop.f32.mrf.mxu0
      %v6629 = vadd.f32 %v6340, %v6628
      %v6630 = vpop.f32.mrf.mxu0
      %6631 = vmatprep.mubr.f32.mxu0 0.0
      %6632 = vmatmul.mubr.f32.gmra.mxu0 %v6448
      %v6633 = vpop.f32.mrf.mxu0
      %v6634 = vadd.f32 %v6345, %v6633
      %v6635 = vpop.f32.mrf.mxu0
      %6636 = vmatprep.mubr.f32.mxu0 0.0
      %6637 = vmatmul.mubr.f32.gmra.mxu0 %v6451
      %v6638 = vpop.f32.mrf.mxu0
      %v6639 = vadd.f32 %v6350, %v6638
      %v6640 = vpop.f32.mrf.mxu0
      %6641 = vmatprep.mubr.f32.mxu0 0.0
      %6642 = vmatmul.mubr.f32.gmra.mxu0 %v6454
      %v6643 = vpop.f32.mrf.mxu0
      %v6644 = vadd.f32 %v6355, %v6643
      %v6645 = vpop.f32.mrf.mxu0
      %6646 = vmatprep.mubr.f32.mxu0 0.0
      %6647 = vmatmul.mubr.f32.gmra.mxu0 %v6457
      %v6648 = vpop.f32.mrf.mxu0
      %v6649 = vadd.f32 %v6360, %v6648
      %v6650 = vpop.f32.mrf.mxu0
      %6651 = vmatprep.mubr.f32.mxu0 0.0
      %6652 = vmatmul.mubr.f32.gmra.mxu0 %v6460
      %v6653 = vpop.f32.mrf.mxu0
      %v6654 = vadd.f32 %v6365, %v6653
      %v6655 = vpop.f32.mrf.mxu0
      %6656 = vmatprep.mubr.f32.mxu0 0.0
      %6657 = vmatmul.mubr.f32.gmra.mxu0 %v6463
      %v6658 = vpop.f32.mrf.mxu0
      %v6659 = vadd.f32 %v6370, %v6658
      %v6660 = vpop.f32.mrf.mxu0
      %6661 = vmatprep.mubr.f32.mxu0 0.0
      %6662 = vmatmul.mubr.f32.gmra.mxu0 %v6466
      %v6663 = vpop.f32.mrf.mxu0
      %v6664 = vadd.f32 %v6375, %v6663
      %v6665 = vpop.f32.mrf.mxu0
      %6666 = vmatprep.mubr.f32.mxu0 0.0
      %6667 = vmatmul.mubr.f32.gmra.mxu0 %v6469
      %v6668 = vpop.f32.mrf.mxu0
      %v6669 = vadd.f32 %v6380, %v6668
      %v6670 = vpop.f32.mrf.mxu0
      %6671 = vmatprep.mubr.f32.mxu0 0.0
      %6672 = vmatmul.mubr.f32.gmra.mxu0 %v6472
      %v6673 = vpop.f32.mrf.mxu0
      %v6674 = vadd.f32 %v6385, %v6673
      %v6675 = vpop.f32.mrf.mxu0
      %6676 = vmatprep.mubr.f32.mxu0 0.0
      %6677 = vmatmul.mubr.f32.gmra.mxu0 %v6475
      %v6678 = vpop.f32.mrf.mxu0
      %v6679 = vadd.f32 %v6390, %v6678
      %v6680 = vpop.f32.mrf.mxu0
      %6681 = vdwg.mxu0
      %v6682 = vld [vmem:[#allocation4 + $0x2] sm:$0xff]
      %v6683 = vld [vmem:[#allocation4 + $0xa] sm:$0xff]
      %v6684 = vld [vmem:[#allocation4 + $0x12] sm:$0xff]
      %v6685 = vld [vmem:[#allocation4 + $0x1a] sm:$0xff]
      %v6686 = vld [vmem:[#allocation4 + $0x22] sm:$0xff]
      %v6687 = vld [vmem:[#allocation4 + $0x2a] sm:$0xff]
      %v6688 = vld [vmem:[#allocation4 + $0x32] sm:$0xff]
      %v6689 = vld [vmem:[#allocation4 + $0x3a] sm:$0xff]
      %v6690 = vld [vmem:[#allocation4 + $0x42] sm:$0xff]
      %v6691 = vld [vmem:[#allocation4 + $0x4a] sm:$0xff]
      %v6692 = vld [vmem:[#allocation4 + $0x52] sm:$0xff]
      %v6693 = vld [vmem:[#allocation4 + $0x5a] sm:$0xff]
      %v6694 = vld [vmem:[#allocation4 + $0x62] sm:$0xff]
      %v6695 = vld [vmem:[#allocation4 + $0x6a] sm:$0xff]
      %v6696 = vld [vmem:[#allocation4 + $0x72] sm:$0xff]
      %v6697 = vld [vmem:[#allocation4 + $0x7a] sm:$0xff]
      %v6698 = vld [vmem:[#allocation4 + $0x82] sm:$0xff]
      %v6699 = vld [vmem:[#allocation4 + $0x8a] sm:$0xff]
      %v6700 = vld [vmem:[#allocation4 + $0x92] sm:$0xff]
      %v6701 = vld [vmem:[#allocation4 + $0x9a] sm:$0xff]
      %v6702 = vld [vmem:[#allocation4 + $0xa2] sm:$0xff]
      %v6703 = vld [vmem:[#allocation4 + $0xaa] sm:$0xff]
      %v6704 = vld [vmem:[#allocation4 + $0xb2] sm:$0xff]
      %v6705 = vld [vmem:[#allocation4 + $0xba] sm:$0xff]
      %v6706 = vld [vmem:[#allocation4 + $0xc2] sm:$0xff]
      %v6707 = vld [vmem:[#allocation4 + $0xca] sm:$0xff]
      %v6708 = vld [vmem:[#allocation4 + $0xd2] sm:$0xff]
      %v6709 = vld [vmem:[#allocation4 + $0xda] sm:$0x3f]
      %s6710 = scalar_lea.vmem %s3, 64
      %v6711 = vld [vmem:[%s6710] sm:$0xff]
      %v6712 = vld [vmem:[%s6710 + $0x8] sm:$0xff]
      %v6713 = vld [vmem:[%s6710 + $0x10] sm:$0xff]
      %v6714 = vld [vmem:[%s6710 + $0x18] sm:$0xff]
      %v6716 = vsel %vm957, %v6682, 0
      %v6719 = vsel %vm957, %v6683, 0
      %v6722 = vsel %vm957, %v6684, 0
      %v6725 = vsel %vm957, %v6685, 0
      %v6728 = vsel %vm957, %v6686, 0
      %v6731 = vsel %vm957, %v6687, 0
      %v6734 = vsel %vm957, %v6688, 0
      %v6737 = vsel %vm957, %v6689, 0
      %v6740 = vsel %vm957, %v6690, 0
      %v6743 = vsel %vm957, %v6691, 0
      %v6746 = vsel %vm957, %v6692, 0
      %v6749 = vsel %vm957, %v6693, 0
      %v6752 = vsel %vm957, %v6694, 0
      %v6755 = vsel %vm957, %v6695, 0
      %v6758 = vsel %vm957, %v6696, 0
      %v6761 = vsel %vm957, %v6697, 0
      %v6764 = vsel %vm957, %v6698, 0
      %v6767 = vsel %vm957, %v6699, 0
      %v6770 = vsel %vm957, %v6700, 0
      %v6773 = vsel %vm957, %v6701, 0
      %v6776 = vsel %vm957, %v6702, 0
      %v6779 = vsel %vm957, %v6703, 0
      %v6782 = vsel %vm957, %v6704, 0
      %v6785 = vsel %vm957, %v6705, 0
      %v6788 = vsel %vm957, %v6706, 0
      %v6791 = vsel %vm957, %v6707, 0
      %v6794 = vsel %vm957, %v6708, 0
      %v6797 = vsel %vm957, %v6709, 0
      %6799 = vmatprep.subr.mxu0 0.0
      %6800 = vmatpush1.msra.mxu0 0.0
      %6801 = vmatprep.subr.mxu0 0.0
      %6802 = vmatpush1.msra.mxu0 0.0
      %6803 = vmatprep.subr.mxu0 0.0
      %6804 = vmatpush1.msra.mxu0 0.0
      %6805 = vmatprep.subr.mxu0 0.0
      %6806 = vmatpush1.msra.mxu0 0.0
      %6807 = vmatprep.subr.mxu0 0.0
      %6808 = vmatpush1.msra.mxu0 0.0
      %6809 = vmatprep.subr.mxu0 0.0
      %6810 = vmatpush1.msra.mxu0 0.0
      %6811 = vmatprep.subr.mxu0 0.0
      %6812 = vmatpush1.msra.mxu0 0.0
      %6813 = vmatprep.subr.mxu0 0.0
      %6814 = vmatpush1.msra.mxu0 0.0
      %6815 = vmatprep.subr.mxu0 0.0
      %6816 = vmatpush1.msra.mxu0 0.0
      %6817 = vmatprep.subr.mxu0 0.0
      %6818 = vmatpush1.msra.mxu0 0.0
      %6819 = vmatprep.subr.mxu0 0.0
      %6820 = vmatpush1.msra.mxu0 0.0
      %6821 = vmatprep.subr.mxu0 0.0
      %6822 = vmatpush1.msra.mxu0 0.0
      %6823 = vmatprep.subr.mxu0 0.0
      %6824 = vmatpush1.msra.mxu0 %v6714
      %6825 = vmatprep.subr.mxu0 0.0
      %6826 = vmatpush1.msra.mxu0 %v6713
      %6827 = vmatprep.subr.mxu0 0.0
      %6828 = vmatpush1.msra.mxu0 %v6712
      %6829 = vmatprep.subr.mxu0 0.0
      %6830 = vmatpush1.msra.mxu0 %v6711
      %6831 = vmatprep.subr.mxu0 0.0
      %6832 = vmatpush2.msra.mxu0 0.0
      %6833 = vmatprep.subr.mxu0 0.0
      %6834 = vmatpush2.msra.mxu0 0.0
      %6835 = vmatprep.subr.mxu0 0.0
      %6836 = vmatpush2.msra.mxu0 0.0
      %6837 = vmatprep.subr.mxu0 0.0
      %6838 = vmatpush2.msra.mxu0 0.0
      %6839 = vmatprep.subr.mxu0 0.0
      %6840 = vmatpush2.msra.mxu0 0.0
      %6841 = vmatprep.subr.mxu0 0.0
      %6842 = vmatpush2.msra.mxu0 0.0
      %6843 = vmatprep.subr.mxu0 0.0
      %6844 = vmatpush2.msra.mxu0 0.0
      %6845 = vmatprep.subr.mxu0 0.0
      %6846 = vmatpush2.msra.mxu0 0.0
      %6847 = vmatprep.subr.mxu0 0.0
      %6848 = vmatpush2.msra.mxu0 0.0
      %6849 = vmatprep.subr.mxu0 0.0
      %6850 = vmatpush2.msra.mxu0 0.0
      %6851 = vmatprep.subr.mxu0 0.0
      %6852 = vmatpush2.msra.mxu0 0.0
      %6853 = vmatprep.subr.mxu0 0.0
      %6854 = vmatpush2.msra.mxu0 0.0
      %6855 = vmatprep.subr.mxu0 0.0
      %6856 = vmatpush2.msra.mxu0 0.0
      %6857 = vmatprep.subr.mxu0 0.0
      %6858 = vmatpush2.msra.mxu0 0.0
      %6859 = vmatprep.subr.mxu0 0.0
      %6860 = vmatpush2.msra.mxu0 0.0
      %6861 = vmatprep.subr.mxu0 0.0
      %6862 = vmatpush2.msra.mxu0 0.0
      %6863 = vmatprep.mubr.f32.mxu0 0.0
      %6864 = vmatmul.mubr.f32.gmra.mxu0 %v6716
      %v6865 = vpop.f32.mrf.mxu0
      %v6866 = vadd.f32 0.0, %v6865
      %v6867 = vpop.f32.mrf.mxu0
      %6868 = vmatprep.mubr.f32.mxu0 0.0
      %6869 = vmatmul.mubr.f32.gmra.mxu0 %v6719
      %v6870 = vpop.f32.mrf.mxu0
      %v6871 = vadd.f32 0.0, %v6870
      %v6872 = vpop.f32.mrf.mxu0
      %6873 = vmatprep.mubr.f32.mxu0 0.0
      %6874 = vmatmul.mubr.f32.gmra.mxu0 %v6722
      %v6875 = vpop.f32.mrf.mxu0
      %v6876 = vadd.f32 0.0, %v6875
      %v6877 = vpop.f32.mrf.mxu0
      %6878 = vmatprep.mubr.f32.mxu0 0.0
      %6879 = vmatmul.mubr.f32.gmra.mxu0 %v6725
      %v6880 = vpop.f32.mrf.mxu0
      %v6881 = vadd.f32 0.0, %v6880
      %v6882 = vpop.f32.mrf.mxu0
      %6883 = vmatprep.mubr.f32.mxu0 0.0
      %6884 = vmatmul.mubr.f32.gmra.mxu0 %v6728
      %v6885 = vpop.f32.mrf.mxu0
      %v6886 = vadd.f32 0.0, %v6885
      %v6887 = vpop.f32.mrf.mxu0
      %6888 = vmatprep.mubr.f32.mxu0 0.0
      %6889 = vmatmul.mubr.f32.gmra.mxu0 %v6731
      %v6890 = vpop.f32.mrf.mxu0
      %v6891 = vadd.f32 0.0, %v6890
      %v6892 = vpop.f32.mrf.mxu0
      %6893 = vmatprep.mubr.f32.mxu0 0.0
      %6894 = vmatmul.mubr.f32.gmra.mxu0 %v6734
      %v6895 = vpop.f32.mrf.mxu0
      %v6896 = vadd.f32 0.0, %v6895
      %v6897 = vpop.f32.mrf.mxu0
      %6898 = vmatprep.mubr.f32.mxu0 0.0
      %6899 = vmatmul.mubr.f32.gmra.mxu0 %v6737
      %v6900 = vpop.f32.mrf.mxu0
      %v6901 = vadd.f32 0.0, %v6900
      %v6902 = vpop.f32.mrf.mxu0
      %6903 = vmatprep.mubr.f32.mxu0 0.0
      %6904 = vmatmul.mubr.f32.gmra.mxu0 %v6740
      %v6905 = vpop.f32.mrf.mxu0
      %v6906 = vadd.f32 0.0, %v6905
      %v6907 = vpop.f32.mrf.mxu0
      %6908 = vmatprep.mubr.f32.mxu0 0.0
      %6909 = vmatmul.mubr.f32.gmra.mxu0 %v6743
      %v6910 = vpop.f32.mrf.mxu0
      %v6911 = vadd.f32 0.0, %v6910
      %v6912 = vpop.f32.mrf.mxu0
      %6913 = vmatprep.mubr.f32.mxu0 0.0
      %6914 = vmatmul.mubr.f32.gmra.mxu0 %v6746
      %v6915 = vpop.f32.mrf.mxu0
      %v6916 = vadd.f32 0.0, %v6915
      %v6917 = vpop.f32.mrf.mxu0
      %6918 = vmatprep.mubr.f32.mxu0 0.0
      %6919 = vmatmul.mubr.f32.gmra.mxu0 %v6749
      %v6920 = vpop.f32.mrf.mxu0
      %v6921 = vadd.f32 0.0, %v6920
      %v6922 = vpop.f32.mrf.mxu0
      %6923 = vmatprep.mubr.f32.mxu0 0.0
      %6924 = vmatmul.mubr.f32.gmra.mxu0 %v6752
      %v6925 = vpop.f32.mrf.mxu0
      %v6926 = vadd.f32 0.0, %v6925
      %v6927 = vpop.f32.mrf.mxu0
      %6928 = vmatprep.mubr.f32.mxu0 0.0
      %6929 = vmatmul.mubr.f32.gmra.mxu0 %v6755
      %v6930 = vpop.f32.mrf.mxu0
      %v6931 = vadd.f32 0.0, %v6930
      %v6932 = vpop.f32.mrf.mxu0
      %6933 = vmatprep.mubr.f32.mxu0 0.0
      %6934 = vmatmul.mubr.f32.gmra.mxu0 %v6758
      %v6935 = vpop.f32.mrf.mxu0
      %v6936 = vadd.f32 0.0, %v6935
      %v6937 = vpop.f32.mrf.mxu0
      %6938 = vmatprep.mubr.f32.mxu0 0.0
      %6939 = vmatmul.mubr.f32.gmra.mxu0 %v6761
      %v6940 = vpop.f32.mrf.mxu0
      %v6941 = vadd.f32 0.0, %v6940
      %v6942 = vpop.f32.mrf.mxu0
      %6943 = vmatprep.mubr.f32.mxu0 0.0
      %6944 = vmatmul.mubr.f32.gmra.mxu0 %v6764
      %v6945 = vpop.f32.mrf.mxu0
      %v6946 = vadd.f32 0.0, %v6945
      %v6947 = vpop.f32.mrf.mxu0
      %6948 = vmatprep.mubr.f32.mxu0 0.0
      %6949 = vmatmul.mubr.f32.gmra.mxu0 %v6767
      %v6950 = vpop.f32.mrf.mxu0
      %v6951 = vadd.f32 0.0, %v6950
      %v6952 = vpop.f32.mrf.mxu0
      %6953 = vmatprep.mubr.f32.mxu0 0.0
      %6954 = vmatmul.mubr.f32.gmra.mxu0 %v6770
      %v6955 = vpop.f32.mrf.mxu0
      %v6956 = vadd.f32 0.0, %v6955
      %v6957 = vpop.f32.mrf.mxu0
      %6958 = vmatprep.mubr.f32.mxu0 0.0
      %6959 = vmatmul.mubr.f32.gmra.mxu0 %v6773
      %v6960 = vpop.f32.mrf.mxu0
      %v6961 = vadd.f32 0.0, %v6960
      %v6962 = vpop.f32.mrf.mxu0
      %6963 = vmatprep.mubr.f32.mxu0 0.0
      %6964 = vmatmul.mubr.f32.gmra.mxu0 %v6776
      %v6965 = vpop.f32.mrf.mxu0
      %v6966 = vadd.f32 0.0, %v6965
      %v6967 = vpop.f32.mrf.mxu0
      %6968 = vmatprep.mubr.f32.mxu0 0.0
      %6969 = vmatmul.mubr.f32.gmra.mxu0 %v6779
      %v6970 = vpop.f32.mrf.mxu0
      %v6971 = vadd.f32 0.0, %v6970
      %v6972 = vpop.f32.mrf.mxu0
      %6973 = vmatprep.mubr.f32.mxu0 0.0
      %6974 = vmatmul.mubr.f32.gmra.mxu0 %v6782
      %v6975 = vpop.f32.mrf.mxu0
      %v6976 = vadd.f32 0.0, %v6975
      %v6977 = vpop.f32.mrf.mxu0
      %6978 = vmatprep.mubr.f32.mxu0 0.0
      %6979 = vmatmul.mubr.f32.gmra.mxu0 %v6785
      %v6980 = vpop.f32.mrf.mxu0
      %v6981 = vadd.f32 0.0, %v6980
      %v6982 = vpop.f32.mrf.mxu0
      %6983 = vmatprep.mubr.f32.mxu0 0.0
      %6984 = vmatmul.mubr.f32.gmra.mxu0 %v6788
      %v6985 = vpop.f32.mrf.mxu0
      %v6986 = vadd.f32 0.0, %v6985
      %v6987 = vpop.f32.mrf.mxu0
      %6988 = vmatprep.mubr.f32.mxu0 0.0
      %6989 = vmatmul.mubr.f32.gmra.mxu0 %v6791
      %v6990 = vpop.f32.mrf.mxu0
      %v6991 = vadd.f32 0.0, %v6990
      %v6992 = vpop.f32.mrf.mxu0
      %6993 = vmatprep.mubr.f32.mxu0 0.0
      %6994 = vmatmul.mubr.f32.gmra.mxu0 %v6794
      %v6995 = vpop.f32.mrf.mxu0
      %v6996 = vadd.f32 0.0, %v6995
      %v6997 = vpop.f32.mrf.mxu0
      %6998 = vmatprep.mubr.f32.mxu0 0.0
      %6999 = vmatmul.mubr.f32.gmra.mxu0 %v6797
      %v7000 = vpop.f32.mrf.mxu0
      %v7001 = vadd.f32 0.0, %v7000
      %v7002 = vpop.f32.mrf.mxu0
      %7003 = vdwg.mxu0
      %v7004 = vadd.f32 %v6544, %v6866
      %v7005 = vadd.f32 %v6549, %v6871
      %v7006 = vadd.f32 %v6554, %v6876
      %v7007 = vadd.f32 %v6559, %v6881
      %v7008 = vadd.f32 %v6564, %v6886
      %v7009 = vadd.f32 %v6569, %v6891
      %v7010 = vadd.f32 %v6574, %v6896
      %v7011 = vadd.f32 %v6579, %v6901
      %v7012 = vadd.f32 %v6584, %v6906
      %v7013 = vadd.f32 %v6589, %v6911
      %v7014 = vadd.f32 %v6594, %v6916
      %v7015 = vadd.f32 %v6599, %v6921
      %v7016 = vadd.f32 %v6604, %v6926
      %v7017 = vadd.f32 %v6609, %v6931
      %v7018 = vadd.f32 %v6614, %v6936
      %v7019 = vadd.f32 %v6619, %v6941
      %v7020 = vadd.f32 %v6624, %v6946
      %v7021 = vadd.f32 %v6629, %v6951
      %v7022 = vadd.f32 %v6634, %v6956
      %v7023 = vadd.f32 %v6639, %v6961
      %v7024 = vadd.f32 %v6644, %v6966
      %v7025 = vadd.f32 %v6649, %v6971
      %v7026 = vadd.f32 %v6654, %v6976
      %v7027 = vadd.f32 %v6659, %v6981
      %v7028 = vadd.f32 %v6664, %v6986
      %v7029 = vadd.f32 %v6669, %v6991
      %v7030 = vadd.f32 %v6674, %v6996
      %v7031 = vadd.f32 %v6679, %v7001
      %v7032 = vld [vmem:[#allocation4 + $0x10] sm:$0xff]
      %v7033 = vld [vmem:[#allocation4 + $0x18] sm:$0xff]
      %v7034 = vld [vmem:[#allocation4 + $0x20] sm:$0xff]
      %v7035 = vld [vmem:[#allocation4 + $0x28] sm:$0xff]
      %v7036 = vld [vmem:[#allocation4 + $0x30] sm:$0xff]
      %v7037 = vld [vmem:[#allocation4 + $0x38] sm:$0xff]
      %v7038 = vld [vmem:[#allocation4 + $0x40] sm:$0xff]
      %v7039 = vld [vmem:[#allocation4 + $0x48] sm:$0xff]
      %v7040 = vld [vmem:[#allocation4 + $0x50] sm:$0xff]
      %v7041 = vld [vmem:[#allocation4 + $0x58] sm:$0xff]
      %v7042 = vld [vmem:[#allocation4 + $0x60] sm:$0xff]
      %v7043 = vld [vmem:[#allocation4 + $0x68] sm:$0xff]
      %v7044 = vld [vmem:[#allocation4 + $0x70] sm:$0xff]
      %v7045 = vld [vmem:[#allocation4 + $0x78] sm:$0xff]
      %v7046 = vld [vmem:[#allocation4 + $0x80] sm:$0xff]
      %v7047 = vld [vmem:[#allocation4 + $0x88] sm:$0xff]
      %v7048 = vld [vmem:[#allocation4 + $0x90] sm:$0xff]
      %v7049 = vld [vmem:[#allocation4 + $0x98] sm:$0xff]
      %v7050 = vld [vmem:[#allocation4 + $0xa0] sm:$0xff]
      %v7051 = vld [vmem:[#allocation4 + $0xa8] sm:$0xff]
      %v7052 = vld [vmem:[#allocation4 + $0xb0] sm:$0xff]
      %v7053 = vld [vmem:[#allocation4 + $0xb8] sm:$0xff]
      %v7054 = vld [vmem:[#allocation4 + $0xc0] sm:$0xff]
      %v7055 = vld [vmem:[#allocation4 + $0xc8] sm:$0xff]
      %v7056 = vld [vmem:[#allocation4 + $0xd0] sm:$0xff]
      %v7057 = vld [vmem:[#allocation4 + $0xd8] sm:$0xff]
      %v7058 = vld [vmem:[#allocation4 + $0xe0] sm:$0xff]
      %v7059 = vld [vmem:[#allocation4 + $0xe8] sm:$0x3f]
      %s7060 = scalar_lea.vmem %s3, 96
      %v7061 = vld [vmem:[%s7060] sm:$0xff]
      %v7062 = vld [vmem:[%s7060 + $0x8] sm:$0xff]
      %v7063 = vld [vmem:[%s7060 + $0x10] sm:$0xff]
      %v7064 = vld [vmem:[%s7060 + $0x18] sm:$0xff]
      %v7066 = vsel %vm957, %v7032, 0
      %v7069 = vsel %vm957, %v7033, 0
      %v7072 = vsel %vm957, %v7034, 0
      %v7075 = vsel %vm957, %v7035, 0
      %v7078 = vsel %vm957, %v7036, 0
      %v7081 = vsel %vm957, %v7037, 0
      %v7084 = vsel %vm957, %v7038, 0
      %v7087 = vsel %vm957, %v7039, 0
      %v7090 = vsel %vm957, %v7040, 0
      %v7093 = vsel %vm957, %v7041, 0
      %v7096 = vsel %vm957, %v7042, 0
      %v7099 = vsel %vm957, %v7043, 0
      %v7102 = vsel %vm957, %v7044, 0
      %v7105 = vsel %vm957, %v7045, 0
      %v7108 = vsel %vm957, %v7046, 0
      %v7111 = vsel %vm957, %v7047, 0
      %v7114 = vsel %vm957, %v7048, 0
      %v7117 = vsel %vm957, %v7049, 0
      %v7120 = vsel %vm957, %v7050, 0
      %v7123 = vsel %vm957, %v7051, 0
      %v7126 = vsel %vm957, %v7052, 0
      %v7129 = vsel %vm957, %v7053, 0
      %v7132 = vsel %vm957, %v7054, 0
      %v7135 = vsel %vm957, %v7055, 0
      %v7138 = vsel %vm957, %v7056, 0
      %v7141 = vsel %vm957, %v7057, 0
      %v7144 = vsel %vm957, %v7058, 0
      %v7147 = vsel %vm957, %v7059, 0
      %7149 = vmatprep.subr.mxu0 0.0
      %7150 = vmatpush1.msra.mxu0 0.0
      %7151 = vmatprep.subr.mxu0 0.0
      %7152 = vmatpush1.msra.mxu0 0.0
      %7153 = vmatprep.subr.mxu0 0.0
      %7154 = vmatpush1.msra.mxu0 0.0
      %7155 = vmatprep.subr.mxu0 0.0
      %7156 = vmatpush1.msra.mxu0 0.0
      %7157 = vmatprep.subr.mxu0 0.0
      %7158 = vmatpush1.msra.mxu0 0.0
      %7159 = vmatprep.subr.mxu0 0.0
      %7160 = vmatpush1.msra.mxu0 0.0
      %7161 = vmatprep.subr.mxu0 0.0
      %7162 = vmatpush1.msra.mxu0 0.0
      %7163 = vmatprep.subr.mxu0 0.0
      %7164 = vmatpush1.msra.mxu0 0.0
      %7165 = vmatprep.subr.mxu0 0.0
      %7166 = vmatpush1.msra.mxu0 0.0
      %7167 = vmatprep.subr.mxu0 0.0
      %7168 = vmatpush1.msra.mxu0 0.0
      %7169 = vmatprep.subr.mxu0 0.0
      %7170 = vmatpush1.msra.mxu0 0.0
      %7171 = vmatprep.subr.mxu0 0.0
      %7172 = vmatpush1.msra.mxu0 0.0
      %7173 = vmatprep.subr.mxu0 0.0
      %7174 = vmatpush1.msra.mxu0 %v7064
      %7175 = vmatprep.subr.mxu0 0.0
      %7176 = vmatpush1.msra.mxu0 %v7063
      %7177 = vmatprep.subr.mxu0 0.0
      %7178 = vmatpush1.msra.mxu0 %v7062
      %7179 = vmatprep.subr.mxu0 0.0
      %7180 = vmatpush1.msra.mxu0 %v7061
      %7181 = vmatprep.subr.mxu0 0.0
      %7182 = vmatpush2.msra.mxu0 0.0
      %7183 = vmatprep.subr.mxu0 0.0
      %7184 = vmatpush2.msra.mxu0 0.0
      %7185 = vmatprep.subr.mxu0 0.0
      %7186 = vmatpush2.msra.mxu0 0.0
      %7187 = vmatprep.subr.mxu0 0.0
      %7188 = vmatpush2.msra.mxu0 0.0
      %7189 = vmatprep.subr.mxu0 0.0
      %7190 = vmatpush2.msra.mxu0 0.0
      %7191 = vmatprep.subr.mxu0 0.0
      %7192 = vmatpush2.msra.mxu0 0.0
      %7193 = vmatprep.subr.mxu0 0.0
      %7194 = vmatpush2.msra.mxu0 0.0
      %7195 = vmatprep.subr.mxu0 0.0
      %7196 = vmatpush2.msra.mxu0 0.0
      %7197 = vmatprep.subr.mxu0 0.0
      %7198 = vmatpush2.msra.mxu0 0.0
      %7199 = vmatprep.subr.mxu0 0.0
      %7200 = vmatpush2.msra.mxu0 0.0
      %7201 = vmatprep.subr.mxu0 0.0
      %7202 = vmatpush2.msra.mxu0 0.0
      %7203 = vmatprep.subr.mxu0 0.0
      %7204 = vmatpush2.msra.mxu0 0.0
      %7205 = vmatprep.subr.mxu0 0.0
      %7206 = vmatpush2.msra.mxu0 0.0
      %7207 = vmatprep.subr.mxu0 0.0
      %7208 = vmatpush2.msra.mxu0 0.0
      %7209 = vmatprep.subr.mxu0 0.0
      %7210 = vmatpush2.msra.mxu0 0.0
      %7211 = vmatprep.subr.mxu0 0.0
      %7212 = vmatpush2.msra.mxu0 0.0
      %7213 = vmatprep.mubr.f32.mxu0 0.0
      %7214 = vmatmul.mubr.f32.gmra.mxu0 %v7066
      %v7215 = vpop.f32.mrf.mxu0
      %v7216 = vadd.f32 0.0, %v7215
      %v7217 = vpop.f32.mrf.mxu0
      %7218 = vmatprep.mubr.f32.mxu0 0.0
      %7219 = vmatmul.mubr.f32.gmra.mxu0 %v7069
      %v7220 = vpop.f32.mrf.mxu0
      %v7221 = vadd.f32 0.0, %v7220
      %v7222 = vpop.f32.mrf.mxu0
      %7223 = vmatprep.mubr.f32.mxu0 0.0
      %7224 = vmatmul.mubr.f32.gmra.mxu0 %v7072
      %v7225 = vpop.f32.mrf.mxu0
      %v7226 = vadd.f32 0.0, %v7225
      %v7227 = vpop.f32.mrf.mxu0
      %7228 = vmatprep.mubr.f32.mxu0 0.0
      %7229 = vmatmul.mubr.f32.gmra.mxu0 %v7075
      %v7230 = vpop.f32.mrf.mxu0
      %v7231 = vadd.f32 0.0, %v7230
      %v7232 = vpop.f32.mrf.mxu0
      %7233 = vmatprep.mubr.f32.mxu0 0.0
      %7234 = vmatmul.mubr.f32.gmra.mxu0 %v7078
      %v7235 = vpop.f32.mrf.mxu0
      %v7236 = vadd.f32 0.0, %v7235
      %v7237 = vpop.f32.mrf.mxu0
      %7238 = vmatprep.mubr.f32.mxu0 0.0
      %7239 = vmatmul.mubr.f32.gmra.mxu0 %v7081
      %v7240 = vpop.f32.mrf.mxu0
      %v7241 = vadd.f32 0.0, %v7240
      %v7242 = vpop.f32.mrf.mxu0
      %7243 = vmatprep.mubr.f32.mxu0 0.0
      %7244 = vmatmul.mubr.f32.gmra.mxu0 %v7084
      %v7245 = vpop.f32.mrf.mxu0
      %v7246 = vadd.f32 0.0, %v7245
      %v7247 = vpop.f32.mrf.mxu0
      %7248 = vmatprep.mubr.f32.mxu0 0.0
      %7249 = vmatmul.mubr.f32.gmra.mxu0 %v7087
      %v7250 = vpop.f32.mrf.mxu0
      %v7251 = vadd.f32 0.0, %v7250
      %v7252 = vpop.f32.mrf.mxu0
      %7253 = vmatprep.mubr.f32.mxu0 0.0
      %7254 = vmatmul.mubr.f32.gmra.mxu0 %v7090
      %v7255 = vpop.f32.mrf.mxu0
      %v7256 = vadd.f32 0.0, %v7255
      %v7257 = vpop.f32.mrf.mxu0
      %7258 = vmatprep.mubr.f32.mxu0 0.0
      %7259 = vmatmul.mubr.f32.gmra.mxu0 %v7093
      %v7260 = vpop.f32.mrf.mxu0
      %v7261 = vadd.f32 0.0, %v7260
      %v7262 = vpop.f32.mrf.mxu0
      %7263 = vmatprep.mubr.f32.mxu0 0.0
      %7264 = vmatmul.mubr.f32.gmra.mxu0 %v7096
      %v7265 = vpop.f32.mrf.mxu0
      %v7266 = vadd.f32 0.0, %v7265
      %v7267 = vpop.f32.mrf.mxu0
      %7268 = vmatprep.mubr.f32.mxu0 0.0
      %7269 = vmatmul.mubr.f32.gmra.mxu0 %v7099
      %v7270 = vpop.f32.mrf.mxu0
      %v7271 = vadd.f32 0.0, %v7270
      %v7272 = vpop.f32.mrf.mxu0
      %7273 = vmatprep.mubr.f32.mxu0 0.0
      %7274 = vmatmul.mubr.f32.gmra.mxu0 %v7102
      %v7275 = vpop.f32.mrf.mxu0
      %v7276 = vadd.f32 0.0, %v7275
      %v7277 = vpop.f32.mrf.mxu0
      %7278 = vmatprep.mubr.f32.mxu0 0.0
      %7279 = vmatmul.mubr.f32.gmra.mxu0 %v7105
      %v7280 = vpop.f32.mrf.mxu0
      %v7281 = vadd.f32 0.0, %v7280
      %v7282 = vpop.f32.mrf.mxu0
      %7283 = vmatprep.mubr.f32.mxu0 0.0
      %7284 = vmatmul.mubr.f32.gmra.mxu0 %v7108
      %v7285 = vpop.f32.mrf.mxu0
      %v7286 = vadd.f32 0.0, %v7285
      %v7287 = vpop.f32.mrf.mxu0
      %7288 = vmatprep.mubr.f32.mxu0 0.0
      %7289 = vmatmul.mubr.f32.gmra.mxu0 %v7111
      %v7290 = vpop.f32.mrf.mxu0
      %v7291 = vadd.f32 0.0, %v7290
      %v7292 = vpop.f32.mrf.mxu0
      %7293 = vmatprep.mubr.f32.mxu0 0.0
      %7294 = vmatmul.mubr.f32.gmra.mxu0 %v7114
      %v7295 = vpop.f32.mrf.mxu0
      %v7296 = vadd.f32 0.0, %v7295
      %v7297 = vpop.f32.mrf.mxu0
      %7298 = vmatprep.mubr.f32.mxu0 0.0
      %7299 = vmatmul.mubr.f32.gmra.mxu0 %v7117
      %v7300 = vpop.f32.mrf.mxu0
      %v7301 = vadd.f32 0.0, %v7300
      %v7302 = vpop.f32.mrf.mxu0
      %7303 = vmatprep.mubr.f32.mxu0 0.0
      %7304 = vmatmul.mubr.f32.gmra.mxu0 %v7120
      %v7305 = vpop.f32.mrf.mxu0
      %v7306 = vadd.f32 0.0, %v7305
      %v7307 = vpop.f32.mrf.mxu0
      %7308 = vmatprep.mubr.f32.mxu0 0.0
      %7309 = vmatmul.mubr.f32.gmra.mxu0 %v7123
      %v7310 = vpop.f32.mrf.mxu0
      %v7311 = vadd.f32 0.0, %v7310
      %v7312 = vpop.f32.mrf.mxu0
      %7313 = vmatprep.mubr.f32.mxu0 0.0
      %7314 = vmatmul.mubr.f32.gmra.mxu0 %v7126
      %v7315 = vpop.f32.mrf.mxu0
      %v7316 = vadd.f32 0.0, %v7315
      %v7317 = vpop.f32.mrf.mxu0
      %7318 = vmatprep.mubr.f32.mxu0 0.0
      %7319 = vmatmul.mubr.f32.gmra.mxu0 %v7129
      %v7320 = vpop.f32.mrf.mxu0
      %v7321 = vadd.f32 0.0, %v7320
      %v7322 = vpop.f32.mrf.mxu0
      %7323 = vmatprep.mubr.f32.mxu0 0.0
      %7324 = vmatmul.mubr.f32.gmra.mxu0 %v7132
      %v7325 = vpop.f32.mrf.mxu0
      %v7326 = vadd.f32 0.0, %v7325
      %v7327 = vpop.f32.mrf.mxu0
      %7328 = vmatprep.mubr.f32.mxu0 0.0
      %7329 = vmatmul.mubr.f32.gmra.mxu0 %v7135
      %v7330 = vpop.f32.mrf.mxu0
      %v7331 = vadd.f32 0.0, %v7330
      %v7332 = vpop.f32.mrf.mxu0
      %7333 = vmatprep.mubr.f32.mxu0 0.0
      %7334 = vmatmul.mubr.f32.gmra.mxu0 %v7138
      %v7335 = vpop.f32.mrf.mxu0
      %v7336 = vadd.f32 0.0, %v7335
      %v7337 = vpop.f32.mrf.mxu0
      %7338 = vmatprep.mubr.f32.mxu0 0.0
      %7339 = vmatmul.mubr.f32.gmra.mxu0 %v7141
      %v7340 = vpop.f32.mrf.mxu0
      %v7341 = vadd.f32 0.0, %v7340
      %v7342 = vpop.f32.mrf.mxu0
      %7343 = vmatprep.mubr.f32.mxu0 0.0
      %7344 = vmatmul.mubr.f32.gmra.mxu0 %v7144
      %v7345 = vpop.f32.mrf.mxu0
      %v7346 = vadd.f32 0.0, %v7345
      %v7347 = vpop.f32.mrf.mxu0
      %7348 = vmatprep.mubr.f32.mxu0 0.0
      %7349 = vmatmul.mubr.f32.gmra.mxu0 %v7147
      %v7350 = vpop.f32.mrf.mxu0
      %v7351 = vadd.f32 0.0, %v7350
      %v7352 = vpop.f32.mrf.mxu0
      %7353 = vdwg.mxu0
      %v7354 = vadd.f32 %v7004, %v7216
      %v7355 = vadd.f32 %v7005, %v7221
      %v7356 = vadd.f32 %v7006, %v7226
      %v7357 = vadd.f32 %v7007, %v7231
      %v7358 = vadd.f32 %v7008, %v7236
      %v7359 = vadd.f32 %v7009, %v7241
      %v7360 = vadd.f32 %v7010, %v7246
      %v7361 = vadd.f32 %v7011, %v7251
      %v7362 = vadd.f32 %v7012, %v7256
      %v7363 = vadd.f32 %v7013, %v7261
      %v7364 = vadd.f32 %v7014, %v7266
      %v7365 = vadd.f32 %v7015, %v7271
      %v7366 = vadd.f32 %v7016, %v7276
      %v7367 = vadd.f32 %v7017, %v7281
      %v7368 = vadd.f32 %v7018, %v7286
      %v7369 = vadd.f32 %v7019, %v7291
      %v7370 = vadd.f32 %v7020, %v7296
      %v7371 = vadd.f32 %v7021, %v7301
      %v7372 = vadd.f32 %v7022, %v7306
      %v7373 = vadd.f32 %v7023, %v7311
      %v7374 = vadd.f32 %v7024, %v7316
      %v7375 = vadd.f32 %v7025, %v7321
      %v7376 = vadd.f32 %v7026, %v7326
      %v7377 = vadd.f32 %v7027, %v7331
      %v7378 = vadd.f32 %v7028, %v7336
      %v7379 = vadd.f32 %v7029, %v7341
      %v7380 = vadd.f32 %v7030, %v7346
      %v7381 = vadd.f32 %v7031, %v7351
      %v7382 = vld [vmem:[#allocation4 + $0x11] sm:$0xff]
      %v7383 = vld [vmem:[#allocation4 + $0x19] sm:$0xff]
      %v7384 = vld [vmem:[#allocation4 + $0x21] sm:$0xff]
      %v7385 = vld [vmem:[#allocation4 + $0x29] sm:$0xff]
      %v7386 = vld [vmem:[#allocation4 + $0x31] sm:$0xff]
      %v7387 = vld [vmem:[#allocation4 + $0x39] sm:$0xff]
      %v7388 = vld [vmem:[#allocation4 + $0x41] sm:$0xff]
      %v7389 = vld [vmem:[#allocation4 + $0x49] sm:$0xff]
      %v7390 = vld [vmem:[#allocation4 + $0x51] sm:$0xff]
      %v7391 = vld [vmem:[#allocation4 + $0x59] sm:$0xff]
      %v7392 = vld [vmem:[#allocation4 + $0x61] sm:$0xff]
      %v7393 = vld [vmem:[#allocation4 + $0x69] sm:$0xff]
      %v7394 = vld [vmem:[#allocation4 + $0x71] sm:$0xff]
      %v7395 = vld [vmem:[#allocation4 + $0x79] sm:$0xff]
      %v7396 = vld [vmem:[#allocation4 + $0x81] sm:$0xff]
      %v7397 = vld [vmem:[#allocation4 + $0x89] sm:$0xff]
      %v7398 = vld [vmem:[#allocation4 + $0x91] sm:$0xff]
      %v7399 = vld [vmem:[#allocation4 + $0x99] sm:$0xff]
      %v7400 = vld [vmem:[#allocation4 + $0xa1] sm:$0xff]
      %v7401 = vld [vmem:[#allocation4 + $0xa9] sm:$0xff]
      %v7402 = vld [vmem:[#allocation4 + $0xb1] sm:$0xff]
      %v7403 = vld [vmem:[#allocation4 + $0xb9] sm:$0xff]
      %v7404 = vld [vmem:[#allocation4 + $0xc1] sm:$0xff]
      %v7405 = vld [vmem:[#allocation4 + $0xc9] sm:$0xff]
      %v7406 = vld [vmem:[#allocation4 + $0xd1] sm:$0xff]
      %v7407 = vld [vmem:[#allocation4 + $0xd9] sm:$0xff]
      %v7408 = vld [vmem:[#allocation4 + $0xe1] sm:$0xff]
      %v7409 = vld [vmem:[#allocation4 + $0xe9] sm:$0x3f]
      %s7410 = scalar_lea.vmem %s3, 128
      %v7411 = vld [vmem:[%s7410] sm:$0xff]
      %v7412 = vld [vmem:[%s7410 + $0x8] sm:$0xff]
      %v7413 = vld [vmem:[%s7410 + $0x10] sm:$0xff]
      %v7414 = vld [vmem:[%s7410 + $0x18] sm:$0xff]
      %v7416 = vsel %vm957, %v7382, 0
      %v7419 = vsel %vm957, %v7383, 0
      %v7422 = vsel %vm957, %v7384, 0
      %v7425 = vsel %vm957, %v7385, 0
      %v7428 = vsel %vm957, %v7386, 0
      %v7431 = vsel %vm957, %v7387, 0
      %v7434 = vsel %vm957, %v7388, 0
      %v7437 = vsel %vm957, %v7389, 0
      %v7440 = vsel %vm957, %v7390, 0
      %v7443 = vsel %vm957, %v7391, 0
      %v7446 = vsel %vm957, %v7392, 0
      %v7449 = vsel %vm957, %v7393, 0
      %v7452 = vsel %vm957, %v7394, 0
      %v7455 = vsel %vm957, %v7395, 0
      %v7458 = vsel %vm957, %v7396, 0
      %v7461 = vsel %vm957, %v7397, 0
      %v7464 = vsel %vm957, %v7398, 0
      %v7467 = vsel %vm957, %v7399, 0
      %v7470 = vsel %vm957, %v7400, 0
      %v7473 = vsel %vm957, %v7401, 0
      %v7476 = vsel %vm957, %v7402, 0
      %v7479 = vsel %vm957, %v7403, 0
      %v7482 = vsel %vm957, %v7404, 0
      %v7485 = vsel %vm957, %v7405, 0
      %v7488 = vsel %vm957, %v7406, 0
      %v7491 = vsel %vm957, %v7407, 0
      %v7494 = vsel %vm957, %v7408, 0
      %v7497 = vsel %vm957, %v7409, 0
      %7499 = vmatprep.subr.mxu0 0.0
      %7500 = vmatpush1.msra.mxu0 0.0
      %7501 = vmatprep.subr.mxu0 0.0
      %7502 = vmatpush1.msra.mxu0 0.0
      %7503 = vmatprep.subr.mxu0 0.0
      %7504 = vmatpush1.msra.mxu0 0.0
      %7505 = vmatprep.subr.mxu0 0.0
      %7506 = vmatpush1.msra.mxu0 0.0
      %7507 = vmatprep.subr.mxu0 0.0
      %7508 = vmatpush1.msra.mxu0 0.0
      %7509 = vmatprep.subr.mxu0 0.0
      %7510 = vmatpush1.msra.mxu0 0.0
      %7511 = vmatprep.subr.mxu0 0.0
      %7512 = vmatpush1.msra.mxu0 0.0
      %7513 = vmatprep.subr.mxu0 0.0
      %7514 = vmatpush1.msra.mxu0 0.0
      %7515 = vmatprep.subr.mxu0 0.0
      %7516 = vmatpush1.msra.mxu0 0.0
      %7517 = vmatprep.subr.mxu0 0.0
      %7518 = vmatpush1.msra.mxu0 0.0
      %7519 = vmatprep.subr.mxu0 0.0
      %7520 = vmatpush1.msra.mxu0 0.0
      %7521 = vmatprep.subr.mxu0 0.0
      %7522 = vmatpush1.msra.mxu0 0.0
      %7523 = vmatprep.subr.mxu0 0.0
      %7524 = vmatpush1.msra.mxu0 %v7414
      %7525 = vmatprep.subr.mxu0 0.0
      %7526 = vmatpush1.msra.mxu0 %v7413
      %7527 = vmatprep.subr.mxu0 0.0
      %7528 = vmatpush1.msra.mxu0 %v7412
      %7529 = vmatprep.subr.mxu0 0.0
      %7530 = vmatpush1.msra.mxu0 %v7411
      %7531 = vmatprep.subr.mxu0 0.0
      %7532 = vmatpush2.msra.mxu0 0.0
      %7533 = vmatprep.subr.mxu0 0.0
      %7534 = vmatpush2.msra.mxu0 0.0
      %7535 = vmatprep.subr.mxu0 0.0
      %7536 = vmatpush2.msra.mxu0 0.0
      %7537 = vmatprep.subr.mxu0 0.0
      %7538 = vmatpush2.msra.mxu0 0.0
      %7539 = vmatprep.subr.mxu0 0.0
      %7540 = vmatpush2.msra.mxu0 0.0
      %7541 = vmatprep.subr.mxu0 0.0
      %7542 = vmatpush2.msra.mxu0 0.0
      %7543 = vmatprep.subr.mxu0 0.0
      %7544 = vmatpush2.msra.mxu0 0.0
      %7545 = vmatprep.subr.mxu0 0.0
      %7546 = vmatpush2.msra.mxu0 0.0
      %7547 = vmatprep.subr.mxu0 0.0
      %7548 = vmatpush2.msra.mxu0 0.0
      %7549 = vmatprep.subr.mxu0 0.0
      %7550 = vmatpush2.msra.mxu0 0.0
      %7551 = vmatprep.subr.mxu0 0.0
      %7552 = vmatpush2.msra.mxu0 0.0
      %7553 = vmatprep.subr.mxu0 0.0
      %7554 = vmatpush2.msra.mxu0 0.0
      %7555 = vmatprep.subr.mxu0 0.0
      %7556 = vmatpush2.msra.mxu0 0.0
      %7557 = vmatprep.subr.mxu0 0.0
      %7558 = vmatpush2.msra.mxu0 0.0
      %7559 = vmatprep.subr.mxu0 0.0
      %7560 = vmatpush2.msra.mxu0 0.0
      %7561 = vmatprep.subr.mxu0 0.0
      %7562 = vmatpush2.msra.mxu0 0.0
      %7563 = vmatprep.mubr.f32.mxu0 0.0
      %7564 = vmatmul.mubr.f32.gmra.mxu0 %v7416
      %v7565 = vpop.f32.mrf.mxu0
      %v7566 = vadd.f32 0.0, %v7565
      %v7567 = vpop.f32.mrf.mxu0
      %7568 = vmatprep.mubr.f32.mxu0 0.0
      %7569 = vmatmul.mubr.f32.gmra.mxu0 %v7419
      %v7570 = vpop.f32.mrf.mxu0
      %v7571 = vadd.f32 0.0, %v7570
      %v7572 = vpop.f32.mrf.mxu0
      %7573 = vmatprep.mubr.f32.mxu0 0.0
      %7574 = vmatmul.mubr.f32.gmra.mxu0 %v7422
      %v7575 = vpop.f32.mrf.mxu0
      %v7576 = vadd.f32 0.0, %v7575
      %v7577 = vpop.f32.mrf.mxu0
      %7578 = vmatprep.mubr.f32.mxu0 0.0
      %7579 = vmatmul.mubr.f32.gmra.mxu0 %v7425
      %v7580 = vpop.f32.mrf.mxu0
      %v7581 = vadd.f32 0.0, %v7580
      %v7582 = vpop.f32.mrf.mxu0
      %7583 = vmatprep.mubr.f32.mxu0 0.0
      %7584 = vmatmul.mubr.f32.gmra.mxu0 %v7428
      %v7585 = vpop.f32.mrf.mxu0
      %v7586 = vadd.f32 0.0, %v7585
      %v7587 = vpop.f32.mrf.mxu0
      %7588 = vmatprep.mubr.f32.mxu0 0.0
      %7589 = vmatmul.mubr.f32.gmra.mxu0 %v7431
      %v7590 = vpop.f32.mrf.mxu0
      %v7591 = vadd.f32 0.0, %v7590
      %v7592 = vpop.f32.mrf.mxu0
      %7593 = vmatprep.mubr.f32.mxu0 0.0
      %7594 = vmatmul.mubr.f32.gmra.mxu0 %v7434
      %v7595 = vpop.f32.mrf.mxu0
      %v7596 = vadd.f32 0.0, %v7595
      %v7597 = vpop.f32.mrf.mxu0
      %7598 = vmatprep.mubr.f32.mxu0 0.0
      %7599 = vmatmul.mubr.f32.gmra.mxu0 %v7437
      %v7600 = vpop.f32.mrf.mxu0
      %v7601 = vadd.f32 0.0, %v7600
      %v7602 = vpop.f32.mrf.mxu0
      %7603 = vmatprep.mubr.f32.mxu0 0.0
      %7604 = vmatmul.mubr.f32.gmra.mxu0 %v7440
      %v7605 = vpop.f32.mrf.mxu0
      %v7606 = vadd.f32 0.0, %v7605
      %v7607 = vpop.f32.mrf.mxu0
      %7608 = vmatprep.mubr.f32.mxu0 0.0
      %7609 = vmatmul.mubr.f32.gmra.mxu0 %v7443
      %v7610 = vpop.f32.mrf.mxu0
      %v7611 = vadd.f32 0.0, %v7610
      %v7612 = vpop.f32.mrf.mxu0
      %7613 = vmatprep.mubr.f32.mxu0 0.0
      %7614 = vmatmul.mubr.f32.gmra.mxu0 %v7446
      %v7615 = vpop.f32.mrf.mxu0
      %v7616 = vadd.f32 0.0, %v7615
      %v7617 = vpop.f32.mrf.mxu0
      %7618 = vmatprep.mubr.f32.mxu0 0.0
      %7619 = vmatmul.mubr.f32.gmra.mxu0 %v7449
      %v7620 = vpop.f32.mrf.mxu0
      %v7621 = vadd.f32 0.0, %v7620
      %v7622 = vpop.f32.mrf.mxu0
      %7623 = vmatprep.mubr.f32.mxu0 0.0
      %7624 = vmatmul.mubr.f32.gmra.mxu0 %v7452
      %v7625 = vpop.f32.mrf.mxu0
      %v7626 = vadd.f32 0.0, %v7625
      %v7627 = vpop.f32.mrf.mxu0
      %7628 = vmatprep.mubr.f32.mxu0 0.0
      %7629 = vmatmul.mubr.f32.gmra.mxu0 %v7455
      %v7630 = vpop.f32.mrf.mxu0
      %v7631 = vadd.f32 0.0, %v7630
      %v7632 = vpop.f32.mrf.mxu0
      %7633 = vmatprep.mubr.f32.mxu0 0.0
      %7634 = vmatmul.mubr.f32.gmra.mxu0 %v7458
      %v7635 = vpop.f32.mrf.mxu0
      %v7636 = vadd.f32 0.0, %v7635
      %v7637 = vpop.f32.mrf.mxu0
      %7638 = vmatprep.mubr.f32.mxu0 0.0
      %7639 = vmatmul.mubr.f32.gmra.mxu0 %v7461
      %v7640 = vpop.f32.mrf.mxu0
      %v7641 = vadd.f32 0.0, %v7640
      %v7642 = vpop.f32.mrf.mxu0
      %7643 = vmatprep.mubr.f32.mxu0 0.0
      %7644 = vmatmul.mubr.f32.gmra.mxu0 %v7464
      %v7645 = vpop.f32.mrf.mxu0
      %v7646 = vadd.f32 0.0, %v7645
      %v7647 = vpop.f32.mrf.mxu0
      %7648 = vmatprep.mubr.f32.mxu0 0.0
      %7649 = vmatmul.mubr.f32.gmra.mxu0 %v7467
      %v7650 = vpop.f32.mrf.mxu0
      %v7651 = vadd.f32 0.0, %v7650
      %v7652 = vpop.f32.mrf.mxu0
      %7653 = vmatprep.mubr.f32.mxu0 0.0
      %7654 = vmatmul.mubr.f32.gmra.mxu0 %v7470
      %v7655 = vpop.f32.mrf.mxu0
      %v7656 = vadd.f32 0.0, %v7655
      %v7657 = vpop.f32.mrf.mxu0
      %7658 = vmatprep.mubr.f32.mxu0 0.0
      %7659 = vmatmul.mubr.f32.gmra.mxu0 %v7473
      %v7660 = vpop.f32.mrf.mxu0
      %v7661 = vadd.f32 0.0, %v7660
      %v7662 = vpop.f32.mrf.mxu0
      %7663 = vmatprep.mubr.f32.mxu0 0.0
      %7664 = vmatmul.mubr.f32.gmra.mxu0 %v7476
      %v7665 = vpop.f32.mrf.mxu0
      %v7666 = vadd.f32 0.0, %v7665
      %v7667 = vpop.f32.mrf.mxu0
      %7668 = vmatprep.mubr.f32.mxu0 0.0
      %7669 = vmatmul.mubr.f32.gmra.mxu0 %v7479
      %v7670 = vpop.f32.mrf.mxu0
      %v7671 = vadd.f32 0.0, %v7670
      %v7672 = vpop.f32.mrf.mxu0
      %7673 = vmatprep.mubr.f32.mxu0 0.0
      %7674 = vmatmul.mubr.f32.gmra.mxu0 %v7482
      %v7675 = vpop.f32.mrf.mxu0
      %v7676 = vadd.f32 0.0, %v7675
      %v7677 = vpop.f32.mrf.mxu0
      %7678 = vmatprep.mubr.f32.mxu0 0.0
      %7679 = vmatmul.mubr.f32.gmra.mxu0 %v7485
      %v7680 = vpop.f32.mrf.mxu0
      %v7681 = vadd.f32 0.0, %v7680
      %v7682 = vpop.f32.mrf.mxu0
      %7683 = vmatprep.mubr.f32.mxu0 0.0
      %7684 = vmatmul.mubr.f32.gmra.mxu0 %v7488
      %v7685 = vpop.f32.mrf.mxu0
      %v7686 = vadd.f32 0.0, %v7685
      %v7687 = vpop.f32.mrf.mxu0
      %7688 = vmatprep.mubr.f32.mxu0 0.0
      %7689 = vmatmul.mubr.f32.gmra.mxu0 %v7491
      %v7690 = vpop.f32.mrf.mxu0
      %v7691 = vadd.f32 0.0, %v7690
      %v7692 = vpop.f32.mrf.mxu0
      %7693 = vmatprep.mubr.f32.mxu0 0.0
      %7694 = vmatmul.mubr.f32.gmra.mxu0 %v7494
      %v7695 = vpop.f32.mrf.mxu0
      %v7696 = vadd.f32 0.0, %v7695
      %v7697 = vpop.f32.mrf.mxu0
      %7698 = vmatprep.mubr.f32.mxu0 0.0
      %7699 = vmatmul.mubr.f32.gmra.mxu0 %v7497
      %v7700 = vpop.f32.mrf.mxu0
      %v7701 = vadd.f32 0.0, %v7700
      %v7702 = vpop.f32.mrf.mxu0
      %7703 = vdwg.mxu0
      %v7704 = vadd.f32 %v7354, %v7566
      %v7705 = vadd.f32 %v7355, %v7571
      %v7706 = vadd.f32 %v7356, %v7576
      %v7707 = vadd.f32 %v7357, %v7581
      %v7708 = vadd.f32 %v7358, %v7586
      %v7709 = vadd.f32 %v7359, %v7591
      %v7710 = vadd.f32 %v7360, %v7596
      %v7711 = vadd.f32 %v7361, %v7601
      %v7712 = vadd.f32 %v7362, %v7606
      %v7713 = vadd.f32 %v7363, %v7611
      %v7714 = vadd.f32 %v7364, %v7616
      %v7715 = vadd.f32 %v7365, %v7621
      %v7716 = vadd.f32 %v7366, %v7626
      %v7717 = vadd.f32 %v7367, %v7631
      %v7718 = vadd.f32 %v7368, %v7636
      %v7719 = vadd.f32 %v7369, %v7641
      %v7720 = vadd.f32 %v7370, %v7646
      %v7721 = vadd.f32 %v7371, %v7651
      %v7722 = vadd.f32 %v7372, %v7656
      %v7723 = vadd.f32 %v7373, %v7661
      %v7724 = vadd.f32 %v7374, %v7666
      %v7725 = vadd.f32 %v7375, %v7671
      %v7726 = vadd.f32 %v7376, %v7676
      %v7727 = vadd.f32 %v7377, %v7681
      %v7728 = vadd.f32 %v7378, %v7686
      %v7729 = vadd.f32 %v7379, %v7691
      %v7730 = vadd.f32 %v7380, %v7696
      %v7731 = vadd.f32 %v7381, %v7701
      %v7732 = vld [vmem:[#allocation4 + $0x12] sm:$0xff]
      %v7733 = vld [vmem:[#allocation4 + $0x1a] sm:$0xff]
      %v7734 = vld [vmem:[#allocation4 + $0x22] sm:$0xff]
      %v7735 = vld [vmem:[#allocation4 + $0x2a] sm:$0xff]
      %v7736 = vld [vmem:[#allocation4 + $0x32] sm:$0xff]
      %v7737 = vld [vmem:[#allocation4 + $0x3a] sm:$0xff]
      %v7738 = vld [vmem:[#allocation4 + $0x42] sm:$0xff]
      %v7739 = vld [vmem:[#allocation4 + $0x4a] sm:$0xff]
      %v7740 = vld [vmem:[#allocation4 + $0x52] sm:$0xff]
      %v7741 = vld [vmem:[#allocation4 + $0x5a] sm:$0xff]
      %v7742 = vld [vmem:[#allocation4 + $0x62] sm:$0xff]
      %v7743 = vld [vmem:[#allocation4 + $0x6a] sm:$0xff]
      %v7744 = vld [vmem:[#allocation4 + $0x72] sm:$0xff]
      %v7745 = vld [vmem:[#allocation4 + $0x7a] sm:$0xff]
      %v7746 = vld [vmem:[#allocation4 + $0x82] sm:$0xff]
      %v7747 = vld [vmem:[#allocation4 + $0x8a] sm:$0xff]
      %v7748 = vld [vmem:[#allocation4 + $0x92] sm:$0xff]
      %v7749 = vld [vmem:[#allocation4 + $0x9a] sm:$0xff]
      %v7750 = vld [vmem:[#allocation4 + $0xa2] sm:$0xff]
      %v7751 = vld [vmem:[#allocation4 + $0xaa] sm:$0xff]
      %v7752 = vld [vmem:[#allocation4 + $0xb2] sm:$0xff]
      %v7753 = vld [vmem:[#allocation4 + $0xba] sm:$0xff]
      %v7754 = vld [vmem:[#allocation4 + $0xc2] sm:$0xff]
      %v7755 = vld [vmem:[#allocation4 + $0xca] sm:$0xff]
      %v7756 = vld [vmem:[#allocation4 + $0xd2] sm:$0xff]
      %v7757 = vld [vmem:[#allocation4 + $0xda] sm:$0xff]
      %v7758 = vld [vmem:[#allocation4 + $0xe2] sm:$0xff]
      %v7759 = vld [vmem:[#allocation4 + $0xea] sm:$0x3f]
      %s7760 = scalar_lea.vmem %s3, 160
      %v7761 = vld [vmem:[%s7760] sm:$0xff]
      %v7762 = vld [vmem:[%s7760 + $0x8] sm:$0xff]
      %v7763 = vld [vmem:[%s7760 + $0x10] sm:$0xff]
      %v7764 = vld [vmem:[%s7760 + $0x18] sm:$0xff]
      %v7766 = vsel %vm957, %v7732, 0
      %v7769 = vsel %vm957, %v7733, 0
      %v7772 = vsel %vm957, %v7734, 0
      %v7775 = vsel %vm957, %v7735, 0
      %v7778 = vsel %vm957, %v7736, 0
      %v7781 = vsel %vm957, %v7737, 0
      %v7784 = vsel %vm957, %v7738, 0
      %v7787 = vsel %vm957, %v7739, 0
      %v7790 = vsel %vm957, %v7740, 0
      %v7793 = vsel %vm957, %v7741, 0
      %v7796 = vsel %vm957, %v7742, 0
      %v7799 = vsel %vm957, %v7743, 0
      %v7802 = vsel %vm957, %v7744, 0
      %v7805 = vsel %vm957, %v7745, 0
      %v7808 = vsel %vm957, %v7746, 0
      %v7811 = vsel %vm957, %v7747, 0
      %v7814 = vsel %vm957, %v7748, 0
      %v7817 = vsel %vm957, %v7749, 0
      %v7820 = vsel %vm957, %v7750, 0
      %v7823 = vsel %vm957, %v7751, 0
      %v7826 = vsel %vm957, %v7752, 0
      %v7829 = vsel %vm957, %v7753, 0
      %v7832 = vsel %vm957, %v7754, 0
      %v7835 = vsel %vm957, %v7755, 0
      %v7838 = vsel %vm957, %v7756, 0
      %v7841 = vsel %vm957, %v7757, 0
      %v7844 = vsel %vm957, %v7758, 0
      %v7847 = vsel %vm957, %v7759, 0
      %7849 = vmatprep.subr.mxu0 0.0
      %7850 = vmatpush1.msra.mxu0 0.0
      %7851 = vmatprep.subr.mxu0 0.0
      %7852 = vmatpush1.msra.mxu0 0.0
      %7853 = vmatprep.subr.mxu0 0.0
      %7854 = vmatpush1.msra.mxu0 0.0
      %7855 = vmatprep.subr.mxu0 0.0
      %7856 = vmatpush1.msra.mxu0 0.0
      %7857 = vmatprep.subr.mxu0 0.0
      %7858 = vmatpush1.msra.mxu0 0.0
      %7859 = vmatprep.subr.mxu0 0.0
      %7860 = vmatpush1.msra.mxu0 0.0
      %7861 = vmatprep.subr.mxu0 0.0
      %7862 = vmatpush1.msra.mxu0 0.0
      %7863 = vmatprep.subr.mxu0 0.0
      %7864 = vmatpush1.msra.mxu0 0.0
      %7865 = vmatprep.subr.mxu0 0.0
      %7866 = vmatpush1.msra.mxu0 0.0
      %7867 = vmatprep.subr.mxu0 0.0
      %7868 = vmatpush1.msra.mxu0 0.0
      %7869 = vmatprep.subr.mxu0 0.0
      %7870 = vmatpush1.msra.mxu0 0.0
      %7871 = vmatprep.subr.mxu0 0.0
      %7872 = vmatpush1.msra.mxu0 0.0
      %7873 = vmatprep.subr.mxu0 0.0
      %7874 = vmatpush1.msra.mxu0 %v7764
      %7875 = vmatprep.subr.mxu0 0.0
      %7876 = vmatpush1.msra.mxu0 %v7763
      %7877 = vmatprep.subr.mxu0 0.0
      %7878 = vmatpush1.msra.mxu0 %v7762
      %7879 = vmatprep.subr.mxu0 0.0
      %7880 = vmatpush1.msra.mxu0 %v7761
      %7881 = vmatprep.subr.mxu0 0.0
      %7882 = vmatpush2.msra.mxu0 0.0
      %7883 = vmatprep.subr.mxu0 0.0
      %7884 = vmatpush2.msra.mxu0 0.0
      %7885 = vmatprep.subr.mxu0 0.0
      %7886 = vmatpush2.msra.mxu0 0.0
      %7887 = vmatprep.subr.mxu0 0.0
      %7888 = vmatpush2.msra.mxu0 0.0
      %7889 = vmatprep.subr.mxu0 0.0
      %7890 = vmatpush2.msra.mxu0 0.0
      %7891 = vmatprep.subr.mxu0 0.0
      %7892 = vmatpush2.msra.mxu0 0.0
      %7893 = vmatprep.subr.mxu0 0.0
      %7894 = vmatpush2.msra.mxu0 0.0
      %7895 = vmatprep.subr.mxu0 0.0
      %7896 = vmatpush2.msra.mxu0 0.0
      %7897 = vmatprep.subr.mxu0 0.0
      %7898 = vmatpush2.msra.mxu0 0.0
      %7899 = vmatprep.subr.mxu0 0.0
      %7900 = vmatpush2.msra.mxu0 0.0
      %7901 = vmatprep.subr.mxu0 0.0
      %7902 = vmatpush2.msra.mxu0 0.0
      %7903 = vmatprep.subr.mxu0 0.0
      %7904 = vmatpush2.msra.mxu0 0.0
      %7905 = vmatprep.subr.mxu0 0.0
      %7906 = vmatpush2.msra.mxu0 0.0
      %7907 = vmatprep.subr.mxu0 0.0
      %7908 = vmatpush2.msra.mxu0 0.0
      %7909 = vmatprep.subr.mxu0 0.0
      %7910 = vmatpush2.msra.mxu0 0.0
      %7911 = vmatprep.subr.mxu0 0.0
      %7912 = vmatpush2.msra.mxu0 0.0
      %7913 = vmatprep.mubr.f32.mxu0 0.0
      %7914 = vmatmul.mubr.f32.gmra.mxu0 %v7766
      %v7915 = vpop.f32.mrf.mxu0
      %v7916 = vadd.f32 0.0, %v7915
      %v7917 = vpop.f32.mrf.mxu0
      %7918 = vmatprep.mubr.f32.mxu0 0.0
      %7919 = vmatmul.mubr.f32.gmra.mxu0 %v7769
      %v7920 = vpop.f32.mrf.mxu0
      %v7921 = vadd.f32 0.0, %v7920
      %v7922 = vpop.f32.mrf.mxu0
      %7923 = vmatprep.mubr.f32.mxu0 0.0
      %7924 = vmatmul.mubr.f32.gmra.mxu0 %v7772
      %v7925 = vpop.f32.mrf.mxu0
      %v7926 = vadd.f32 0.0, %v7925
      %v7927 = vpop.f32.mrf.mxu0
      %7928 = vmatprep.mubr.f32.mxu0 0.0
      %7929 = vmatmul.mubr.f32.gmra.mxu0 %v7775
      %v7930 = vpop.f32.mrf.mxu0
      %v7931 = vadd.f32 0.0, %v7930
      %v7932 = vpop.f32.mrf.mxu0
      %7933 = vmatprep.mubr.f32.mxu0 0.0
      %7934 = vmatmul.mubr.f32.gmra.mxu0 %v7778
      %v7935 = vpop.f32.mrf.mxu0
      %v7936 = vadd.f32 0.0, %v7935
      %v7937 = vpop.f32.mrf.mxu0
      %7938 = vmatprep.mubr.f32.mxu0 0.0
      %7939 = vmatmul.mubr.f32.gmra.mxu0 %v7781
      %v7940 = vpop.f32.mrf.mxu0
      %v7941 = vadd.f32 0.0, %v7940
      %v7942 = vpop.f32.mrf.mxu0
      %7943 = vmatprep.mubr.f32.mxu0 0.0
      %7944 = vmatmul.mubr.f32.gmra.mxu0 %v7784
      %v7945 = vpop.f32.mrf.mxu0
      %v7946 = vadd.f32 0.0, %v7945
      %v7947 = vpop.f32.mrf.mxu0
      %7948 = vmatprep.mubr.f32.mxu0 0.0
      %7949 = vmatmul.mubr.f32.gmra.mxu0 %v7787
      %v7950 = vpop.f32.mrf.mxu0
      %v7951 = vadd.f32 0.0, %v7950
      %v7952 = vpop.f32.mrf.mxu0
      %7953 = vmatprep.mubr.f32.mxu0 0.0
      %7954 = vmatmul.mubr.f32.gmra.mxu0 %v7790
      %v7955 = vpop.f32.mrf.mxu0
      %v7956 = vadd.f32 0.0, %v7955
      %v7957 = vpop.f32.mrf.mxu0
      %7958 = vmatprep.mubr.f32.mxu0 0.0
      %7959 = vmatmul.mubr.f32.gmra.mxu0 %v7793
      %v7960 = vpop.f32.mrf.mxu0
      %v7961 = vadd.f32 0.0, %v7960
      %v7962 = vpop.f32.mrf.mxu0
      %7963 = vmatprep.mubr.f32.mxu0 0.0
      %7964 = vmatmul.mubr.f32.gmra.mxu0 %v7796
      %v7965 = vpop.f32.mrf.mxu0
      %v7966 = vadd.f32 0.0, %v7965
      %v7967 = vpop.f32.mrf.mxu0
      %7968 = vmatprep.mubr.f32.mxu0 0.0
      %7969 = vmatmul.mubr.f32.gmra.mxu0 %v7799
      %v7970 = vpop.f32.mrf.mxu0
      %v7971 = vadd.f32 0.0, %v7970
      %v7972 = vpop.f32.mrf.mxu0
      %7973 = vmatprep.mubr.f32.mxu0 0.0
      %7974 = vmatmul.mubr.f32.gmra.mxu0 %v7802
      %v7975 = vpop.f32.mrf.mxu0
      %v7976 = vadd.f32 0.0, %v7975
      %v7977 = vpop.f32.mrf.mxu0
      %7978 = vmatprep.mubr.f32.mxu0 0.0
      %7979 = vmatmul.mubr.f32.gmra.mxu0 %v7805
      %v7980 = vpop.f32.mrf.mxu0
      %v7981 = vadd.f32 0.0, %v7980
      %v7982 = vpop.f32.mrf.mxu0
      %7983 = vmatprep.mubr.f32.mxu0 0.0
      %7984 = vmatmul.mubr.f32.gmra.mxu0 %v7808
      %v7985 = vpop.f32.mrf.mxu0
      %v7986 = vadd.f32 0.0, %v7985
      %v7987 = vpop.f32.mrf.mxu0
      %7988 = vmatprep.mubr.f32.mxu0 0.0
      %7989 = vmatmul.mubr.f32.gmra.mxu0 %v7811
      %v7990 = vpop.f32.mrf.mxu0
      %v7991 = vadd.f32 0.0, %v7990
      %v7992 = vpop.f32.mrf.mxu0
      %7993 = vmatprep.mubr.f32.mxu0 0.0
      %7994 = vmatmul.mubr.f32.gmra.mxu0 %v7814
      %v7995 = vpop.f32.mrf.mxu0
      %v7996 = vadd.f32 0.0, %v7995
      %v7997 = vpop.f32.mrf.mxu0
      %7998 = vmatprep.mubr.f32.mxu0 0.0
      %7999 = vmatmul.mubr.f32.gmra.mxu0 %v7817
      %v8000 = vpop.f32.mrf.mxu0
      %v8001 = vadd.f32 0.0, %v8000
      %v8002 = vpop.f32.mrf.mxu0
      %8003 = vmatprep.mubr.f32.mxu0 0.0
      %8004 = vmatmul.mubr.f32.gmra.mxu0 %v7820
      %v8005 = vpop.f32.mrf.mxu0
      %v8006 = vadd.f32 0.0, %v8005
      %v8007 = vpop.f32.mrf.mxu0
      %8008 = vmatprep.mubr.f32.mxu0 0.0
      %8009 = vmatmul.mubr.f32.gmra.mxu0 %v7823
      %v8010 = vpop.f32.mrf.mxu0
      %v8011 = vadd.f32 0.0, %v8010
      %v8012 = vpop.f32.mrf.mxu0
      %8013 = vmatprep.mubr.f32.mxu0 0.0
      %8014 = vmatmul.mubr.f32.gmra.mxu0 %v7826
      %v8015 = vpop.f32.mrf.mxu0
      %v8016 = vadd.f32 0.0, %v8015
      %v8017 = vpop.f32.mrf.mxu0
      %8018 = vmatprep.mubr.f32.mxu0 0.0
      %8019 = vmatmul.mubr.f32.gmra.mxu0 %v7829
      %v8020 = vpop.f32.mrf.mxu0
      %v8021 = vadd.f32 0.0, %v8020
      %v8022 = vpop.f32.mrf.mxu0
      %8023 = vmatprep.mubr.f32.mxu0 0.0
      %8024 = vmatmul.mubr.f32.gmra.mxu0 %v7832
      %v8025 = vpop.f32.mrf.mxu0
      %v8026 = vadd.f32 0.0, %v8025
      %v8027 = vpop.f32.mrf.mxu0
      %8028 = vmatprep.mubr.f32.mxu0 0.0
      %8029 = vmatmul.mubr.f32.gmra.mxu0 %v7835
      %v8030 = vpop.f32.mrf.mxu0
      %v8031 = vadd.f32 0.0, %v8030
      %v8032 = vpop.f32.mrf.mxu0
      %8033 = vmatprep.mubr.f32.mxu0 0.0
      %8034 = vmatmul.mubr.f32.gmra.mxu0 %v7838
      %v8035 = vpop.f32.mrf.mxu0
      %v8036 = vadd.f32 0.0, %v8035
      %v8037 = vpop.f32.mrf.mxu0
      %8038 = vmatprep.mubr.f32.mxu0 0.0
      %8039 = vmatmul.mubr.f32.gmra.mxu0 %v7841
      %v8040 = vpop.f32.mrf.mxu0
      %v8041 = vadd.f32 0.0, %v8040
      %v8042 = vpop.f32.mrf.mxu0
      %8043 = vmatprep.mubr.f32.mxu0 0.0
      %8044 = vmatmul.mubr.f32.gmra.mxu0 %v7844
      %v8045 = vpop.f32.mrf.mxu0
      %v8046 = vadd.f32 0.0, %v8045
      %v8047 = vpop.f32.mrf.mxu0
      %8048 = vmatprep.mubr.f32.mxu0 0.0
      %8049 = vmatmul.mubr.f32.gmra.mxu0 %v7847
      %v8050 = vpop.f32.mrf.mxu0
      %v8051 = vadd.f32 0.0, %v8050
      %v8052 = vpop.f32.mrf.mxu0
      %8053 = vdwg.mxu0
      %v8054 = vadd.f32 %v7704, %v7916
      %v8055 = vadd.f32 %v7705, %v7921
      %v8056 = vadd.f32 %v7706, %v7926
      %v8057 = vadd.f32 %v7707, %v7931
      %v8058 = vadd.f32 %v7708, %v7936
      %v8059 = vadd.f32 %v7709, %v7941
      %v8060 = vadd.f32 %v7710, %v7946
      %v8061 = vadd.f32 %v7711, %v7951
      %v8062 = vadd.f32 %v7712, %v7956
      %v8063 = vadd.f32 %v7713, %v7961
      %v8064 = vadd.f32 %v7714, %v7966
      %v8065 = vadd.f32 %v7715, %v7971
      %v8066 = vadd.f32 %v7716, %v7976
      %v8067 = vadd.f32 %v7717, %v7981
      %v8068 = vadd.f32 %v7718, %v7986
      %v8069 = vadd.f32 %v7719, %v7991
      %v8070 = vadd.f32 %v7720, %v7996
      %v8071 = vadd.f32 %v7721, %v8001
      %v8072 = vadd.f32 %v7722, %v8006
      %v8073 = vadd.f32 %v7723, %v8011
      %v8074 = vadd.f32 %v7724, %v8016
      %v8075 = vadd.f32 %v7725, %v8021
      %v8076 = vadd.f32 %v7726, %v8026
      %v8077 = vadd.f32 %v7727, %v8031
      %v8078 = vadd.f32 %v7728, %v8036
      %v8079 = vadd.f32 %v7729, %v8041
      %v8080 = vadd.f32 %v7730, %v8046
      %v8081 = vadd.f32 %v7731, %v8051
      %v8082 = vld [vmem:[#allocation4 + $0x20] sm:$0xff]
      %v8083 = vld [vmem:[#allocation4 + $0x28] sm:$0xff]
      %v8084 = vld [vmem:[#allocation4 + $0x30] sm:$0xff]
      %v8085 = vld [vmem:[#allocation4 + $0x38] sm:$0xff]
      %v8086 = vld [vmem:[#allocation4 + $0x40] sm:$0xff]
      %v8087 = vld [vmem:[#allocation4 + $0x48] sm:$0xff]
      %v8088 = vld [vmem:[#allocation4 + $0x50] sm:$0xff]
      %v8089 = vld [vmem:[#allocation4 + $0x58] sm:$0xff]
      %v8090 = vld [vmem:[#allocation4 + $0x60] sm:$0xff]
      %v8091 = vld [vmem:[#allocation4 + $0x68] sm:$0xff]
      %v8092 = vld [vmem:[#allocation4 + $0x70] sm:$0xff]
      %v8093 = vld [vmem:[#allocation4 + $0x78] sm:$0xff]
      %v8094 = vld [vmem:[#allocation4 + $0x80] sm:$0xff]
      %v8095 = vld [vmem:[#allocation4 + $0x88] sm:$0xff]
      %v8096 = vld [vmem:[#allocation4 + $0x90] sm:$0xff]
      %v8097 = vld [vmem:[#allocation4 + $0x98] sm:$0xff]
      %v8098 = vld [vmem:[#allocation4 + $0xa0] sm:$0xff]
      %v8099 = vld [vmem:[#allocation4 + $0xa8] sm:$0xff]
      %v8100 = vld [vmem:[#allocation4 + $0xb0] sm:$0xff]
      %v8101 = vld [vmem:[#allocation4 + $0xb8] sm:$0xff]
      %v8102 = vld [vmem:[#allocation4 + $0xc0] sm:$0xff]
      %v8103 = vld [vmem:[#allocation4 + $0xc8] sm:$0xff]
      %v8104 = vld [vmem:[#allocation4 + $0xd0] sm:$0xff]
      %v8105 = vld [vmem:[#allocation4 + $0xd8] sm:$0xff]
      %v8106 = vld [vmem:[#allocation4 + $0xe0] sm:$0xff]
      %v8107 = vld [vmem:[#allocation4 + $0xe8] sm:$0xff]
      %v8108 = vld [vmem:[#allocation4 + $0xf0] sm:$0xff]
      %v8109 = vld [vmem:[#allocation4 + $0xf8] sm:$0x3f]
      %s8110 = scalar_lea.vmem %s3, 192
      %v8111 = vld [vmem:[%s8110] sm:$0xff]
      %v8112 = vld [vmem:[%s8110 + $0x8] sm:$0xff]
      %v8113 = vld [vmem:[%s8110 + $0x10] sm:$0xff]
      %v8114 = vld [vmem:[%s8110 + $0x18] sm:$0xff]
      %v8116 = vsel %vm957, %v8082, 0
      %v8119 = vsel %vm957, %v8083, 0
      %v8122 = vsel %vm957, %v8084, 0
      %v8125 = vsel %vm957, %v8085, 0
      %v8128 = vsel %vm957, %v8086, 0
      %v8131 = vsel %vm957, %v8087, 0
      %v8134 = vsel %vm957, %v8088, 0
      %v8137 = vsel %vm957, %v8089, 0
      %v8140 = vsel %vm957, %v8090, 0
      %v8143 = vsel %vm957, %v8091, 0
      %v8146 = vsel %vm957, %v8092, 0
      %v8149 = vsel %vm957, %v8093, 0
      %v8152 = vsel %vm957, %v8094, 0
      %v8155 = vsel %vm957, %v8095, 0
      %v8158 = vsel %vm957, %v8096, 0
      %v8161 = vsel %vm957, %v8097, 0
      %v8164 = vsel %vm957, %v8098, 0
      %v8167 = vsel %vm957, %v8099, 0
      %v8170 = vsel %vm957, %v8100, 0
      %v8173 = vsel %vm957, %v8101, 0
      %v8176 = vsel %vm957, %v8102, 0
      %v8179 = vsel %vm957, %v8103, 0
      %v8182 = vsel %vm957, %v8104, 0
      %v8185 = vsel %vm957, %v8105, 0
      %v8188 = vsel %vm957, %v8106, 0
      %v8191 = vsel %vm957, %v8107, 0
      %v8194 = vsel %vm957, %v8108, 0
      %v8197 = vsel %vm957, %v8109, 0
      %8199 = vmatprep.subr.mxu0 0.0
      %8200 = vmatpush1.msra.mxu0 0.0
      %8201 = vmatprep.subr.mxu0 0.0
      %8202 = vmatpush1.msra.mxu0 0.0
      %8203 = vmatprep.subr.mxu0 0.0
      %8204 = vmatpush1.msra.mxu0 0.0
      %8205 = vmatprep.subr.mxu0 0.0
      %8206 = vmatpush1.msra.mxu0 0.0
      %8207 = vmatprep.subr.mxu0 0.0
      %8208 = vmatpush1.msra.mxu0 0.0
      %8209 = vmatprep.subr.mxu0 0.0
      %8210 = vmatpush1.msra.mxu0 0.0
      %8211 = vmatprep.subr.mxu0 0.0
      %8212 = vmatpush1.msra.mxu0 0.0
      %8213 = vmatprep.subr.mxu0 0.0
      %8214 = vmatpush1.msra.mxu0 0.0
      %8215 = vmatprep.subr.mxu0 0.0
      %8216 = vmatpush1.msra.mxu0 0.0
      %8217 = vmatprep.subr.mxu0 0.0
      %8218 = vmatpush1.msra.mxu0 0.0
      %8219 = vmatprep.subr.mxu0 0.0
      %8220 = vmatpush1.msra.mxu0 0.0
      %8221 = vmatprep.subr.mxu0 0.0
      %8222 = vmatpush1.msra.mxu0 0.0
      %8223 = vmatprep.subr.mxu0 0.0
      %8224 = vmatpush1.msra.mxu0 %v8114
      %8225 = vmatprep.subr.mxu0 0.0
      %8226 = vmatpush1.msra.mxu0 %v8113
      %8227 = vmatprep.subr.mxu0 0.0
      %8228 = vmatpush1.msra.mxu0 %v8112
      %8229 = vmatprep.subr.mxu0 0.0
      %8230 = vmatpush1.msra.mxu0 %v8111
      %8231 = vmatprep.subr.mxu0 0.0
      %8232 = vmatpush2.msra.mxu0 0.0
      %8233 = vmatprep.subr.mxu0 0.0
      %8234 = vmatpush2.msra.mxu0 0.0
      %8235 = vmatprep.subr.mxu0 0.0
      %8236 = vmatpush2.msra.mxu0 0.0
      %8237 = vmatprep.subr.mxu0 0.0
      %8238 = vmatpush2.msra.mxu0 0.0
      %8239 = vmatprep.subr.mxu0 0.0
      %8240 = vmatpush2.msra.mxu0 0.0
      %8241 = vmatprep.subr.mxu0 0.0
      %8242 = vmatpush2.msra.mxu0 0.0
      %8243 = vmatprep.subr.mxu0 0.0
      %8244 = vmatpush2.msra.mxu0 0.0
      %8245 = vmatprep.subr.mxu0 0.0
      %8246 = vmatpush2.msra.mxu0 0.0
      %8247 = vmatprep.subr.mxu0 0.0
      %8248 = vmatpush2.msra.mxu0 0.0
      %8249 = vmatprep.subr.mxu0 0.0
      %8250 = vmatpush2.msra.mxu0 0.0
      %8251 = vmatprep.subr.mxu0 0.0
      %8252 = vmatpush2.msra.mxu0 0.0
      %8253 = vmatprep.subr.mxu0 0.0
      %8254 = vmatpush2.msra.mxu0 0.0
      %8255 = vmatprep.subr.mxu0 0.0
      %8256 = vmatpush2.msra.mxu0 0.0
      %8257 = vmatprep.subr.mxu0 0.0
      %8258 = vmatpush2.msra.mxu0 0.0
      %8259 = vmatprep.subr.mxu0 0.0
      %8260 = vmatpush2.msra.mxu0 0.0
      %8261 = vmatprep.subr.mxu0 0.0
      %8262 = vmatpush2.msra.mxu0 0.0
      %8263 = vmatprep.mubr.f32.mxu0 0.0
      %8264 = vmatmul.mubr.f32.gmra.mxu0 %v8116
      %v8265 = vpop.f32.mrf.mxu0
      %v8266 = vadd.f32 0.0, %v8265
      %v8267 = vpop.f32.mrf.mxu0
      %8268 = vmatprep.mubr.f32.mxu0 0.0
      %8269 = vmatmul.mubr.f32.gmra.mxu0 %v8119
      %v8270 = vpop.f32.mrf.mxu0
      %v8271 = vadd.f32 0.0, %v8270
      %v8272 = vpop.f32.mrf.mxu0
      %8273 = vmatprep.mubr.f32.mxu0 0.0
      %8274 = vmatmul.mubr.f32.gmra.mxu0 %v8122
      %v8275 = vpop.f32.mrf.mxu0
      %v8276 = vadd.f32 0.0, %v8275
      %v8277 = vpop.f32.mrf.mxu0
      %8278 = vmatprep.mubr.f32.mxu0 0.0
      %8279 = vmatmul.mubr.f32.gmra.mxu0 %v8125
      %v8280 = vpop.f32.mrf.mxu0
      %v8281 = vadd.f32 0.0, %v8280
      %v8282 = vpop.f32.mrf.mxu0
      %8283 = vmatprep.mubr.f32.mxu0 0.0
      %8284 = vmatmul.mubr.f32.gmra.mxu0 %v8128
      %v8285 = vpop.f32.mrf.mxu0
      %v8286 = vadd.f32 0.0, %v8285
      %v8287 = vpop.f32.mrf.mxu0
      %8288 = vmatprep.mubr.f32.mxu0 0.0
      %8289 = vmatmul.mubr.f32.gmra.mxu0 %v8131
      %v8290 = vpop.f32.mrf.mxu0
      %v8291 = vadd.f32 0.0, %v8290
      %v8292 = vpop.f32.mrf.mxu0
      %8293 = vmatprep.mubr.f32.mxu0 0.0
      %8294 = vmatmul.mubr.f32.gmra.mxu0 %v8134
      %v8295 = vpop.f32.mrf.mxu0
      %v8296 = vadd.f32 0.0, %v8295
      %v8297 = vpop.f32.mrf.mxu0
      %8298 = vmatprep.mubr.f32.mxu0 0.0
      %8299 = vmatmul.mubr.f32.gmra.mxu0 %v8137
      %v8300 = vpop.f32.mrf.mxu0
      %v8301 = vadd.f32 0.0, %v8300
      %v8302 = vpop.f32.mrf.mxu0
      %8303 = vmatprep.mubr.f32.mxu0 0.0
      %8304 = vmatmul.mubr.f32.gmra.mxu0 %v8140
      %v8305 = vpop.f32.mrf.mxu0
      %v8306 = vadd.f32 0.0, %v8305
      %v8307 = vpop.f32.mrf.mxu0
      %8308 = vmatprep.mubr.f32.mxu0 0.0
      %8309 = vmatmul.mubr.f32.gmra.mxu0 %v8143
      %v8310 = vpop.f32.mrf.mxu0
      %v8311 = vadd.f32 0.0, %v8310
      %v8312 = vpop.f32.mrf.mxu0
      %8313 = vmatprep.mubr.f32.mxu0 0.0
      %8314 = vmatmul.mubr.f32.gmra.mxu0 %v8146
      %v8315 = vpop.f32.mrf.mxu0
      %v8316 = vadd.f32 0.0, %v8315
      %v8317 = vpop.f32.mrf.mxu0
      %8318 = vmatprep.mubr.f32.mxu0 0.0
      %8319 = vmatmul.mubr.f32.gmra.mxu0 %v8149
      %v8320 = vpop.f32.mrf.mxu0
      %v8321 = vadd.f32 0.0, %v8320
      %v8322 = vpop.f32.mrf.mxu0
      %8323 = vmatprep.mubr.f32.mxu0 0.0
      %8324 = vmatmul.mubr.f32.gmra.mxu0 %v8152
      %v8325 = vpop.f32.mrf.mxu0
      %v8326 = vadd.f32 0.0, %v8325
      %v8327 = vpop.f32.mrf.mxu0
      %8328 = vmatprep.mubr.f32.mxu0 0.0
      %8329 = vmatmul.mubr.f32.gmra.mxu0 %v8155
      %v8330 = vpop.f32.mrf.mxu0
      %v8331 = vadd.f32 0.0, %v8330
      %v8332 = vpop.f32.mrf.mxu0
      %8333 = vmatprep.mubr.f32.mxu0 0.0
      %8334 = vmatmul.mubr.f32.gmra.mxu0 %v8158
      %v8335 = vpop.f32.mrf.mxu0
      %v8336 = vadd.f32 0.0, %v8335
      %v8337 = vpop.f32.mrf.mxu0
      %8338 = vmatprep.mubr.f32.mxu0 0.0
      %8339 = vmatmul.mubr.f32.gmra.mxu0 %v8161
      %v8340 = vpop.f32.mrf.mxu0
      %v8341 = vadd.f32 0.0, %v8340
      %v8342 = vpop.f32.mrf.mxu0
      %8343 = vmatprep.mubr.f32.mxu0 0.0
      %8344 = vmatmul.mubr.f32.gmra.mxu0 %v8164
      %v8345 = vpop.f32.mrf.mxu0
      %v8346 = vadd.f32 0.0, %v8345
      %v8347 = vpop.f32.mrf.mxu0
      %8348 = vmatprep.mubr.f32.mxu0 0.0
      %8349 = vmatmul.mubr.f32.gmra.mxu0 %v8167
      %v8350 = vpop.f32.mrf.mxu0
      %v8351 = vadd.f32 0.0, %v8350
      %v8352 = vpop.f32.mrf.mxu0
      %8353 = vmatprep.mubr.f32.mxu0 0.0
      %8354 = vmatmul.mubr.f32.gmra.mxu0 %v8170
      %v8355 = vpop.f32.mrf.mxu0
      %v8356 = vadd.f32 0.0, %v8355
      %v8357 = vpop.f32.mrf.mxu0
      %8358 = vmatprep.mubr.f32.mxu0 0.0
      %8359 = vmatmul.mubr.f32.gmra.mxu0 %v8173
      %v8360 = vpop.f32.mrf.mxu0
      %v8361 = vadd.f32 0.0, %v8360
      %v8362 = vpop.f32.mrf.mxu0
      %8363 = vmatprep.mubr.f32.mxu0 0.0
      %8364 = vmatmul.mubr.f32.gmra.mxu0 %v8176
      %v8365 = vpop.f32.mrf.mxu0
      %v8366 = vadd.f32 0.0, %v8365
      %v8367 = vpop.f32.mrf.mxu0
      %8368 = vmatprep.mubr.f32.mxu0 0.0
      %8369 = vmatmul.mubr.f32.gmra.mxu0 %v8179
      %v8370 = vpop.f32.mrf.mxu0
      %v8371 = vadd.f32 0.0, %v8370
      %v8372 = vpop.f32.mrf.mxu0
      %8373 = vmatprep.mubr.f32.mxu0 0.0
      %8374 = vmatmul.mubr.f32.gmra.mxu0 %v8182
      %v8375 = vpop.f32.mrf.mxu0
      %v8376 = vadd.f32 0.0, %v8375
      %v8377 = vpop.f32.mrf.mxu0
      %8378 = vmatprep.mubr.f32.mxu0 0.0
      %8379 = vmatmul.mubr.f32.gmra.mxu0 %v8185
      %v8380 = vpop.f32.mrf.mxu0
      %v8381 = vadd.f32 0.0, %v8380
      %v8382 = vpop.f32.mrf.mxu0
      %8383 = vmatprep.mubr.f32.mxu0 0.0
      %8384 = vmatmul.mubr.f32.gmra.mxu0 %v8188
      %v8385 = vpop.f32.mrf.mxu0
      %v8386 = vadd.f32 0.0, %v8385
      %v8387 = vpop.f32.mrf.mxu0
      %8388 = vmatprep.mubr.f32.mxu0 0.0
      %8389 = vmatmul.mubr.f32.gmra.mxu0 %v8191
      %v8390 = vpop.f32.mrf.mxu0
      %v8391 = vadd.f32 0.0, %v8390
      %v8392 = vpop.f32.mrf.mxu0
      %8393 = vmatprep.mubr.f32.mxu0 0.0
      %8394 = vmatmul.mubr.f32.gmra.mxu0 %v8194
      %v8395 = vpop.f32.mrf.mxu0
      %v8396 = vadd.f32 0.0, %v8395
      %v8397 = vpop.f32.mrf.mxu0
      %8398 = vmatprep.mubr.f32.mxu0 0.0
      %8399 = vmatmul.mubr.f32.gmra.mxu0 %v8197
      %v8400 = vpop.f32.mrf.mxu0
      %v8401 = vadd.f32 0.0, %v8400
      %v8402 = vpop.f32.mrf.mxu0
      %8403 = vdwg.mxu0
      %v8404 = vadd.f32 %v8054, %v8266
      %v8405 = vadd.f32 %v8055, %v8271
      %v8406 = vadd.f32 %v8056, %v8276
      %v8407 = vadd.f32 %v8057, %v8281
      %v8408 = vadd.f32 %v8058, %v8286
      %v8409 = vadd.f32 %v8059, %v8291
      %v8410 = vadd.f32 %v8060, %v8296
      %v8411 = vadd.f32 %v8061, %v8301
      %v8412 = vadd.f32 %v8062, %v8306
      %v8413 = vadd.f32 %v8063, %v8311
      %v8414 = vadd.f32 %v8064, %v8316
      %v8415 = vadd.f32 %v8065, %v8321
      %v8416 = vadd.f32 %v8066, %v8326
      %v8417 = vadd.f32 %v8067, %v8331
      %v8418 = vadd.f32 %v8068, %v8336
      %v8419 = vadd.f32 %v8069, %v8341
      %v8420 = vadd.f32 %v8070, %v8346
      %v8421 = vadd.f32 %v8071, %v8351
      %v8422 = vadd.f32 %v8072, %v8356
      %v8423 = vadd.f32 %v8073, %v8361
      %v8424 = vadd.f32 %v8074, %v8366
      %v8425 = vadd.f32 %v8075, %v8371
      %v8426 = vadd.f32 %v8076, %v8376
      %v8427 = vadd.f32 %v8077, %v8381
      %v8428 = vadd.f32 %v8078, %v8386
      %v8429 = vadd.f32 %v8079, %v8391
      %v8430 = vadd.f32 %v8080, %v8396
      %v8431 = vadd.f32 %v8081, %v8401
      %v8432 = vld [vmem:[#allocation4 + $0x21] sm:$0xff]
      %v8433 = vld [vmem:[#allocation4 + $0x29] sm:$0xff]
      %v8434 = vld [vmem:[#allocation4 + $0x31] sm:$0xff]
      %v8435 = vld [vmem:[#allocation4 + $0x39] sm:$0xff]
      %v8436 = vld [vmem:[#allocation4 + $0x41] sm:$0xff]
      %v8437 = vld [vmem:[#allocation4 + $0x49] sm:$0xff]
      %v8438 = vld [vmem:[#allocation4 + $0x51] sm:$0xff]
      %v8439 = vld [vmem:[#allocation4 + $0x59] sm:$0xff]
      %v8440 = vld [vmem:[#allocation4 + $0x61] sm:$0xff]
      %v8441 = vld [vmem:[#allocation4 + $0x69] sm:$0xff]
      %v8442 = vld [vmem:[#allocation4 + $0x71] sm:$0xff]
      %v8443 = vld [vmem:[#allocation4 + $0x79] sm:$0xff]
      %v8444 = vld [vmem:[#allocation4 + $0x81] sm:$0xff]
      %v8445 = vld [vmem:[#allocation4 + $0x89] sm:$0xff]
      %v8446 = vld [vmem:[#allocation4 + $0x91] sm:$0xff]
      %v8447 = vld [vmem:[#allocation4 + $0x99] sm:$0xff]
      %v8448 = vld [vmem:[#allocation4 + $0xa1] sm:$0xff]
      %v8449 = vld [vmem:[#allocation4 + $0xa9] sm:$0xff]
      %v8450 = vld [vmem:[#allocation4 + $0xb1] sm:$0xff]
      %v8451 = vld [vmem:[#allocation4 + $0xb9] sm:$0xff]
      %v8452 = vld [vmem:[#allocation4 + $0xc1] sm:$0xff]
      %v8453 = vld [vmem:[#allocation4 + $0xc9] sm:$0xff]
      %v8454 = vld [vmem:[#allocation4 + $0xd1] sm:$0xff]
      %v8455 = vld [vmem:[#allocation4 + $0xd9] sm:$0xff]
      %v8456 = vld [vmem:[#allocation4 + $0xe1] sm:$0xff]
      %v8457 = vld [vmem:[#allocation4 + $0xe9] sm:$0xff]
      %v8458 = vld [vmem:[#allocation4 + $0xf1] sm:$0xff]
      %v8459 = vld [vmem:[#allocation4 + $0xf9] sm:$0x3f]
      %s8460 = scalar_lea.vmem %s3, 224
      %v8461 = vld [vmem:[%s8460] sm:$0xff]
      %v8462 = vld [vmem:[%s8460 + $0x8] sm:$0xff]
      %v8463 = vld [vmem:[%s8460 + $0x10] sm:$0xff]
      %v8464 = vld [vmem:[%s8460 + $0x18] sm:$0xff]
      %v8466 = vsel %vm957, %v8432, 0
      %v8469 = vsel %vm957, %v8433, 0
      %v8472 = vsel %vm957, %v8434, 0
      %v8475 = vsel %vm957, %v8435, 0
      %v8478 = vsel %vm957, %v8436, 0
      %v8481 = vsel %vm957, %v8437, 0
      %v8484 = vsel %vm957, %v8438, 0
      %v8487 = vsel %vm957, %v8439, 0
      %v8490 = vsel %vm957, %v8440, 0
      %v8493 = vsel %vm957, %v8441, 0
      %v8496 = vsel %vm957, %v8442, 0
      %v8499 = vsel %vm957, %v8443, 0
      %v8502 = vsel %vm957, %v8444, 0
      %v8505 = vsel %vm957, %v8445, 0
      %v8508 = vsel %vm957, %v8446, 0
      %v8511 = vsel %vm957, %v8447, 0
      %v8514 = vsel %vm957, %v8448, 0
      %v8517 = vsel %vm957, %v8449, 0
      %v8520 = vsel %vm957, %v8450, 0
      %v8523 = vsel %vm957, %v8451, 0
      %v8526 = vsel %vm957, %v8452, 0
      %v8529 = vsel %vm957, %v8453, 0
      %v8532 = vsel %vm957, %v8454, 0
      %v8535 = vsel %vm957, %v8455, 0
      %v8538 = vsel %vm957, %v8456, 0
      %v8541 = vsel %vm957, %v8457, 0
      %v8544 = vsel %vm957, %v8458, 0
      %v8547 = vsel %vm957, %v8459, 0
      %8549 = vmatprep.subr.mxu0 0.0
      %8550 = vmatpush1.msra.mxu0 0.0
      %8551 = vmatprep.subr.mxu0 0.0
      %8552 = vmatpush1.msra.mxu0 0.0
      %8553 = vmatprep.subr.mxu0 0.0
      %8554 = vmatpush1.msra.mxu0 0.0
      %8555 = vmatprep.subr.mxu0 0.0
      %8556 = vmatpush1.msra.mxu0 0.0
      %8557 = vmatprep.subr.mxu0 0.0
      %8558 = vmatpush1.msra.mxu0 0.0
      %8559 = vmatprep.subr.mxu0 0.0
      %8560 = vmatpush1.msra.mxu0 0.0
      %8561 = vmatprep.subr.mxu0 0.0
      %8562 = vmatpush1.msra.mxu0 0.0
      %8563 = vmatprep.subr.mxu0 0.0
      %8564 = vmatpush1.msra.mxu0 0.0
      %8565 = vmatprep.subr.mxu0 0.0
      %8566 = vmatpush1.msra.mxu0 0.0
      %8567 = vmatprep.subr.mxu0 0.0
      %8568 = vmatpush1.msra.mxu0 0.0
      %8569 = vmatprep.subr.mxu0 0.0
      %8570 = vmatpush1.msra.mxu0 0.0
      %8571 = vmatprep.subr.mxu0 0.0
      %8572 = vmatpush1.msra.mxu0 0.0
      %8573 = vmatprep.subr.mxu0 0.0
      %8574 = vmatpush1.msra.mxu0 %v8464
      %8575 = vmatprep.subr.mxu0 0.0
      %8576 = vmatpush1.msra.mxu0 %v8463
      %8577 = vmatprep.subr.mxu0 0.0
      %8578 = vmatpush1.msra.mxu0 %v8462
      %8579 = vmatprep.subr.mxu0 0.0
      %8580 = vmatpush1.msra.mxu0 %v8461
      %8581 = vmatprep.subr.mxu0 0.0
      %8582 = vmatpush2.msra.mxu0 0.0
      %8583 = vmatprep.subr.mxu0 0.0
      %8584 = vmatpush2.msra.mxu0 0.0
      %8585 = vmatprep.subr.mxu0 0.0
      %8586 = vmatpush2.msra.mxu0 0.0
      %8587 = vmatprep.subr.mxu0 0.0
      %8588 = vmatpush2.msra.mxu0 0.0
      %8589 = vmatprep.subr.mxu0 0.0
      %8590 = vmatpush2.msra.mxu0 0.0
      %8591 = vmatprep.subr.mxu0 0.0
      %8592 = vmatpush2.msra.mxu0 0.0
      %8593 = vmatprep.subr.mxu0 0.0
      %8594 = vmatpush2.msra.mxu0 0.0
      %8595 = vmatprep.subr.mxu0 0.0
      %8596 = vmatpush2.msra.mxu0 0.0
      %8597 = vmatprep.subr.mxu0 0.0
      %8598 = vmatpush2.msra.mxu0 0.0
      %8599 = vmatprep.subr.mxu0 0.0
      %8600 = vmatpush2.msra.mxu0 0.0
      %8601 = vmatprep.subr.mxu0 0.0
      %8602 = vmatpush2.msra.mxu0 0.0
      %8603 = vmatprep.subr.mxu0 0.0
      %8604 = vmatpush2.msra.mxu0 0.0
      %8605 = vmatprep.subr.mxu0 0.0
      %8606 = vmatpush2.msra.mxu0 0.0
      %8607 = vmatprep.subr.mxu0 0.0
      %8608 = vmatpush2.msra.mxu0 0.0
      %8609 = vmatprep.subr.mxu0 0.0
      %8610 = vmatpush2.msra.mxu0 0.0
      %8611 = vmatprep.subr.mxu0 0.0
      %8612 = vmatpush2.msra.mxu0 0.0
      %8613 = vmatprep.mubr.f32.mxu0 0.0
      %8614 = vmatmul.mubr.f32.gmra.mxu0 %v8466
      %v8615 = vpop.f32.mrf.mxu0
      %v8616 = vadd.f32 0.0, %v8615
      %v8617 = vpop.f32.mrf.mxu0
      %8618 = vmatprep.mubr.f32.mxu0 0.0
      %8619 = vmatmul.mubr.f32.gmra.mxu0 %v8469
      %v8620 = vpop.f32.mrf.mxu0
      %v8621 = vadd.f32 0.0, %v8620
      %v8622 = vpop.f32.mrf.mxu0
      %8623 = vmatprep.mubr.f32.mxu0 0.0
      %8624 = vmatmul.mubr.f32.gmra.mxu0 %v8472
      %v8625 = vpop.f32.mrf.mxu0
      %v8626 = vadd.f32 0.0, %v8625
      %v8627 = vpop.f32.mrf.mxu0
      %8628 = vmatprep.mubr.f32.mxu0 0.0
      %8629 = vmatmul.mubr.f32.gmra.mxu0 %v8475
      %v8630 = vpop.f32.mrf.mxu0
      %v8631 = vadd.f32 0.0, %v8630
      %v8632 = vpop.f32.mrf.mxu0
      %8633 = vmatprep.mubr.f32.mxu0 0.0
      %8634 = vmatmul.mubr.f32.gmra.mxu0 %v8478
      %v8635 = vpop.f32.mrf.mxu0
      %v8636 = vadd.f32 0.0, %v8635
      %v8637 = vpop.f32.mrf.mxu0
      %8638 = vmatprep.mubr.f32.mxu0 0.0
      %8639 = vmatmul.mubr.f32.gmra.mxu0 %v8481
      %v8640 = vpop.f32.mrf.mxu0
      %v8641 = vadd.f32 0.0, %v8640
      %v8642 = vpop.f32.mrf.mxu0
      %8643 = vmatprep.mubr.f32.mxu0 0.0
      %8644 = vmatmul.mubr.f32.gmra.mxu0 %v8484
      %v8645 = vpop.f32.mrf.mxu0
      %v8646 = vadd.f32 0.0, %v8645
      %v8647 = vpop.f32.mrf.mxu0
      %8648 = vmatprep.mubr.f32.mxu0 0.0
      %8649 = vmatmul.mubr.f32.gmra.mxu0 %v8487
      %v8650 = vpop.f32.mrf.mxu0
      %v8651 = vadd.f32 0.0, %v8650
      %v8652 = vpop.f32.mrf.mxu0
      %8653 = vmatprep.mubr.f32.mxu0 0.0
      %8654 = vmatmul.mubr.f32.gmra.mxu0 %v8490
      %v8655 = vpop.f32.mrf.mxu0
      %v8656 = vadd.f32 0.0, %v8655
      %v8657 = vpop.f32.mrf.mxu0
      %8658 = vmatprep.mubr.f32.mxu0 0.0
      %8659 = vmatmul.mubr.f32.gmra.mxu0 %v8493
      %v8660 = vpop.f32.mrf.mxu0
      %v8661 = vadd.f32 0.0, %v8660
      %v8662 = vpop.f32.mrf.mxu0
      %8663 = vmatprep.mubr.f32.mxu0 0.0
      %8664 = vmatmul.mubr.f32.gmra.mxu0 %v8496
      %v8665 = vpop.f32.mrf.mxu0
      %v8666 = vadd.f32 0.0, %v8665
      %v8667 = vpop.f32.mrf.mxu0
      %8668 = vmatprep.mubr.f32.mxu0 0.0
      %8669 = vmatmul.mubr.f32.gmra.mxu0 %v8499
      %v8670 = vpop.f32.mrf.mxu0
      %v8671 = vadd.f32 0.0, %v8670
      %v8672 = vpop.f32.mrf.mxu0
      %8673 = vmatprep.mubr.f32.mxu0 0.0
      %8674 = vmatmul.mubr.f32.gmra.mxu0 %v8502
      %v8675 = vpop.f32.mrf.mxu0
      %v8676 = vadd.f32 0.0, %v8675
      %v8677 = vpop.f32.mrf.mxu0
      %8678 = vmatprep.mubr.f32.mxu0 0.0
      %8679 = vmatmul.mubr.f32.gmra.mxu0 %v8505
      %v8680 = vpop.f32.mrf.mxu0
      %v8681 = vadd.f32 0.0, %v8680
      %v8682 = vpop.f32.mrf.mxu0
      %8683 = vmatprep.mubr.f32.mxu0 0.0
      %8684 = vmatmul.mubr.f32.gmra.mxu0 %v8508
      %v8685 = vpop.f32.mrf.mxu0
      %v8686 = vadd.f32 0.0, %v8685
      %v8687 = vpop.f32.mrf.mxu0
      %8688 = vmatprep.mubr.f32.mxu0 0.0
      %8689 = vmatmul.mubr.f32.gmra.mxu0 %v8511
      %v8690 = vpop.f32.mrf.mxu0
      %v8691 = vadd.f32 0.0, %v8690
      %v8692 = vpop.f32.mrf.mxu0
      %8693 = vmatprep.mubr.f32.mxu0 0.0
      %8694 = vmatmul.mubr.f32.gmra.mxu0 %v8514
      %v8695 = vpop.f32.mrf.mxu0
      %v8696 = vadd.f32 0.0, %v8695
      %v8697 = vpop.f32.mrf.mxu0
      %8698 = vmatprep.mubr.f32.mxu0 0.0
      %8699 = vmatmul.mubr.f32.gmra.mxu0 %v8517
      %v8700 = vpop.f32.mrf.mxu0
      %v8701 = vadd.f32 0.0, %v8700
      %v8702 = vpop.f32.mrf.mxu0
      %8703 = vmatprep.mubr.f32.mxu0 0.0
      %8704 = vmatmul.mubr.f32.gmra.mxu0 %v8520
      %v8705 = vpop.f32.mrf.mxu0
      %v8706 = vadd.f32 0.0, %v8705
      %v8707 = vpop.f32.mrf.mxu0
      %8708 = vmatprep.mubr.f32.mxu0 0.0
      %8709 = vmatmul.mubr.f32.gmra.mxu0 %v8523
      %v8710 = vpop.f32.mrf.mxu0
      %v8711 = vadd.f32 0.0, %v8710
      %v8712 = vpop.f32.mrf.mxu0
      %8713 = vmatprep.mubr.f32.mxu0 0.0
      %8714 = vmatmul.mubr.f32.gmra.mxu0 %v8526
      %v8715 = vpop.f32.mrf.mxu0
      %v8716 = vadd.f32 0.0, %v8715
      %v8717 = vpop.f32.mrf.mxu0
      %8718 = vmatprep.mubr.f32.mxu0 0.0
      %8719 = vmatmul.mubr.f32.gmra.mxu0 %v8529
      %v8720 = vpop.f32.mrf.mxu0
      %v8721 = vadd.f32 0.0, %v8720
      %v8722 = vpop.f32.mrf.mxu0
      %8723 = vmatprep.mubr.f32.mxu0 0.0
      %8724 = vmatmul.mubr.f32.gmra.mxu0 %v8532
      %v8725 = vpop.f32.mrf.mxu0
      %v8726 = vadd.f32 0.0, %v8725
      %v8727 = vpop.f32.mrf.mxu0
      %8728 = vmatprep.mubr.f32.mxu0 0.0
      %8729 = vmatmul.mubr.f32.gmra.mxu0 %v8535
      %v8730 = vpop.f32.mrf.mxu0
      %v8731 = vadd.f32 0.0, %v8730
      %v8732 = vpop.f32.mrf.mxu0
      %8733 = vmatprep.mubr.f32.mxu0 0.0
      %8734 = vmatmul.mubr.f32.gmra.mxu0 %v8538
      %v8735 = vpop.f32.mrf.mxu0
      %v8736 = vadd.f32 0.0, %v8735
      %v8737 = vpop.f32.mrf.mxu0
      %8738 = vmatprep.mubr.f32.mxu0 0.0
      %8739 = vmatmul.mubr.f32.gmra.mxu0 %v8541
      %v8740 = vpop.f32.mrf.mxu0
      %v8741 = vadd.f32 0.0, %v8740
      %v8742 = vpop.f32.mrf.mxu0
      %8743 = vmatprep.mubr.f32.mxu0 0.0
      %8744 = vmatmul.mubr.f32.gmra.mxu0 %v8544
      %v8745 = vpop.f32.mrf.mxu0
      %v8746 = vadd.f32 0.0, %v8745
      %v8747 = vpop.f32.mrf.mxu0
      %8748 = vmatprep.mubr.f32.mxu0 0.0
      %8749 = vmatmul.mubr.f32.gmra.mxu0 %v8547
      %v8750 = vpop.f32.mrf.mxu0
      %v8751 = vadd.f32 0.0, %v8750
      %v8752 = vpop.f32.mrf.mxu0
      %8753 = vdwg.mxu0
      %v8754 = vadd.f32 %v8404, %v8616
      %v8755 = vadd.f32 %v8405, %v8621
      %v8756 = vadd.f32 %v8406, %v8626
      %v8757 = vadd.f32 %v8407, %v8631
      %v8758 = vadd.f32 %v8408, %v8636
      %v8759 = vadd.f32 %v8409, %v8641
      %v8760 = vadd.f32 %v8410, %v8646
      %v8761 = vadd.f32 %v8411, %v8651
      %v8762 = vadd.f32 %v8412, %v8656
      %v8763 = vadd.f32 %v8413, %v8661
      %v8764 = vadd.f32 %v8414, %v8666
      %v8765 = vadd.f32 %v8415, %v8671
      %v8766 = vadd.f32 %v8416, %v8676
      %v8767 = vadd.f32 %v8417, %v8681
      %v8768 = vadd.f32 %v8418, %v8686
      %v8769 = vadd.f32 %v8419, %v8691
      %v8770 = vadd.f32 %v8420, %v8696
      %v8771 = vadd.f32 %v8421, %v8701
      %v8772 = vadd.f32 %v8422, %v8706
      %v8773 = vadd.f32 %v8423, %v8711
      %v8774 = vadd.f32 %v8424, %v8716
      %v8775 = vadd.f32 %v8425, %v8721
      %v8776 = vadd.f32 %v8426, %v8726
      %v8777 = vadd.f32 %v8427, %v8731
      %v8778 = vadd.f32 %v8428, %v8736
      %v8779 = vadd.f32 %v8429, %v8741
      %v8780 = vadd.f32 %v8430, %v8746
      %v8781 = vadd.f32 %v8431, %v8751
      %v8782 = vld [vmem:[#allocation4 + $0x22] sm:$0xff]
      %v8783 = vld [vmem:[#allocation4 + $0x2a] sm:$0xff]
      %v8784 = vld [vmem:[#allocation4 + $0x32] sm:$0xff]
      %v8785 = vld [vmem:[#allocation4 + $0x3a] sm:$0xff]
      %v8786 = vld [vmem:[#allocation4 + $0x42] sm:$0xff]
      %v8787 = vld [vmem:[#allocation4 + $0x4a] sm:$0xff]
      %v8788 = vld [vmem:[#allocation4 + $0x52] sm:$0xff]
      %v8789 = vld [vmem:[#allocation4 + $0x5a] sm:$0xff]
      %v8790 = vld [vmem:[#allocation4 + $0x62] sm:$0xff]
      %v8791 = vld [vmem:[#allocation4 + $0x6a] sm:$0xff]
      %v8792 = vld [vmem:[#allocation4 + $0x72] sm:$0xff]
      %v8793 = vld [vmem:[#allocation4 + $0x7a] sm:$0xff]
      %v8794 = vld [vmem:[#allocation4 + $0x82] sm:$0xff]
      %v8795 = vld [vmem:[#allocation4 + $0x8a] sm:$0xff]
      %v8796 = vld [vmem:[#allocation4 + $0x92] sm:$0xff]
      %v8797 = vld [vmem:[#allocation4 + $0x9a] sm:$0xff]
      %v8798 = vld [vmem:[#allocation4 + $0xa2] sm:$0xff]
      %v8799 = vld [vmem:[#allocation4 + $0xaa] sm:$0xff]
      %v8800 = vld [vmem:[#allocation4 + $0xb2] sm:$0xff]
      %v8801 = vld [vmem:[#allocation4 + $0xba] sm:$0xff]
      %v8802 = vld [vmem:[#allocation4 + $0xc2] sm:$0xff]
      %v8803 = vld [vmem:[#allocation4 + $0xca] sm:$0xff]
      %v8804 = vld [vmem:[#allocation4 + $0xd2] sm:$0xff]
      %v8805 = vld [vmem:[#allocation4 + $0xda] sm:$0xff]
      %v8806 = vld [vmem:[#allocation4 + $0xe2] sm:$0xff]
      %v8807 = vld [vmem:[#allocation4 + $0xea] sm:$0xff]
      %v8808 = vld [vmem:[#allocation4 + $0xf2] sm:$0xff]
      %v8809 = vld [vmem:[#allocation4 + $0xfa] sm:$0x3f]
      %s8810 = scalar_lea.vmem %s3, 256
      %v8811 = vld [vmem:[%s8810] sm:$0xff]
      %v8812 = vld [vmem:[%s8810 + $0x8] sm:$0xff]
      %v8813 = vld [vmem:[%s8810 + $0x10] sm:$0xff]
      %v8814 = vld [vmem:[%s8810 + $0x18] sm:$0xff]
      %v8816 = vsel %vm957, %v8782, 0
      %v8819 = vsel %vm957, %v8783, 0
      %v8822 = vsel %vm957, %v8784, 0
      %v8825 = vsel %vm957, %v8785, 0
      %v8828 = vsel %vm957, %v8786, 0
      %v8831 = vsel %vm957, %v8787, 0
      %v8834 = vsel %vm957, %v8788, 0
      %v8837 = vsel %vm957, %v8789, 0
      %v8840 = vsel %vm957, %v8790, 0
      %v8843 = vsel %vm957, %v8791, 0
      %v8846 = vsel %vm957, %v8792, 0
      %v8849 = vsel %vm957, %v8793, 0
      %v8852 = vsel %vm957, %v8794, 0
      %v8855 = vsel %vm957, %v8795, 0
      %v8858 = vsel %vm957, %v8796, 0
      %v8861 = vsel %vm957, %v8797, 0
      %v8864 = vsel %vm957, %v8798, 0
      %v8867 = vsel %vm957, %v8799, 0
      %v8870 = vsel %vm957, %v8800, 0
      %v8873 = vsel %vm957, %v8801, 0
      %v8876 = vsel %vm957, %v8802, 0
      %v8879 = vsel %vm957, %v8803, 0
      %v8882 = vsel %vm957, %v8804, 0
      %v8885 = vsel %vm957, %v8805, 0
      %v8888 = vsel %vm957, %v8806, 0
      %v8891 = vsel %vm957, %v8807, 0
      %v8894 = vsel %vm957, %v8808, 0
      %v8897 = vsel %vm957, %v8809, 0
      %8899 = vmatprep.subr.mxu0 0.0
      %8900 = vmatpush1.msra.mxu0 0.0
      %8901 = vmatprep.subr.mxu0 0.0
      %8902 = vmatpush1.msra.mxu0 0.0
      %8903 = vmatprep.subr.mxu0 0.0
      %8904 = vmatpush1.msra.mxu0 0.0
      %8905 = vmatprep.subr.mxu0 0.0
      %8906 = vmatpush1.msra.mxu0 0.0
      %8907 = vmatprep.subr.mxu0 0.0
      %8908 = vmatpush1.msra.mxu0 0.0
      %8909 = vmatprep.subr.mxu0 0.0
      %8910 = vmatpush1.msra.mxu0 0.0
      %8911 = vmatprep.subr.mxu0 0.0
      %8912 = vmatpush1.msra.mxu0 0.0
      %8913 = vmatprep.subr.mxu0 0.0
      %8914 = vmatpush1.msra.mxu0 0.0
      %8915 = vmatprep.subr.mxu0 0.0
      %8916 = vmatpush1.msra.mxu0 0.0
      %8917 = vmatprep.subr.mxu0 0.0
      %8918 = vmatpush1.msra.mxu0 0.0
      %8919 = vmatprep.subr.mxu0 0.0
      %8920 = vmatpush1.msra.mxu0 0.0
      %8921 = vmatprep.subr.mxu0 0.0
      %8922 = vmatpush1.msra.mxu0 0.0
      %8923 = vmatprep.subr.mxu0 0.0
      %8924 = vmatpush1.msra.mxu0 %v8814
      %8925 = vmatprep.subr.mxu0 0.0
      %8926 = vmatpush1.msra.mxu0 %v8813
      %8927 = vmatprep.subr.mxu0 0.0
      %8928 = vmatpush1.msra.mxu0 %v8812
      %8929 = vmatprep.subr.mxu0 0.0
      %8930 = vmatpush1.msra.mxu0 %v8811
      %8931 = vmatprep.subr.mxu0 0.0
      %8932 = vmatpush2.msra.mxu0 0.0
      %8933 = vmatprep.subr.mxu0 0.0
      %8934 = vmatpush2.msra.mxu0 0.0
      %8935 = vmatprep.subr.mxu0 0.0
      %8936 = vmatpush2.msra.mxu0 0.0
      %8937 = vmatprep.subr.mxu0 0.0
      %8938 = vmatpush2.msra.mxu0 0.0
      %8939 = vmatprep.subr.mxu0 0.0
      %8940 = vmatpush2.msra.mxu0 0.0
      %8941 = vmatprep.subr.mxu0 0.0
      %8942 = vmatpush2.msra.mxu0 0.0
      %8943 = vmatprep.subr.mxu0 0.0
      %8944 = vmatpush2.msra.mxu0 0.0
      %8945 = vmatprep.subr.mxu0 0.0
      %8946 = vmatpush2.msra.mxu0 0.0
      %8947 = vmatprep.subr.mxu0 0.0
      %8948 = vmatpush2.msra.mxu0 0.0
      %8949 = vmatprep.subr.mxu0 0.0
      %8950 = vmatpush2.msra.mxu0 0.0
      %8951 = vmatprep.subr.mxu0 0.0
      %8952 = vmatpush2.msra.mxu0 0.0
      %8953 = vmatprep.subr.mxu0 0.0
      %8954 = vmatpush2.msra.mxu0 0.0
      %8955 = vmatprep.subr.mxu0 0.0
      %8956 = vmatpush2.msra.mxu0 0.0
      %8957 = vmatprep.subr.mxu0 0.0
      %8958 = vmatpush2.msra.mxu0 0.0
      %8959 = vmatprep.subr.mxu0 0.0
      %8960 = vmatpush2.msra.mxu0 0.0
      %8961 = vmatprep.subr.mxu0 0.0
      %8962 = vmatpush2.msra.mxu0 0.0
      %8963 = vmatprep.mubr.f32.mxu0 0.0
      %8964 = vmatmul.mubr.f32.gmra.mxu0 %v8816
      %v8965 = vpop.f32.mrf.mxu0
      %v8966 = vadd.f32 0.0, %v8965
      %v8967 = vpop.f32.mrf.mxu0
      %8968 = vmatprep.mubr.f32.mxu0 0.0
      %8969 = vmatmul.mubr.f32.gmra.mxu0 %v8819
      %v8970 = vpop.f32.mrf.mxu0
      %v8971 = vadd.f32 0.0, %v8970
      %v8972 = vpop.f32.mrf.mxu0
      %8973 = vmatprep.mubr.f32.mxu0 0.0
      %8974 = vmatmul.mubr.f32.gmra.mxu0 %v8822
      %v8975 = vpop.f32.mrf.mxu0
      %v8976 = vadd.f32 0.0, %v8975
      %v8977 = vpop.f32.mrf.mxu0
      %8978 = vmatprep.mubr.f32.mxu0 0.0
      %8979 = vmatmul.mubr.f32.gmra.mxu0 %v8825
      %v8980 = vpop.f32.mrf.mxu0
      %v8981 = vadd.f32 0.0, %v8980
      %v8982 = vpop.f32.mrf.mxu0
      %8983 = vmatprep.mubr.f32.mxu0 0.0
      %8984 = vmatmul.mubr.f32.gmra.mxu0 %v8828
      %v8985 = vpop.f32.mrf.mxu0
      %v8986 = vadd.f32 0.0, %v8985
      %v8987 = vpop.f32.mrf.mxu0
      %8988 = vmatprep.mubr.f32.mxu0 0.0
      %8989 = vmatmul.mubr.f32.gmra.mxu0 %v8831
      %v8990 = vpop.f32.mrf.mxu0
      %v8991 = vadd.f32 0.0, %v8990
      %v8992 = vpop.f32.mrf.mxu0
      %8993 = vmatprep.mubr.f32.mxu0 0.0
      %8994 = vmatmul.mubr.f32.gmra.mxu0 %v8834
      %v8995 = vpop.f32.mrf.mxu0
      %v8996 = vadd.f32 0.0, %v8995
      %v8997 = vpop.f32.mrf.mxu0
      %8998 = vmatprep.mubr.f32.mxu0 0.0
      %8999 = vmatmul.mubr.f32.gmra.mxu0 %v8837
      %v9000 = vpop.f32.mrf.mxu0
      %v9001 = vadd.f32 0.0, %v9000
      %v9002 = vpop.f32.mrf.mxu0
      %9003 = vmatprep.mubr.f32.mxu0 0.0
      %9004 = vmatmul.mubr.f32.gmra.mxu0 %v8840
      %v9005 = vpop.f32.mrf.mxu0
      %v9006 = vadd.f32 0.0, %v9005
      %v9007 = vpop.f32.mrf.mxu0
      %9008 = vmatprep.mubr.f32.mxu0 0.0
      %9009 = vmatmul.mubr.f32.gmra.mxu0 %v8843
      %v9010 = vpop.f32.mrf.mxu0
      %v9011 = vadd.f32 0.0, %v9010
      %v9012 = vpop.f32.mrf.mxu0
      %9013 = vmatprep.mubr.f32.mxu0 0.0
      %9014 = vmatmul.mubr.f32.gmra.mxu0 %v8846
      %v9015 = vpop.f32.mrf.mxu0
      %v9016 = vadd.f32 0.0, %v9015
      %v9017 = vpop.f32.mrf.mxu0
      %9018 = vmatprep.mubr.f32.mxu0 0.0
      %9019 = vmatmul.mubr.f32.gmra.mxu0 %v8849
      %v9020 = vpop.f32.mrf.mxu0
      %v9021 = vadd.f32 0.0, %v9020
      %v9022 = vpop.f32.mrf.mxu0
      %9023 = vmatprep.mubr.f32.mxu0 0.0
      %9024 = vmatmul.mubr.f32.gmra.mxu0 %v8852
      %v9025 = vpop.f32.mrf.mxu0
      %v9026 = vadd.f32 0.0, %v9025
      %v9027 = vpop.f32.mrf.mxu0
      %9028 = vmatprep.mubr.f32.mxu0 0.0
      %9029 = vmatmul.mubr.f32.gmra.mxu0 %v8855
      %v9030 = vpop.f32.mrf.mxu0
      %v9031 = vadd.f32 0.0, %v9030
      %v9032 = vpop.f32.mrf.mxu0
      %9033 = vmatprep.mubr.f32.mxu0 0.0
      %9034 = vmatmul.mubr.f32.gmra.mxu0 %v8858
      %v9035 = vpop.f32.mrf.mxu0
      %v9036 = vadd.f32 0.0, %v9035
      %v9037 = vpop.f32.mrf.mxu0
      %9038 = vmatprep.mubr.f32.mxu0 0.0
      %9039 = vmatmul.mubr.f32.gmra.mxu0 %v8861
      %v9040 = vpop.f32.mrf.mxu0
      %v9041 = vadd.f32 0.0, %v9040
      %v9042 = vpop.f32.mrf.mxu0
      %9043 = vmatprep.mubr.f32.mxu0 0.0
      %9044 = vmatmul.mubr.f32.gmra.mxu0 %v8864
      %v9045 = vpop.f32.mrf.mxu0
      %v9046 = vadd.f32 0.0, %v9045
      %v9047 = vpop.f32.mrf.mxu0
      %9048 = vmatprep.mubr.f32.mxu0 0.0
      %9049 = vmatmul.mubr.f32.gmra.mxu0 %v8867
      %v9050 = vpop.f32.mrf.mxu0
      %v9051 = vadd.f32 0.0, %v9050
      %v9052 = vpop.f32.mrf.mxu0
      %9053 = vmatprep.mubr.f32.mxu0 0.0
      %9054 = vmatmul.mubr.f32.gmra.mxu0 %v8870
      %v9055 = vpop.f32.mrf.mxu0
      %v9056 = vadd.f32 0.0, %v9055
      %v9057 = vpop.f32.mrf.mxu0
      %9058 = vmatprep.mubr.f32.mxu0 0.0
      %9059 = vmatmul.mubr.f32.gmra.mxu0 %v8873
      %v9060 = vpop.f32.mrf.mxu0
      %v9061 = vadd.f32 0.0, %v9060
      %v9062 = vpop.f32.mrf.mxu0
      %9063 = vmatprep.mubr.f32.mxu0 0.0
      %9064 = vmatmul.mubr.f32.gmra.mxu0 %v8876
      %v9065 = vpop.f32.mrf.mxu0
      %v9066 = vadd.f32 0.0, %v9065
      %v9067 = vpop.f32.mrf.mxu0
      %9068 = vmatprep.mubr.f32.mxu0 0.0
      %9069 = vmatmul.mubr.f32.gmra.mxu0 %v8879
      %v9070 = vpop.f32.mrf.mxu0
      %v9071 = vadd.f32 0.0, %v9070
      %v9072 = vpop.f32.mrf.mxu0
      %9073 = vmatprep.mubr.f32.mxu0 0.0
      %9074 = vmatmul.mubr.f32.gmra.mxu0 %v8882
      %v9075 = vpop.f32.mrf.mxu0
      %v9076 = vadd.f32 0.0, %v9075
      %v9077 = vpop.f32.mrf.mxu0
      %9078 = vmatprep.mubr.f32.mxu0 0.0
      %9079 = vmatmul.mubr.f32.gmra.mxu0 %v8885
      %v9080 = vpop.f32.mrf.mxu0
      %v9081 = vadd.f32 0.0, %v9080
      %v9082 = vpop.f32.mrf.mxu0
      %9083 = vmatprep.mubr.f32.mxu0 0.0
      %9084 = vmatmul.mubr.f32.gmra.mxu0 %v8888
      %v9085 = vpop.f32.mrf.mxu0
      %v9086 = vadd.f32 0.0, %v9085
      %v9087 = vpop.f32.mrf.mxu0
      %9088 = vmatprep.mubr.f32.mxu0 0.0
      %9089 = vmatmul.mubr.f32.gmra.mxu0 %v8891
      %v9090 = vpop.f32.mrf.mxu0
      %v9091 = vadd.f32 0.0, %v9090
      %v9092 = vpop.f32.mrf.mxu0
      %9093 = vmatprep.mubr.f32.mxu0 0.0
      %9094 = vmatmul.mubr.f32.gmra.mxu0 %v8894
      %v9095 = vpop.f32.mrf.mxu0
      %v9096 = vadd.f32 0.0, %v9095
      %v9097 = vpop.f32.mrf.mxu0
      %9098 = vmatprep.mubr.f32.mxu0 0.0
      %9099 = vmatmul.mubr.f32.gmra.mxu0 %v8897
      %v9100 = vpop.f32.mrf.mxu0
      %v9101 = vadd.f32 0.0, %v9100
      %v9102 = vpop.f32.mrf.mxu0
      %9103 = vdwg.mxu0
      %v9104 = vadd.f32 %v8754, %v8966
      %v9105 = vadd.f32 %v8755, %v8971
      %v9106 = vadd.f32 %v8756, %v8976
      %v9107 = vadd.f32 %v8757, %v8981
      %v9108 = vadd.f32 %v8758, %v8986
      %v9109 = vadd.f32 %v8759, %v8991
      %v9110 = vadd.f32 %v8760, %v8996
      %v9111 = vadd.f32 %v8761, %v9001
      %v9112 = vadd.f32 %v8762, %v9006
      %v9113 = vadd.f32 %v8763, %v9011
      %v9114 = vadd.f32 %v8764, %v9016
      %v9115 = vadd.f32 %v8765, %v9021
      %v9116 = vadd.f32 %v8766, %v9026
      %v9117 = vadd.f32 %v8767, %v9031
      %v9118 = vadd.f32 %v8768, %v9036
      %v9119 = vadd.f32 %v8769, %v9041
      %v9120 = vadd.f32 %v8770, %v9046
      %v9121 = vadd.f32 %v8771, %v9051
      %v9122 = vadd.f32 %v8772, %v9056
      %v9123 = vadd.f32 %v8773, %v9061
      %v9124 = vadd.f32 %v8774, %v9066
      %v9125 = vadd.f32 %v8775, %v9071
      %v9126 = vadd.f32 %v8776, %v9076
      %v9127 = vadd.f32 %v8777, %v9081
      %v9128 = vadd.f32 %v8778, %v9086
      %v9129 = vadd.f32 %v8779, %v9091
      %v9130 = vadd.f32 %v8780, %v9096
      %v9131 = vadd.f32 %v8781, %v9101
      %v9132 = vld [vmem:[%s4] sm:$0x1]
      %v9134 = vlaneseq
      %v9135 = vshrl.u32 %v9134, 7
      %v9136 = vsub.s32 0, %v9135
      %v9137 = vrot.slane %v9132, %v9136
      %v9139 = vadd.f32 %v9104, %v9137
      %v9140 = vadd.f32 %v9105, %v9137
      %v9141 = vadd.f32 %v9106, %v9137
      %v9142 = vadd.f32 %v9107, %v9137
      %v9143 = vadd.f32 %v9108, %v9137
      %v9144 = vadd.f32 %v9109, %v9137
      %v9145 = vadd.f32 %v9110, %v9137
      %v9146 = vadd.f32 %v9111, %v9137
      %v9147 = vadd.f32 %v9112, %v9137
      %v9148 = vadd.f32 %v9113, %v9137
      %v9149 = vadd.f32 %v9114, %v9137
      %v9150 = vadd.f32 %v9115, %v9137
      %v9151 = vadd.f32 %v9116, %v9137
      %v9152 = vadd.f32 %v9117, %v9137
      %v9153 = vadd.f32 %v9118, %v9137
      %v9154 = vadd.f32 %v9119, %v9137
      %v9155 = vadd.f32 %v9120, %v9137
      %v9156 = vadd.f32 %v9121, %v9137
      %v9157 = vadd.f32 %v9122, %v9137
      %v9158 = vadd.f32 %v9123, %v9137
      %v9159 = vadd.f32 %v9124, %v9137
      %v9160 = vadd.f32 %v9125, %v9137
      %v9161 = vadd.f32 %v9126, %v9137
      %v9162 = vadd.f32 %v9127, %v9137
      %v9163 = vadd.f32 %v9128, %v9137
      %v9164 = vadd.f32 %v9129, %v9137
      %v9165 = vadd.f32 %v9130, %v9137
      %v9166 = vadd.f32 %v9131, %v9137
      %v9167 = vmax.f32 %v9139, 0.0
      %v9168 = vmax.f32 %v9140, 0.0
      %v9169 = vmax.f32 %v9141, 0.0
      %v9170 = vmax.f32 %v9142, 0.0
      %v9171 = vmax.f32 %v9143, 0.0
      %v9172 = vmax.f32 %v9144, 0.0
      %v9173 = vmax.f32 %v9145, 0.0
      %v9174 = vmax.f32 %v9146, 0.0
      %v9175 = vmax.f32 %v9147, 0.0
      %v9176 = vmax.f32 %v9148, 0.0
      %v9177 = vmax.f32 %v9149, 0.0
      %v9178 = vmax.f32 %v9150, 0.0
      %v9179 = vmax.f32 %v9151, 0.0
      %v9180 = vmax.f32 %v9152, 0.0
      %v9181 = vmax.f32 %v9153, 0.0
      %v9182 = vmax.f32 %v9154, 0.0
      %v9183 = vmax.f32 %v9155, 0.0
      %v9184 = vmax.f32 %v9156, 0.0
      %v9185 = vmax.f32 %v9157, 0.0
      %v9186 = vmax.f32 %v9158, 0.0
      %v9187 = vmax.f32 %v9159, 0.0
      %v9188 = vmax.f32 %v9160, 0.0
      %v9189 = vmax.f32 %v9161, 0.0
      %v9190 = vmax.f32 %v9162, 0.0
      %v9191 = vmax.f32 %v9163, 0.0
      %v9192 = vmax.f32 %v9164, 0.0
      %v9193 = vmax.f32 %v9165, 0.0
      %v9194 = vmax.f32 %v9166, 0.0
      %vm9195 = vcmask 523264
      %9196 = vst.msk [vmem:[#allocation5] sm:$0xff] %vm9195, %v9167
      %9197 = vst.msk [vmem:[#allocation5 + $0x8] sm:$0xff] %vm9195, %v9168
      %9198 = vst.msk [vmem:[#allocation5 + $0x10] sm:$0xff] %vm9195, %v9169
      %9199 = vst.msk [vmem:[#allocation5 + $0x18] sm:$0xff] %vm9195, %v9170
      %9200 = vst.msk [vmem:[#allocation5 + $0x20] sm:$0xff] %vm9195, %v9171
      %9201 = vst.msk [vmem:[#allocation5 + $0x28] sm:$0xff] %vm9195, %v9172
      %9202 = vst.msk [vmem:[#allocation5 + $0x30] sm:$0xff] %vm9195, %v9173
      %9203 = vst.msk [vmem:[#allocation5 + $0x38] sm:$0xff] %vm9195, %v9174
      %9204 = vst.msk [vmem:[#allocation5 + $0x40] sm:$0xff] %vm9195, %v9175
      %9205 = vst.msk [vmem:[#allocation5 + $0x48] sm:$0xff] %vm9195, %v9176
      %9206 = vst.msk [vmem:[#allocation5 + $0x50] sm:$0xff] %vm9195, %v9177
      %9207 = vst.msk [vmem:[#allocation5 + $0x58] sm:$0xff] %vm9195, %v9178
      %9208 = vst.msk [vmem:[#allocation5 + $0x60] sm:$0xff] %vm9195, %v9179
      %9209 = vst.msk [vmem:[#allocation5 + $0x68] sm:$0xff] %vm9195, %v9180
      %9210 = vst.msk [vmem:[#allocation5 + $0x70] sm:$0xff] %vm9195, %v9181
      %9211 = vst.msk [vmem:[#allocation5 + $0x78] sm:$0xff] %vm9195, %v9182
      %9212 = vst.msk [vmem:[#allocation5 + $0x80] sm:$0xff] %vm9195, %v9183
      %9213 = vst.msk [vmem:[#allocation5 + $0x88] sm:$0xff] %vm9195, %v9184
      %9214 = vst.msk [vmem:[#allocation5 + $0x90] sm:$0xff] %vm9195, %v9185
      %9215 = vst.msk [vmem:[#allocation5 + $0x98] sm:$0xff] %vm9195, %v9186
      %9216 = vst.msk [vmem:[#allocation5 + $0xa0] sm:$0xff] %vm9195, %v9187
      %9217 = vst.msk [vmem:[#allocation5 + $0xa8] sm:$0xff] %vm9195, %v9188
      %9218 = vst.msk [vmem:[#allocation5 + $0xb0] sm:$0xff] %vm9195, %v9189
      %9219 = vst.msk [vmem:[#allocation5 + $0xb8] sm:$0xff] %vm9195, %v9190
      %9220 = vst.msk [vmem:[#allocation5 + $0xc0] sm:$0xff] %vm9195, %v9191
      %9221 = vst.msk [vmem:[#allocation5 + $0xc8] sm:$0xff] %vm9195, %v9192
      %9222 = vst.msk [vmem:[#allocation5 + $0xd0] sm:$0xff] %vm9195, %v9193
      %vm9223 = vcmask 521216
      %9224 = vst.msk [vmem:[#allocation5 + $0xd8] sm:$0x3f] %vm9223, %v9194
      %v9225 = vld [vmem:[#allocation5] sm:$0xff]
      %v9226 = vld [vmem:[#allocation5 + $0x8] sm:$0xff]
      %v9227 = vld [vmem:[#allocation5 + $0x10] sm:$0xff]
      %v9228 = vld [vmem:[#allocation5 + $0x18] sm:$0xff]
      %v9229 = vld [vmem:[#allocation5 + $0x20] sm:$0xff]
      %v9230 = vld [vmem:[#allocation5 + $0x28] sm:$0xff]
      %v9231 = vld [vmem:[#allocation5 + $0x30] sm:$0xff]
      %v9232 = vld [vmem:[#allocation5 + $0x38] sm:$0xff]
      %v9233 = vld [vmem:[#allocation5 + $0x40] sm:$0xff]
      %v9234 = vld [vmem:[#allocation5 + $0x48] sm:$0xff]
      %v9235 = vld [vmem:[#allocation5 + $0x50] sm:$0xff]
      %v9236 = vld [vmem:[#allocation5 + $0x58] sm:$0xff]
      %v9237 = vld [vmem:[#allocation5 + $0x60] sm:$0xff]
      %v9238 = vld [vmem:[#allocation5 + $0x68] sm:$0xff]
      %v9239 = vld [vmem:[#allocation5 + $0x70] sm:$0xff]
      %v9240 = vld [vmem:[#allocation5 + $0x78] sm:$0xff]
      %v9241 = vld [vmem:[#allocation5 + $0x80] sm:$0xff]
      %v9242 = vld [vmem:[#allocation5 + $0x88] sm:$0xff]
      %v9243 = vld [vmem:[#allocation5 + $0x90] sm:$0xff]
      %v9244 = vld [vmem:[#allocation5 + $0x98] sm:$0xff]
      %v9245 = vld [vmem:[#allocation5 + $0xa0] sm:$0xff]
      %v9246 = vld [vmem:[#allocation5 + $0xa8] sm:$0xff]
      %v9247 = vld [vmem:[#allocation5 + $0xb0] sm:$0xff]
      %v9248 = vld [vmem:[#allocation5 + $0xb8] sm:$0xff]
      %v9249 = vld [vmem:[#allocation5 + $0xc0] sm:$0xff]
      %v9250 = vld [vmem:[#allocation5 + $0xc8] sm:$0x1f]
      %v9251 = vld [vmem:[#allocation5 + $0x1] sm:$0xff]
      %v9252 = vld [vmem:[#allocation5 + $0x9] sm:$0xff]
      %v9253 = vld [vmem:[#allocation5 + $0x11] sm:$0xff]
      %v9254 = vld [vmem:[#allocation5 + $0x19] sm:$0xff]
      %v9255 = vld [vmem:[#allocation5 + $0x21] sm:$0xff]
      %v9256 = vld [vmem:[#allocation5 + $0x29] sm:$0xff]
      %v9257 = vld [vmem:[#allocation5 + $0x31] sm:$0xff]
      %v9258 = vld [vmem:[#allocation5 + $0x39] sm:$0xff]
      %v9259 = vld [vmem:[#allocation5 + $0x41] sm:$0xff]
      %v9260 = vld [vmem:[#allocation5 + $0x49] sm:$0xff]
      %v9261 = vld [vmem:[#allocation5 + $0x51] sm:$0xff]
      %v9262 = vld [vmem:[#allocation5 + $0x59] sm:$0xff]
      %v9263 = vld [vmem:[#allocation5 + $0x61] sm:$0xff]
      %v9264 = vld [vmem:[#allocation5 + $0x69] sm:$0xff]
      %v9265 = vld [vmem:[#allocation5 + $0x71] sm:$0xff]
      %v9266 = vld [vmem:[#allocation5 + $0x79] sm:$0xff]
      %v9267 = vld [vmem:[#allocation5 + $0x81] sm:$0xff]
      %v9268 = vld [vmem:[#allocation5 + $0x89] sm:$0xff]
      %v9269 = vld [vmem:[#allocation5 + $0x91] sm:$0xff]
      %v9270 = vld [vmem:[#allocation5 + $0x99] sm:$0xff]
      %v9271 = vld [vmem:[#allocation5 + $0xa1] sm:$0xff]
      %v9272 = vld [vmem:[#allocation5 + $0xa9] sm:$0xff]
      %v9273 = vld [vmem:[#allocation5 + $0xb1] sm:$0xff]
      %v9274 = vld [vmem:[#allocation5 + $0xb9] sm:$0xff]
      %v9275 = vld [vmem:[#allocation5 + $0xc1] sm:$0xff]
      %v9276 = vld [vmem:[#allocation5 + $0xc9] sm:$0x1f]
      %v9277 = vmax.f32 %v9225, %v9251
      %v9278 = vmax.f32 %v9226, %v9252
      %v9279 = vmax.f32 %v9227, %v9253
      %v9280 = vmax.f32 %v9228, %v9254
      %v9281 = vmax.f32 %v9229, %v9255
      %v9282 = vmax.f32 %v9230, %v9256
      %v9283 = vmax.f32 %v9231, %v9257
      %v9284 = vmax.f32 %v9232, %v9258
      %v9285 = vmax.f32 %v9233, %v9259
      %v9286 = vmax.f32 %v9234, %v9260
      %v9287 = vmax.f32 %v9235, %v9261
      %v9288 = vmax.f32 %v9236, %v9262
      %v9289 = vmax.f32 %v9237, %v9263
      %v9290 = vmax.f32 %v9238, %v9264
      %v9291 = vmax.f32 %v9239, %v9265
      %v9292 = vmax.f32 %v9240, %v9266
      %v9293 = vmax.f32 %v9241, %v9267
      %v9294 = vmax.f32 %v9242, %v9268
      %v9295 = vmax.f32 %v9243, %v9269
      %v9296 = vmax.f32 %v9244, %v9270
      %v9297 = vmax.f32 %v9245, %v9271
      %v9298 = vmax.f32 %v9246, %v9272
      %v9299 = vmax.f32 %v9247, %v9273
      %v9300 = vmax.f32 %v9248, %v9274
      %v9301 = vmax.f32 %v9249, %v9275
      %v9302 = vmax.f32 %v9250, %v9276
      %v9303 = vld [vmem:[#allocation5 + $0xc8] sm:$0xff]
      %v9304 = vld [vmem:[#allocation5 + $0xd0] sm:$0xff]
      %v9305 = vld [vmem:[#allocation5 + $0xd8] sm:$0x1f]
      %v9306 = vld [vmem:[#allocation5 + $0xc9] sm:$0xff]
      %v9307 = vld [vmem:[#allocation5 + $0xd1] sm:$0xff]
      %v9308 = vld [vmem:[#allocation5 + $0xd9] sm:$0x1f]
      %v9309 = vmax.f32 %v9303, %v9306
      %v9310 = vmax.f32 %v9304, %v9307
      %v9311 = vmax.f32 %v9305, %v9308
      %v9312 = vmax.f32 %v9277, %v9279
      %v9313 = vmax.f32 %v9278, %v9280
      %v9314 = vmax.f32 %v9279, %v9281
      %v9315 = vmax.f32 %v9280, %v9282
      %v9316 = vmax.f32 %v9281, %v9283
      %v9317 = vmax.f32 %v9282, %v9284
      %v9318 = vmax.f32 %v9283, %v9285
      %v9319 = vmax.f32 %v9284, %v9286
      %v9320 = vmax.f32 %v9285, %v9287
      %v9321 = vmax.f32 %v9286, %v9288
      %v9322 = vmax.f32 %v9287, %v9289
      %v9323 = vmax.f32 %v9288, %v9290
      %v9324 = vmax.f32 %v9289, %v9291
      %v9325 = vmax.f32 %v9290, %v9292
      %v9326 = vmax.f32 %v9291, %v9293
      %v9327 = vmax.f32 %v9292, %v9294
      %v9328 = vmax.f32 %v9293, %v9295
      %v9329 = vmax.f32 %v9294, %v9296
      %v9330 = vmax.f32 %v9295, %v9297
      %v9331 = vmax.f32 %v9296, %v9298
      %v9332 = vmax.f32 %v9297, %v9299
      %v9333 = vmax.f32 %v9298, %v9300
      %v9334 = vmax.f32 %v9299, %v9301
      %v9335 = vmax.f32 %v9300, %v9309
      %v9336 = vmax.f32 %v9301, %v9310
      %v9337 = vmax.f32 %v9302, %v9311
      %v9338 = vld [vmem:[%s6] sm:$0xff]
      %v9339 = vld [vmem:[%s6 + $0x8] sm:$0xff]
      %v9340 = vld [vmem:[%s6 + $0x10] sm:$0xff]
      %v9341 = vld [vmem:[%s6 + $0x18] sm:$0xff]
      %v9342 = vld [vmem:[%s6 + $0x20] sm:$0xff]
      %v9343 = vld [vmem:[%s6 + $0x28] sm:$0xff]
      %v9344 = vld [vmem:[%s6 + $0x30] sm:$0xff]
      %v9345 = vld [vmem:[%s6 + $0x38] sm:$0xff]
      %v9346 = vld [vmem:[%s6 + $0x40] sm:$0xff]
      %v9347 = vld [vmem:[%s6 + $0x48] sm:$0xff]
      %v9348 = vld [vmem:[%s6 + $0x50] sm:$0xff]
      %v9349 = vld [vmem:[%s6 + $0x58] sm:$0xff]
      %v9350 = vld [vmem:[%s6 + $0x60] sm:$0x1]
      %v9351 = vld [vmem:[%s6 + $0x68] sm:$0x1]
      %vm9352 = vcmask 629760
      %v9354 = vsel %vm9352, %v9339, 0
      %v9357 = vsel %vm9352, %v9341, 0
      %v9360 = vsel %vm9352, %v9343, 0
      %v9363 = vsel %vm9352, %v9345, 0
      %v9366 = vsel %vm9352, %v9347, 0
      %v9369 = vsel %vm9352, %v9349, 0
      %v9372 = vsel %vm9352, %v9351, 0
      %vm9374 = vcmask 1044480
      %v9376 = vsel %vm9374, %v9337, 0
      %9378 = vmatprep.subr.mxu0 0.0
      %9379 = vmatpush1.msra.mxu0 %v9327
      %9380 = vmatprep.subr.mxu0 0.0
      %9381 = vmatpush1.msra.mxu0 %v9326
      %9382 = vmatprep.subr.mxu0 0.0
      %9383 = vmatpush1.msra.mxu0 %v9325
      %9384 = vmatprep.subr.mxu0 0.0
      %9385 = vmatpush1.msra.mxu0 %v9324
      %9386 = vmatprep.subr.mxu0 0.0
      %9387 = vmatpush1.msra.mxu0 %v9323
      %9388 = vmatprep.subr.mxu0 0.0
      %9389 = vmatpush1.msra.mxu0 %v9322
      %9390 = vmatprep.subr.mxu0 0.0
      %9391 = vmatpush1.msra.mxu0 %v9321
      %9392 = vmatprep.subr.mxu0 0.0
      %9393 = vmatpush1.msra.mxu0 %v9320
      %9394 = vmatprep.subr.mxu0 0.0
      %9395 = vmatpush1.msra.mxu0 %v9319
      %9396 = vmatprep.subr.mxu0 0.0
      %9397 = vmatpush1.msra.mxu0 %v9318
      %9398 = vmatprep.subr.mxu0 0.0
      %9399 = vmatpush1.msra.mxu0 %v9317
      %9400 = vmatprep.subr.mxu0 0.0
      %9401 = vmatpush1.msra.mxu0 %v9316
      %9402 = vmatprep.subr.mxu0 0.0
      %9403 = vmatpush1.msra.mxu0 %v9315
      %9404 = vmatprep.subr.mxu0 0.0
      %9405 = vmatpush1.msra.mxu0 %v9314
      %9406 = vmatprep.subr.mxu0 0.0
      %9407 = vmatpush1.msra.mxu0 %v9313
      %9408 = vmatprep.subr.mxu0 0.0
      %9409 = vmatpush1.msra.mxu0 %v9312
      %9410 = vmatprep.subr.mxu0 0.0
      %9411 = vmatpush2.msra.mxu0 0.0
      %9412 = vmatprep.subr.mxu0 0.0
      %9413 = vmatpush2.msra.mxu0 0.0
      %9414 = vmatprep.subr.mxu0 0.0
      %9415 = vmatpush2.msra.mxu0 0.0
      %9416 = vmatprep.subr.mxu0 0.0
      %9417 = vmatpush2.msra.mxu0 0.0
      %9418 = vmatprep.subr.mxu0 0.0
      %9419 = vmatpush2.msra.mxu0 0.0
      %9420 = vmatprep.subr.mxu0 0.0
      %9421 = vmatpush2.msra.mxu0 0.0
      %9422 = vmatprep.subr.mxu0 0.0
      %9423 = vmatpush2.msra.mxu0 %v9376
      %9424 = vmatprep.subr.mxu0 0.0
      %9425 = vmatpush2.msra.mxu0 %v9336
      %9426 = vmatprep.subr.mxu0 0.0
      %9427 = vmatpush2.msra.mxu0 %v9335
      %9428 = vmatprep.subr.mxu0 0.0
      %9429 = vmatpush2.msra.mxu0 %v9334
      %9430 = vmatprep.subr.mxu0 0.0
      %9431 = vmatpush2.msra.mxu0 %v9333
      %9432 = vmatprep.subr.mxu0 0.0
      %9433 = vmatpush2.msra.mxu0 %v9332
      %9434 = vmatprep.subr.mxu0 0.0
      %9435 = vmatpush2.msra.mxu0 %v9331
      %9436 = vmatprep.subr.mxu0 0.0
      %9437 = vmatpush2.msra.mxu0 %v9330
      %9438 = vmatprep.subr.mxu0 0.0
      %9439 = vmatpush2.msra.mxu0 %v9329
      %9440 = vmatprep.subr.mxu0 0.0
      %9441 = vmatpush2.msra.mxu0 %v9328
      %9442 = vmatprep.mubr.f32.mxu0 %v9354
      %9443 = vmatmul.mubr.f32.gmra.mxu0 %v9338
      %v9444 = vpop.f32.mrf.mxu0
      %v9445 = vadd.f32 0.0, %v9444
      %v9446 = vpop.f32.mrf.mxu0
      %9447 = vmatprep.mubr.f32.mxu0 %v9357
      %9448 = vmatmul.mubr.f32.gmra.mxu0 %v9340
      %v9449 = vpop.f32.mrf.mxu0
      %v9450 = vadd.f32 0.0, %v9449
      %v9451 = vpop.f32.mrf.mxu0
      %9452 = vmatprep.mubr.f32.mxu0 %v9360
      %9453 = vmatmul.mubr.f32.gmra.mxu0 %v9342
      %v9454 = vpop.f32.mrf.mxu0
      %v9455 = vadd.f32 0.0, %v9454
      %v9456 = vpop.f32.mrf.mxu0
      %9457 = vmatprep.mubr.f32.mxu0 %v9363
      %9458 = vmatmul.mubr.f32.gmra.mxu0 %v9344
      %v9459 = vpop.f32.mrf.mxu0
      %v9460 = vadd.f32 0.0, %v9459
      %v9461 = vpop.f32.mrf.mxu0
      %9462 = vmatprep.mubr.f32.mxu0 %v9366
      %9463 = vmatmul.mubr.f32.gmra.mxu0 %v9346
      %v9464 = vpop.f32.mrf.mxu0
      %v9465 = vadd.f32 0.0, %v9464
      %v9466 = vpop.f32.mrf.mxu0
      %9467 = vmatprep.mubr.f32.mxu0 %v9369
      %9468 = vmatmul.mubr.f32.gmra.mxu0 %v9348
      %v9469 = vpop.f32.mrf.mxu0
      %v9470 = vadd.f32 0.0, %v9469
      %v9471 = vpop.f32.mrf.mxu0
      %9472 = vmatprep.mubr.f32.mxu0 %v9372
      %9473 = vmatmul.mubr.f32.gmra.mxu0 %v9350
      %v9474 = vpop.f32.mrf.mxu0
      %v9475 = vadd.f32 0.0, %v9474
      %v9476 = vpop.f32.mrf.mxu0
      %9477 = vdwg.mxu0
      %9478 = vst.msk [vmem:[%s278] sm:$0xff] %vm9195, %v9445
      %9479 = vst.msk [vmem:[%s278 + $0x8] sm:$0xff] %vm9195, %v9450
      %9480 = vst.msk [vmem:[%s278 + $0x10] sm:$0xff] %vm9195, %v9455
      %9481 = vst.msk [vmem:[%s278 + $0x18] sm:$0xff] %vm9195, %v9460
      %9482 = vst.msk [vmem:[%s278 + $0x20] sm:$0xff] %vm9195, %v9465
      %9483 = vst.msk [vmem:[%s278 + $0x28] sm:$0xff] %vm9195, %v9470
      %vm9484 = vcmask 516096
      %9485 = vst.msk [vmem:[%s278 + $0x30] sm:$0x1] %vm9484, %v9475
      %p9486 = scmp.lt.s32.totalorder %s18, 1
      %s9487 = scalar_select %p9486, %s18, 1
      %s9488 = smul.addr %s9487, 7
      %s9489 = smul.addr %s9488, 8
      %s9490 = scalar_lea.vmem %s7, %s9489
      // Predicated region
      $region49: #{net_forward.2} parent=47 // pred_check
        %p9491 = pneg %p188
      $region50: #{net_forward.2} parent=47 // pred_check_branch
        %9493 = sbr.rel (%p9491) target = $region52
      $region51: #{net_forward.2} parent=47 // pred_region
        _
      $region52: #{net_forward.2} parent=47 // pred_fallthru
        _
    $region48: #{net_forward.2} parent=5 // pred_fallthru
      _
    %p9494 = scmp.le.s32.totalorder 2, %s13
    // Predicated region
    $region53: #{net_forward.2} parent=5 // pred_check
      %p9495 = pneg %p9494
    $region54: #{net_forward.2} parent=5 // pred_check_branch
      %9497 = sbr.rel (%p9495) target = $region56
    $region55: #{net_forward.2} parent=5 // pred_region
      %s9498 = ssub.s32 %s13, 2
      // Predicated region
      $region57: #{net_forward.2} parent=55 // pred_check
        %p9499 = pneg %p194
      $region58: #{net_forward.2} parent=55 // pred_check_branch
        %9501 = sbr.rel (%p9499) target = $region60
      $region59: #{net_forward.2} parent=55 // pred_region
        %p9502 = scmp.lt.s32.totalorder %s19, 1
        %s9503 = scalar_select %p9502, %s19, 1
        %s9504 = smul.addr %s9503, 7
        %s9505 = smul.addr %s9504, 8
        %s9506 = scalar_lea.vmem %s7, %s9505
      $region60: #{net_forward.2} parent=55 // pred_fallthru
        _
    $region56: #{net_forward.2} parent=5 // pred_fallthru
      _
  $region6: #{net_forward.2} parent=0 // loop_footer
    %s17 = sadd.s32 1, %s13
  $region7: #{net_forward.2} parent=0 // loop_footer_branch
    %12 = sbr.rel target = $region3
  $region8: #{net_forward.2} parent=0 // loop_exit
    _

</llo_original>
